<compile_context>
chip_gen: v6e
topology: v6e:2x2x1
jax: 0.10.0
libtpu: 0.0.40
codegen_flags: <defaults>
</compile_context>

<pallas_src>
import jax
import jax.numpy as jnp
import numpy as np
from jax.experimental import pallas as pl
from jax.experimental.pallas import tpu as pltpu

HIDDEN = 256          # LSTM hidden size per direction
IN_DIM = 768          # LSTM input size ("roberta logits" feature dim)
NUM_CLASSES = 30      # final linear output


def bilstm_head_kernel(xf_ref, xb_ref,                 # (T, Bp, 768) fwd / reversed chunks
                       wihf_ref, whhf_ref, bf_ref,     # fwd:  (768,1024) (256,1024) (1,1024)
                       wihb_ref, whhb_ref, bb_ref,     # bwd:  (768,1024) (256,1024) (1,1024)
                       wlf_ref, wlb_ref, bl_ref,       # head: (256,30) (256,30) (1,30)
                       out_ref,                        # (Bp, 30)
                       gates_f_ref, gates_b_ref,       # (T*Bp, 1024) f32 scratch
                       hf_ref, cf_ref, hb_ref, cb_ref):  # (Bp, 256) f32 carries
    T, Bp, _ = xf_ref.shape
    H = HIDDEN
    step = pl.program_id(0)

    @pl.when(step == 0)
    def _():
        hf_ref[...] = jnp.zeros_like(hf_ref)
        cf_ref[...] = jnp.zeros_like(cf_ref)
        hb_ref[...] = jnp.zeros_like(hb_ref)
        cb_ref[...] = jnp.zeros_like(cb_ref)

    # Hoisted input projection: one big bf16 MXU matmul per direction for the whole chunk,
    # with the combined b_ih+b_hh bias folded in (never re-added inside the serial loop).
    xf = xf_ref[...].reshape(T * Bp, IN_DIM)
    xb = xb_ref[...].reshape(T * Bp, IN_DIM)
    gates_f_ref[...] = (jnp.dot(xf, wihf_ref[...], preferred_element_type=jnp.float32)
                        + bf_ref[...])
    gates_b_ref[...] = (jnp.dot(xb, wihb_ref[...], preferred_element_type=jnp.float32)
                        + bb_ref[...])

    whh_f = whhf_ref[...]
    whh_b = whhb_ref[...]

    def cell(g_in, h, c, whh):
        # PyTorch LSTM gate order: i, f, g, o.  Gate math stays in f32.
        gates = g_in + jnp.dot(h.astype(jnp.bfloat16), whh,
                               preferred_element_type=jnp.float32)
        i_g = jax.nn.sigmoid(gates[:, 0 * H:1 * H])
        f_g = jax.nn.sigmoid(gates[:, 1 * H:2 * H])
        g_g = jnp.tanh(gates[:, 2 * H:3 * H])
        o_g = jax.nn.sigmoid(gates[:, 3 * H:4 * H])
        c_new = f_g * c + i_g * g_g
        h_new = o_g * jnp.tanh(c_new)
        return h_new, c_new

    # Interleaved recurrence: fwd cell at local step t, bwd cell at local step T-1-t.
    # (The bwd chunk itself is already the globally reversed chunk via its index_map.)
    def body(t, carry):
        h_f, c_f, h_b, c_b = carry
        off_f = pl.multiple_of(t * Bp, Bp)
        off_b = pl.multiple_of((T - 1 - t) * Bp, Bp)
        gf = gates_f_ref[pl.ds(off_f, Bp), :]
        gb = gates_b_ref[pl.ds(off_b, Bp), :]
        h_f, c_f = cell(gf, h_f, c_f, whh_f)
        h_b, c_b = cell(gb, h_b, c_b, whh_b)
        return h_f, c_f, h_b, c_b

    carry0 = (hf_ref[...], cf_ref[...], hb_ref[...], cb_ref[...])
    h_f, c_f, h_b, c_b = jax.lax.fori_loop(0, T, body, carry0, unroll=(T <= 8))
    hf_ref[...] = h_f
    cf_ref[...] = c_f
    hb_ref[...] = h_b
    cb_ref[...] = c_b

    # Final linear head: linear(cat(h_fwd, h_bwd)) as two matmuls (avoids lane concat).
    @pl.when(step == pl.num_programs(0) - 1)
    def _():
        out_ref[...] = (jnp.dot(h_f, wlf_ref[...], preferred_element_type=jnp.float32)
                        + jnp.dot(h_b, wlb_ref[...], preferred_element_type=jnp.float32)
                        + bl_ref[...])


def roberta_add_lstm_forward(input_ids, attention_mask, params, *, chunk_steps=128):
    """Full module forward: stand-in roberta (plain JAX glue) + Pallas bi-LSTM head."""
    # TODO(synk): pretrained RoBERTa-large replaced by deterministic embedding lookup.
    feats = params["emb"][input_ids] * attention_mask[..., None].astype(jnp.float32)
    B, S, _ = feats.shape

    # Pad batch to a full sublane group (>= 8 rows).
    Bp = max(8, -(-B // 8) * 8)
    x_tm = jnp.transpose(feats, (1, 0, 2))                        # time-major (S, B, 768)
    if Bp != B:
        x_tm = jnp.pad(x_tm, ((0, 0), (0, Bp - B), (0, 0)))
    x_tm = x_tm.astype(jnp.bfloat16)

    # Time-chunk size: largest divisor of S not exceeding chunk_steps (no time padding —
    # padded steps would change the LSTM's final hidden state).
    T = min(chunk_steps, S)
    while S % T:
        T -= 1
    C = S // T

    H = HIDDEN

    def full2(shape):
        # All weight/bias operands are 2-D and loaded whole every grid step.
        return pl.BlockSpec(shape, lambda i: (0, 0))

    grid_spec = pltpu.PrefetchScalarGridSpec(
        num_scalar_prefetch=0,
        grid=(C,),
        in_specs=[
            pl.BlockSpec((T, Bp, IN_DIM), lambda i: (i, 0, 0)),           # x, forward chunks
            pl.BlockSpec((T, Bp, IN_DIM), lambda i: (C - 1 - i, 0, 0)),   # x, reversed chunks
            full2((IN_DIM, 4 * H)), full2((H, 4 * H)), full2((1, 4 * H)),  # forward weights
            full2((IN_DIM, 4 * H)), full2((H, 4 * H)), full2((1, 4 * H)),  # backward weights
            full2((H, NUM_CLASSES)), full2((H, NUM_CLASSES)), full2((1, NUM_CLASSES)),
        ],
        out_specs=pl.BlockSpec((Bp, NUM_CLASSES), lambda i: (0, 0)),
        scratch_shapes=[
            pltpu.VMEM((T * Bp, 4 * H), jnp.float32),   # pre-projected gates, fwd chunk
            pltpu.VMEM((T * Bp, 4 * H), jnp.float32),   # pre-projected gates, bwd chunk
            pltpu.VMEM((Bp, H), jnp.float32),           # h_fwd carry
            pltpu.VMEM((Bp, H), jnp.float32),           # c_fwd carry
            pltpu.VMEM((Bp, H), jnp.float32),           # h_bwd carry
            pltpu.VMEM((Bp, H), jnp.float32),           # c_bwd carry
        ],
    )

    def bf16(a):
        return a.astype(jnp.bfloat16)

    out = pl.pallas_call(
        bilstm_head_kernel,
        out_shape=jax.ShapeDtypeStruct((Bp, NUM_CLASSES), jnp.float32),
        grid_spec=grid_spec,
        compiler_params=pltpu.CompilerParams(
            dimension_semantics=("arbitrary",),   # sequential recurrence over time chunks
            vmem_limit_bytes=48 << 20,            # fits v7x's 64 MiB physical VMEM
        ),
    )(x_tm, x_tm,
      bf16(params["wih_f"]), bf16(params["whh_f"]), params["b_f"],
      bf16(params["wih_b"]), bf16(params["whh_b"]), params["b_b"],
      params["wlin_f"], params["wlin_b"], params["blin"])

    return out[:B]


def init_params(key, vocab=100):
    ks = jax.random.split(key, 12)
    stdv = 1.0 / np.sqrt(HIDDEN)

    def u(k, shape, s):
        return jax.random.uniform(k, shape, jnp.float32, -s, s)

    params = {
        "emb": 0.02 * jax.random.normal(ks[0], (vocab, IN_DIM), jnp.float32),
        # LSTM weights, pre-transposed for the kernel; b = b_ih + b_hh combined.
        "wih_f": u(ks[1], (IN_DIM, 4 * HIDDEN), stdv),
        "whh_f": u(ks[2], (HIDDEN, 4 * HIDDEN), stdv),
        "b_f": u(ks[3], (1, 4 * HIDDEN), stdv) + u(ks[4], (1, 4 * HIDDEN), stdv),
        "wih_b": u(ks[5], (IN_DIM, 4 * HIDDEN), stdv),
        "whh_b": u(ks[6], (HIDDEN, 4 * HIDDEN), stdv),
        "b_b": u(ks[7], (1, 4 * HIDDEN), stdv) + u(ks[8], (1, 4 * HIDDEN), stdv),
        # Linear(512 -> 30), split into fwd/bwd halves of the input dim.
        "wlin_f": u(ks[9], (HIDDEN, NUM_CLASSES), 1.0 / np.sqrt(2 * HIDDEN)),
        "wlin_b": u(ks[10], (HIDDEN, NUM_CLASSES), 1.0 / np.sqrt(2 * HIDDEN)),
        "blin": u(ks[11], (1, NUM_CLASSES), 1.0 / np.sqrt(2 * HIDDEN)),
    }
    return params


# ---------------- pure-JAX f32 reference (for correctness check) ----------------
def _lstm_dir_ref(x_sbd, wih_t, whh_t, bias):
    S, B, _ = x_sbd.shape
    H = HIDDEN

    def step(carry, xt):
        h, c = carry
        gates = xt @ wih_t + h @ whh_t + bias[0]
        i = jax.nn.sigmoid(gates[:, :H])
        f = jax.nn.sigmoid(gates[:, H:2 * H])
        g = jnp.tanh(gates[:, 2 * H:3 * H])
        o = jax.nn.sigmoid(gates[:, 3 * H:])
        c = f * c + i * g
        h = o * jnp.tanh(c)
        return (h, c), None

    init = (jnp.zeros((B, H), jnp.float32), jnp.zeros((B, H), jnp.float32))
    (h, _), _ = jax.lax.scan(step, init, x_sbd)
    return h


def reference_forward(input_ids, attention_mask, params):
    feats = params["emb"][input_ids] * attention_mask[..., None].astype(jnp.float32)
    x_tm = jnp.transpose(feats, (1, 0, 2))
    h_fwd = _lstm_dir_ref(x_tm, params["wih_f"], params["whh_f"], params["b_f"])
    h_bwd = _lstm_dir_ref(x_tm[::-1], params["wih_b"], params["whh_b"], params["b_b"])
    return h_fwd @ params["wlin_f"] + h_bwd @ params["wlin_b"] + params["blin"]


if __name__ == "__main__":
    key = jax.random.PRNGKey(0)
    k_ids, k_params = jax.random.split(key)

    B, S, VOCAB = 2, 8, 100
    input_ids = jax.random.randint(k_ids, (B, S), 0, VOCAB, dtype=jnp.int32)
    attention_mask = jnp.ones((B, S), dtype=jnp.int32)
    params = init_params(k_params, vocab=VOCAB)

    # chunk_steps=4 -> 2 time chunks: exercises the streaming / chunked-grid path.
    fwd = jax.jit(lambda ids, m, p: roberta_add_lstm_forward(ids, m, p, chunk_steps=4))
    out = jax.block_until_ready(fwd(input_ids, attention_mask, params))

    ref = jax.block_until_ready(reference_forward(input_ids, attention_mask, params))
    assert out.shape == (B, NUM_CLASSES)
    # bf16 inputs/weights in the kernel vs f32 reference -> small numeric drift allowed.
    np.testing.assert_allclose(np.asarray(out), np.asarray(ref), atol=5e-3, rtol=5e-3)

    print("KERNEL_OK")
</pallas_src>

<mosaic_0001>
module attributes {stable_mosaic.version = 11 : i64} {
  func.func @bilstm_head_kernel(%arg0: i32, %arg1: memref<4x8x768xbf16, #tpu.memory_space<vmem>>, %arg2: memref<4x8x768xbf16, #tpu.memory_space<vmem>>, %arg3: memref<768x1024xbf16, #tpu.memory_space<vmem>>, %arg4: memref<256x1024xbf16, #tpu.memory_space<vmem>>, %arg5: memref<1x1024xf32, #tpu.memory_space<vmem>>, %arg6: memref<768x1024xbf16, #tpu.memory_space<vmem>>, %arg7: memref<256x1024xbf16, #tpu.memory_space<vmem>>, %arg8: memref<1x1024xf32, #tpu.memory_space<vmem>>, %arg9: memref<256x30xf32, #tpu.memory_space<vmem>>, %arg10: memref<256x30xf32, #tpu.memory_space<vmem>>, %arg11: memref<1x30xf32, #tpu.memory_space<vmem>>, %arg12: memref<8x30xf32, #tpu.memory_space<vmem>>, %arg13: memref<32x1024xf32, #tpu.memory_space<vmem>>, %arg14: memref<32x1024xf32, #tpu.memory_space<vmem>>, %arg15: memref<8x256xf32, #tpu.memory_space<vmem>>, %arg16: memref<8x256xf32, #tpu.memory_space<vmem>>, %arg17: memref<8x256xf32, #tpu.memory_space<vmem>>, %arg18: memref<8x256xf32, #tpu.memory_space<vmem>>) attributes {dimension_semantics = [#tpu.dimension_semantics<arbitrary>], iteration_bounds = array<i64: 2>, scalar_prefetch = 0 : i64, scratch_operands = 6 : i64, tpu.core_type = #tpu.core_type<tc>, window_params = [{transform_indices = @transform_0, window_bounds = array<i64: 4, 8, 768>}, {transform_indices = @transform_1, window_bounds = array<i64: 4, 8, 768>}, {pipeline_mode = #tpu.pipeline_mode<synchronous>, transform_indices = @transform_2, window_bounds = array<i64: 768, 1024>}, {pipeline_mode = #tpu.pipeline_mode<synchronous>, transform_indices = @transform_3, window_bounds = array<i64: 256, 1024>}, {pipeline_mode = #tpu.pipeline_mode<synchronous>, transform_indices = @transform_4, window_bounds = array<i64: 1, 1024>}, {pipeline_mode = #tpu.pipeline_mode<synchronous>, transform_indices = @transform_5, window_bounds = array<i64: 768, 1024>}, {pipeline_mode = #tpu.pipeline_mode<synchronous>, transform_indices = @transform_6, window_bounds = array<i64: 256, 1024>}, {pipeline_mode = #tpu.pipeline_mode<synchronous>, transform_indices = @transform_7, window_bounds = array<i64: 1, 1024>}, {pipeline_mode = #tpu.pipeline_mode<synchronous>, transform_indices = @transform_8, window_bounds = array<i64: 256, 30>}, {pipeline_mode = #tpu.pipeline_mode<synchronous>, transform_indices = @transform_9, window_bounds = array<i64: 256, 30>}, {pipeline_mode = #tpu.pipeline_mode<synchronous>, transform_indices = @transform_10, window_bounds = array<i64: 1, 30>}, {pipeline_mode = #tpu.pipeline_mode<synchronous>, transform_indices = @transform_11, window_bounds = array<i64: 8, 30>}]} {
    %c0_i32 = arith.constant 0 : i32
    %0 = arith.cmpi eq, %arg0, %c0_i32 : i32
    %1 = arith.extui %0 : i1 to i32
    %c0_i32_0 = arith.constant 0 : i32
    %2 = arith.cmpi ne, %1, %c0_i32_0 : i32
    scf.if %2 {
      %cst_93 = arith.constant 0.000000e+00 : f32
      %292 = vector.broadcast %cst_93 : f32 to vector<8x256xf32>
      %c0_94 = arith.constant 0 : index
      %c0_95 = arith.constant 0 : index
      %293 = vector.load %arg15[%c0_94, %c0_95] : memref<8x256xf32, #tpu.memory_space<vmem>>, vector<8x256xf32>
      tpu.vector_store %arg15[%c0_94, %c0_95], %292 {strides = array<i32>} : memref<8x256xf32, #tpu.memory_space<vmem>>, vector<8x256xf32>,
      %cst_96 = arith.constant 0.000000e+00 : f32
      %294 = vector.broadcast %cst_96 : f32 to vector<8x256xf32>
      %c0_97 = arith.constant 0 : index
      %c0_98 = arith.constant 0 : index
      %295 = vector.load %arg16[%c0_97, %c0_98] : memref<8x256xf32, #tpu.memory_space<vmem>>, vector<8x256xf32>
      tpu.vector_store %arg16[%c0_97, %c0_98], %294 {strides = array<i32>} : memref<8x256xf32, #tpu.memory_space<vmem>>, vector<8x256xf32>,
      %cst_99 = arith.constant 0.000000e+00 : f32
      %296 = vector.broadcast %cst_99 : f32 to vector<8x256xf32>
      %c0_100 = arith.constant 0 : index
      %c0_101 = arith.constant 0 : index
      %297 = vector.load %arg17[%c0_100, %c0_101] : memref<8x256xf32, #tpu.memory_space<vmem>>, vector<8x256xf32>
      tpu.vector_store %arg17[%c0_100, %c0_101], %296 {strides = array<i32>} : memref<8x256xf32, #tpu.memory_space<vmem>>, vector<8x256xf32>,
      %cst_102 = arith.constant 0.000000e+00 : f32
      %298 = vector.broadcast %cst_102 : f32 to vector<8x256xf32>
      %c0_103 = arith.constant 0 : index
      %c0_104 = arith.constant 0 : index
      %299 = vector.load %arg18[%c0_103, %c0_104] : memref<8x256xf32, #tpu.memory_space<vmem>>, vector<8x256xf32>
      tpu.vector_store %arg18[%c0_103, %c0_104], %298 {strides = array<i32>} : memref<8x256xf32, #tpu.memory_space<vmem>>, vector<8x256xf32>,
    } else {
    }
    %c0 = arith.constant 0 : index
    %c0_1 = arith.constant 0 : index
    %c0_2 = arith.constant 0 : index
    %3 = vector.load %arg1[%c0, %c0_1, %c0_2] : memref<4x8x768xbf16, #tpu.memory_space<vmem>>, vector<4x8x768xbf16>
    %4 = vector.shape_cast %3 : vector<4x8x768xbf16> to vector<32x768xbf16>
    %c0_3 = arith.constant 0 : index
    %c0_4 = arith.constant 0 : index
    %c0_5 = arith.constant 0 : index
    %5 = vector.load %arg2[%c0_3, %c0_4, %c0_5] : memref<4x8x768xbf16, #tpu.memory_space<vmem>>, vector<4x8x768xbf16>
    %6 = vector.shape_cast %5 : vector<4x8x768xbf16> to vector<32x768xbf16>
    %c0_6 = arith.constant 0 : index
    %c0_7 = arith.constant 0 : index
    %7 = vector.load %arg3[%c0_6, %c0_7] : memref<768x1024xbf16, #tpu.memory_space<vmem>>, vector<768x1024xbf16>
    %cst = arith.constant dense<0.000000e+00> : vector<32x1024xf32>
    %8 = tpu.matmul %4, %7, %cst {dimension_numbers = #tpu.dot_dimension_numbers<[1], [0], [0], [1], [0, 0, 1, 1], [], []>} : vector<32x768xbf16>, vector<768x1024xbf16>, vector<32x1024xf32> -> vector<32x1024xf32>
    %c0_8 = arith.constant 0 : index
    %c0_9 = arith.constant 0 : index
    %9 = vector.load %arg5[%c0_8, %c0_9] : memref<1x1024xf32, #tpu.memory_space<vmem>>, vector<1x1024xf32>
    %10 = vector.broadcast %9 : vector<1x1024xf32> to vector<32x1024xf32>
    %11 = arith.addf %8, %10 : vector<32x1024xf32>
    %c0_10 = arith.constant 0 : index
    %c0_11 = arith.constant 0 : index
    %12 = vector.load %arg13[%c0_10, %c0_11] : memref<32x1024xf32, #tpu.memory_space<vmem>>, vector<32x1024xf32>
    tpu.vector_store %arg13[%c0_10, %c0_11], %11 {strides = array<i32>} : memref<32x1024xf32, #tpu.memory_space<vmem>>, vector<32x1024xf32>,
    %c0_12 = arith.constant 0 : index
    %c0_13 = arith.constant 0 : index
    %13 = vector.load %arg6[%c0_12, %c0_13] : memref<768x1024xbf16, #tpu.memory_space<vmem>>, vector<768x1024xbf16>
    %cst_14 = arith.constant dense<0.000000e+00> : vector<32x1024xf32>
    %14 = tpu.matmul %6, %13, %cst_14 {dimension_numbers = #tpu.dot_dimension_numbers<[1], [0], [0], [1], [0, 0, 1, 1], [], []>} : vector<32x768xbf16>, vector<768x1024xbf16>, vector<32x1024xf32> -> vector<32x1024xf32>
    %c0_15 = arith.constant 0 : index
    %c0_16 = arith.constant 0 : index
    %15 = vector.load %arg8[%c0_15, %c0_16] : memref<1x1024xf32, #tpu.memory_space<vmem>>, vector<1x1024xf32>
    %16 = vector.broadcast %15 : vector<1x1024xf32> to vector<32x1024xf32>
    %17 = arith.addf %14, %16 : vector<32x1024xf32>
    %c0_17 = arith.constant 0 : index
    %c0_18 = arith.constant 0 : index
    %18 = vector.load %arg14[%c0_17, %c0_18] : memref<32x1024xf32, #tpu.memory_space<vmem>>, vector<32x1024xf32>
    tpu.vector_store %arg14[%c0_17, %c0_18], %17 {strides = array<i32>} : memref<32x1024xf32, #tpu.memory_space<vmem>>, vector<32x1024xf32>,
    %c0_19 = arith.constant 0 : index
    %c0_20 = arith.constant 0 : index
    %19 = vector.load %arg4[%c0_19, %c0_20] : memref<256x1024xbf16, #tpu.memory_space<vmem>>, vector<256x1024xbf16>
    %c0_21 = arith.constant 0 : index
    %c0_22 = arith.constant 0 : index
    %20 = vector.load %arg7[%c0_21, %c0_22] : memref<256x1024xbf16, #tpu.memory_space<vmem>>, vector<256x1024xbf16>
    %c0_23 = arith.constant 0 : index
    %c0_24 = arith.constant 0 : index
    %21 = vector.load %arg15[%c0_23, %c0_24] : memref<8x256xf32, #tpu.memory_space<vmem>>, vector<8x256xf32>
    %c0_25 = arith.constant 0 : index
    %c0_26 = arith.constant 0 : index
    %22 = vector.load %arg16[%c0_25, %c0_26] : memref<8x256xf32, #tpu.memory_space<vmem>>, vector<8x256xf32>
    %c0_27 = arith.constant 0 : index
    %c0_28 = arith.constant 0 : index
    %23 = vector.load %arg17[%c0_27, %c0_28] : memref<8x256xf32, #tpu.memory_space<vmem>>, vector<8x256xf32>
    %c0_29 = arith.constant 0 : index
    %c0_30 = arith.constant 0 : index
    %24 = vector.load %arg18[%c0_29, %c0_30] : memref<8x256xf32, #tpu.memory_space<vmem>>, vector<8x256xf32>
    %c0_i32_31 = arith.constant 0 : i32
    %c8_i32 = arith.constant 8 : i32
    %25 = arith.muli %c0_i32_31, %c8_i32 : i32
    %26 = tpu.assume_multiple %25, 8 : i32
    %c3_i32 = arith.constant 3 : i32
    %27 = arith.subi %c3_i32, %c0_i32_31 : i32
    %c8_i32_32 = arith.constant 8 : i32
    %28 = arith.muli %27, %c8_i32_32 : i32
    %29 = tpu.assume_multiple %28, 8 : i32
    %30 = arith.index_cast %26 : i32 to index
    %c0_33 = arith.constant 0 : index
    %31 = vector.load %arg13[%30, %c0_33] : memref<32x1024xf32, #tpu.memory_space<vmem>>, vector<8x1024xf32>
    %32 = arith.index_cast %29 : i32 to index
    %c0_34 = arith.constant 0 : index
    %33 = vector.load %arg14[%32, %c0_34] : memref<32x1024xf32, #tpu.memory_space<vmem>>, vector<8x1024xf32>
    %34 = arith.truncf %21 : vector<8x256xf32> to vector<8x256xbf16>
    %cst_35 = arith.constant dense<0.000000e+00> : vector<8x1024xf32>
    %35 = tpu.matmul %34, %19, %cst_35 {dimension_numbers = #tpu.dot_dimension_numbers<[1], [0], [0], [1], [0, 0, 1, 1], [], []>} : vector<8x256xbf16>, vector<256x1024xbf16>, vector<8x1024xf32> -> vector<8x1024xf32>
    %36 = arith.addf %31, %35 : vector<8x1024xf32>
    %37 = vector.extract_strided_slice %36 {offsets = [0, 0], sizes = [8, 256], strides = [1, 1]} : vector<8x1024xf32> to vector<8x256xf32>
    %38 = arith.negf %37 : vector<8x256xf32>
    %39 = math.exp %38 : vector<8x256xf32>
    %cst_36 = arith.constant 1.000000e+00 : f32
    %40 = vector.broadcast %cst_36 : f32 to vector<8x256xf32>
    %41 = arith.addf %40, %39 : vector<8x256xf32>
    %42 = arith.divf %40, %41 : vector<8x256xf32>
    %43 = vector.extract_strided_slice %36 {offsets = [0, 256], sizes = [8, 256], strides = [1, 1]} : vector<8x1024xf32> to vector<8x256xf32>
    %44 = arith.negf %43 : vector<8x256xf32>
    %45 = math.exp %44 : vector<8x256xf32>
    %cst_37 = arith.constant 1.000000e+00 : f32
    %46 = vector.broadcast %cst_37 : f32 to vector<8x256xf32>
    %47 = arith.addf %46, %45 : vector<8x256xf32>
    %48 = arith.divf %46, %47 : vector<8x256xf32>
    %49 = vector.extract_strided_slice %36 {offsets = [0, 512], sizes = [8, 256], strides = [1, 1]} : vector<8x1024xf32> to vector<8x256xf32>
    %50 = math.tanh %49 : vector<8x256xf32>
    %51 = vector.extract_strided_slice %36 {offsets = [0, 768], sizes = [8, 256], strides = [1, 1]} : vector<8x1024xf32> to vector<8x256xf32>
    %52 = arith.negf %51 : vector<8x256xf32>
    %53 = math.exp %52 : vector<8x256xf32>
    %cst_38 = arith.constant 1.000000e+00 : f32
    %54 = vector.broadcast %cst_38 : f32 to vector<8x256xf32>
    %55 = arith.addf %54, %53 : vector<8x256xf32>
    %56 = arith.divf %54, %55 : vector<8x256xf32>
    %57 = arith.mulf %48, %22 : vector<8x256xf32>
    %58 = arith.mulf %42, %50 : vector<8x256xf32>
    %59 = arith.addf %57, %58 : vector<8x256xf32>
    %60 = math.tanh %59 : vector<8x256xf32>
    %61 = arith.mulf %56, %60 : vector<8x256xf32>
    %62 = arith.truncf %23 : vector<8x256xf32> to vector<8x256xbf16>
    %cst_39 = arith.constant dense<0.000000e+00> : vector<8x1024xf32>
    %63 = tpu.matmul %62, %20, %cst_39 {dimension_numbers = #tpu.dot_dimension_numbers<[1], [0], [0], [1], [0, 0, 1, 1], [], []>} : vector<8x256xbf16>, vector<256x1024xbf16>, vector<8x1024xf32> -> vector<8x1024xf32>
    %64 = arith.addf %33, %63 : vector<8x1024xf32>
    %65 = vector.extract_strided_slice %64 {offsets = [0, 0], sizes = [8, 256], strides = [1, 1]} : vector<8x1024xf32> to vector<8x256xf32>
    %66 = arith.negf %65 : vector<8x256xf32>
    %67 = math.exp %66 : vector<8x256xf32>
    %cst_40 = arith.constant 1.000000e+00 : f32
    %68 = vector.broadcast %cst_40 : f32 to vector<8x256xf32>
    %69 = arith.addf %68, %67 : vector<8x256xf32>
    %70 = arith.divf %68, %69 : vector<8x256xf32>
    %71 = vector.extract_strided_slice %64 {offsets = [0, 256], sizes = [8, 256], strides = [1, 1]} : vector<8x1024xf32> to vector<8x256xf32>
    %72 = arith.negf %71 : vector<8x256xf32>
    %73 = math.exp %72 : vector<8x256xf32>
    %cst_41 = arith.constant 1.000000e+00 : f32
    %74 = vector.broadcast %cst_41 : f32 to vector<8x256xf32>
    %75 = arith.addf %74, %73 : vector<8x256xf32>
    %76 = arith.divf %74, %75 : vector<8x256xf32>
    %77 = vector.extract_strided_slice %64 {offsets = [0, 512], sizes = [8, 256], strides = [1, 1]} : vector<8x1024xf32> to vector<8x256xf32>
    %78 = math.tanh %77 : vector<8x256xf32>
    %79 = vector.extract_strided_slice %64 {offsets = [0, 768], sizes = [8, 256], strides = [1, 1]} : vector<8x1024xf32> to vector<8x256xf32>
    %80 = arith.negf %79 : vector<8x256xf32>
    %81 = math.exp %80 : vector<8x256xf32>
    %cst_42 = arith.constant 1.000000e+00 : f32
    %82 = vector.broadcast %cst_42 : f32 to vector<8x256xf32>
    %83 = arith.addf %82, %81 : vector<8x256xf32>
    %84 = arith.divf %82, %83 : vector<8x256xf32>
    %85 = arith.mulf %76, %24 : vector<8x256xf32>
    %86 = arith.mulf %70, %78 : vector<8x256xf32>
    %87 = arith.addf %85, %86 : vector<8x256xf32>
    %88 = math.tanh %87 : vector<8x256xf32>
    %89 = arith.mulf %84, %88 : vector<8x256xf32>
    %c1_i32 = arith.constant 1 : i32
    %c8_i32_43 = arith.constant 8 : i32
    %90 = arith.muli %c1_i32, %c8_i32_43 : i32
    %91 = tpu.assume_multiple %90, 8 : i32
    %c3_i32_44 = arith.constant 3 : i32
    %92 = arith.subi %c3_i32_44, %c1_i32 : i32
    %c8_i32_45 = arith.constant 8 : i32
    %93 = arith.muli %92, %c8_i32_45 : i32
    %94 = tpu.assume_multiple %93, 8 : i32
    %95 = arith.index_cast %91 : i32 to index
    %c0_46 = arith.constant 0 : index
    %96 = vector.load %arg13[%95, %c0_46] : memref<32x1024xf32, #tpu.memory_space<vmem>>, vector<8x1024xf32>
    %97 = arith.index_cast %94 : i32 to index
    %c0_47 = arith.constant 0 : index
    %98 = vector.load %arg14[%97, %c0_47] : memref<32x1024xf32, #tpu.memory_space<vmem>>, vector<8x1024xf32>
    %99 = arith.truncf %61 : vector<8x256xf32> to vector<8x256xbf16>
    %cst_48 = arith.constant dense<0.000000e+00> : vector<8x1024xf32>
    %100 = tpu.matmul %99, %19, %cst_48 {dimension_numbers = #tpu.dot_dimension_numbers<[1], [0], [0], [1], [0, 0, 1, 1], [], []>} : vector<8x256xbf16>, vector<256x1024xbf16>, vector<8x1024xf32> -> vector<8x1024xf32>
    %101 = arith.addf %96, %100 : vector<8x1024xf32>
    %102 = vector.extract_strided_slice %101 {offsets = [0, 0], sizes = [8, 256], strides = [1, 1]} : vector<8x1024xf32> to vector<8x256xf32>
    %103 = arith.negf %102 : vector<8x256xf32>
    %104 = math.exp %103 : vector<8x256xf32>
    %cst_49 = arith.constant 1.000000e+00 : f32
    %105 = vector.broadcast %cst_49 : f32 to vector<8x256xf32>
    %106 = arith.addf %105, %104 : vector<8x256xf32>
    %107 = arith.divf %105, %106 : vector<8x256xf32>
    %108 = vector.extract_strided_slice %101 {offsets = [0, 256], sizes = [8, 256], strides = [1, 1]} : vector<8x1024xf32> to vector<8x256xf32>
    %109 = arith.negf %108 : vector<8x256xf32>
    %110 = math.exp %109 : vector<8x256xf32>
    %cst_50 = arith.constant 1.000000e+00 : f32
    %111 = vector.broadcast %cst_50 : f32 to vector<8x256xf32>
    %112 = arith.addf %111, %110 : vector<8x256xf32>
    %113 = arith.divf %111, %112 : vector<8x256xf32>
    %114 = vector.extract_strided_slice %101 {offsets = [0, 512], sizes = [8, 256], strides = [1, 1]} : vector<8x1024xf32> to vector<8x256xf32>
    %115 = math.tanh %114 : vector<8x256xf32>
    %116 = vector.extract_strided_slice %101 {offsets = [0, 768], sizes = [8, 256], strides = [1, 1]} : vector<8x1024xf32> to vector<8x256xf32>
    %117 = arith.negf %116 : vector<8x256xf32>
    %118 = math.exp %117 : vector<8x256xf32>
    %cst_51 = arith.constant 1.000000e+00 : f32
    %119 = vector.broadcast %cst_51 : f32 to vector<8x256xf32>
    %120 = arith.addf %119, %118 : vector<8x256xf32>
    %121 = arith.divf %119, %120 : vector<8x256xf32>
    %122 = arith.mulf %113, %59 : vector<8x256xf32>
    %123 = arith.mulf %107, %115 : vector<8x256xf32>
    %124 = arith.addf %122, %123 : vector<8x256xf32>
    %125 = math.tanh %124 : vector<8x256xf32>
    %126 = arith.mulf %121, %125 : vector<8x256xf32>
    %127 = arith.truncf %89 : vector<8x256xf32> to vector<8x256xbf16>
    %cst_52 = arith.constant dense<0.000000e+00> : vector<8x1024xf32>
    %128 = tpu.matmul %127, %20, %cst_52 {dimension_numbers = #tpu.dot_dimension_numbers<[1], [0], [0], [1], [0, 0, 1, 1], [], []>} : vector<8x256xbf16>, vector<256x1024xbf16>, vector<8x1024xf32> -> vector<8x1024xf32>
    %129 = arith.addf %98, %128 : vector<8x1024xf32>
    %130 = vector.extract_strided_slice %129 {offsets = [0, 0], sizes = [8, 256], strides = [1, 1]} : vector<8x1024xf32> to vector<8x256xf32>
    %131 = arith.negf %130 : vector<8x256xf32>
    %132 = math.exp %131 : vector<8x256xf32>
    %cst_53 = arith.constant 1.000000e+00 : f32
    %133 = vector.broadcast %cst_53 : f32 to vector<8x256xf32>
    %134 = arith.addf %133, %132 : vector<8x256xf32>
    %135 = arith.divf %133, %134 : vector<8x256xf32>
    %136 = vector.extract_strided_slice %129 {offsets = [0, 256], sizes = [8, 256], strides = [1, 1]} : vector<8x1024xf32> to vector<8x256xf32>
    %137 = arith.negf %136 : vector<8x256xf32>
    %138 = math.exp %137 : vector<8x256xf32>
    %cst_54 = arith.constant 1.000000e+00 : f32
    %139 = vector.broadcast %cst_54 : f32 to vector<8x256xf32>
    %140 = arith.addf %139, %138 : vector<8x256xf32>
    %141 = arith.divf %139, %140 : vector<8x256xf32>
    %142 = vector.extract_strided_slice %129 {offsets = [0, 512], sizes = [8, 256], strides = [1, 1]} : vector<8x1024xf32> to vector<8x256xf32>
    %143 = math.tanh %142 : vector<8x256xf32>
    %144 = vector.extract_strided_slice %129 {offsets = [0, 768], sizes = [8, 256], strides = [1, 1]} : vector<8x1024xf32> to vector<8x256xf32>
    %145 = arith.negf %144 : vector<8x256xf32>
    %146 = math.exp %145 : vector<8x256xf32>
    %cst_55 = arith.constant 1.000000e+00 : f32
    %147 = vector.broadcast %cst_55 : f32 to vector<8x256xf32>
    %148 = arith.addf %147, %146 : vector<8x256xf32>
    %149 = arith.divf %147, %148 : vector<8x256xf32>
    %150 = arith.mulf %141, %87 : vector<8x256xf32>
    %151 = arith.mulf %135, %143 : vector<8x256xf32>
    %152 = arith.addf %150, %151 : vector<8x256xf32>
    %153 = math.tanh %152 : vector<8x256xf32>
    %154 = arith.mulf %149, %153 : vector<8x256xf32>
    %c2_i32 = arith.constant 2 : i32
    %c8_i32_56 = arith.constant 8 : i32
    %155 = arith.muli %c2_i32, %c8_i32_56 : i32
    %156 = tpu.assume_multiple %155, 8 : i32
    %c3_i32_57 = arith.constant 3 : i32
    %157 = arith.subi %c3_i32_57, %c2_i32 : i32
    %c8_i32_58 = arith.constant 8 : i32
    %158 = arith.muli %157, %c8_i32_58 : i32
    %159 = tpu.assume_multiple %158, 8 : i32
    %160 = arith.index_cast %156 : i32 to index
    %c0_59 = arith.constant 0 : index
    %161 = vector.load %arg13[%160, %c0_59] : memref<32x1024xf32, #tpu.memory_space<vmem>>, vector<8x1024xf32>
    %162 = arith.index_cast %159 : i32 to index
    %c0_60 = arith.constant 0 : index
    %163 = vector.load %arg14[%162, %c0_60] : memref<32x1024xf32, #tpu.memory_space<vmem>>, vector<8x1024xf32>
    %164 = arith.truncf %126 : vector<8x256xf32> to vector<8x256xbf16>
    %cst_61 = arith.constant dense<0.000000e+00> : vector<8x1024xf32>
    %165 = tpu.matmul %164, %19, %cst_61 {dimension_numbers = #tpu.dot_dimension_numbers<[1], [0], [0], [1], [0, 0, 1, 1], [], []>} : vector<8x256xbf16>, vector<256x1024xbf16>, vector<8x1024xf32> -> vector<8x1024xf32>
    %166 = arith.addf %161, %165 : vector<8x1024xf32>
    %167 = vector.extract_strided_slice %166 {offsets = [0, 0], sizes = [8, 256], strides = [1, 1]} : vector<8x1024xf32> to vector<8x256xf32>
    %168 = arith.negf %167 : vector<8x256xf32>
    %169 = math.exp %168 : vector<8x256xf32>
    %cst_62 = arith.constant 1.000000e+00 : f32
    %170 = vector.broadcast %cst_62 : f32 to vector<8x256xf32>
    %171 = arith.addf %170, %169 : vector<8x256xf32>
    %172 = arith.divf %170, %171 : vector<8x256xf32>
    %173 = vector.extract_strided_slice %166 {offsets = [0, 256], sizes = [8, 256], strides = [1, 1]} : vector<8x1024xf32> to vector<8x256xf32>
    %174 = arith.negf %173 : vector<8x256xf32>
    %175 = math.exp %174 : vector<8x256xf32>
    %cst_63 = arith.constant 1.000000e+00 : f32
    %176 = vector.broadcast %cst_63 : f32 to vector<8x256xf32>
    %177 = arith.addf %176, %175 : vector<8x256xf32>
    %178 = arith.divf %176, %177 : vector<8x256xf32>
    %179 = vector.extract_strided_slice %166 {offsets = [0, 512], sizes = [8, 256], strides = [1, 1]} : vector<8x1024xf32> to vector<8x256xf32>
    %180 = math.tanh %179 : vector<8x256xf32>
    %181 = vector.extract_strided_slice %166 {offsets = [0, 768], sizes = [8, 256], strides = [1, 1]} : vector<8x1024xf32> to vector<8x256xf32>
    %182 = arith.negf %181 : vector<8x256xf32>
    %183 = math.exp %182 : vector<8x256xf32>
    %cst_64 = arith.constant 1.000000e+00 : f32
    %184 = vector.broadcast %cst_64 : f32 to vector<8x256xf32>
    %185 = arith.addf %184, %183 : vector<8x256xf32>
    %186 = arith.divf %184, %185 : vector<8x256xf32>
    %187 = arith.mulf %178, %124 : vector<8x256xf32>
    %188 = arith.mulf %172, %180 : vector<8x256xf32>
    %189 = arith.addf %187, %188 : vector<8x256xf32>
    %190 = math.tanh %189 : vector<8x256xf32>
    %191 = arith.mulf %186, %190 : vector<8x256xf32>
    %192 = arith.truncf %154 : vector<8x256xf32> to vector<8x256xbf16>
    %cst_65 = arith.constant dense<0.000000e+00> : vector<8x1024xf32>
    %193 = tpu.matmul %192, %20, %cst_65 {dimension_numbers = #tpu.dot_dimension_numbers<[1], [0], [0], [1], [0, 0, 1, 1], [], []>} : vector<8x256xbf16>, vector<256x1024xbf16>, vector<8x1024xf32> -> vector<8x1024xf32>
    %194 = arith.addf %163, %193 : vector<8x1024xf32>
    %195 = vector.extract_strided_slice %194 {offsets = [0, 0], sizes = [8, 256], strides = [1, 1]} : vector<8x1024xf32> to vector<8x256xf32>
    %196 = arith.negf %195 : vector<8x256xf32>
    %197 = math.exp %196 : vector<8x256xf32>
    %cst_66 = arith.constant 1.000000e+00 : f32
    %198 = vector.broadcast %cst_66 : f32 to vector<8x256xf32>
    %199 = arith.addf %198, %197 : vector<8x256xf32>
    %200 = arith.divf %198, %199 : vector<8x256xf32>
    %201 = vector.extract_strided_slice %194 {offsets = [0, 256], sizes = [8, 256], strides = [1, 1]} : vector<8x1024xf32> to vector<8x256xf32>
    %202 = arith.negf %201 : vector<8x256xf32>
    %203 = math.exp %202 : vector<8x256xf32>
    %cst_67 = arith.constant 1.000000e+00 : f32
    %204 = vector.broadcast %cst_67 : f32 to vector<8x256xf32>
    %205 = arith.addf %204, %203 : vector<8x256xf32>
    %206 = arith.divf %204, %205 : vector<8x256xf32>
    %207 = vector.extract_strided_slice %194 {offsets = [0, 512], sizes = [8, 256], strides = [1, 1]} : vector<8x1024xf32> to vector<8x256xf32>
    %208 = math.tanh %207 : vector<8x256xf32>
    %209 = vector.extract_strided_slice %194 {offsets = [0, 768], sizes = [8, 256], strides = [1, 1]} : vector<8x1024xf32> to vector<8x256xf32>
    %210 = arith.negf %209 : vector<8x256xf32>
    %211 = math.exp %210 : vector<8x256xf32>
    %cst_68 = arith.constant 1.000000e+00 : f32
    %212 = vector.broadcast %cst_68 : f32 to vector<8x256xf32>
    %213 = arith.addf %212, %211 : vector<8x256xf32>
    %214 = arith.divf %212, %213 : vector<8x256xf32>
    %215 = arith.mulf %206, %152 : vector<8x256xf32>
    %216 = arith.mulf %200, %208 : vector<8x256xf32>
    %217 = arith.addf %215, %216 : vector<8x256xf32>
    %218 = math.tanh %217 : vector<8x256xf32>
    %219 = arith.mulf %214, %218 : vector<8x256xf32>
    %c3_i32_69 = arith.constant 3 : i32
    %c8_i32_70 = arith.constant 8 : i32
    %220 = arith.muli %c3_i32_69, %c8_i32_70 : i32
    %221 = tpu.assume_multiple %220, 8 : i32
    %c3_i32_71 = arith.constant 3 : i32
    %222 = arith.subi %c3_i32_71, %c3_i32_69 : i32
    %c8_i32_72 = arith.constant 8 : i32
    %223 = arith.muli %222, %c8_i32_72 : i32
    %224 = tpu.assume_multiple %223, 8 : i32
    %225 = arith.index_cast %221 : i32 to index
    %c0_73 = arith.constant 0 : index
    %226 = vector.load %arg13[%225, %c0_73] : memref<32x1024xf32, #tpu.memory_space<vmem>>, vector<8x1024xf32>
    %227 = arith.index_cast %224 : i32 to index
    %c0_74 = arith.constant 0 : index
    %228 = vector.load %arg14[%227, %c0_74] : memref<32x1024xf32, #tpu.memory_space<vmem>>, vector<8x1024xf32>
    %229 = arith.truncf %191 : vector<8x256xf32> to vector<8x256xbf16>
    %cst_75 = arith.constant dense<0.000000e+00> : vector<8x1024xf32>
    %230 = tpu.matmul %229, %19, %cst_75 {dimension_numbers = #tpu.dot_dimension_numbers<[1], [0], [0], [1], [0, 0, 1, 1], [], []>} : vector<8x256xbf16>, vector<256x1024xbf16>, vector<8x1024xf32> -> vector<8x1024xf32>
    %231 = arith.addf %226, %230 : vector<8x1024xf32>
    %232 = vector.extract_strided_slice %231 {offsets = [0, 0], sizes = [8, 256], strides = [1, 1]} : vector<8x1024xf32> to vector<8x256xf32>
    %233 = arith.negf %232 : vector<8x256xf32>
    %234 = math.exp %233 : vector<8x256xf32>
    %cst_76 = arith.constant 1.000000e+00 : f32
    %235 = vector.broadcast %cst_76 : f32 to vector<8x256xf32>
    %236 = arith.addf %235, %234 : vector<8x256xf32>
    %237 = arith.divf %235, %236 : vector<8x256xf32>
    %238 = vector.extract_strided_slice %231 {offsets = [0, 256], sizes = [8, 256], strides = [1, 1]} : vector<8x1024xf32> to vector<8x256xf32>
    %239 = arith.negf %238 : vector<8x256xf32>
    %240 = math.exp %239 : vector<8x256xf32>
    %cst_77 = arith.constant 1.000000e+00 : f32
    %241 = vector.broadcast %cst_77 : f32 to vector<8x256xf32>
    %242 = arith.addf %241, %240 : vector<8x256xf32>
    %243 = arith.divf %241, %242 : vector<8x256xf32>
    %244 = vector.extract_strided_slice %231 {offsets = [0, 512], sizes = [8, 256], strides = [1, 1]} : vector<8x1024xf32> to vector<8x256xf32>
    %245 = math.tanh %244 : vector<8x256xf32>
    %246 = vector.extract_strided_slice %231 {offsets = [0, 768], sizes = [8, 256], strides = [1, 1]} : vector<8x1024xf32> to vector<8x256xf32>
    %247 = arith.negf %246 : vector<8x256xf32>
    %248 = math.exp %247 : vector<8x256xf32>
    %cst_78 = arith.constant 1.000000e+00 : f32
    %249 = vector.broadcast %cst_78 : f32 to vector<8x256xf32>
    %250 = arith.addf %249, %248 : vector<8x256xf32>
    %251 = arith.divf %249, %250 : vector<8x256xf32>
    %252 = arith.mulf %243, %189 : vector<8x256xf32>
    %253 = arith.mulf %237, %245 : vector<8x256xf32>
    %254 = arith.addf %252, %253 : vector<8x256xf32>
    %255 = math.tanh %254 : vector<8x256xf32>
    %256 = arith.mulf %251, %255 : vector<8x256xf32>
    %257 = arith.truncf %219 : vector<8x256xf32> to vector<8x256xbf16>
    %cst_79 = arith.constant dense<0.000000e+00> : vector<8x1024xf32>
    %258 = tpu.matmul %257, %20, %cst_79 {dimension_numbers = #tpu.dot_dimension_numbers<[1], [0], [0], [1], [0, 0, 1, 1], [], []>} : vector<8x256xbf16>, vector<256x1024xbf16>, vector<8x1024xf32> -> vector<8x1024xf32>
    %259 = arith.addf %228, %258 : vector<8x1024xf32>
    %260 = vector.extract_strided_slice %259 {offsets = [0, 0], sizes = [8, 256], strides = [1, 1]} : vector<8x1024xf32> to vector<8x256xf32>
    %261 = arith.negf %260 : vector<8x256xf32>
    %262 = math.exp %261 : vector<8x256xf32>
    %cst_80 = arith.constant 1.000000e+00 : f32
    %263 = vector.broadcast %cst_80 : f32 to vector<8x256xf32>
    %264 = arith.addf %263, %262 : vector<8x256xf32>
    %265 = arith.divf %263, %264 : vector<8x256xf32>
    %266 = vector.extract_strided_slice %259 {offsets = [0, 256], sizes = [8, 256], strides = [1, 1]} : vector<8x1024xf32> to vector<8x256xf32>
    %267 = arith.negf %266 : vector<8x256xf32>
    %268 = math.exp %267 : vector<8x256xf32>
    %cst_81 = arith.constant 1.000000e+00 : f32
    %269 = vector.broadcast %cst_81 : f32 to vector<8x256xf32>
    %270 = arith.addf %269, %268 : vector<8x256xf32>
    %271 = arith.divf %269, %270 : vector<8x256xf32>
    %272 = vector.extract_strided_slice %259 {offsets = [0, 512], sizes = [8, 256], strides = [1, 1]} : vector<8x1024xf32> to vector<8x256xf32>
    %273 = math.tanh %272 : vector<8x256xf32>
    %274 = vector.extract_strided_slice %259 {offsets = [0, 768], sizes = [8, 256], strides = [1, 1]} : vector<8x1024xf32> to vector<8x256xf32>
    %275 = arith.negf %274 : vector<8x256xf32>
    %276 = math.exp %275 : vector<8x256xf32>
    %cst_82 = arith.constant 1.000000e+00 : f32
    %277 = vector.broadcast %cst_82 : f32 to vector<8x256xf32>
    %278 = arith.addf %277, %276 : vector<8x256xf32>
    %279 = arith.divf %277, %278 : vector<8x256xf32>
    %280 = arith.mulf %271, %217 : vector<8x256xf32>
    %281 = arith.mulf %265, %273 : vector<8x256xf32>
    %282 = arith.addf %280, %281 : vector<8x256xf32>
    %283 = math.tanh %282 : vector<8x256xf32>
    %284 = arith.mulf %279, %283 : vector<8x256xf32>
    %c4_i32 = arith.constant 4 : i32
    %c0_83 = arith.constant 0 : index
    %c0_84 = arith.constant 0 : index
    %285 = vector.load %arg15[%c0_83, %c0_84] : memref<8x256xf32, #tpu.memory_space<vmem>>, vector<8x256xf32>
    tpu.vector_store %arg15[%c0_83, %c0_84], %256 {strides = array<i32>} : memref<8x256xf32, #tpu.memory_space<vmem>>, vector<8x256xf32>,
    %c0_85 = arith.constant 0 : index
    %c0_86 = arith.constant 0 : index
    %286 = vector.load %arg16[%c0_85, %c0_86] : memref<8x256xf32, #tpu.memory_space<vmem>>, vector<8x256xf32>
    tpu.vector_store %arg16[%c0_85, %c0_86], %254 {strides = array<i32>} : memref<8x256xf32, #tpu.memory_space<vmem>>, vector<8x256xf32>,
    %c0_87 = arith.constant 0 : index
    %c0_88 = arith.constant 0 : index
    %287 = vector.load %arg17[%c0_87, %c0_88] : memref<8x256xf32, #tpu.memory_space<vmem>>, vector<8x256xf32>
    tpu.vector_store %arg17[%c0_87, %c0_88], %284 {strides = array<i32>} : memref<8x256xf32, #tpu.memory_space<vmem>>, vector<8x256xf32>,
    %c0_89 = arith.constant 0 : index
    %c0_90 = arith.constant 0 : index
    %288 = vector.load %arg18[%c0_89, %c0_90] : memref<8x256xf32, #tpu.memory_space<vmem>>, vector<8x256xf32>
    tpu.vector_store %arg18[%c0_89, %c0_90], %282 {strides = array<i32>} : memref<8x256xf32, #tpu.memory_space<vmem>>, vector<8x256xf32>,
    %c1_i32_91 = arith.constant 1 : i32
    %289 = arith.cmpi eq, %arg0, %c1_i32_91 : i32
    %290 = arith.extui %289 : i1 to i32
    %c0_i32_92 = arith.constant 0 : i32
    %291 = arith.cmpi ne, %290, %c0_i32_92 : i32
    scf.if %291 {
      %c0_93 = arith.constant 0 : index
      %c0_94 = arith.constant 0 : index
      %292 = vector.load %arg9[%c0_93, %c0_94] : memref<256x30xf32, #tpu.memory_space<vmem>>, vector<256x30xf32>
      %cst_95 = arith.constant dense<0.000000e+00> : vector<8x30xf32>
      %293 = tpu.matmul %256, %292, %cst_95 {dimension_numbers = #tpu.dot_dimension_numbers<[1], [0], [0], [1], [0, 0, 1, 1], [], []>} : vector<8x256xf32>, vector<256x30xf32>, vector<8x30xf32> -> vector<8x30xf32>
      %c0_96 = arith.constant 0 : index
      %c0_97 = arith.constant 0 : index
      %294 = vector.load %arg10[%c0_96, %c0_97] : memref<256x30xf32, #tpu.memory_space<vmem>>, vector<256x30xf32>
      %cst_98 = arith.constant dense<0.000000e+00> : vector<8x30xf32>
      %295 = tpu.matmul %284, %294, %cst_98 {dimension_numbers = #tpu.dot_dimension_numbers<[1], [0], [0], [1], [0, 0, 1, 1], [], []>} : vector<8x256xf32>, vector<256x30xf32>, vector<8x30xf32> -> vector<8x30xf32>
      %296 = arith.addf %293, %295 : vector<8x30xf32>
      %c0_99 = arith.constant 0 : index
      %c0_100 = arith.constant 0 : index
      %297 = vector.load %arg11[%c0_99, %c0_100] : memref<1x30xf32, #tpu.memory_space<vmem>>, vector<1x30xf32>
      %298 = vector.broadcast %297 : vector<1x30xf32> to vector<8x30xf32>
      %299 = arith.addf %296, %298 : vector<8x30xf32>
      %c0_101 = arith.constant 0 : index
      %c0_102 = arith.constant 0 : index
      %300 = vector.load %arg12[%c0_101, %c0_102] : memref<8x30xf32, #tpu.memory_space<vmem>>, vector<8x30xf32>
      tpu.vector_store %arg12[%c0_101, %c0_102], %299 {strides = array<i32>} : memref<8x30xf32, #tpu.memory_space<vmem>>, vector<8x30xf32>,
    } else {
    }
    return
  }
  func.func @transform_0(%arg0: i32) -> (i32, i32, i32) {
    %c0_i32 = arith.constant 0 : i32
    %c0_i32_0 = arith.constant 0 : i32
    %c0_i32_1 = arith.constant 0 : i32
    return %arg0, %c0_i32, %c0_i32_0 : i32, i32, i32
  }
  func.func @transform_1(%arg0: i32) -> (i32, i32, i32) {
    %c1_i32 = arith.constant 1 : i32
    %0 = arith.subi %c1_i32, %arg0 : i32
    %c0_i32 = arith.constant 0 : i32
    %c0_i32_0 = arith.constant 0 : i32
    %c0_i32_1 = arith.constant 0 : i32
    return %0, %c0_i32, %c0_i32_0 : i32, i32, i32
  }
  func.func @transform_2(%arg0: i32) -> (i32, i32) {
    %c0_i32 = arith.constant 0 : i32
    %c0_i32_0 = arith.constant 0 : i32
    %c0_i32_1 = arith.constant 0 : i32
    return %c0_i32, %c0_i32_0 : i32, i32
  }
  func.func @transform_3(%arg0: i32) -> (i32, i32) {
    %c0_i32 = arith.constant 0 : i32
    %c0_i32_0 = arith.constant 0 : i32
    %c0_i32_1 = arith.constant 0 : i32
    return %c0_i32, %c0_i32_0 : i32, i32
  }
  func.func @transform_4(%arg0: i32) -> (i32, i32) {
    %c0_i32 = arith.constant 0 : i32
    %c0_i32_0 = arith.constant 0 : i32
    %c0_i32_1 = arith.constant 0 : i32
    return %c0_i32, %c0_i32_0 : i32, i32
  }
  func.func @transform_5(%arg0: i32) -> (i32, i32) {
    %c0_i32 = arith.constant 0 : i32
    %c0_i32_0 = arith.constant 0 : i32
    %c0_i32_1 = arith.constant 0 : i32
    return %c0_i32, %c0_i32_0 : i32, i32
  }
  func.func @transform_6(%arg0: i32) -> (i32, i32) {
    %c0_i32 = arith.constant 0 : i32
    %c0_i32_0 = arith.constant 0 : i32
    %c0_i32_1 = arith.constant 0 : i32
    return %c0_i32, %c0_i32_0 : i32, i32
  }
  func.func @transform_7(%arg0: i32) -> (i32, i32) {
    %c0_i32 = arith.constant 0 : i32
    %c0_i32_0 = arith.constant 0 : i32
    %c0_i32_1 = arith.constant 0 : i32
    return %c0_i32, %c0_i32_0 : i32, i32
  }
  func.func @transform_8(%arg0: i32) -> (i32, i32) {
    %c0_i32 = arith.constant 0 : i32
    %c0_i32_0 = arith.constant 0 : i32
    %c0_i32_1 = arith.constant 0 : i32
    return %c0_i32, %c0_i32_0 : i32, i32
  }
  func.func @transform_9(%arg0: i32) -> (i32, i32) {
    %c0_i32 = arith.constant 0 : i32
    %c0_i32_0 = arith.constant 0 : i32
    %c0_i32_1 = arith.constant 0 : i32
    return %c0_i32, %c0_i32_0 : i32, i32
  }
  func.func @transform_10(%arg0: i32) -> (i32, i32) {
    %c0_i32 = arith.constant 0 : i32
    %c0_i32_0 = arith.constant 0 : i32
    %c0_i32_1 = arith.constant 0 : i32
    return %c0_i32, %c0_i32_0 : i32, i32
  }
  func.func @transform_11(%arg0: i32) -> (i32, i32) {
    %c0_i32 = arith.constant 0 : i32
    %c0_i32_0 = arith.constant 0 : i32
    %c0_i32_1 = arith.constant 0 : i32
    return %c0_i32, %c0_i32_0 : i32, i32
  }
}

</mosaic_0001>

<llo_original>
// kernel: _lambda_.1
$region0: #{_lambda_.1}
  #allocation0 [shape = 'u32[]', space=smem, size = 0x4, offset = 0x4, fixed_abs, tag = 'smem constant byte address 0x4 - core index']
  #allocation1 [shape = 'u32[144,128]{1,0:T(1,128)}', space=vmem, size = 0x12000, scoped, tag = 'internal scratch']
  #allocation2 [shape = 'f32[32,1024]{1,0:T(8,128)}', space=vmem, size = 0x20000, scoped, tag = 'scratch operand']
  #allocation3 [shape = 'f32[32,1024]{1,0:T(8,128)}', space=vmem, size = 0x20000, scoped, tag = 'scratch operand']
  #allocation4 [shape = 'f32[8,256]{1,0:T(8,128)}', space=vmem, size = 0x2000, scoped, tag = 'scratch operand']
  #allocation5 [shape = 'f32[8,256]{1,0:T(8,128)}', space=vmem, size = 0x2000, scoped, tag = 'scratch operand']
  #allocation6 [shape = 'f32[8,256]{1,0:T(8,128)}', space=vmem, size = 0x2000, scoped, tag = 'scratch operand']
  #allocation7 [shape = 'f32[8,256]{1,0:T(8,128)}', space=vmem, size = 0x2000, scoped, tag = 'scratch operand']
  %s0 = inlined_call_operand.vmem [shape: bf16[8,8,768], index: 0, kind: input, shape index: {}, may-alias: {0,1}]
  %s1 = inlined_call_operand.vmem [shape: bf16[8,8,768], index: 1, kind: input, shape index: {}, may-alias: {0,1}]
  %s2 = inlined_call_operand.vmem [shape: bf16[768,1024], index: 2, kind: input, shape index: {}]
  %s3 = inlined_call_operand.vmem [shape: bf16[256,1024], index: 3, kind: input, shape index: {}]
  %s4 = inlined_call_operand.vmem [shape: f32[1,1024], index: 4, kind: input, shape index: {}]
  %s5 = inlined_call_operand.vmem [shape: bf16[768,1024], index: 5, kind: input, shape index: {}]
  %s6 = inlined_call_operand.vmem [shape: bf16[256,1024], index: 6, kind: input, shape index: {}]
  %s7 = inlined_call_operand.vmem [shape: f32[1,1024], index: 7, kind: input, shape index: {}]
  %s8 = inlined_call_operand.vmem [shape: f32[256,30], index: 8, kind: input, shape index: {}]
  %s9 = inlined_call_operand.vmem [shape: f32[256,30], index: 9, kind: input, shape index: {}]
  %s10 = inlined_call_operand.vmem [shape: f32[1,30], index: 10, kind: input, shape index: {}]
  %s11 = inlined_call_operand.vmem [shape: f32[8,30], index: 11, kind: output, shape index: {}]
  %s12 = sld [smem:[#allocation0]]
  $region85: #{_lambda_.1} parent=0
    _
  %s14 = ssub.s32 1, %s12
  %s15 = scalar_select 0, %s14, %s12
  loop: start=0, step=1, limit=4
  $region2: #{_lambda_.1} parent=0 // loop_pre_header
    _
  $region3: #{_lambda_.1} parent=0 // loop_header
    %s17 = sphi 0, %s21
    %p18 = scmp.ge.s32.totalorder %s17, 4
    %s27 = sphi 0, %s29
    %s30 = sphi 0, %s27
    %s31 = sphi 0, %s30
    %s47 = sphi 0, %s31
    %s55 = sphi 0, %s57
    %s58 = sphi 0, %s55
    %s59 = sphi 0, %s58
    %s75 = sphi 0, %s59
    %s79 = sphi 0, %s79
    %s81 = sphi 0, %s79
    %s82 = sphi 0, %s81
    %s96 = sphi 0, %s82
    %s100 = sphi 0, %s100
    %s102 = sphi 0, %s100
    %s103 = sphi 0, %s102
    %s117 = sphi 0, %s103
    %s121 = sphi 0, %s121
    %s123 = sphi 0, %s121
    %s124 = sphi 0, %s123
    %s138 = sphi 0, %s124
    %s142 = sphi 0, %s142
    %s144 = sphi 0, %s142
    %s145 = sphi 0, %s144
    %s159 = sphi 0, %s145
    %s163 = sphi 0, %s163
    %s165 = sphi 0, %s163
    %s166 = sphi 0, %s165
    %s180 = sphi 0, %s166
    %s184 = sphi 0, %s184
    %s186 = sphi 0, %s184
    %s187 = sphi 0, %s186
    %s201 = sphi 0, %s187
    %s205 = sphi 0, %s205
    %s207 = sphi 0, %s205
    %s208 = sphi 0, %s207
    %s222 = sphi 0, %s208
    %s226 = sphi 0, %s226
    %s228 = sphi 0, %s226
    %s229 = sphi 0, %s228
    %s243 = sphi 0, %s229
    %s247 = sphi 0, %s247
    %s249 = sphi 0, %s247
    %s250 = sphi 0, %s249
    %s264 = sphi 0, %s250
    %s268 = sphi 0, %s268
    %s270 = sphi 0, %s268
    %s271 = sphi 0, %s270
    %s285 = sphi 0, %s271
  $region4: #{_lambda_.1} parent=0 // loop_header_branch
    %20 = sbr.rel (%p18) target = $region8
  $region5: #{_lambda_.1} parent=0 // loop_body
    %s22 = ssub.s32 %s17, 1
    %s23 = ssub.s32 %s17, 2
    %s24 = sadd.s32 %s17, 1
    %s25 = ssub.s32 %s17, %s24
    %p26 = scmp.eq.s32.totalorder %s25, 0
    %s28 = sadd.s32 %s27, 1
    %s29 = scalar_select %p26, %s27, %s28
    %p32 = pneg %p26
    %p33 = scmp.eq.s32.totalorder %s17, 1
    %p34 = por %p32, %p33
    %p35 = scmp.ne.s32.totalorder %s27, %s30
    %p36 = scmp.eq.s32.totalorder %s17, 0
    %p37 = por %p35, %p36
    %p38 = scmp.ne.s32.totalorder %s27, %s30
    %p39 = scmp.eq.s32.totalorder %s22, 1
    %p40 = por %p38, %p39
    %p41 = scmp.ne.s32.totalorder %s30, %s31
    %p42 = scmp.eq.s32.totalorder %s22, 0
    %p43 = por %p41, %p42
    %p44 = scmp.ne.s32.totalorder %s30, %s31
    %p45 = scmp.eq.s32.totalorder %s23, 1
    %p46 = por %p44, %p45
    %p48 = scmp.ne.s32.totalorder %s31, %s47
    %p49 = scmp.eq.s32.totalorder %s23, 0
    %p50 = por %p48, %p49
    %s51 = ssub.s32 1, %s17
    %s52 = ssub.s32 1, %s24
    %s53 = ssub.s32 %s51, %s52
    %p54 = scmp.eq.s32.totalorder %s53, 0
    %s56 = sadd.s32 %s55, 1
    %s57 = scalar_select %p54, %s55, %s56
    %p60 = pneg %p54
    %p61 = scmp.eq.s32.totalorder %s17, 1
    %p62 = por %p60, %p61
    %p63 = scmp.ne.s32.totalorder %s55, %s58
    %p64 = scmp.eq.s32.totalorder %s17, 0
    %p65 = por %p63, %p64
    %p66 = scmp.ne.s32.totalorder %s55, %s58
    %p67 = scmp.eq.s32.totalorder %s22, 1
    %p68 = por %p66, %p67
    %p69 = scmp.ne.s32.totalorder %s58, %s59
    %p70 = scmp.eq.s32.totalorder %s22, 0
    %p71 = por %p69, %p70
    %p72 = scmp.ne.s32.totalorder %s58, %s59
    %p73 = scmp.eq.s32.totalorder %s23, 1
    %p74 = por %p72, %p73
    %p76 = scmp.ne.s32.totalorder %s59, %s75
    %p77 = scmp.eq.s32.totalorder %s23, 0
    %p78 = por %p76, %p77
    %s80 = sadd.s32 %s79, 1
    %p83 = scmp.eq.s32.totalorder %s17, 1
    %p84 = scmp.ne.s32.totalorder %s79, %s81
    %p85 = scmp.eq.s32.totalorder %s17, 0
    %p86 = por %p84, %p85
    %p87 = scmp.ne.s32.totalorder %s79, %s81
    %p88 = scmp.eq.s32.totalorder %s22, 1
    %p89 = por %p87, %p88
    %p90 = scmp.ne.s32.totalorder %s81, %s82
    %p91 = scmp.eq.s32.totalorder %s22, 0
    %p92 = por %p90, %p91
    %p93 = scmp.ne.s32.totalorder %s81, %s82
    %p94 = scmp.eq.s32.totalorder %s23, 1
    %p95 = por %p93, %p94
    %p97 = scmp.ne.s32.totalorder %s82, %s96
    %p98 = scmp.eq.s32.totalorder %s23, 0
    %p99 = por %p97, %p98
    %s101 = sadd.s32 %s100, 1
    %p104 = scmp.eq.s32.totalorder %s17, 1
    %p105 = scmp.ne.s32.totalorder %s100, %s102
    %p106 = scmp.eq.s32.totalorder %s17, 0
    %p107 = por %p105, %p106
    %p108 = scmp.ne.s32.totalorder %s100, %s102
    %p109 = scmp.eq.s32.totalorder %s22, 1
    %p110 = por %p108, %p109
    %p111 = scmp.ne.s32.totalorder %s102, %s103
    %p112 = scmp.eq.s32.totalorder %s22, 0
    %p113 = por %p111, %p112
    %p114 = scmp.ne.s32.totalorder %s102, %s103
    %p115 = scmp.eq.s32.totalorder %s23, 1
    %p116 = por %p114, %p115
    %p118 = scmp.ne.s32.totalorder %s103, %s117
    %p119 = scmp.eq.s32.totalorder %s23, 0
    %p120 = por %p118, %p119
    %s122 = sadd.s32 %s121, 1
    %p125 = scmp.eq.s32.totalorder %s17, 1
    %p126 = scmp.ne.s32.totalorder %s121, %s123
    %p127 = scmp.eq.s32.totalorder %s17, 0
    %p128 = por %p126, %p127
    %p129 = scmp.ne.s32.totalorder %s121, %s123
    %p130 = scmp.eq.s32.totalorder %s22, 1
    %p131 = por %p129, %p130
    %p132 = scmp.ne.s32.totalorder %s123, %s124
    %p133 = scmp.eq.s32.totalorder %s22, 0
    %p134 = por %p132, %p133
    %p135 = scmp.ne.s32.totalorder %s123, %s124
    %p136 = scmp.eq.s32.totalorder %s23, 1
    %p137 = por %p135, %p136
    %p139 = scmp.ne.s32.totalorder %s124, %s138
    %p140 = scmp.eq.s32.totalorder %s23, 0
    %p141 = por %p139, %p140
    %s143 = sadd.s32 %s142, 1
    %p146 = scmp.eq.s32.totalorder %s17, 1
    %p147 = scmp.ne.s32.totalorder %s142, %s144
    %p148 = scmp.eq.s32.totalorder %s17, 0
    %p149 = por %p147, %p148
    %p150 = scmp.ne.s32.totalorder %s142, %s144
    %p151 = scmp.eq.s32.totalorder %s22, 1
    %p152 = por %p150, %p151
    %p153 = scmp.ne.s32.totalorder %s144, %s145
    %p154 = scmp.eq.s32.totalorder %s22, 0
    %p155 = por %p153, %p154
    %p156 = scmp.ne.s32.totalorder %s144, %s145
    %p157 = scmp.eq.s32.totalorder %s23, 1
    %p158 = por %p156, %p157
    %p160 = scmp.ne.s32.totalorder %s145, %s159
    %p161 = scmp.eq.s32.totalorder %s23, 0
    %p162 = por %p160, %p161
    %s164 = sadd.s32 %s163, 1
    %p167 = scmp.eq.s32.totalorder %s17, 1
    %p168 = scmp.ne.s32.totalorder %s163, %s165
    %p169 = scmp.eq.s32.totalorder %s17, 0
    %p170 = por %p168, %p169
    %p171 = scmp.ne.s32.totalorder %s163, %s165
    %p172 = scmp.eq.s32.totalorder %s22, 1
    %p173 = por %p171, %p172
    %p174 = scmp.ne.s32.totalorder %s165, %s166
    %p175 = scmp.eq.s32.totalorder %s22, 0
    %p176 = por %p174, %p175
    %p177 = scmp.ne.s32.totalorder %s165, %s166
    %p178 = scmp.eq.s32.totalorder %s23, 1
    %p179 = por %p177, %p178
    %p181 = scmp.ne.s32.totalorder %s166, %s180
    %p182 = scmp.eq.s32.totalorder %s23, 0
    %p183 = por %p181, %p182
    %s185 = sadd.s32 %s184, 1
    %p188 = scmp.eq.s32.totalorder %s17, 1
    %p189 = scmp.ne.s32.totalorder %s184, %s186
    %p190 = scmp.eq.s32.totalorder %s17, 0
    %p191 = por %p189, %p190
    %p192 = scmp.ne.s32.totalorder %s184, %s186
    %p193 = scmp.eq.s32.totalorder %s22, 1
    %p194 = por %p192, %p193
    %p195 = scmp.ne.s32.totalorder %s186, %s187
    %p196 = scmp.eq.s32.totalorder %s22, 0
    %p197 = por %p195, %p196
    %p198 = scmp.ne.s32.totalorder %s186, %s187
    %p199 = scmp.eq.s32.totalorder %s23, 1
    %p200 = por %p198, %p199
    %p202 = scmp.ne.s32.totalorder %s187, %s201
    %p203 = scmp.eq.s32.totalorder %s23, 0
    %p204 = por %p202, %p203
    %s206 = sadd.s32 %s205, 1
    %p209 = scmp.eq.s32.totalorder %s17, 1
    %p210 = scmp.ne.s32.totalorder %s205, %s207
    %p211 = scmp.eq.s32.totalorder %s17, 0
    %p212 = por %p210, %p211
    %p213 = scmp.ne.s32.totalorder %s205, %s207
    %p214 = scmp.eq.s32.totalorder %s22, 1
    %p215 = por %p213, %p214
    %p216 = scmp.ne.s32.totalorder %s207, %s208
    %p217 = scmp.eq.s32.totalorder %s22, 0
    %p218 = por %p216, %p217
    %p219 = scmp.ne.s32.totalorder %s207, %s208
    %p220 = scmp.eq.s32.totalorder %s23, 1
    %p221 = por %p219, %p220
    %p223 = scmp.ne.s32.totalorder %s208, %s222
    %p224 = scmp.eq.s32.totalorder %s23, 0
    %p225 = por %p223, %p224
    %s227 = sadd.s32 %s226, 1
    %p230 = scmp.eq.s32.totalorder %s17, 1
    %p231 = scmp.ne.s32.totalorder %s226, %s228
    %p232 = scmp.eq.s32.totalorder %s17, 0
    %p233 = por %p231, %p232
    %p234 = scmp.ne.s32.totalorder %s226, %s228
    %p235 = scmp.eq.s32.totalorder %s22, 1
    %p236 = por %p234, %p235
    %p237 = scmp.ne.s32.totalorder %s228, %s229
    %p238 = scmp.eq.s32.totalorder %s22, 0
    %p239 = por %p237, %p238
    %p240 = scmp.ne.s32.totalorder %s228, %s229
    %p241 = scmp.eq.s32.totalorder %s23, 1
    %p242 = por %p240, %p241
    %p244 = scmp.ne.s32.totalorder %s229, %s243
    %p245 = scmp.eq.s32.totalorder %s23, 0
    %p246 = por %p244, %p245
    %s248 = sadd.s32 %s247, 1
    %p251 = scmp.eq.s32.totalorder %s17, 1
    %p252 = scmp.ne.s32.totalorder %s247, %s249
    %p253 = scmp.eq.s32.totalorder %s17, 0
    %p254 = por %p252, %p253
    %p255 = scmp.ne.s32.totalorder %s247, %s249
    %p256 = scmp.eq.s32.totalorder %s22, 1
    %p257 = por %p255, %p256
    %p258 = scmp.ne.s32.totalorder %s249, %s250
    %p259 = scmp.eq.s32.totalorder %s22, 0
    %p260 = por %p258, %p259
    %p261 = scmp.ne.s32.totalorder %s249, %s250
    %p262 = scmp.eq.s32.totalorder %s23, 1
    %p263 = por %p261, %p262
    %p265 = scmp.ne.s32.totalorder %s250, %s264
    %p266 = scmp.eq.s32.totalorder %s23, 0
    %p267 = por %p265, %p266
    %s269 = sadd.s32 %s268, 1
    %p272 = scmp.eq.s32.totalorder %s17, 1
    %p273 = scmp.ne.s32.totalorder %s268, %s270
    %p274 = scmp.eq.s32.totalorder %s17, 0
    %p275 = por %p273, %p274
    %p276 = scmp.ne.s32.totalorder %s268, %s270
    %p277 = scmp.eq.s32.totalorder %s22, 1
    %p278 = por %p276, %p277
    %p279 = scmp.ne.s32.totalorder %s270, %s271
    %p280 = scmp.eq.s32.totalorder %s22, 0
    %p281 = por %p279, %p280
    %p282 = scmp.ne.s32.totalorder %s270, %s271
    %p283 = scmp.eq.s32.totalorder %s23, 1
    %p284 = por %p282, %p283
    %p286 = scmp.ne.s32.totalorder %s271, %s285
    %p287 = scmp.eq.s32.totalorder %s23, 0
    %p288 = por %p286, %p287
    %p289 = scmp.le.s32.totalorder 1, %s17
    %p290 = scmp.lt.s32.totalorder %s17, 3
    %p291 = pnand %p289, %p290
    %p292 = pneg %p291
    // Predicated region
    $region9: #{_lambda_.1} parent=5 // pred_check
      _
    $region10: #{_lambda_.1} parent=5 // pred_check_branch
      %294 = sbr.rel (%p291) target = $region12
    $region11: #{_lambda_.1} parent=5 // pred_region
      %s295 = ssub.s32 %s17, 1
      // Predicated region
      $region13: #{_lambda_.1} parent=11 // pred_check
        %p296 = pneg %p92
      $region14: #{_lambda_.1} parent=11 // pred_check_branch
        %298 = sbr.rel (%p296) target = $region16
      $region15: #{_lambda_.1} parent=11 // pred_region
        _
      $region16: #{_lambda_.1} parent=11 // pred_fallthru
        _
      // Predicated region
      $region17: #{_lambda_.1} parent=11 // pred_check
        %p299 = pneg %p113
      $region18: #{_lambda_.1} parent=11 // pred_check_branch
        %301 = sbr.rel (%p299) target = $region20
      $region19: #{_lambda_.1} parent=11 // pred_region
        _
      $region20: #{_lambda_.1} parent=11 // pred_fallthru
        _
      // Predicated region
      $region21: #{_lambda_.1} parent=11 // pred_check
        %p302 = pneg %p134
      $region22: #{_lambda_.1} parent=11 // pred_check_branch
        %304 = sbr.rel (%p302) target = $region24
      $region23: #{_lambda_.1} parent=11 // pred_region
        _
      $region24: #{_lambda_.1} parent=11 // pred_fallthru
        _
      // Predicated region
      $region25: #{_lambda_.1} parent=11 // pred_check
        %p305 = pneg %p155
      $region26: #{_lambda_.1} parent=11 // pred_check_branch
        %307 = sbr.rel (%p305) target = $region28
      $region27: #{_lambda_.1} parent=11 // pred_region
        _
      $region28: #{_lambda_.1} parent=11 // pred_fallthru
        _
      // Predicated region
      $region29: #{_lambda_.1} parent=11 // pred_check
        %p308 = pneg %p176
      $region30: #{_lambda_.1} parent=11 // pred_check_branch
        %310 = sbr.rel (%p308) target = $region32
      $region31: #{_lambda_.1} parent=11 // pred_region
        _
      $region32: #{_lambda_.1} parent=11 // pred_fallthru
        _
      // Predicated region
      $region33: #{_lambda_.1} parent=11 // pred_check
        %p311 = pneg %p197
      $region34: #{_lambda_.1} parent=11 // pred_check_branch
        %313 = sbr.rel (%p311) target = $region36
      $region35: #{_lambda_.1} parent=11 // pred_region
        _
      $region36: #{_lambda_.1} parent=11 // pred_fallthru
        _
      // Predicated region
      $region37: #{_lambda_.1} parent=11 // pred_check
        %p314 = pneg %p218
      $region38: #{_lambda_.1} parent=11 // pred_check_branch
        %316 = sbr.rel (%p314) target = $region40
      $region39: #{_lambda_.1} parent=11 // pred_region
        _
      $region40: #{_lambda_.1} parent=11 // pred_fallthru
        _
      // Predicated region
      $region41: #{_lambda_.1} parent=11 // pred_check
        %p317 = pneg %p239
      $region42: #{_lambda_.1} parent=11 // pred_check_branch
        %319 = sbr.rel (%p317) target = $region44
      $region43: #{_lambda_.1} parent=11 // pred_region
        _
      $region44: #{_lambda_.1} parent=11 // pred_fallthru
        _
      // Predicated region
      $region45: #{_lambda_.1} parent=11 // pred_check
        %p320 = pneg %p260
      $region46: #{_lambda_.1} parent=11 // pred_check_branch
        %322 = sbr.rel (%p320) target = $region48
      $region47: #{_lambda_.1} parent=11 // pred_region
        _
      $region48: #{_lambda_.1} parent=11 // pred_fallthru
        _
    $region12: #{_lambda_.1} parent=5 // pred_fallthru
      _
    %p323 = scmp.lt.s32.totalorder %s17, 2
    // Predicated region
    $region49: #{_lambda_.1} parent=5 // pred_check
      %p324 = pneg %p323
    $region50: #{_lambda_.1} parent=5 // pred_check_branch
      %326 = sbr.rel (%p324) target = $region52
    $region51: #{_lambda_.1} parent=5 // pred_region
      // Predicated region
      $region53: #{_lambda_.1} parent=51 // pred_check
        %p327 = pneg %p37
      $region54: #{_lambda_.1} parent=51 // pred_check_branch
        %329 = sbr.rel (%p327) target = $region56
      $region55: #{_lambda_.1} parent=51 // pred_region
        %s330 = smul.u32 4, %s17
        %p331 = scmp.lt.s32.totalorder %s330, 7
        %s332 = scalar_select %p331, %s330, 7
        %s333 = smul.addr %s332, 6
        %s334 = smul.addr %s333, 4
        %s335 = scalar_lea.vmem %s0, %s334
        %s336 = smul.u32 4, %s17
      $region56: #{_lambda_.1} parent=51 // pred_fallthru
        _
      // Predicated region
      $region57: #{_lambda_.1} parent=51 // pred_check
        %p337 = pneg %p65
      $region58: #{_lambda_.1} parent=51 // pred_check_branch
        %339 = sbr.rel (%p337) target = $region60
      $region59: #{_lambda_.1} parent=51 // pred_region
        %s340 = ssub.s32 1, %s17
        %s341 = smul.u32 4, %s340
        %p342 = scmp.lt.s32.totalorder %s341, 7
        %s343 = scalar_select %p342, %s341, 7
        %s344 = smul.addr %s343, 6
        %s345 = smul.addr %s344, 4
        %s346 = scalar_lea.vmem %s1, %s345
        %s347 = ssub.s32 1, %s17
        %s348 = smul.u32 4, %s347
      $region60: #{_lambda_.1} parent=51 // pred_fallthru
        _
    $region52: #{_lambda_.1} parent=5 // pred_fallthru
      _
    %p349 = scmp.le.s32.totalorder 1, %s17
    %p350 = scmp.lt.s32.totalorder %s17, 3
    %p351 = pnand %p349, %p350
    %p352 = pneg %p351
    // Predicated region
    $region61: #{_lambda_.1} parent=5 // pred_check
      _
    $region62: #{_lambda_.1} parent=5 // pred_check_branch
      %354 = sbr.rel (%p351) target = $region64
    $region63: #{_lambda_.1} parent=5 // pred_region
      %s355 = ssub.s32 %s17, 1
      %s356 = smul.u32 4, %s22
      %p357 = scmp.lt.s32.totalorder %s356, 7
      %s358 = scalar_select %p357, %s356, 7
      %s359 = smul.addr %s358, 6
      %s360 = smul.addr %s359, 4
      %s361 = scalar_lea.vmem %s0, %s360
      %p362 = pneg %p43
      %p363 = pneg %p40
      %s364 = ssub.s32 1, %s22
      %s365 = smul.u32 4, %s364
      %p366 = scmp.lt.s32.totalorder %s365, 7
      %s367 = scalar_select %p366, %s365, 7
      %s368 = smul.addr %s367, 6
      %s369 = smul.addr %s368, 4
      %s370 = scalar_lea.vmem %s1, %s369
      %p371 = pneg %p71
      %p372 = pneg %p68
      %p373 = pneg %p92
      %p374 = pneg %p89
      %p375 = pneg %p113
      %p376 = pneg %p110
      %p377 = pneg %p134
      %p378 = pneg %p131
      %p379 = pneg %p155
      %p380 = pneg %p152
      %p381 = pneg %p176
      %p382 = pneg %p173
      %p383 = pneg %p197
      %p384 = pneg %p194
      %p385 = pneg %p218
      %p386 = pneg %p215
      %p387 = pneg %p239
      %p388 = pneg %p236
      %p389 = pneg %p260
      %p390 = pneg %p257
      %p391 = pneg %p281
      %p392 = pneg %p278
      %s393 = smul.u32 4, %s22
      %p394 = scmp.lt.s32.totalorder %s393, 7
      %s395 = scalar_select %p394, %s393, 7
      %s396 = smul.addr %s395, 6
      %s397 = smul.addr %s396, 4
      %s398 = scalar_lea.vmem %s0, %s397
      %s399 = smul.u32 4, %s22
      %s400 = ssub.s32 1, %s22
      %s401 = smul.u32 4, %s400
      %p402 = scmp.lt.s32.totalorder %s401, 7
      %s403 = scalar_select %p402, %s401, 7
      %s404 = smul.addr %s403, 6
      %s405 = smul.addr %s404, 4
      %s406 = scalar_lea.vmem %s1, %s405
      %s407 = ssub.s32 1, %s22
      %s408 = smul.u32 4, %s407
      %p409 = scmp.eq.s32.totalorder %s22, 0
      // Predicated region
      $region65: #{_lambda_.1} parent=63 // pred_check
        %p410 = pneg %p409
      $region66: #{_lambda_.1} parent=63 // pred_check_branch
        %412 = sbr.rel (%p410) target = $region68
      $region67: #{_lambda_.1} parent=63 // pred_region
        %413 = vst [vmem:[#allocation4] sm:$0xff] 0.0
        %414 = vst [vmem:[#allocation4 + $0x8] sm:$0xff] 0.0
        %415 = vst [vmem:[#allocation5] sm:$0xff] 0.0
        %416 = vst [vmem:[#allocation5 + $0x8] sm:$0xff] 0.0
        %417 = vst [vmem:[#allocation6] sm:$0xff] 0.0
        %418 = vst [vmem:[#allocation6 + $0x8] sm:$0xff] 0.0
        %419 = vst [vmem:[#allocation7] sm:$0xff] 0.0
        %420 = vst [vmem:[#allocation7 + $0x8] sm:$0xff] 0.0
      $region68: #{_lambda_.1} parent=63 // pred_fallthru
        _
      %v421 = vld [vmem:[%s398] sm:$0xff]
      %v422 = vld [vmem:[%s398 + $0x8] sm:$0xff]
      %v423 = vld [vmem:[%s398 + $0x10] sm:$0xff]
      %v424 = vld [vmem:[%s398 + $0x18] sm:$0xff]
      %v425 = vld [vmem:[%s398 + $0x20] sm:$0xff]
      %v426 = vld [vmem:[%s398 + $0x28] sm:$0xff]
      %v427 = vld [vmem:[%s398 + $0x30] sm:$0xff]
      %v428 = vld [vmem:[%s398 + $0x38] sm:$0xff]
      %v429 = vld [vmem:[%s398 + $0x40] sm:$0xff]
      %v430 = vld [vmem:[%s398 + $0x48] sm:$0xff]
      %v431 = vld [vmem:[%s398 + $0x50] sm:$0xff]
      %v432 = vld [vmem:[%s398 + $0x58] sm:$0xff]
      %v433 = vld [vmem:[%s406] sm:$0xff]
      %v434 = vld [vmem:[%s406 + $0x8] sm:$0xff]
      %v435 = vld [vmem:[%s406 + $0x10] sm:$0xff]
      %v436 = vld [vmem:[%s406 + $0x18] sm:$0xff]
      %v437 = vld [vmem:[%s406 + $0x20] sm:$0xff]
      %v438 = vld [vmem:[%s406 + $0x28] sm:$0xff]
      %v439 = vld [vmem:[%s406 + $0x30] sm:$0xff]
      %v440 = vld [vmem:[%s406 + $0x38] sm:$0xff]
      %v441 = vld [vmem:[%s406 + $0x40] sm:$0xff]
      %v442 = vld [vmem:[%s406 + $0x48] sm:$0xff]
      %v443 = vld [vmem:[%s406 + $0x50] sm:$0xff]
      %v444 = vld [vmem:[%s406 + $0x58] sm:$0xff]
      %v445 = vld [vmem:[%s2] sm:$0xff]
      %v446 = vld [vmem:[%s2 + $0x8] sm:$0xff]
      %v447 = vld [vmem:[%s2 + $0x10] sm:$0xff]
      %v448 = vld [vmem:[%s2 + $0x18] sm:$0xff]
      %v449 = vld [vmem:[%s2 + $0x20] sm:$0xff]
      %v450 = vld [vmem:[%s2 + $0x28] sm:$0xff]
      %v451 = vld [vmem:[%s2 + $0x30] sm:$0xff]
      %v452 = vld [vmem:[%s2 + $0x38] sm:$0xff]
      %v453 = vld [vmem:[%s2 + $0x40] sm:$0xff]
      %v454 = vld [vmem:[%s2 + $0x48] sm:$0xff]
      %v455 = vld [vmem:[%s2 + $0x50] sm:$0xff]
      %v456 = vld [vmem:[%s2 + $0x58] sm:$0xff]
      %v457 = vld [vmem:[%s2 + $0x60] sm:$0xff]
      %v458 = vld [vmem:[%s2 + $0x68] sm:$0xff]
      %v459 = vld [vmem:[%s2 + $0x70] sm:$0xff]
      %v460 = vld [vmem:[%s2 + $0x78] sm:$0xff]
      %v461 = vld [vmem:[%s2 + $0x80] sm:$0xff]
      %v462 = vld [vmem:[%s2 + $0x88] sm:$0xff]
      %v463 = vld [vmem:[%s2 + $0x90] sm:$0xff]
      %v464 = vld [vmem:[%s2 + $0x98] sm:$0xff]
      %v465 = vld [vmem:[%s2 + $0xa0] sm:$0xff]
      %v466 = vld [vmem:[%s2 + $0xa8] sm:$0xff]
      %v467 = vld [vmem:[%s2 + $0xb0] sm:$0xff]
      %v468 = vld [vmem:[%s2 + $0xb8] sm:$0xff]
      %v469 = vld [vmem:[%s2 + $0xc0] sm:$0xff]
      %v470 = vld [vmem:[%s2 + $0xc8] sm:$0xff]
      %v471 = vld [vmem:[%s2 + $0xd0] sm:$0xff]
      %v472 = vld [vmem:[%s2 + $0xd8] sm:$0xff]
      %v473 = vld [vmem:[%s2 + $0xe0] sm:$0xff]
      %v474 = vld [vmem:[%s2 + $0xe8] sm:$0xff]
      %v475 = vld [vmem:[%s2 + $0xf0] sm:$0xff]
      %v476 = vld [vmem:[%s2 + $0xf8] sm:$0xff]
      %v477 = vld [vmem:[%s2 + $0x100] sm:$0xff]
      %v478 = vld [vmem:[%s2 + $0x108] sm:$0xff]
      %v479 = vld [vmem:[%s2 + $0x110] sm:$0xff]
      %v480 = vld [vmem:[%s2 + $0x118] sm:$0xff]
      %v481 = vld [vmem:[%s2 + $0x120] sm:$0xff]
      %v482 = vld [vmem:[%s2 + $0x128] sm:$0xff]
      %v483 = vld [vmem:[%s2 + $0x130] sm:$0xff]
      %v484 = vld [vmem:[%s2 + $0x138] sm:$0xff]
      %v485 = vld [vmem:[%s2 + $0x140] sm:$0xff]
      %v486 = vld [vmem:[%s2 + $0x148] sm:$0xff]
      %v487 = vld [vmem:[%s2 + $0x150] sm:$0xff]
      %v488 = vld [vmem:[%s2 + $0x158] sm:$0xff]
      %v489 = vld [vmem:[%s2 + $0x160] sm:$0xff]
      %v490 = vld [vmem:[%s2 + $0x168] sm:$0xff]
      %v491 = vld [vmem:[%s2 + $0x170] sm:$0xff]
      %v492 = vld [vmem:[%s2 + $0x178] sm:$0xff]
      %v493 = vld [vmem:[%s2 + $0x180] sm:$0xff]
      %v494 = vld [vmem:[%s2 + $0x188] sm:$0xff]
      %v495 = vld [vmem:[%s2 + $0x190] sm:$0xff]
      %v496 = vld [vmem:[%s2 + $0x198] sm:$0xff]
      %v497 = vld [vmem:[%s2 + $0x1a0] sm:$0xff]
      %v498 = vld [vmem:[%s2 + $0x1a8] sm:$0xff]
      %v499 = vld [vmem:[%s2 + $0x1b0] sm:$0xff]
      %v500 = vld [vmem:[%s2 + $0x1b8] sm:$0xff]
      %v501 = vld [vmem:[%s2 + $0x1c0] sm:$0xff]
      %v502 = vld [vmem:[%s2 + $0x1c8] sm:$0xff]
      %v503 = vld [vmem:[%s2 + $0x1d0] sm:$0xff]
      %v504 = vld [vmem:[%s2 + $0x1d8] sm:$0xff]
      %v505 = vld [vmem:[%s2 + $0x1e0] sm:$0xff]
      %v506 = vld [vmem:[%s2 + $0x1e8] sm:$0xff]
      %v507 = vld [vmem:[%s2 + $0x1f0] sm:$0xff]
      %v508 = vld [vmem:[%s2 + $0x1f8] sm:$0xff]
      %v509 = vld [vmem:[%s2 + $0x200] sm:$0xff]
      %v510 = vld [vmem:[%s2 + $0x208] sm:$0xff]
      %v511 = vld [vmem:[%s2 + $0x210] sm:$0xff]
      %v512 = vld [vmem:[%s2 + $0x218] sm:$0xff]
      %v513 = vld [vmem:[%s2 + $0x220] sm:$0xff]
      %v514 = vld [vmem:[%s2 + $0x228] sm:$0xff]
      %v515 = vld [vmem:[%s2 + $0x230] sm:$0xff]
      %v516 = vld [vmem:[%s2 + $0x238] sm:$0xff]
      %v517 = vld [vmem:[%s2 + $0x240] sm:$0xff]
      %v518 = vld [vmem:[%s2 + $0x248] sm:$0xff]
      %v519 = vld [vmem:[%s2 + $0x250] sm:$0xff]
      %v520 = vld [vmem:[%s2 + $0x258] sm:$0xff]
      %v521 = vld [vmem:[%s2 + $0x260] sm:$0xff]
      %v522 = vld [vmem:[%s2 + $0x268] sm:$0xff]
      %v523 = vld [vmem:[%s2 + $0x270] sm:$0xff]
      %v524 = vld [vmem:[%s2 + $0x278] sm:$0xff]
      %v525 = vld [vmem:[%s2 + $0x280] sm:$0xff]
      %v526 = vld [vmem:[%s2 + $0x288] sm:$0xff]
      %v527 = vld [vmem:[%s2 + $0x290] sm:$0xff]
      %v528 = vld [vmem:[%s2 + $0x298] sm:$0xff]
      %v529 = vld [vmem:[%s2 + $0x2a0] sm:$0xff]
      %v530 = vld [vmem:[%s2 + $0x2a8] sm:$0xff]
      %v531 = vld [vmem:[%s2 + $0x2b0] sm:$0xff]
      %v532 = vld [vmem:[%s2 + $0x2b8] sm:$0xff]
      %v533 = vld [vmem:[%s2 + $0x2c0] sm:$0xff]
      %v534 = vld [vmem:[%s2 + $0x2c8] sm:$0xff]
      %v535 = vld [vmem:[%s2 + $0x2d0] sm:$0xff]
      %v536 = vld [vmem:[%s2 + $0x2d8] sm:$0xff]
      %v537 = vld [vmem:[%s2 + $0x2e0] sm:$0xff]
      %v538 = vld [vmem:[%s2 + $0x2e8] sm:$0xff]
      %v539 = vld [vmem:[%s2 + $0x2f0] sm:$0xff]
      %v540 = vld [vmem:[%s2 + $0x2f8] sm:$0xff]
      %v541 = vld [vmem:[%s2 + $0x300] sm:$0xff]
      %v542 = vld [vmem:[%s2 + $0x308] sm:$0xff]
      %v543 = vld [vmem:[%s2 + $0x310] sm:$0xff]
      %v544 = vld [vmem:[%s2 + $0x318] sm:$0xff]
      %v545 = vld [vmem:[%s2 + $0x320] sm:$0xff]
      %v546 = vld [vmem:[%s2 + $0x328] sm:$0xff]
      %v547 = vld [vmem:[%s2 + $0x330] sm:$0xff]
      %v548 = vld [vmem:[%s2 + $0x338] sm:$0xff]
      %v549 = vld [vmem:[%s2 + $0x340] sm:$0xff]
      %v550 = vld [vmem:[%s2 + $0x348] sm:$0xff]
      %v551 = vld [vmem:[%s2 + $0x350] sm:$0xff]
      %v552 = vld [vmem:[%s2 + $0x358] sm:$0xff]
      %v553 = vld [vmem:[%s2 + $0x360] sm:$0xff]
      %v554 = vld [vmem:[%s2 + $0x368] sm:$0xff]
      %v555 = vld [vmem:[%s2 + $0x370] sm:$0xff]
      %v556 = vld [vmem:[%s2 + $0x378] sm:$0xff]
      %v557 = vld [vmem:[%s2 + $0x380] sm:$0xff]
      %v558 = vld [vmem:[%s2 + $0x388] sm:$0xff]
      %v559 = vld [vmem:[%s2 + $0x390] sm:$0xff]
      %v560 = vld [vmem:[%s2 + $0x398] sm:$0xff]
      %v561 = vld [vmem:[%s2 + $0x3a0] sm:$0xff]
      %v562 = vld [vmem:[%s2 + $0x3a8] sm:$0xff]
      %v563 = vld [vmem:[%s2 + $0x3b0] sm:$0xff]
      %v564 = vld [vmem:[%s2 + $0x3b8] sm:$0xff]
      %v565 = vld [vmem:[%s2 + $0x3c0] sm:$0xff]
      %v566 = vld [vmem:[%s2 + $0x3c8] sm:$0xff]
      %v567 = vld [vmem:[%s2 + $0x3d0] sm:$0xff]
      %v568 = vld [vmem:[%s2 + $0x3d8] sm:$0xff]
      %v569 = vld [vmem:[%s2 + $0x3e0] sm:$0xff]
      %v570 = vld [vmem:[%s2 + $0x3e8] sm:$0xff]
      %v571 = vld [vmem:[%s2 + $0x3f0] sm:$0xff]
      %v572 = vld [vmem:[%s2 + $0x3f8] sm:$0xff]
      %v573 = vld [vmem:[%s2 + $0x400] sm:$0xff]
      %v574 = vld [vmem:[%s2 + $0x408] sm:$0xff]
      %v575 = vld [vmem:[%s2 + $0x410] sm:$0xff]
      %v576 = vld [vmem:[%s2 + $0x418] sm:$0xff]
      %v577 = vld [vmem:[%s2 + $0x420] sm:$0xff]
      %v578 = vld [vmem:[%s2 + $0x428] sm:$0xff]
      %v579 = vld [vmem:[%s2 + $0x430] sm:$0xff]
      %v580 = vld [vmem:[%s2 + $0x438] sm:$0xff]
      %v581 = vld [vmem:[%s2 + $0x440] sm:$0xff]
      %v582 = vld [vmem:[%s2 + $0x448] sm:$0xff]
      %v583 = vld [vmem:[%s2 + $0x450] sm:$0xff]
      %v584 = vld [vmem:[%s2 + $0x458] sm:$0xff]
      %v585 = vld [vmem:[%s2 + $0x460] sm:$0xff]
      %v586 = vld [vmem:[%s2 + $0x468] sm:$0xff]
      %v587 = vld [vmem:[%s2 + $0x470] sm:$0xff]
      %v588 = vld [vmem:[%s2 + $0x478] sm:$0xff]
      %v589 = vld [vmem:[%s2 + $0x480] sm:$0xff]
      %v590 = vld [vmem:[%s2 + $0x488] sm:$0xff]
      %v591 = vld [vmem:[%s2 + $0x490] sm:$0xff]
      %v592 = vld [vmem:[%s2 + $0x498] sm:$0xff]
      %v593 = vld [vmem:[%s2 + $0x4a0] sm:$0xff]
      %v594 = vld [vmem:[%s2 + $0x4a8] sm:$0xff]
      %v595 = vld [vmem:[%s2 + $0x4b0] sm:$0xff]
      %v596 = vld [vmem:[%s2 + $0x4b8] sm:$0xff]
      %v597 = vld [vmem:[%s2 + $0x4c0] sm:$0xff]
      %v598 = vld [vmem:[%s2 + $0x4c8] sm:$0xff]
      %v599 = vld [vmem:[%s2 + $0x4d0] sm:$0xff]
      %v600 = vld [vmem:[%s2 + $0x4d8] sm:$0xff]
      %v601 = vld [vmem:[%s2 + $0x4e0] sm:$0xff]
      %v602 = vld [vmem:[%s2 + $0x4e8] sm:$0xff]
      %v603 = vld [vmem:[%s2 + $0x4f0] sm:$0xff]
      %v604 = vld [vmem:[%s2 + $0x4f8] sm:$0xff]
      %v605 = vld [vmem:[%s2 + $0x500] sm:$0xff]
      %v606 = vld [vmem:[%s2 + $0x508] sm:$0xff]
      %v607 = vld [vmem:[%s2 + $0x510] sm:$0xff]
      %v608 = vld [vmem:[%s2 + $0x518] sm:$0xff]
      %v609 = vld [vmem:[%s2 + $0x520] sm:$0xff]
      %v610 = vld [vmem:[%s2 + $0x528] sm:$0xff]
      %v611 = vld [vmem:[%s2 + $0x530] sm:$0xff]
      %v612 = vld [vmem:[%s2 + $0x538] sm:$0xff]
      %v613 = vld [vmem:[%s2 + $0x540] sm:$0xff]
      %v614 = vld [vmem:[%s2 + $0x548] sm:$0xff]
      %v615 = vld [vmem:[%s2 + $0x550] sm:$0xff]
      %v616 = vld [vmem:[%s2 + $0x558] sm:$0xff]
      %v617 = vld [vmem:[%s2 + $0x560] sm:$0xff]
      %v618 = vld [vmem:[%s2 + $0x568] sm:$0xff]
      %v619 = vld [vmem:[%s2 + $0x570] sm:$0xff]
      %v620 = vld [vmem:[%s2 + $0x578] sm:$0xff]
      %v621 = vld [vmem:[%s2 + $0x580] sm:$0xff]
      %v622 = vld [vmem:[%s2 + $0x588] sm:$0xff]
      %v623 = vld [vmem:[%s2 + $0x590] sm:$0xff]
      %v624 = vld [vmem:[%s2 + $0x598] sm:$0xff]
      %v625 = vld [vmem:[%s2 + $0x5a0] sm:$0xff]
      %v626 = vld [vmem:[%s2 + $0x5a8] sm:$0xff]
      %v627 = vld [vmem:[%s2 + $0x5b0] sm:$0xff]
      %v628 = vld [vmem:[%s2 + $0x5b8] sm:$0xff]
      %v629 = vld [vmem:[%s2 + $0x5c0] sm:$0xff]
      %v630 = vld [vmem:[%s2 + $0x5c8] sm:$0xff]
      %v631 = vld [vmem:[%s2 + $0x5d0] sm:$0xff]
      %v632 = vld [vmem:[%s2 + $0x5d8] sm:$0xff]
      %v633 = vld [vmem:[%s2 + $0x5e0] sm:$0xff]
      %v634 = vld [vmem:[%s2 + $0x5e8] sm:$0xff]
      %v635 = vld [vmem:[%s2 + $0x5f0] sm:$0xff]
      %v636 = vld [vmem:[%s2 + $0x5f8] sm:$0xff]
      %v637 = vld [vmem:[%s2 + $0x600] sm:$0xff]
      %v638 = vld [vmem:[%s2 + $0x608] sm:$0xff]
      %v639 = vld [vmem:[%s2 + $0x610] sm:$0xff]
      %v640 = vld [vmem:[%s2 + $0x618] sm:$0xff]
      %v641 = vld [vmem:[%s2 + $0x620] sm:$0xff]
      %v642 = vld [vmem:[%s2 + $0x628] sm:$0xff]
      %v643 = vld [vmem:[%s2 + $0x630] sm:$0xff]
      %v644 = vld [vmem:[%s2 + $0x638] sm:$0xff]
      %v645 = vld [vmem:[%s2 + $0x640] sm:$0xff]
      %v646 = vld [vmem:[%s2 + $0x648] sm:$0xff]
      %v647 = vld [vmem:[%s2 + $0x650] sm:$0xff]
      %v648 = vld [vmem:[%s2 + $0x658] sm:$0xff]
      %v649 = vld [vmem:[%s2 + $0x660] sm:$0xff]
      %v650 = vld [vmem:[%s2 + $0x668] sm:$0xff]
      %v651 = vld [vmem:[%s2 + $0x670] sm:$0xff]
      %v652 = vld [vmem:[%s2 + $0x678] sm:$0xff]
      %v653 = vld [vmem:[%s2 + $0x680] sm:$0xff]
      %v654 = vld [vmem:[%s2 + $0x688] sm:$0xff]
      %v655 = vld [vmem:[%s2 + $0x690] sm:$0xff]
      %v656 = vld [vmem:[%s2 + $0x698] sm:$0xff]
      %v657 = vld [vmem:[%s2 + $0x6a0] sm:$0xff]
      %v658 = vld [vmem:[%s2 + $0x6a8] sm:$0xff]
      %v659 = vld [vmem:[%s2 + $0x6b0] sm:$0xff]
      %v660 = vld [vmem:[%s2 + $0x6b8] sm:$0xff]
      %v661 = vld [vmem:[%s2 + $0x6c0] sm:$0xff]
      %v662 = vld [vmem:[%s2 + $0x6c8] sm:$0xff]
      %v663 = vld [vmem:[%s2 + $0x6d0] sm:$0xff]
      %v664 = vld [vmem:[%s2 + $0x6d8] sm:$0xff]
      %v665 = vld [vmem:[%s2 + $0x6e0] sm:$0xff]
      %v666 = vld [vmem:[%s2 + $0x6e8] sm:$0xff]
      %v667 = vld [vmem:[%s2 + $0x6f0] sm:$0xff]
      %v668 = vld [vmem:[%s2 + $0x6f8] sm:$0xff]
      %v669 = vld [vmem:[%s2 + $0x700] sm:$0xff]
      %v670 = vld [vmem:[%s2 + $0x708] sm:$0xff]
      %v671 = vld [vmem:[%s2 + $0x710] sm:$0xff]
      %v672 = vld [vmem:[%s2 + $0x718] sm:$0xff]
      %v673 = vld [vmem:[%s2 + $0x720] sm:$0xff]
      %v674 = vld [vmem:[%s2 + $0x728] sm:$0xff]
      %v675 = vld [vmem:[%s2 + $0x730] sm:$0xff]
      %v676 = vld [vmem:[%s2 + $0x738] sm:$0xff]
      %v677 = vld [vmem:[%s2 + $0x740] sm:$0xff]
      %v678 = vld [vmem:[%s2 + $0x748] sm:$0xff]
      %v679 = vld [vmem:[%s2 + $0x750] sm:$0xff]
      %v680 = vld [vmem:[%s2 + $0x758] sm:$0xff]
      %v681 = vld [vmem:[%s2 + $0x760] sm:$0xff]
      %v682 = vld [vmem:[%s2 + $0x768] sm:$0xff]
      %v683 = vld [vmem:[%s2 + $0x770] sm:$0xff]
      %v684 = vld [vmem:[%s2 + $0x778] sm:$0xff]
      %v685 = vld [vmem:[%s2 + $0x780] sm:$0xff]
      %v686 = vld [vmem:[%s2 + $0x788] sm:$0xff]
      %v687 = vld [vmem:[%s2 + $0x790] sm:$0xff]
      %v688 = vld [vmem:[%s2 + $0x798] sm:$0xff]
      %v689 = vld [vmem:[%s2 + $0x7a0] sm:$0xff]
      %v690 = vld [vmem:[%s2 + $0x7a8] sm:$0xff]
      %v691 = vld [vmem:[%s2 + $0x7b0] sm:$0xff]
      %v692 = vld [vmem:[%s2 + $0x7b8] sm:$0xff]
      %v693 = vld [vmem:[%s2 + $0x7c0] sm:$0xff]
      %v694 = vld [vmem:[%s2 + $0x7c8] sm:$0xff]
      %v695 = vld [vmem:[%s2 + $0x7d0] sm:$0xff]
      %v696 = vld [vmem:[%s2 + $0x7d8] sm:$0xff]
      %v697 = vld [vmem:[%s2 + $0x7e0] sm:$0xff]
      %v698 = vld [vmem:[%s2 + $0x7e8] sm:$0xff]
      %v699 = vld [vmem:[%s2 + $0x7f0] sm:$0xff]
      %v700 = vld [vmem:[%s2 + $0x7f8] sm:$0xff]
      %v701 = vld [vmem:[%s2 + $0x800] sm:$0xff]
      %v702 = vld [vmem:[%s2 + $0x808] sm:$0xff]
      %v703 = vld [vmem:[%s2 + $0x810] sm:$0xff]
      %v704 = vld [vmem:[%s2 + $0x818] sm:$0xff]
      %v705 = vld [vmem:[%s2 + $0x820] sm:$0xff]
      %v706 = vld [vmem:[%s2 + $0x828] sm:$0xff]
      %v707 = vld [vmem:[%s2 + $0x830] sm:$0xff]
      %v708 = vld [vmem:[%s2 + $0x838] sm:$0xff]
      %v709 = vld [vmem:[%s2 + $0x840] sm:$0xff]
      %v710 = vld [vmem:[%s2 + $0x848] sm:$0xff]
      %v711 = vld [vmem:[%s2 + $0x850] sm:$0xff]
      %v712 = vld [vmem:[%s2 + $0x858] sm:$0xff]
      %v713 = vld [vmem:[%s2 + $0x860] sm:$0xff]
      %v714 = vld [vmem:[%s2 + $0x868] sm:$0xff]
      %v715 = vld [vmem:[%s2 + $0x870] sm:$0xff]
      %v716 = vld [vmem:[%s2 + $0x878] sm:$0xff]
      %v717 = vld [vmem:[%s2 + $0x880] sm:$0xff]
      %v718 = vld [vmem:[%s2 + $0x888] sm:$0xff]
      %v719 = vld [vmem:[%s2 + $0x890] sm:$0xff]
      %v720 = vld [vmem:[%s2 + $0x898] sm:$0xff]
      %v721 = vld [vmem:[%s2 + $0x8a0] sm:$0xff]
      %v722 = vld [vmem:[%s2 + $0x8a8] sm:$0xff]
      %v723 = vld [vmem:[%s2 + $0x8b0] sm:$0xff]
      %v724 = vld [vmem:[%s2 + $0x8b8] sm:$0xff]
      %v725 = vld [vmem:[%s2 + $0x8c0] sm:$0xff]
      %v726 = vld [vmem:[%s2 + $0x8c8] sm:$0xff]
      %v727 = vld [vmem:[%s2 + $0x8d0] sm:$0xff]
      %v728 = vld [vmem:[%s2 + $0x8d8] sm:$0xff]
      %v729 = vld [vmem:[%s2 + $0x8e0] sm:$0xff]
      %v730 = vld [vmem:[%s2 + $0x8e8] sm:$0xff]
      %v731 = vld [vmem:[%s2 + $0x8f0] sm:$0xff]
      %v732 = vld [vmem:[%s2 + $0x8f8] sm:$0xff]
      %v733 = vld [vmem:[%s2 + $0x900] sm:$0xff]
      %v734 = vld [vmem:[%s2 + $0x908] sm:$0xff]
      %v735 = vld [vmem:[%s2 + $0x910] sm:$0xff]
      %v736 = vld [vmem:[%s2 + $0x918] sm:$0xff]
      %v737 = vld [vmem:[%s2 + $0x920] sm:$0xff]
      %v738 = vld [vmem:[%s2 + $0x928] sm:$0xff]
      %v739 = vld [vmem:[%s2 + $0x930] sm:$0xff]
      %v740 = vld [vmem:[%s2 + $0x938] sm:$0xff]
      %v741 = vld [vmem:[%s2 + $0x940] sm:$0xff]
      %v742 = vld [vmem:[%s2 + $0x948] sm:$0xff]
      %v743 = vld [vmem:[%s2 + $0x950] sm:$0xff]
      %v744 = vld [vmem:[%s2 + $0x958] sm:$0xff]
      %v745 = vld [vmem:[%s2 + $0x960] sm:$0xff]
      %v746 = vld [vmem:[%s2 + $0x968] sm:$0xff]
      %v747 = vld [vmem:[%s2 + $0x970] sm:$0xff]
      %v748 = vld [vmem:[%s2 + $0x978] sm:$0xff]
      %v749 = vld [vmem:[%s2 + $0x980] sm:$0xff]
      %v750 = vld [vmem:[%s2 + $0x988] sm:$0xff]
      %v751 = vld [vmem:[%s2 + $0x990] sm:$0xff]
      %v752 = vld [vmem:[%s2 + $0x998] sm:$0xff]
      %v753 = vld [vmem:[%s2 + $0x9a0] sm:$0xff]
      %v754 = vld [vmem:[%s2 + $0x9a8] sm:$0xff]
      %v755 = vld [vmem:[%s2 + $0x9b0] sm:$0xff]
      %v756 = vld [vmem:[%s2 + $0x9b8] sm:$0xff]
      %v757 = vld [vmem:[%s2 + $0x9c0] sm:$0xff]
      %v758 = vld [vmem:[%s2 + $0x9c8] sm:$0xff]
      %v759 = vld [vmem:[%s2 + $0x9d0] sm:$0xff]
      %v760 = vld [vmem:[%s2 + $0x9d8] sm:$0xff]
      %v761 = vld [vmem:[%s2 + $0x9e0] sm:$0xff]
      %v762 = vld [vmem:[%s2 + $0x9e8] sm:$0xff]
      %v763 = vld [vmem:[%s2 + $0x9f0] sm:$0xff]
      %v764 = vld [vmem:[%s2 + $0x9f8] sm:$0xff]
      %v765 = vld [vmem:[%s2 + $0xa00] sm:$0xff]
      %v766 = vld [vmem:[%s2 + $0xa08] sm:$0xff]
      %v767 = vld [vmem:[%s2 + $0xa10] sm:$0xff]
      %v768 = vld [vmem:[%s2 + $0xa18] sm:$0xff]
      %v769 = vld [vmem:[%s2 + $0xa20] sm:$0xff]
      %v770 = vld [vmem:[%s2 + $0xa28] sm:$0xff]
      %v771 = vld [vmem:[%s2 + $0xa30] sm:$0xff]
      %v772 = vld [vmem:[%s2 + $0xa38] sm:$0xff]
      %v773 = vld [vmem:[%s2 + $0xa40] sm:$0xff]
      %v774 = vld [vmem:[%s2 + $0xa48] sm:$0xff]
      %v775 = vld [vmem:[%s2 + $0xa50] sm:$0xff]
      %v776 = vld [vmem:[%s2 + $0xa58] sm:$0xff]
      %v777 = vld [vmem:[%s2 + $0xa60] sm:$0xff]
      %v778 = vld [vmem:[%s2 + $0xa68] sm:$0xff]
      %v779 = vld [vmem:[%s2 + $0xa70] sm:$0xff]
      %v780 = vld [vmem:[%s2 + $0xa78] sm:$0xff]
      %v781 = vld [vmem:[%s2 + $0xa80] sm:$0xff]
      %v782 = vld [vmem:[%s2 + $0xa88] sm:$0xff]
      %v783 = vld [vmem:[%s2 + $0xa90] sm:$0xff]
      %v784 = vld [vmem:[%s2 + $0xa98] sm:$0xff]
      %v785 = vld [vmem:[%s2 + $0xaa0] sm:$0xff]
      %v786 = vld [vmem:[%s2 + $0xaa8] sm:$0xff]
      %v787 = vld [vmem:[%s2 + $0xab0] sm:$0xff]
      %v788 = vld [vmem:[%s2 + $0xab8] sm:$0xff]
      %v789 = vld [vmem:[%s2 + $0xac0] sm:$0xff]
      %v790 = vld [vmem:[%s2 + $0xac8] sm:$0xff]
      %v791 = vld [vmem:[%s2 + $0xad0] sm:$0xff]
      %v792 = vld [vmem:[%s2 + $0xad8] sm:$0xff]
      %v793 = vld [vmem:[%s2 + $0xae0] sm:$0xff]
      %v794 = vld [vmem:[%s2 + $0xae8] sm:$0xff]
      %v795 = vld [vmem:[%s2 + $0xaf0] sm:$0xff]
      %v796 = vld [vmem:[%s2 + $0xaf8] sm:$0xff]
      %v797 = vld [vmem:[%s2 + $0xb00] sm:$0xff]
      %v798 = vld [vmem:[%s2 + $0xb08] sm:$0xff]
      %v799 = vld [vmem:[%s2 + $0xb10] sm:$0xff]
      %v800 = vld [vmem:[%s2 + $0xb18] sm:$0xff]
      %v801 = vld [vmem:[%s2 + $0xb20] sm:$0xff]
      %v802 = vld [vmem:[%s2 + $0xb28] sm:$0xff]
      %v803 = vld [vmem:[%s2 + $0xb30] sm:$0xff]
      %v804 = vld [vmem:[%s2 + $0xb38] sm:$0xff]
      %v805 = vld [vmem:[%s2 + $0xb40] sm:$0xff]
      %v806 = vld [vmem:[%s2 + $0xb48] sm:$0xff]
      %v807 = vld [vmem:[%s2 + $0xb50] sm:$0xff]
      %v808 = vld [vmem:[%s2 + $0xb58] sm:$0xff]
      %v809 = vld [vmem:[%s2 + $0xb60] sm:$0xff]
      %v810 = vld [vmem:[%s2 + $0xb68] sm:$0xff]
      %v811 = vld [vmem:[%s2 + $0xb70] sm:$0xff]
      %v812 = vld [vmem:[%s2 + $0xb78] sm:$0xff]
      %v813 = vld [vmem:[%s2 + $0xb80] sm:$0xff]
      %v814 = vld [vmem:[%s2 + $0xb88] sm:$0xff]
      %v815 = vld [vmem:[%s2 + $0xb90] sm:$0xff]
      %v816 = vld [vmem:[%s2 + $0xb98] sm:$0xff]
      %v817 = vld [vmem:[%s2 + $0xba0] sm:$0xff]
      %v818 = vld [vmem:[%s2 + $0xba8] sm:$0xff]
      %v819 = vld [vmem:[%s2 + $0xbb0] sm:$0xff]
      %v820 = vld [vmem:[%s2 + $0xbb8] sm:$0xff]
      %v821 = vld [vmem:[%s2 + $0xbc0] sm:$0xff]
      %v822 = vld [vmem:[%s2 + $0xbc8] sm:$0xff]
      %v823 = vld [vmem:[%s2 + $0xbd0] sm:$0xff]
      %v824 = vld [vmem:[%s2 + $0xbd8] sm:$0xff]
      %v825 = vld [vmem:[%s2 + $0xbe0] sm:$0xff]
      %v826 = vld [vmem:[%s2 + $0xbe8] sm:$0xff]
      %v827 = vld [vmem:[%s2 + $0xbf0] sm:$0xff]
      %v828 = vld [vmem:[%s2 + $0xbf8] sm:$0xff]
      %v829 = vld [vmem:[%s4] sm:$0xff]
      %v831 = vlaneseq
      %v832 = vshrl.u32 %v831, 7
      %v833 = vsub.s32 0, %v832
      %v834 = vrot.slane %v829, %v833
      %v835 = vlaneseq
      %v836 = vshrl.u32 %v835, 7
      %v837 = vsub.s32 1, %v836
      %v838 = vrot.slane %v829, %v837
      %v839 = vlaneseq
      %v840 = vshrl.u32 %v839, 7
      %v841 = vsub.s32 2, %v840
      %v842 = vrot.slane %v829, %v841
      %v843 = vlaneseq
      %v844 = vshrl.u32 %v843, 7
      %v845 = vsub.s32 3, %v844
      %v846 = vrot.slane %v829, %v845
      %v847 = vlaneseq
      %v848 = vshrl.u32 %v847, 7
      %v849 = vsub.s32 4, %v848
      %v850 = vrot.slane %v829, %v849
      %v851 = vlaneseq
      %v852 = vshrl.u32 %v851, 7
      %v853 = vsub.s32 5, %v852
      %v854 = vrot.slane %v829, %v853
      %v855 = vlaneseq
      %v856 = vshrl.u32 %v855, 7
      %v857 = vsub.s32 6, %v856
      %v858 = vrot.slane %v829, %v857
      %v859 = vlaneseq
      %v860 = vshrl.u32 %v859, 7
      %v861 = vsub.s32 7, %v860
      %v862 = vrot.slane %v829, %v861
      %v883 = vunpack.c.l.b16 %v421
      %v884 = vunpack.c.h.b16 %v421
      %v885 = vunpack.c.l.b16 %v422
      %v886 = vunpack.c.h.b16 %v422
      %v887 = vunpack.c.l.b16 %v423
      %v888 = vunpack.c.h.b16 %v423
      %v889 = vunpack.c.l.b16 %v424
      %v890 = vunpack.c.h.b16 %v424
      %v891 = vunpack.c.l.b16 %v425
      %v892 = vunpack.c.h.b16 %v425
      %v893 = vunpack.c.l.b16 %v426
      %v894 = vunpack.c.h.b16 %v426
      %v895 = vunpack.c.l.b16 %v427
      %v896 = vunpack.c.h.b16 %v427
      %v897 = vunpack.c.l.b16 %v428
      %v898 = vunpack.c.h.b16 %v428
      %v899 = vunpack.c.l.b16 %v429
      %v900 = vunpack.c.h.b16 %v429
      %v901 = vunpack.c.l.b16 %v430
      %v902 = vunpack.c.h.b16 %v430
      %v903 = vunpack.c.l.b16 %v431
      %v904 = vunpack.c.h.b16 %v431
      %v905 = vunpack.c.l.b16 %v432
      %v906 = vunpack.c.h.b16 %v432
      %v907 = vpack.c.b16 %v889, %v883
      %v908 = vpack.c.b16 %v890, %v884
      %v909 = vpack.c.b16 %v891, %v885
      %v910 = vpack.c.b16 %v892, %v886
      %v911 = vpack.c.b16 %v893, %v887
      %v912 = vpack.c.b16 %v894, %v888
      %v913 = vpack.c.b16 %v901, %v895
      %v914 = vpack.c.b16 %v902, %v896
      %v915 = vpack.c.b16 %v903, %v897
      %v916 = vpack.c.b16 %v904, %v898
      %v917 = vpack.c.b16 %v905, %v899
      %v918 = vpack.c.b16 %v906, %v900
      %v1315 = vunpack.c.l.b16 %v445
      %v1316 = vunpack.c.h.b16 %v445
      %v1317 = vunpack.c.l.b16 %v446
      %v1318 = vunpack.c.h.b16 %v446
      %v1319 = vunpack.c.l.b16 %v447
      %v1320 = vunpack.c.h.b16 %v447
      %v1321 = vunpack.c.l.b16 %v448
      %v1322 = vunpack.c.h.b16 %v448
      %v1323 = vunpack.c.l.b16 %v449
      %v1324 = vunpack.c.h.b16 %v449
      %v1325 = vunpack.c.l.b16 %v450
      %v1326 = vunpack.c.h.b16 %v450
      %v1327 = vunpack.c.l.b16 %v451
      %v1328 = vunpack.c.h.b16 %v451
      %v1329 = vunpack.c.l.b16 %v452
      %v1330 = vunpack.c.h.b16 %v452
      %v1331 = vunpack.c.l.b16 %v453
      %v1332 = vunpack.c.h.b16 %v453
      %v1333 = vunpack.c.l.b16 %v454
      %v1334 = vunpack.c.h.b16 %v454
      %v1335 = vunpack.c.l.b16 %v455
      %v1336 = vunpack.c.h.b16 %v455
      %v1337 = vunpack.c.l.b16 %v456
      %v1338 = vunpack.c.h.b16 %v456
      %v1339 = vunpack.c.l.b16 %v457
      %v1340 = vunpack.c.h.b16 %v457
      %v1341 = vunpack.c.l.b16 %v458
      %v1342 = vunpack.c.h.b16 %v458
      %v1343 = vunpack.c.l.b16 %v459
      %v1344 = vunpack.c.h.b16 %v459
      %v1345 = vunpack.c.l.b16 %v460
      %v1346 = vunpack.c.h.b16 %v460
      %v1347 = vunpack.c.l.b16 %v461
      %v1348 = vunpack.c.h.b16 %v461
      %v1349 = vunpack.c.l.b16 %v462
      %v1350 = vunpack.c.h.b16 %v462
      %v1351 = vunpack.c.l.b16 %v463
      %v1352 = vunpack.c.h.b16 %v463
      %v1353 = vunpack.c.l.b16 %v464
      %v1354 = vunpack.c.h.b16 %v464
      %v1355 = vunpack.c.l.b16 %v465
      %v1356 = vunpack.c.h.b16 %v465
      %v1357 = vunpack.c.l.b16 %v466
      %v1358 = vunpack.c.h.b16 %v466
      %v1359 = vunpack.c.l.b16 %v467
      %v1360 = vunpack.c.h.b16 %v467
      %v1361 = vunpack.c.l.b16 %v468
      %v1362 = vunpack.c.h.b16 %v468
      %v1363 = vunpack.c.l.b16 %v469
      %v1364 = vunpack.c.h.b16 %v469
      %v1365 = vunpack.c.l.b16 %v470
      %v1366 = vunpack.c.h.b16 %v470
      %v1367 = vunpack.c.l.b16 %v471
      %v1368 = vunpack.c.h.b16 %v471
      %v1369 = vunpack.c.l.b16 %v472
      %v1370 = vunpack.c.h.b16 %v472
      %v1371 = vunpack.c.l.b16 %v473
      %v1372 = vunpack.c.h.b16 %v473
      %v1373 = vunpack.c.l.b16 %v474
      %v1374 = vunpack.c.h.b16 %v474
      %v1375 = vunpack.c.l.b16 %v475
      %v1376 = vunpack.c.h.b16 %v475
      %v1377 = vunpack.c.l.b16 %v476
      %v1378 = vunpack.c.h.b16 %v476
      %v1379 = vunpack.c.l.b16 %v477
      %v1380 = vunpack.c.h.b16 %v477
      %v1381 = vunpack.c.l.b16 %v478
      %v1382 = vunpack.c.h.b16 %v478
      %v1383 = vunpack.c.l.b16 %v479
      %v1384 = vunpack.c.h.b16 %v479
      %v1385 = vunpack.c.l.b16 %v480
      %v1386 = vunpack.c.h.b16 %v480
      %v1387 = vunpack.c.l.b16 %v481
      %v1388 = vunpack.c.h.b16 %v481
      %v1389 = vunpack.c.l.b16 %v482
      %v1390 = vunpack.c.h.b16 %v482
      %v1391 = vunpack.c.l.b16 %v483
      %v1392 = vunpack.c.h.b16 %v483
      %v1393 = vunpack.c.l.b16 %v484
      %v1394 = vunpack.c.h.b16 %v484
      %v1395 = vunpack.c.l.b16 %v485
      %v1396 = vunpack.c.h.b16 %v485
      %v1397 = vunpack.c.l.b16 %v486
      %v1398 = vunpack.c.h.b16 %v486
      %v1399 = vunpack.c.l.b16 %v487
      %v1400 = vunpack.c.h.b16 %v487
      %v1401 = vunpack.c.l.b16 %v488
      %v1402 = vunpack.c.h.b16 %v488
      %v1403 = vunpack.c.l.b16 %v489
      %v1404 = vunpack.c.h.b16 %v489
      %v1405 = vunpack.c.l.b16 %v490
      %v1406 = vunpack.c.h.b16 %v490
      %v1407 = vunpack.c.l.b16 %v491
      %v1408 = vunpack.c.h.b16 %v491
      %v1409 = vunpack.c.l.b16 %v492
      %v1410 = vunpack.c.h.b16 %v492
      %v1411 = vunpack.c.l.b16 %v493
      %v1412 = vunpack.c.h.b16 %v493
      %v1413 = vunpack.c.l.b16 %v494
      %v1414 = vunpack.c.h.b16 %v494
      %v1415 = vunpack.c.l.b16 %v495
      %v1416 = vunpack.c.h.b16 %v495
      %v1417 = vunpack.c.l.b16 %v496
      %v1418 = vunpack.c.h.b16 %v496
      %v1419 = vunpack.c.l.b16 %v497
      %v1420 = vunpack.c.h.b16 %v497
      %v1421 = vunpack.c.l.b16 %v498
      %v1422 = vunpack.c.h.b16 %v498
      %v1423 = vunpack.c.l.b16 %v499
      %v1424 = vunpack.c.h.b16 %v499
      %v1425 = vunpack.c.l.b16 %v500
      %v1426 = vunpack.c.h.b16 %v500
      %v1427 = vunpack.c.l.b16 %v501
      %v1428 = vunpack.c.h.b16 %v501
      %v1429 = vunpack.c.l.b16 %v502
      %v1430 = vunpack.c.h.b16 %v502
      %v1431 = vunpack.c.l.b16 %v503
      %v1432 = vunpack.c.h.b16 %v503
      %v1433 = vunpack.c.l.b16 %v504
      %v1434 = vunpack.c.h.b16 %v504
      %v1435 = vunpack.c.l.b16 %v505
      %v1436 = vunpack.c.h.b16 %v505
      %v1437 = vunpack.c.l.b16 %v506
      %v1438 = vunpack.c.h.b16 %v506
      %v1439 = vunpack.c.l.b16 %v507
      %v1440 = vunpack.c.h.b16 %v507
      %v1441 = vunpack.c.l.b16 %v508
      %v1442 = vunpack.c.h.b16 %v508
      %v1443 = vunpack.c.l.b16 %v509
      %v1444 = vunpack.c.h.b16 %v509
      %v1445 = vunpack.c.l.b16 %v510
      %v1446 = vunpack.c.h.b16 %v510
      %v1447 = vunpack.c.l.b16 %v511
      %v1448 = vunpack.c.h.b16 %v511
      %v1449 = vunpack.c.l.b16 %v512
      %v1450 = vunpack.c.h.b16 %v512
      %v1451 = vunpack.c.l.b16 %v513
      %v1452 = vunpack.c.h.b16 %v513
      %v1453 = vunpack.c.l.b16 %v514
      %v1454 = vunpack.c.h.b16 %v514
      %v1455 = vunpack.c.l.b16 %v515
      %v1456 = vunpack.c.h.b16 %v515
      %v1457 = vunpack.c.l.b16 %v516
      %v1458 = vunpack.c.h.b16 %v516
      %v1459 = vunpack.c.l.b16 %v517
      %v1460 = vunpack.c.h.b16 %v517
      %v1461 = vunpack.c.l.b16 %v518
      %v1462 = vunpack.c.h.b16 %v518
      %v1463 = vunpack.c.l.b16 %v519
      %v1464 = vunpack.c.h.b16 %v519
      %v1465 = vunpack.c.l.b16 %v520
      %v1466 = vunpack.c.h.b16 %v520
      %v1467 = vunpack.c.l.b16 %v521
      %v1468 = vunpack.c.h.b16 %v521
      %v1469 = vunpack.c.l.b16 %v522
      %v1470 = vunpack.c.h.b16 %v522
      %v1471 = vunpack.c.l.b16 %v523
      %v1472 = vunpack.c.h.b16 %v523
      %v1473 = vunpack.c.l.b16 %v524
      %v1474 = vunpack.c.h.b16 %v524
      %v1475 = vunpack.c.l.b16 %v525
      %v1476 = vunpack.c.h.b16 %v525
      %v1477 = vunpack.c.l.b16 %v526
      %v1478 = vunpack.c.h.b16 %v526
      %v1479 = vunpack.c.l.b16 %v527
      %v1480 = vunpack.c.h.b16 %v527
      %v1481 = vunpack.c.l.b16 %v528
      %v1482 = vunpack.c.h.b16 %v528
      %v1483 = vunpack.c.l.b16 %v529
      %v1484 = vunpack.c.h.b16 %v529
      %v1485 = vunpack.c.l.b16 %v530
      %v1486 = vunpack.c.h.b16 %v530
      %v1487 = vunpack.c.l.b16 %v531
      %v1488 = vunpack.c.h.b16 %v531
      %v1489 = vunpack.c.l.b16 %v532
      %v1490 = vunpack.c.h.b16 %v532
      %v1491 = vunpack.c.l.b16 %v533
      %v1492 = vunpack.c.h.b16 %v533
      %v1493 = vunpack.c.l.b16 %v534
      %v1494 = vunpack.c.h.b16 %v534
      %v1495 = vunpack.c.l.b16 %v535
      %v1496 = vunpack.c.h.b16 %v535
      %v1497 = vunpack.c.l.b16 %v536
      %v1498 = vunpack.c.h.b16 %v536
      %v1499 = vunpack.c.l.b16 %v537
      %v1500 = vunpack.c.h.b16 %v537
      %v1501 = vunpack.c.l.b16 %v538
      %v1502 = vunpack.c.h.b16 %v538
      %v1503 = vunpack.c.l.b16 %v539
      %v1504 = vunpack.c.h.b16 %v539
      %v1505 = vunpack.c.l.b16 %v540
      %v1506 = vunpack.c.h.b16 %v540
      %v1507 = vunpack.c.l.b16 %v541
      %v1508 = vunpack.c.h.b16 %v541
      %v1509 = vunpack.c.l.b16 %v542
      %v1510 = vunpack.c.h.b16 %v542
      %v1511 = vunpack.c.l.b16 %v543
      %v1512 = vunpack.c.h.b16 %v543
      %v1513 = vunpack.c.l.b16 %v544
      %v1514 = vunpack.c.h.b16 %v544
      %v1515 = vunpack.c.l.b16 %v545
      %v1516 = vunpack.c.h.b16 %v545
      %v1517 = vunpack.c.l.b16 %v546
      %v1518 = vunpack.c.h.b16 %v546
      %v1519 = vunpack.c.l.b16 %v547
      %v1520 = vunpack.c.h.b16 %v547
      %v1521 = vunpack.c.l.b16 %v548
      %v1522 = vunpack.c.h.b16 %v548
      %v1523 = vunpack.c.l.b16 %v549
      %v1524 = vunpack.c.h.b16 %v549
      %v1525 = vunpack.c.l.b16 %v550
      %v1526 = vunpack.c.h.b16 %v550
      %v1527 = vunpack.c.l.b16 %v551
      %v1528 = vunpack.c.h.b16 %v551
      %v1529 = vunpack.c.l.b16 %v552
      %v1530 = vunpack.c.h.b16 %v552
      %v1531 = vunpack.c.l.b16 %v553
      %v1532 = vunpack.c.h.b16 %v553
      %v1533 = vunpack.c.l.b16 %v554
      %v1534 = vunpack.c.h.b16 %v554
      %v1535 = vunpack.c.l.b16 %v555
      %v1536 = vunpack.c.h.b16 %v555
      %v1537 = vunpack.c.l.b16 %v556
      %v1538 = vunpack.c.h.b16 %v556
      %v1539 = vunpack.c.l.b16 %v557
      %v1540 = vunpack.c.h.b16 %v557
      %v1541 = vunpack.c.l.b16 %v558
      %v1542 = vunpack.c.h.b16 %v558
      %v1543 = vunpack.c.l.b16 %v559
      %v1544 = vunpack.c.h.b16 %v559
      %v1545 = vunpack.c.l.b16 %v560
      %v1546 = vunpack.c.h.b16 %v560
      %v1547 = vunpack.c.l.b16 %v561
      %v1548 = vunpack.c.h.b16 %v561
      %v1549 = vunpack.c.l.b16 %v562
      %v1550 = vunpack.c.h.b16 %v562
      %v1551 = vunpack.c.l.b16 %v563
      %v1552 = vunpack.c.h.b16 %v563
      %v1553 = vunpack.c.l.b16 %v564
      %v1554 = vunpack.c.h.b16 %v564
      %v1555 = vunpack.c.l.b16 %v565
      %v1556 = vunpack.c.h.b16 %v565
      %v1557 = vunpack.c.l.b16 %v566
      %v1558 = vunpack.c.h.b16 %v566
      %v1559 = vunpack.c.l.b16 %v567
      %v1560 = vunpack.c.h.b16 %v567
      %v1561 = vunpack.c.l.b16 %v568
      %v1562 = vunpack.c.h.b16 %v568
      %v1563 = vunpack.c.l.b16 %v569
      %v1564 = vunpack.c.h.b16 %v569
      %v1565 = vunpack.c.l.b16 %v570
      %v1566 = vunpack.c.h.b16 %v570
      %v1567 = vunpack.c.l.b16 %v571
      %v1568 = vunpack.c.h.b16 %v571
      %v1569 = vunpack.c.l.b16 %v572
      %v1570 = vunpack.c.h.b16 %v572
      %v1571 = vunpack.c.l.b16 %v573
      %v1572 = vunpack.c.h.b16 %v573
      %v1573 = vunpack.c.l.b16 %v574
      %v1574 = vunpack.c.h.b16 %v574
      %v1575 = vunpack.c.l.b16 %v575
      %v1576 = vunpack.c.h.b16 %v575
      %v1577 = vunpack.c.l.b16 %v576
      %v1578 = vunpack.c.h.b16 %v576
      %v1579 = vunpack.c.l.b16 %v577
      %v1580 = vunpack.c.h.b16 %v577
      %v1581 = vunpack.c.l.b16 %v578
      %v1582 = vunpack.c.h.b16 %v578
      %v1583 = vunpack.c.l.b16 %v579
      %v1584 = vunpack.c.h.b16 %v579
      %v1585 = vunpack.c.l.b16 %v580
      %v1586 = vunpack.c.h.b16 %v580
      %v1587 = vunpack.c.l.b16 %v581
      %v1588 = vunpack.c.h.b16 %v581
      %v1589 = vunpack.c.l.b16 %v582
      %v1590 = vunpack.c.h.b16 %v582
      %v1591 = vunpack.c.l.b16 %v583
      %v1592 = vunpack.c.h.b16 %v583
      %v1593 = vunpack.c.l.b16 %v584
      %v1594 = vunpack.c.h.b16 %v584
      %v1595 = vunpack.c.l.b16 %v585
      %v1596 = vunpack.c.h.b16 %v585
      %v1597 = vunpack.c.l.b16 %v586
      %v1598 = vunpack.c.h.b16 %v586
      %v1599 = vunpack.c.l.b16 %v587
      %v1600 = vunpack.c.h.b16 %v587
      %v1601 = vunpack.c.l.b16 %v588
      %v1602 = vunpack.c.h.b16 %v588
      %v1603 = vunpack.c.l.b16 %v589
      %v1604 = vunpack.c.h.b16 %v589
      %v1605 = vunpack.c.l.b16 %v590
      %v1606 = vunpack.c.h.b16 %v590
      %v1607 = vunpack.c.l.b16 %v591
      %v1608 = vunpack.c.h.b16 %v591
      %v1609 = vunpack.c.l.b16 %v592
      %v1610 = vunpack.c.h.b16 %v592
      %v1611 = vunpack.c.l.b16 %v593
      %v1612 = vunpack.c.h.b16 %v593
      %v1613 = vunpack.c.l.b16 %v594
      %v1614 = vunpack.c.h.b16 %v594
      %v1615 = vunpack.c.l.b16 %v595
      %v1616 = vunpack.c.h.b16 %v595
      %v1617 = vunpack.c.l.b16 %v596
      %v1618 = vunpack.c.h.b16 %v596
      %v1619 = vunpack.c.l.b16 %v597
      %v1620 = vunpack.c.h.b16 %v597
      %v1621 = vunpack.c.l.b16 %v598
      %v1622 = vunpack.c.h.b16 %v598
      %v1623 = vunpack.c.l.b16 %v599
      %v1624 = vunpack.c.h.b16 %v599
      %v1625 = vunpack.c.l.b16 %v600
      %v1626 = vunpack.c.h.b16 %v600
      %v1627 = vunpack.c.l.b16 %v601
      %v1628 = vunpack.c.h.b16 %v601
      %v1629 = vunpack.c.l.b16 %v602
      %v1630 = vunpack.c.h.b16 %v602
      %v1631 = vunpack.c.l.b16 %v603
      %v1632 = vunpack.c.h.b16 %v603
      %v1633 = vunpack.c.l.b16 %v604
      %v1634 = vunpack.c.h.b16 %v604
      %v1635 = vunpack.c.l.b16 %v605
      %v1636 = vunpack.c.h.b16 %v605
      %v1637 = vunpack.c.l.b16 %v606
      %v1638 = vunpack.c.h.b16 %v606
      %v1639 = vunpack.c.l.b16 %v607
      %v1640 = vunpack.c.h.b16 %v607
      %v1641 = vunpack.c.l.b16 %v608
      %v1642 = vunpack.c.h.b16 %v608
      %v1643 = vunpack.c.l.b16 %v609
      %v1644 = vunpack.c.h.b16 %v609
      %v1645 = vunpack.c.l.b16 %v610
      %v1646 = vunpack.c.h.b16 %v610
      %v1647 = vunpack.c.l.b16 %v611
      %v1648 = vunpack.c.h.b16 %v611
      %v1649 = vunpack.c.l.b16 %v612
      %v1650 = vunpack.c.h.b16 %v612
      %v1651 = vunpack.c.l.b16 %v613
      %v1652 = vunpack.c.h.b16 %v613
      %v1653 = vunpack.c.l.b16 %v614
      %v1654 = vunpack.c.h.b16 %v614
      %v1655 = vunpack.c.l.b16 %v615
      %v1656 = vunpack.c.h.b16 %v615
      %v1657 = vunpack.c.l.b16 %v616
      %v1658 = vunpack.c.h.b16 %v616
      %v1659 = vunpack.c.l.b16 %v617
      %v1660 = vunpack.c.h.b16 %v617
      %v1661 = vunpack.c.l.b16 %v618
      %v1662 = vunpack.c.h.b16 %v618
      %v1663 = vunpack.c.l.b16 %v619
      %v1664 = vunpack.c.h.b16 %v619
      %v1665 = vunpack.c.l.b16 %v620
      %v1666 = vunpack.c.h.b16 %v620
      %v1667 = vunpack.c.l.b16 %v621
      %v1668 = vunpack.c.h.b16 %v621
      %v1669 = vunpack.c.l.b16 %v622
      %v1670 = vunpack.c.h.b16 %v622
      %v1671 = vunpack.c.l.b16 %v623
      %v1672 = vunpack.c.h.b16 %v623
      %v1673 = vunpack.c.l.b16 %v624
      %v1674 = vunpack.c.h.b16 %v624
      %v1675 = vunpack.c.l.b16 %v625
      %v1676 = vunpack.c.h.b16 %v625
      %v1677 = vunpack.c.l.b16 %v626
      %v1678 = vunpack.c.h.b16 %v626
      %v1679 = vunpack.c.l.b16 %v627
      %v1680 = vunpack.c.h.b16 %v627
      %v1681 = vunpack.c.l.b16 %v628
      %v1682 = vunpack.c.h.b16 %v628
      %v1683 = vunpack.c.l.b16 %v629
      %v1684 = vunpack.c.h.b16 %v629
      %v1685 = vunpack.c.l.b16 %v630
      %v1686 = vunpack.c.h.b16 %v630
      %v1687 = vunpack.c.l.b16 %v631
      %v1688 = vunpack.c.h.b16 %v631
      %v1689 = vunpack.c.l.b16 %v632
      %v1690 = vunpack.c.h.b16 %v632
      %v1691 = vunpack.c.l.b16 %v633
      %v1692 = vunpack.c.h.b16 %v633
      %v1693 = vunpack.c.l.b16 %v634
      %v1694 = vunpack.c.h.b16 %v634
      %v1695 = vunpack.c.l.b16 %v635
      %v1696 = vunpack.c.h.b16 %v635
      %v1697 = vunpack.c.l.b16 %v636
      %v1698 = vunpack.c.h.b16 %v636
      %v1699 = vunpack.c.l.b16 %v637
      %v1700 = vunpack.c.h.b16 %v637
      %v1701 = vunpack.c.l.b16 %v638
      %v1702 = vunpack.c.h.b16 %v638
      %v1703 = vunpack.c.l.b16 %v639
      %v1704 = vunpack.c.h.b16 %v639
      %v1705 = vunpack.c.l.b16 %v640
      %v1706 = vunpack.c.h.b16 %v640
      %v1707 = vunpack.c.l.b16 %v641
      %v1708 = vunpack.c.h.b16 %v641
      %v1709 = vunpack.c.l.b16 %v642
      %v1710 = vunpack.c.h.b16 %v642
      %v1711 = vunpack.c.l.b16 %v643
      %v1712 = vunpack.c.h.b16 %v643
      %v1713 = vunpack.c.l.b16 %v644
      %v1714 = vunpack.c.h.b16 %v644
      %v1715 = vunpack.c.l.b16 %v645
      %v1716 = vunpack.c.h.b16 %v645
      %v1717 = vunpack.c.l.b16 %v646
      %v1718 = vunpack.c.h.b16 %v646
      %v1719 = vunpack.c.l.b16 %v647
      %v1720 = vunpack.c.h.b16 %v647
      %v1721 = vunpack.c.l.b16 %v648
      %v1722 = vunpack.c.h.b16 %v648
      %v1723 = vunpack.c.l.b16 %v649
      %v1724 = vunpack.c.h.b16 %v649
      %v1725 = vunpack.c.l.b16 %v650
      %v1726 = vunpack.c.h.b16 %v650
      %v1727 = vunpack.c.l.b16 %v651
      %v1728 = vunpack.c.h.b16 %v651
      %v1729 = vunpack.c.l.b16 %v652
      %v1730 = vunpack.c.h.b16 %v652
      %v1731 = vunpack.c.l.b16 %v653
      %v1732 = vunpack.c.h.b16 %v653
      %v1733 = vunpack.c.l.b16 %v654
      %v1734 = vunpack.c.h.b16 %v654
      %v1735 = vunpack.c.l.b16 %v655
      %v1736 = vunpack.c.h.b16 %v655
      %v1737 = vunpack.c.l.b16 %v656
      %v1738 = vunpack.c.h.b16 %v656
      %v1739 = vunpack.c.l.b16 %v657
      %v1740 = vunpack.c.h.b16 %v657
      %v1741 = vunpack.c.l.b16 %v658
      %v1742 = vunpack.c.h.b16 %v658
      %v1743 = vunpack.c.l.b16 %v659
      %v1744 = vunpack.c.h.b16 %v659
      %v1745 = vunpack.c.l.b16 %v660
      %v1746 = vunpack.c.h.b16 %v660
      %v1747 = vunpack.c.l.b16 %v661
      %v1748 = vunpack.c.h.b16 %v661
      %v1749 = vunpack.c.l.b16 %v662
      %v1750 = vunpack.c.h.b16 %v662
      %v1751 = vunpack.c.l.b16 %v663
      %v1752 = vunpack.c.h.b16 %v663
      %v1753 = vunpack.c.l.b16 %v664
      %v1754 = vunpack.c.h.b16 %v664
      %v1755 = vunpack.c.l.b16 %v665
      %v1756 = vunpack.c.h.b16 %v665
      %v1757 = vunpack.c.l.b16 %v666
      %v1758 = vunpack.c.h.b16 %v666
      %v1759 = vunpack.c.l.b16 %v667
      %v1760 = vunpack.c.h.b16 %v667
      %v1761 = vunpack.c.l.b16 %v668
      %v1762 = vunpack.c.h.b16 %v668
      %v1763 = vunpack.c.l.b16 %v669
      %v1764 = vunpack.c.h.b16 %v669
      %v1765 = vunpack.c.l.b16 %v670
      %v1766 = vunpack.c.h.b16 %v670
      %v1767 = vunpack.c.l.b16 %v671
      %v1768 = vunpack.c.h.b16 %v671
      %v1769 = vunpack.c.l.b16 %v672
      %v1770 = vunpack.c.h.b16 %v672
      %v1771 = vunpack.c.l.b16 %v673
      %v1772 = vunpack.c.h.b16 %v673
      %v1773 = vunpack.c.l.b16 %v674
      %v1774 = vunpack.c.h.b16 %v674
      %v1775 = vunpack.c.l.b16 %v675
      %v1776 = vunpack.c.h.b16 %v675
      %v1777 = vunpack.c.l.b16 %v676
      %v1778 = vunpack.c.h.b16 %v676
      %v1779 = vunpack.c.l.b16 %v677
      %v1780 = vunpack.c.h.b16 %v677
      %v1781 = vunpack.c.l.b16 %v678
      %v1782 = vunpack.c.h.b16 %v678
      %v1783 = vunpack.c.l.b16 %v679
      %v1784 = vunpack.c.h.b16 %v679
      %v1785 = vunpack.c.l.b16 %v680
      %v1786 = vunpack.c.h.b16 %v680
      %v1787 = vunpack.c.l.b16 %v681
      %v1788 = vunpack.c.h.b16 %v681
      %v1789 = vunpack.c.l.b16 %v682
      %v1790 = vunpack.c.h.b16 %v682
      %v1791 = vunpack.c.l.b16 %v683
      %v1792 = vunpack.c.h.b16 %v683
      %v1793 = vunpack.c.l.b16 %v684
      %v1794 = vunpack.c.h.b16 %v684
      %v1795 = vunpack.c.l.b16 %v685
      %v1796 = vunpack.c.h.b16 %v685
      %v1797 = vunpack.c.l.b16 %v686
      %v1798 = vunpack.c.h.b16 %v686
      %v1799 = vunpack.c.l.b16 %v687
      %v1800 = vunpack.c.h.b16 %v687
      %v1801 = vunpack.c.l.b16 %v688
      %v1802 = vunpack.c.h.b16 %v688
      %v1803 = vunpack.c.l.b16 %v689
      %v1804 = vunpack.c.h.b16 %v689
      %v1805 = vunpack.c.l.b16 %v690
      %v1806 = vunpack.c.h.b16 %v690
      %v1807 = vunpack.c.l.b16 %v691
      %v1808 = vunpack.c.h.b16 %v691
      %v1809 = vunpack.c.l.b16 %v692
      %v1810 = vunpack.c.h.b16 %v692
      %v1811 = vunpack.c.l.b16 %v693
      %v1812 = vunpack.c.h.b16 %v693
      %v1813 = vunpack.c.l.b16 %v694
      %v1814 = vunpack.c.h.b16 %v694
      %v1815 = vunpack.c.l.b16 %v695
      %v1816 = vunpack.c.h.b16 %v695
      %v1817 = vunpack.c.l.b16 %v696
      %v1818 = vunpack.c.h.b16 %v696
      %v1819 = vunpack.c.l.b16 %v697
      %v1820 = vunpack.c.h.b16 %v697
      %v1821 = vunpack.c.l.b16 %v698
      %v1822 = vunpack.c.h.b16 %v698
      %v1823 = vunpack.c.l.b16 %v699
      %v1824 = vunpack.c.h.b16 %v699
      %v1825 = vunpack.c.l.b16 %v700
      %v1826 = vunpack.c.h.b16 %v700
      %v1827 = vunpack.c.l.b16 %v701
      %v1828 = vunpack.c.h.b16 %v701
      %v1829 = vunpack.c.l.b16 %v702
      %v1830 = vunpack.c.h.b16 %v702
      %v1831 = vunpack.c.l.b16 %v703
      %v1832 = vunpack.c.h.b16 %v703
      %v1833 = vunpack.c.l.b16 %v704
      %v1834 = vunpack.c.h.b16 %v704
      %v1835 = vunpack.c.l.b16 %v705
      %v1836 = vunpack.c.h.b16 %v705
      %v1837 = vunpack.c.l.b16 %v706
      %v1838 = vunpack.c.h.b16 %v706
      %v1839 = vunpack.c.l.b16 %v707
      %v1840 = vunpack.c.h.b16 %v707
      %v1841 = vunpack.c.l.b16 %v708
      %v1842 = vunpack.c.h.b16 %v708
      %v1843 = vunpack.c.l.b16 %v709
      %v1844 = vunpack.c.h.b16 %v709
      %v1845 = vunpack.c.l.b16 %v710
      %v1846 = vunpack.c.h.b16 %v710
      %v1847 = vunpack.c.l.b16 %v711
      %v1848 = vunpack.c.h.b16 %v711
      %v1849 = vunpack.c.l.b16 %v712
      %v1850 = vunpack.c.h.b16 %v712
      %v1851 = vunpack.c.l.b16 %v713
      %v1852 = vunpack.c.h.b16 %v713
      %v1853 = vunpack.c.l.b16 %v714
      %v1854 = vunpack.c.h.b16 %v714
      %v1855 = vunpack.c.l.b16 %v715
      %v1856 = vunpack.c.h.b16 %v715
      %v1857 = vunpack.c.l.b16 %v716
      %v1858 = vunpack.c.h.b16 %v716
      %v1859 = vunpack.c.l.b16 %v717
      %v1860 = vunpack.c.h.b16 %v717
      %v1861 = vunpack.c.l.b16 %v718
      %v1862 = vunpack.c.h.b16 %v718
      %v1863 = vunpack.c.l.b16 %v719
      %v1864 = vunpack.c.h.b16 %v719
      %v1865 = vunpack.c.l.b16 %v720
      %v1866 = vunpack.c.h.b16 %v720
      %v1867 = vunpack.c.l.b16 %v721
      %v1868 = vunpack.c.h.b16 %v721
      %v1869 = vunpack.c.l.b16 %v722
      %v1870 = vunpack.c.h.b16 %v722
      %v1871 = vunpack.c.l.b16 %v723
      %v1872 = vunpack.c.h.b16 %v723
      %v1873 = vunpack.c.l.b16 %v724
      %v1874 = vunpack.c.h.b16 %v724
      %v1875 = vunpack.c.l.b16 %v725
      %v1876 = vunpack.c.h.b16 %v725
      %v1877 = vunpack.c.l.b16 %v726
      %v1878 = vunpack.c.h.b16 %v726
      %v1879 = vunpack.c.l.b16 %v727
      %v1880 = vunpack.c.h.b16 %v727
      %v1881 = vunpack.c.l.b16 %v728
      %v1882 = vunpack.c.h.b16 %v728
      %v1883 = vunpack.c.l.b16 %v729
      %v1884 = vunpack.c.h.b16 %v729
      %v1885 = vunpack.c.l.b16 %v730
      %v1886 = vunpack.c.h.b16 %v730
      %v1887 = vunpack.c.l.b16 %v731
      %v1888 = vunpack.c.h.b16 %v731
      %v1889 = vunpack.c.l.b16 %v732
      %v1890 = vunpack.c.h.b16 %v732
      %v1891 = vunpack.c.l.b16 %v733
      %v1892 = vunpack.c.h.b16 %v733
      %v1893 = vunpack.c.l.b16 %v734
      %v1894 = vunpack.c.h.b16 %v734
      %v1895 = vunpack.c.l.b16 %v735
      %v1896 = vunpack.c.h.b16 %v735
      %v1897 = vunpack.c.l.b16 %v736
      %v1898 = vunpack.c.h.b16 %v736
      %v1899 = vunpack.c.l.b16 %v737
      %v1900 = vunpack.c.h.b16 %v737
      %v1901 = vunpack.c.l.b16 %v738
      %v1902 = vunpack.c.h.b16 %v738
      %v1903 = vunpack.c.l.b16 %v739
      %v1904 = vunpack.c.h.b16 %v739
      %v1905 = vunpack.c.l.b16 %v740
      %v1906 = vunpack.c.h.b16 %v740
      %v1907 = vunpack.c.l.b16 %v741
      %v1908 = vunpack.c.h.b16 %v741
      %v1909 = vunpack.c.l.b16 %v742
      %v1910 = vunpack.c.h.b16 %v742
      %v1911 = vunpack.c.l.b16 %v743
      %v1912 = vunpack.c.h.b16 %v743
      %v1913 = vunpack.c.l.b16 %v744
      %v1914 = vunpack.c.h.b16 %v744
      %v1915 = vunpack.c.l.b16 %v745
      %v1916 = vunpack.c.h.b16 %v745
      %v1917 = vunpack.c.l.b16 %v746
      %v1918 = vunpack.c.h.b16 %v746
      %v1919 = vunpack.c.l.b16 %v747
      %v1920 = vunpack.c.h.b16 %v747
      %v1921 = vunpack.c.l.b16 %v748
      %v1922 = vunpack.c.h.b16 %v748
      %v1923 = vunpack.c.l.b16 %v749
      %v1924 = vunpack.c.h.b16 %v749
      %v1925 = vunpack.c.l.b16 %v750
      %v1926 = vunpack.c.h.b16 %v750
      %v1927 = vunpack.c.l.b16 %v751
      %v1928 = vunpack.c.h.b16 %v751
      %v1929 = vunpack.c.l.b16 %v752
      %v1930 = vunpack.c.h.b16 %v752
      %v1931 = vunpack.c.l.b16 %v753
      %v1932 = vunpack.c.h.b16 %v753
      %v1933 = vunpack.c.l.b16 %v754
      %v1934 = vunpack.c.h.b16 %v754
      %v1935 = vunpack.c.l.b16 %v755
      %v1936 = vunpack.c.h.b16 %v755
      %v1937 = vunpack.c.l.b16 %v756
      %v1938 = vunpack.c.h.b16 %v756
      %v1939 = vunpack.c.l.b16 %v757
      %v1940 = vunpack.c.h.b16 %v757
      %v1941 = vunpack.c.l.b16 %v758
      %v1942 = vunpack.c.h.b16 %v758
      %v1943 = vunpack.c.l.b16 %v759
      %v1944 = vunpack.c.h.b16 %v759
      %v1945 = vunpack.c.l.b16 %v760
      %v1946 = vunpack.c.h.b16 %v760
      %v1947 = vunpack.c.l.b16 %v761
      %v1948 = vunpack.c.h.b16 %v761
      %v1949 = vunpack.c.l.b16 %v762
      %v1950 = vunpack.c.h.b16 %v762
      %v1951 = vunpack.c.l.b16 %v763
      %v1952 = vunpack.c.h.b16 %v763
      %v1953 = vunpack.c.l.b16 %v764
      %v1954 = vunpack.c.h.b16 %v764
      %v1955 = vunpack.c.l.b16 %v765
      %v1956 = vunpack.c.h.b16 %v765
      %v1957 = vunpack.c.l.b16 %v766
      %v1958 = vunpack.c.h.b16 %v766
      %v1959 = vunpack.c.l.b16 %v767
      %v1960 = vunpack.c.h.b16 %v767
      %v1961 = vunpack.c.l.b16 %v768
      %v1962 = vunpack.c.h.b16 %v768
      %v1963 = vunpack.c.l.b16 %v769
      %v1964 = vunpack.c.h.b16 %v769
      %v1965 = vunpack.c.l.b16 %v770
      %v1966 = vunpack.c.h.b16 %v770
      %v1967 = vunpack.c.l.b16 %v771
      %v1968 = vunpack.c.h.b16 %v771
      %v1969 = vunpack.c.l.b16 %v772
      %v1970 = vunpack.c.h.b16 %v772
      %v1971 = vunpack.c.l.b16 %v773
      %v1972 = vunpack.c.h.b16 %v773
      %v1973 = vunpack.c.l.b16 %v774
      %v1974 = vunpack.c.h.b16 %v774
      %v1975 = vunpack.c.l.b16 %v775
      %v1976 = vunpack.c.h.b16 %v775
      %v1977 = vunpack.c.l.b16 %v776
      %v1978 = vunpack.c.h.b16 %v776
      %v1979 = vunpack.c.l.b16 %v777
      %v1980 = vunpack.c.h.b16 %v777
      %v1981 = vunpack.c.l.b16 %v778
      %v1982 = vunpack.c.h.b16 %v778
      %v1983 = vunpack.c.l.b16 %v779
      %v1984 = vunpack.c.h.b16 %v779
      %v1985 = vunpack.c.l.b16 %v780
      %v1986 = vunpack.c.h.b16 %v780
      %v1987 = vunpack.c.l.b16 %v781
      %v1988 = vunpack.c.h.b16 %v781
      %v1989 = vunpack.c.l.b16 %v782
      %v1990 = vunpack.c.h.b16 %v782
      %v1991 = vunpack.c.l.b16 %v783
      %v1992 = vunpack.c.h.b16 %v783
      %v1993 = vunpack.c.l.b16 %v784
      %v1994 = vunpack.c.h.b16 %v784
      %v1995 = vunpack.c.l.b16 %v785
      %v1996 = vunpack.c.h.b16 %v785
      %v1997 = vunpack.c.l.b16 %v786
      %v1998 = vunpack.c.h.b16 %v786
      %v1999 = vunpack.c.l.b16 %v787
      %v2000 = vunpack.c.h.b16 %v787
      %v2001 = vunpack.c.l.b16 %v788
      %v2002 = vunpack.c.h.b16 %v788
      %v2003 = vunpack.c.l.b16 %v789
      %v2004 = vunpack.c.h.b16 %v789
      %v2005 = vunpack.c.l.b16 %v790
      %v2006 = vunpack.c.h.b16 %v790
      %v2007 = vunpack.c.l.b16 %v791
      %v2008 = vunpack.c.h.b16 %v791
      %v2009 = vunpack.c.l.b16 %v792
      %v2010 = vunpack.c.h.b16 %v792
      %v2011 = vunpack.c.l.b16 %v793
      %v2012 = vunpack.c.h.b16 %v793
      %v2013 = vunpack.c.l.b16 %v794
      %v2014 = vunpack.c.h.b16 %v794
      %v2015 = vunpack.c.l.b16 %v795
      %v2016 = vunpack.c.h.b16 %v795
      %v2017 = vunpack.c.l.b16 %v796
      %v2018 = vunpack.c.h.b16 %v796
      %v2019 = vunpack.c.l.b16 %v797
      %v2020 = vunpack.c.h.b16 %v797
      %v2021 = vunpack.c.l.b16 %v798
      %v2022 = vunpack.c.h.b16 %v798
      %v2023 = vunpack.c.l.b16 %v799
      %v2024 = vunpack.c.h.b16 %v799
      %v2025 = vunpack.c.l.b16 %v800
      %v2026 = vunpack.c.h.b16 %v800
      %v2027 = vunpack.c.l.b16 %v801
      %v2028 = vunpack.c.h.b16 %v801
      %v2029 = vunpack.c.l.b16 %v802
      %v2030 = vunpack.c.h.b16 %v802
      %v2031 = vunpack.c.l.b16 %v803
      %v2032 = vunpack.c.h.b16 %v803
      %v2033 = vunpack.c.l.b16 %v804
      %v2034 = vunpack.c.h.b16 %v804
      %v2035 = vunpack.c.l.b16 %v805
      %v2036 = vunpack.c.h.b16 %v805
      %v2037 = vunpack.c.l.b16 %v806
      %v2038 = vunpack.c.h.b16 %v806
      %v2039 = vunpack.c.l.b16 %v807
      %v2040 = vunpack.c.h.b16 %v807
      %v2041 = vunpack.c.l.b16 %v808
      %v2042 = vunpack.c.h.b16 %v808
      %v2043 = vunpack.c.l.b16 %v809
      %v2044 = vunpack.c.h.b16 %v809
      %v2045 = vunpack.c.l.b16 %v810
      %v2046 = vunpack.c.h.b16 %v810
      %v2047 = vunpack.c.l.b16 %v811
      %v2048 = vunpack.c.h.b16 %v811
      %v2049 = vunpack.c.l.b16 %v812
      %v2050 = vunpack.c.h.b16 %v812
      %v2051 = vunpack.c.l.b16 %v813
      %v2052 = vunpack.c.h.b16 %v813
      %v2053 = vunpack.c.l.b16 %v814
      %v2054 = vunpack.c.h.b16 %v814
      %v2055 = vunpack.c.l.b16 %v815
      %v2056 = vunpack.c.h.b16 %v815
      %v2057 = vunpack.c.l.b16 %v816
      %v2058 = vunpack.c.h.b16 %v816
      %v2059 = vunpack.c.l.b16 %v817
      %v2060 = vunpack.c.h.b16 %v817
      %v2061 = vunpack.c.l.b16 %v818
      %v2062 = vunpack.c.h.b16 %v818
      %v2063 = vunpack.c.l.b16 %v819
      %v2064 = vunpack.c.h.b16 %v819
      %v2065 = vunpack.c.l.b16 %v820
      %v2066 = vunpack.c.h.b16 %v820
      %v2067 = vunpack.c.l.b16 %v821
      %v2068 = vunpack.c.h.b16 %v821
      %v2069 = vunpack.c.l.b16 %v822
      %v2070 = vunpack.c.h.b16 %v822
      %v2071 = vunpack.c.l.b16 %v823
      %v2072 = vunpack.c.h.b16 %v823
      %v2073 = vunpack.c.l.b16 %v824
      %v2074 = vunpack.c.h.b16 %v824
      %v2075 = vunpack.c.l.b16 %v825
      %v2076 = vunpack.c.h.b16 %v825
      %v2077 = vunpack.c.l.b16 %v826
      %v2078 = vunpack.c.h.b16 %v826
      %v2079 = vunpack.c.l.b16 %v827
      %v2080 = vunpack.c.h.b16 %v827
      %v2081 = vunpack.c.l.b16 %v828
      %v2082 = vunpack.c.h.b16 %v828
      %v2083 = vpack.c.b16 %v1323, %v1315
      %v2084 = vpack.c.b16 %v1324, %v1316
      %v2085 = vpack.c.b16 %v1325, %v1317
      %v2086 = vpack.c.b16 %v1326, %v1318
      %v2087 = vpack.c.b16 %v1327, %v1319
      %v2088 = vpack.c.b16 %v1328, %v1320
      %v2089 = vpack.c.b16 %v1329, %v1321
      %v2090 = vpack.c.b16 %v1330, %v1322
      %v2091 = vpack.c.b16 %v1339, %v1331
      %v2092 = vpack.c.b16 %v1340, %v1332
      %v2093 = vpack.c.b16 %v1341, %v1333
      %v2094 = vpack.c.b16 %v1342, %v1334
      %v2095 = vpack.c.b16 %v1343, %v1335
      %v2096 = vpack.c.b16 %v1344, %v1336
      %v2097 = vpack.c.b16 %v1345, %v1337
      %v2098 = vpack.c.b16 %v1346, %v1338
      %v2099 = vpack.c.b16 %v1355, %v1347
      %v2100 = vpack.c.b16 %v1356, %v1348
      %v2101 = vpack.c.b16 %v1357, %v1349
      %v2102 = vpack.c.b16 %v1358, %v1350
      %v2103 = vpack.c.b16 %v1359, %v1351
      %v2104 = vpack.c.b16 %v1360, %v1352
      %v2105 = vpack.c.b16 %v1361, %v1353
      %v2106 = vpack.c.b16 %v1362, %v1354
      %v2107 = vpack.c.b16 %v1371, %v1363
      %v2108 = vpack.c.b16 %v1372, %v1364
      %v2109 = vpack.c.b16 %v1373, %v1365
      %v2110 = vpack.c.b16 %v1374, %v1366
      %v2111 = vpack.c.b16 %v1375, %v1367
      %v2112 = vpack.c.b16 %v1376, %v1368
      %v2113 = vpack.c.b16 %v1377, %v1369
      %v2114 = vpack.c.b16 %v1378, %v1370
      %v2115 = vpack.c.b16 %v1387, %v1379
      %v2116 = vpack.c.b16 %v1388, %v1380
      %v2117 = vpack.c.b16 %v1389, %v1381
      %v2118 = vpack.c.b16 %v1390, %v1382
      %v2119 = vpack.c.b16 %v1391, %v1383
      %v2120 = vpack.c.b16 %v1392, %v1384
      %v2121 = vpack.c.b16 %v1393, %v1385
      %v2122 = vpack.c.b16 %v1394, %v1386
      %v2123 = vpack.c.b16 %v1403, %v1395
      %v2124 = vpack.c.b16 %v1404, %v1396
      %v2125 = vpack.c.b16 %v1405, %v1397
      %v2126 = vpack.c.b16 %v1406, %v1398
      %v2127 = vpack.c.b16 %v1407, %v1399
      %v2128 = vpack.c.b16 %v1408, %v1400
      %v2129 = vpack.c.b16 %v1409, %v1401
      %v2130 = vpack.c.b16 %v1410, %v1402
      %v2131 = vpack.c.b16 %v1419, %v1411
      %v2132 = vpack.c.b16 %v1420, %v1412
      %v2133 = vpack.c.b16 %v1421, %v1413
      %v2134 = vpack.c.b16 %v1422, %v1414
      %v2135 = vpack.c.b16 %v1423, %v1415
      %v2136 = vpack.c.b16 %v1424, %v1416
      %v2137 = vpack.c.b16 %v1425, %v1417
      %v2138 = vpack.c.b16 %v1426, %v1418
      %v2139 = vpack.c.b16 %v1435, %v1427
      %v2140 = vpack.c.b16 %v1436, %v1428
      %v2141 = vpack.c.b16 %v1437, %v1429
      %v2142 = vpack.c.b16 %v1438, %v1430
      %v2143 = vpack.c.b16 %v1439, %v1431
      %v2144 = vpack.c.b16 %v1440, %v1432
      %v2145 = vpack.c.b16 %v1441, %v1433
      %v2146 = vpack.c.b16 %v1442, %v1434
      %v2147 = vpack.c.b16 %v1451, %v1443
      %v2148 = vpack.c.b16 %v1452, %v1444
      %v2149 = vpack.c.b16 %v1453, %v1445
      %v2150 = vpack.c.b16 %v1454, %v1446
      %v2151 = vpack.c.b16 %v1455, %v1447
      %v2152 = vpack.c.b16 %v1456, %v1448
      %v2153 = vpack.c.b16 %v1457, %v1449
      %v2154 = vpack.c.b16 %v1458, %v1450
      %v2155 = vpack.c.b16 %v1467, %v1459
      %v2156 = vpack.c.b16 %v1468, %v1460
      %v2157 = vpack.c.b16 %v1469, %v1461
      %v2158 = vpack.c.b16 %v1470, %v1462
      %v2159 = vpack.c.b16 %v1471, %v1463
      %v2160 = vpack.c.b16 %v1472, %v1464
      %v2161 = vpack.c.b16 %v1473, %v1465
      %v2162 = vpack.c.b16 %v1474, %v1466
      %v2163 = vpack.c.b16 %v1483, %v1475
      %v2164 = vpack.c.b16 %v1484, %v1476
      %v2165 = vpack.c.b16 %v1485, %v1477
      %v2166 = vpack.c.b16 %v1486, %v1478
      %v2167 = vpack.c.b16 %v1487, %v1479
      %v2168 = vpack.c.b16 %v1488, %v1480
      %v2169 = vpack.c.b16 %v1489, %v1481
      %v2170 = vpack.c.b16 %v1490, %v1482
      %v2171 = vpack.c.b16 %v1499, %v1491
      %v2172 = vpack.c.b16 %v1500, %v1492
      %v2173 = vpack.c.b16 %v1501, %v1493
      %v2174 = vpack.c.b16 %v1502, %v1494
      %v2175 = vpack.c.b16 %v1503, %v1495
      %v2176 = vpack.c.b16 %v1504, %v1496
      %v2177 = vpack.c.b16 %v1505, %v1497
      %v2178 = vpack.c.b16 %v1506, %v1498
      %v2179 = vpack.c.b16 %v1515, %v1507
      %v2180 = vpack.c.b16 %v1516, %v1508
      %v2181 = vpack.c.b16 %v1517, %v1509
      %v2182 = vpack.c.b16 %v1518, %v1510
      %v2183 = vpack.c.b16 %v1519, %v1511
      %v2184 = vpack.c.b16 %v1520, %v1512
      %v2185 = vpack.c.b16 %v1521, %v1513
      %v2186 = vpack.c.b16 %v1522, %v1514
      %v2187 = vpack.c.b16 %v1531, %v1523
      %v2188 = vpack.c.b16 %v1532, %v1524
      %v2189 = vpack.c.b16 %v1533, %v1525
      %v2190 = vpack.c.b16 %v1534, %v1526
      %v2191 = vpack.c.b16 %v1535, %v1527
      %v2192 = vpack.c.b16 %v1536, %v1528
      %v2193 = vpack.c.b16 %v1537, %v1529
      %v2194 = vpack.c.b16 %v1538, %v1530
      %v2195 = vpack.c.b16 %v1547, %v1539
      %v2196 = vpack.c.b16 %v1548, %v1540
      %v2197 = vpack.c.b16 %v1549, %v1541
      %v2198 = vpack.c.b16 %v1550, %v1542
      %v2199 = vpack.c.b16 %v1551, %v1543
      %v2200 = vpack.c.b16 %v1552, %v1544
      %v2201 = vpack.c.b16 %v1553, %v1545
      %v2202 = vpack.c.b16 %v1554, %v1546
      %v2203 = vpack.c.b16 %v1563, %v1555
      %v2204 = vpack.c.b16 %v1564, %v1556
      %v2205 = vpack.c.b16 %v1565, %v1557
      %v2206 = vpack.c.b16 %v1566, %v1558
      %v2207 = vpack.c.b16 %v1567, %v1559
      %v2208 = vpack.c.b16 %v1568, %v1560
      %v2209 = vpack.c.b16 %v1569, %v1561
      %v2210 = vpack.c.b16 %v1570, %v1562
      %v2211 = vpack.c.b16 %v1579, %v1571
      %v2212 = vpack.c.b16 %v1580, %v1572
      %v2213 = vpack.c.b16 %v1581, %v1573
      %v2214 = vpack.c.b16 %v1582, %v1574
      %v2215 = vpack.c.b16 %v1583, %v1575
      %v2216 = vpack.c.b16 %v1584, %v1576
      %v2217 = vpack.c.b16 %v1585, %v1577
      %v2218 = vpack.c.b16 %v1586, %v1578
      %v2219 = vpack.c.b16 %v1595, %v1587
      %v2220 = vpack.c.b16 %v1596, %v1588
      %v2221 = vpack.c.b16 %v1597, %v1589
      %v2222 = vpack.c.b16 %v1598, %v1590
      %v2223 = vpack.c.b16 %v1599, %v1591
      %v2224 = vpack.c.b16 %v1600, %v1592
      %v2225 = vpack.c.b16 %v1601, %v1593
      %v2226 = vpack.c.b16 %v1602, %v1594
      %v2227 = vpack.c.b16 %v1611, %v1603
      %v2228 = vpack.c.b16 %v1612, %v1604
      %v2229 = vpack.c.b16 %v1613, %v1605
      %v2230 = vpack.c.b16 %v1614, %v1606
      %v2231 = vpack.c.b16 %v1615, %v1607
      %v2232 = vpack.c.b16 %v1616, %v1608
      %v2233 = vpack.c.b16 %v1617, %v1609
      %v2234 = vpack.c.b16 %v1618, %v1610
      %v2235 = vpack.c.b16 %v1627, %v1619
      %v2236 = vpack.c.b16 %v1628, %v1620
      %v2237 = vpack.c.b16 %v1629, %v1621
      %v2238 = vpack.c.b16 %v1630, %v1622
      %v2239 = vpack.c.b16 %v1631, %v1623
      %v2240 = vpack.c.b16 %v1632, %v1624
      %v2241 = vpack.c.b16 %v1633, %v1625
      %v2242 = vpack.c.b16 %v1634, %v1626
      %v2243 = vpack.c.b16 %v1643, %v1635
      %v2244 = vpack.c.b16 %v1644, %v1636
      %v2245 = vpack.c.b16 %v1645, %v1637
      %v2246 = vpack.c.b16 %v1646, %v1638
      %v2247 = vpack.c.b16 %v1647, %v1639
      %v2248 = vpack.c.b16 %v1648, %v1640
      %v2249 = vpack.c.b16 %v1649, %v1641
      %v2250 = vpack.c.b16 %v1650, %v1642
      %v2251 = vpack.c.b16 %v1659, %v1651
      %v2252 = vpack.c.b16 %v1660, %v1652
      %v2253 = vpack.c.b16 %v1661, %v1653
      %v2254 = vpack.c.b16 %v1662, %v1654
      %v2255 = vpack.c.b16 %v1663, %v1655
      %v2256 = vpack.c.b16 %v1664, %v1656
      %v2257 = vpack.c.b16 %v1665, %v1657
      %v2258 = vpack.c.b16 %v1666, %v1658
      %v2259 = vpack.c.b16 %v1675, %v1667
      %v2260 = vpack.c.b16 %v1676, %v1668
      %v2261 = vpack.c.b16 %v1677, %v1669
      %v2262 = vpack.c.b16 %v1678, %v1670
      %v2263 = vpack.c.b16 %v1679, %v1671
      %v2264 = vpack.c.b16 %v1680, %v1672
      %v2265 = vpack.c.b16 %v1681, %v1673
      %v2266 = vpack.c.b16 %v1682, %v1674
      %v2267 = vpack.c.b16 %v1691, %v1683
      %v2268 = vpack.c.b16 %v1692, %v1684
      %v2269 = vpack.c.b16 %v1693, %v1685
      %v2270 = vpack.c.b16 %v1694, %v1686
      %v2271 = vpack.c.b16 %v1695, %v1687
      %v2272 = vpack.c.b16 %v1696, %v1688
      %v2273 = vpack.c.b16 %v1697, %v1689
      %v2274 = vpack.c.b16 %v1698, %v1690
      %v2275 = vpack.c.b16 %v1707, %v1699
      %v2276 = vpack.c.b16 %v1708, %v1700
      %v2277 = vpack.c.b16 %v1709, %v1701
      %v2278 = vpack.c.b16 %v1710, %v1702
      %v2279 = vpack.c.b16 %v1711, %v1703
      %v2280 = vpack.c.b16 %v1712, %v1704
      %v2281 = vpack.c.b16 %v1713, %v1705
      %v2282 = vpack.c.b16 %v1714, %v1706
      %v2283 = vpack.c.b16 %v1723, %v1715
      %v2284 = vpack.c.b16 %v1724, %v1716
      %v2285 = vpack.c.b16 %v1725, %v1717
      %v2286 = vpack.c.b16 %v1726, %v1718
      %v2287 = vpack.c.b16 %v1727, %v1719
      %v2288 = vpack.c.b16 %v1728, %v1720
      %v2289 = vpack.c.b16 %v1729, %v1721
      %v2290 = vpack.c.b16 %v1730, %v1722
      %v2291 = vpack.c.b16 %v1739, %v1731
      %v2292 = vpack.c.b16 %v1740, %v1732
      %v2293 = vpack.c.b16 %v1741, %v1733
      %v2294 = vpack.c.b16 %v1742, %v1734
      %v2295 = vpack.c.b16 %v1743, %v1735
      %v2296 = vpack.c.b16 %v1744, %v1736
      %v2297 = vpack.c.b16 %v1745, %v1737
      %v2298 = vpack.c.b16 %v1746, %v1738
      %v2299 = vpack.c.b16 %v1755, %v1747
      %v2300 = vpack.c.b16 %v1756, %v1748
      %v2301 = vpack.c.b16 %v1757, %v1749
      %v2302 = vpack.c.b16 %v1758, %v1750
      %v2303 = vpack.c.b16 %v1759, %v1751
      %v2304 = vpack.c.b16 %v1760, %v1752
      %v2305 = vpack.c.b16 %v1761, %v1753
      %v2306 = vpack.c.b16 %v1762, %v1754
      %v2307 = vpack.c.b16 %v1771, %v1763
      %v2308 = vpack.c.b16 %v1772, %v1764
      %v2309 = vpack.c.b16 %v1773, %v1765
      %v2310 = vpack.c.b16 %v1774, %v1766
      %v2311 = vpack.c.b16 %v1775, %v1767
      %v2312 = vpack.c.b16 %v1776, %v1768
      %v2313 = vpack.c.b16 %v1777, %v1769
      %v2314 = vpack.c.b16 %v1778, %v1770
      %v2315 = vpack.c.b16 %v1787, %v1779
      %v2316 = vpack.c.b16 %v1788, %v1780
      %v2317 = vpack.c.b16 %v1789, %v1781
      %v2318 = vpack.c.b16 %v1790, %v1782
      %v2319 = vpack.c.b16 %v1791, %v1783
      %v2320 = vpack.c.b16 %v1792, %v1784
      %v2321 = vpack.c.b16 %v1793, %v1785
      %v2322 = vpack.c.b16 %v1794, %v1786
      %v2323 = vpack.c.b16 %v1803, %v1795
      %v2324 = vpack.c.b16 %v1804, %v1796
      %v2325 = vpack.c.b16 %v1805, %v1797
      %v2326 = vpack.c.b16 %v1806, %v1798
      %v2327 = vpack.c.b16 %v1807, %v1799
      %v2328 = vpack.c.b16 %v1808, %v1800
      %v2329 = vpack.c.b16 %v1809, %v1801
      %v2330 = vpack.c.b16 %v1810, %v1802
      %v2331 = vpack.c.b16 %v1819, %v1811
      %v2332 = vpack.c.b16 %v1820, %v1812
      %v2333 = vpack.c.b16 %v1821, %v1813
      %v2334 = vpack.c.b16 %v1822, %v1814
      %v2335 = vpack.c.b16 %v1823, %v1815
      %v2336 = vpack.c.b16 %v1824, %v1816
      %v2337 = vpack.c.b16 %v1825, %v1817
      %v2338 = vpack.c.b16 %v1826, %v1818
      %v2339 = vpack.c.b16 %v1835, %v1827
      %v2340 = vpack.c.b16 %v1836, %v1828
      %v2341 = vpack.c.b16 %v1837, %v1829
      %v2342 = vpack.c.b16 %v1838, %v1830
      %v2343 = vpack.c.b16 %v1839, %v1831
      %v2344 = vpack.c.b16 %v1840, %v1832
      %v2345 = vpack.c.b16 %v1841, %v1833
      %v2346 = vpack.c.b16 %v1842, %v1834
      %v2347 = vpack.c.b16 %v1851, %v1843
      %v2348 = vpack.c.b16 %v1852, %v1844
      %v2349 = vpack.c.b16 %v1853, %v1845
      %v2350 = vpack.c.b16 %v1854, %v1846
      %v2351 = vpack.c.b16 %v1855, %v1847
      %v2352 = vpack.c.b16 %v1856, %v1848
      %v2353 = vpack.c.b16 %v1857, %v1849
      %v2354 = vpack.c.b16 %v1858, %v1850
      %v2355 = vpack.c.b16 %v1867, %v1859
      %v2356 = vpack.c.b16 %v1868, %v1860
      %v2357 = vpack.c.b16 %v1869, %v1861
      %v2358 = vpack.c.b16 %v1870, %v1862
      %v2359 = vpack.c.b16 %v1871, %v1863
      %v2360 = vpack.c.b16 %v1872, %v1864
      %v2361 = vpack.c.b16 %v1873, %v1865
      %v2362 = vpack.c.b16 %v1874, %v1866
      %v2363 = vpack.c.b16 %v1883, %v1875
      %v2364 = vpack.c.b16 %v1884, %v1876
      %v2365 = vpack.c.b16 %v1885, %v1877
      %v2366 = vpack.c.b16 %v1886, %v1878
      %v2367 = vpack.c.b16 %v1887, %v1879
      %v2368 = vpack.c.b16 %v1888, %v1880
      %v2369 = vpack.c.b16 %v1889, %v1881
      %v2370 = vpack.c.b16 %v1890, %v1882
      %v2371 = vpack.c.b16 %v1899, %v1891
      %v2372 = vpack.c.b16 %v1900, %v1892
      %v2373 = vpack.c.b16 %v1901, %v1893
      %v2374 = vpack.c.b16 %v1902, %v1894
      %v2375 = vpack.c.b16 %v1903, %v1895
      %v2376 = vpack.c.b16 %v1904, %v1896
      %v2377 = vpack.c.b16 %v1905, %v1897
      %v2378 = vpack.c.b16 %v1906, %v1898
      %v2379 = vpack.c.b16 %v1915, %v1907
      %v2380 = vpack.c.b16 %v1916, %v1908
      %v2381 = vpack.c.b16 %v1917, %v1909
      %v2382 = vpack.c.b16 %v1918, %v1910
      %v2383 = vpack.c.b16 %v1919, %v1911
      %v2384 = vpack.c.b16 %v1920, %v1912
      %v2385 = vpack.c.b16 %v1921, %v1913
      %v2386 = vpack.c.b16 %v1922, %v1914
      %v2387 = vpack.c.b16 %v1931, %v1923
      %v2388 = vpack.c.b16 %v1932, %v1924
      %v2389 = vpack.c.b16 %v1933, %v1925
      %v2390 = vpack.c.b16 %v1934, %v1926
      %v2391 = vpack.c.b16 %v1935, %v1927
      %v2392 = vpack.c.b16 %v1936, %v1928
      %v2393 = vpack.c.b16 %v1937, %v1929
      %v2394 = vpack.c.b16 %v1938, %v1930
      %v2395 = vpack.c.b16 %v1947, %v1939
      %v2396 = vpack.c.b16 %v1948, %v1940
      %v2397 = vpack.c.b16 %v1949, %v1941
      %v2398 = vpack.c.b16 %v1950, %v1942
      %v2399 = vpack.c.b16 %v1951, %v1943
      %v2400 = vpack.c.b16 %v1952, %v1944
      %v2401 = vpack.c.b16 %v1953, %v1945
      %v2402 = vpack.c.b16 %v1954, %v1946
      %v2403 = vpack.c.b16 %v1963, %v1955
      %v2404 = vpack.c.b16 %v1964, %v1956
      %v2405 = vpack.c.b16 %v1965, %v1957
      %v2406 = vpack.c.b16 %v1966, %v1958
      %v2407 = vpack.c.b16 %v1967, %v1959
      %v2408 = vpack.c.b16 %v1968, %v1960
      %v2409 = vpack.c.b16 %v1969, %v1961
      %v2410 = vpack.c.b16 %v1970, %v1962
      %v2411 = vpack.c.b16 %v1979, %v1971
      %v2412 = vpack.c.b16 %v1980, %v1972
      %v2413 = vpack.c.b16 %v1981, %v1973
      %v2414 = vpack.c.b16 %v1982, %v1974
      %v2415 = vpack.c.b16 %v1983, %v1975
      %v2416 = vpack.c.b16 %v1984, %v1976
      %v2417 = vpack.c.b16 %v1985, %v1977
      %v2418 = vpack.c.b16 %v1986, %v1978
      %v2419 = vpack.c.b16 %v1995, %v1987
      %v2420 = vpack.c.b16 %v1996, %v1988
      %v2421 = vpack.c.b16 %v1997, %v1989
      %v2422 = vpack.c.b16 %v1998, %v1990
      %v2423 = vpack.c.b16 %v1999, %v1991
      %v2424 = vpack.c.b16 %v2000, %v1992
      %v2425 = vpack.c.b16 %v2001, %v1993
      %v2426 = vpack.c.b16 %v2002, %v1994
      %v2427 = vpack.c.b16 %v2011, %v2003
      %v2428 = vpack.c.b16 %v2012, %v2004
      %v2429 = vpack.c.b16 %v2013, %v2005
      %v2430 = vpack.c.b16 %v2014, %v2006
      %v2431 = vpack.c.b16 %v2015, %v2007
      %v2432 = vpack.c.b16 %v2016, %v2008
      %v2433 = vpack.c.b16 %v2017, %v2009
      %v2434 = vpack.c.b16 %v2018, %v2010
      %v2435 = vpack.c.b16 %v2027, %v2019
      %v2436 = vpack.c.b16 %v2028, %v2020
      %v2437 = vpack.c.b16 %v2029, %v2021
      %v2438 = vpack.c.b16 %v2030, %v2022
      %v2439 = vpack.c.b16 %v2031, %v2023
      %v2440 = vpack.c.b16 %v2032, %v2024
      %v2441 = vpack.c.b16 %v2033, %v2025
      %v2442 = vpack.c.b16 %v2034, %v2026
      %v2443 = vpack.c.b16 %v2043, %v2035
      %v2444 = vpack.c.b16 %v2044, %v2036
      %v2445 = vpack.c.b16 %v2045, %v2037
      %v2446 = vpack.c.b16 %v2046, %v2038
      %v2447 = vpack.c.b16 %v2047, %v2039
      %v2448 = vpack.c.b16 %v2048, %v2040
      %v2449 = vpack.c.b16 %v2049, %v2041
      %v2450 = vpack.c.b16 %v2050, %v2042
      %v2451 = vpack.c.b16 %v2059, %v2051
      %v2452 = vpack.c.b16 %v2060, %v2052
      %v2453 = vpack.c.b16 %v2061, %v2053
      %v2454 = vpack.c.b16 %v2062, %v2054
      %v2455 = vpack.c.b16 %v2063, %v2055
      %v2456 = vpack.c.b16 %v2064, %v2056
      %v2457 = vpack.c.b16 %v2065, %v2057
      %v2458 = vpack.c.b16 %v2066, %v2058
      %v2459 = vpack.c.b16 %v2075, %v2067
      %v2460 = vpack.c.b16 %v2076, %v2068
      %v2461 = vpack.c.b16 %v2077, %v2069
      %v2462 = vpack.c.b16 %v2078, %v2070
      %v2463 = vpack.c.b16 %v2079, %v2071
      %v2464 = vpack.c.b16 %v2080, %v2072
      %v2465 = vpack.c.b16 %v2081, %v2073
      %v2466 = vpack.c.b16 %v2082, %v2074
      %2851 = vmatprep.subr.bf16.mxu0 %v2140
      %2852 = vmatpush1.bf16.msra.mxu0 %v2139
      %2853 = vmatprep.subr.bf16.mxu0 %v2132
      %2854 = vmatpush1.bf16.msra.mxu0 %v2131
      %2855 = vmatprep.subr.bf16.mxu0 %v2124
      %2856 = vmatpush1.bf16.msra.mxu0 %v2123
      %2857 = vmatprep.subr.bf16.mxu0 %v2116
      %2858 = vmatpush1.bf16.msra.mxu0 %v2115
      %2859 = vmatprep.subr.bf16.mxu0 %v2108
      %2860 = vmatpush1.bf16.msra.mxu0 %v2107
      %2861 = vmatprep.subr.bf16.mxu0 %v2100
      %2862 = vmatpush1.bf16.msra.mxu0 %v2099
      %2863 = vmatprep.subr.bf16.mxu0 %v2092
      %2864 = vmatpush1.bf16.msra.mxu0 %v2091
      %2865 = vmatprep.subr.bf16.mxu0 %v2084
      %2866 = vmatpush1.bf16.msra.mxu0 %v2083
      %2867 = vmatprep.subr.bf16.mxu0 %v2204
      %2868 = vmatpush2.bf16.msra.mxu0 %v2203
      %2869 = vmatprep.subr.bf16.mxu0 %v2196
      %2870 = vmatpush2.bf16.msra.mxu0 %v2195
      %2871 = vmatprep.subr.bf16.mxu0 %v2188
      %2872 = vmatpush2.bf16.msra.mxu0 %v2187
      %2873 = vmatprep.subr.bf16.mxu0 %v2180
      %2874 = vmatpush2.bf16.msra.mxu0 %v2179
      %2875 = vmatprep.subr.bf16.mxu0 %v2172
      %2876 = vmatpush2.bf16.msra.mxu0 %v2171
      %2877 = vmatprep.subr.bf16.mxu0 %v2164
      %2878 = vmatpush2.bf16.msra.mxu0 %v2163
      %2879 = vmatprep.subr.bf16.mxu0 %v2156
      %2880 = vmatpush2.bf16.msra.mxu0 %v2155
      %2881 = vmatprep.subr.bf16.mxu0 %v2148
      %2882 = vmatpush2.bf16.msra.mxu0 %v2147
      %2883 = vmatprep.mubr.bf16.mxu0 %v908
      %2884 = vmatmul.mubr.bf16.gmra.mxu0 %v907
      %v2885 = vpop.f32.mrf.mxu0
      %v2886 = vadd.f32 %v834, %v2885
      %v2887 = vpop.f32.mrf.mxu0
      %v2888 = vadd.f32 %v838, %v2887
      %v2889 = vpop.f32.mrf.mxu0
      %v2890 = vadd.f32 %v834, %v2889
      %v2891 = vpop.f32.mrf.mxu0
      %v2892 = vadd.f32 %v838, %v2891
      %2893 = vmatprep.mubr.bf16.mxu0 %v914
      %2894 = vmatmul.mubr.bf16.gmra.mxu0 %v913
      %v2895 = vpop.f32.mrf.mxu0
      %v2896 = vadd.f32 %v834, %v2895
      %v2897 = vpop.f32.mrf.mxu0
      %v2898 = vadd.f32 %v838, %v2897
      %v2899 = vpop.f32.mrf.mxu0
      %v2900 = vadd.f32 %v834, %v2899
      %v2901 = vpop.f32.mrf.mxu0
      %v2902 = vadd.f32 %v838, %v2901
      %2903 = vdwg.mxu0
      %2904 = vmatprep.subr.bf16.mxu0 %v2268
      %2905 = vmatpush1.bf16.msra.mxu0 %v2267
      %2906 = vmatprep.subr.bf16.mxu0 %v2260
      %2907 = vmatpush1.bf16.msra.mxu0 %v2259
      %2908 = vmatprep.subr.bf16.mxu0 %v2252
      %2909 = vmatpush1.bf16.msra.mxu0 %v2251
      %2910 = vmatprep.subr.bf16.mxu0 %v2244
      %2911 = vmatpush1.bf16.msra.mxu0 %v2243
      %2912 = vmatprep.subr.bf16.mxu0 %v2236
      %2913 = vmatpush1.bf16.msra.mxu0 %v2235
      %2914 = vmatprep.subr.bf16.mxu0 %v2228
      %2915 = vmatpush1.bf16.msra.mxu0 %v2227
      %2916 = vmatprep.subr.bf16.mxu0 %v2220
      %2917 = vmatpush1.bf16.msra.mxu0 %v2219
      %2918 = vmatprep.subr.bf16.mxu0 %v2212
      %2919 = vmatpush1.bf16.msra.mxu0 %v2211
      %2920 = vmatprep.subr.bf16.mxu0 %v2332
      %2921 = vmatpush2.bf16.msra.mxu0 %v2331
      %2922 = vmatprep.subr.bf16.mxu0 %v2324
      %2923 = vmatpush2.bf16.msra.mxu0 %v2323
      %2924 = vmatprep.subr.bf16.mxu0 %v2316
      %2925 = vmatpush2.bf16.msra.mxu0 %v2315
      %2926 = vmatprep.subr.bf16.mxu0 %v2308
      %2927 = vmatpush2.bf16.msra.mxu0 %v2307
      %2928 = vmatprep.subr.bf16.mxu0 %v2300
      %2929 = vmatpush2.bf16.msra.mxu0 %v2299
      %2930 = vmatprep.subr.bf16.mxu0 %v2292
      %2931 = vmatpush2.bf16.msra.mxu0 %v2291
      %2932 = vmatprep.subr.bf16.mxu0 %v2284
      %2933 = vmatpush2.bf16.msra.mxu0 %v2283
      %2934 = vmatprep.subr.bf16.mxu0 %v2276
      %2935 = vmatpush2.bf16.msra.mxu0 %v2275
      %2936 = vmatprep.mubr.bf16.mxu0 %v910
      %2937 = vmatmul.mubr.bf16.gmra.mxu0 %v909
      %v2938 = vpop.f32.mrf.mxu0
      %v2939 = vadd.f32 %v2886, %v2938
      %v2940 = vpop.f32.mrf.mxu0
      %v2941 = vadd.f32 %v2888, %v2940
      %v2942 = vpop.f32.mrf.mxu0
      %v2943 = vadd.f32 %v2890, %v2942
      %v2944 = vpop.f32.mrf.mxu0
      %v2945 = vadd.f32 %v2892, %v2944
      %2946 = vmatprep.mubr.bf16.mxu0 %v916
      %2947 = vmatmul.mubr.bf16.gmra.mxu0 %v915
      %v2948 = vpop.f32.mrf.mxu0
      %v2949 = vadd.f32 %v2896, %v2948
      %v2950 = vpop.f32.mrf.mxu0
      %v2951 = vadd.f32 %v2898, %v2950
      %v2952 = vpop.f32.mrf.mxu0
      %v2953 = vadd.f32 %v2900, %v2952
      %v2954 = vpop.f32.mrf.mxu0
      %v2955 = vadd.f32 %v2902, %v2954
      %2956 = vdwg.mxu0
      %2957 = vmatprep.subr.bf16.mxu0 %v2396
      %2958 = vmatpush1.bf16.msra.mxu0 %v2395
      %2959 = vmatprep.subr.bf16.mxu0 %v2388
      %2960 = vmatpush1.bf16.msra.mxu0 %v2387
      %2961 = vmatprep.subr.bf16.mxu0 %v2380
      %2962 = vmatpush1.bf16.msra.mxu0 %v2379
      %2963 = vmatprep.subr.bf16.mxu0 %v2372
      %2964 = vmatpush1.bf16.msra.mxu0 %v2371
      %2965 = vmatprep.subr.bf16.mxu0 %v2364
      %2966 = vmatpush1.bf16.msra.mxu0 %v2363
      %2967 = vmatprep.subr.bf16.mxu0 %v2356
      %2968 = vmatpush1.bf16.msra.mxu0 %v2355
      %2969 = vmatprep.subr.bf16.mxu0 %v2348
      %2970 = vmatpush1.bf16.msra.mxu0 %v2347
      %2971 = vmatprep.subr.bf16.mxu0 %v2340
      %2972 = vmatpush1.bf16.msra.mxu0 %v2339
      %2973 = vmatprep.subr.bf16.mxu0 %v2460
      %2974 = vmatpush2.bf16.msra.mxu0 %v2459
      %2975 = vmatprep.subr.bf16.mxu0 %v2452
      %2976 = vmatpush2.bf16.msra.mxu0 %v2451
      %2977 = vmatprep.subr.bf16.mxu0 %v2444
      %2978 = vmatpush2.bf16.msra.mxu0 %v2443
      %2979 = vmatprep.subr.bf16.mxu0 %v2436
      %2980 = vmatpush2.bf16.msra.mxu0 %v2435
      %2981 = vmatprep.subr.bf16.mxu0 %v2428
      %2982 = vmatpush2.bf16.msra.mxu0 %v2427
      %2983 = vmatprep.subr.bf16.mxu0 %v2420
      %2984 = vmatpush2.bf16.msra.mxu0 %v2419
      %2985 = vmatprep.subr.bf16.mxu0 %v2412
      %2986 = vmatpush2.bf16.msra.mxu0 %v2411
      %2987 = vmatprep.subr.bf16.mxu0 %v2404
      %2988 = vmatpush2.bf16.msra.mxu0 %v2403
      %2989 = vmatprep.mubr.bf16.mxu0 %v912
      %2990 = vmatmul.mubr.bf16.gmra.mxu0 %v911
      %v2991 = vpop.f32.mrf.mxu0
      %v2992 = vadd.f32 %v2939, %v2991
      %v2993 = vpop.f32.mrf.mxu0
      %v2994 = vadd.f32 %v2941, %v2993
      %v2995 = vpop.f32.mrf.mxu0
      %v2996 = vadd.f32 %v2943, %v2995
      %v2997 = vpop.f32.mrf.mxu0
      %v2998 = vadd.f32 %v2945, %v2997
      %2999 = vmatprep.mubr.bf16.mxu0 %v918
      %3000 = vmatmul.mubr.bf16.gmra.mxu0 %v917
      %v3001 = vpop.f32.mrf.mxu0
      %v3002 = vadd.f32 %v2949, %v3001
      %v3003 = vpop.f32.mrf.mxu0
      %v3004 = vadd.f32 %v2951, %v3003
      %v3005 = vpop.f32.mrf.mxu0
      %v3006 = vadd.f32 %v2953, %v3005
      %v3007 = vpop.f32.mrf.mxu0
      %v3008 = vadd.f32 %v2955, %v3007
      %3009 = vdwg.mxu0
      %3010 = vmatprep.subr.bf16.mxu0 %v2142
      %3011 = vmatpush1.bf16.msra.mxu0 %v2141
      %3012 = vmatprep.subr.bf16.mxu0 %v2134
      %3013 = vmatpush1.bf16.msra.mxu0 %v2133
      %3014 = vmatprep.subr.bf16.mxu0 %v2126
      %3015 = vmatpush1.bf16.msra.mxu0 %v2125
      %3016 = vmatprep.subr.bf16.mxu0 %v2118
      %3017 = vmatpush1.bf16.msra.mxu0 %v2117
      %3018 = vmatprep.subr.bf16.mxu0 %v2110
      %3019 = vmatpush1.bf16.msra.mxu0 %v2109
      %3020 = vmatprep.subr.bf16.mxu0 %v2102
      %3021 = vmatpush1.bf16.msra.mxu0 %v2101
      %3022 = vmatprep.subr.bf16.mxu0 %v2094
      %3023 = vmatpush1.bf16.msra.mxu0 %v2093
      %3024 = vmatprep.subr.bf16.mxu0 %v2086
      %3025 = vmatpush1.bf16.msra.mxu0 %v2085
      %3026 = vmatprep.subr.bf16.mxu0 %v2206
      %3027 = vmatpush2.bf16.msra.mxu0 %v2205
      %3028 = vmatprep.subr.bf16.mxu0 %v2198
      %3029 = vmatpush2.bf16.msra.mxu0 %v2197
      %3030 = vmatprep.subr.bf16.mxu0 %v2190
      %3031 = vmatpush2.bf16.msra.mxu0 %v2189
      %3032 = vmatprep.subr.bf16.mxu0 %v2182
      %3033 = vmatpush2.bf16.msra.mxu0 %v2181
      %3034 = vmatprep.subr.bf16.mxu0 %v2174
      %3035 = vmatpush2.bf16.msra.mxu0 %v2173
      %3036 = vmatprep.subr.bf16.mxu0 %v2166
      %3037 = vmatpush2.bf16.msra.mxu0 %v2165
      %3038 = vmatprep.subr.bf16.mxu0 %v2158
      %3039 = vmatpush2.bf16.msra.mxu0 %v2157
      %3040 = vmatprep.subr.bf16.mxu0 %v2150
      %3041 = vmatpush2.bf16.msra.mxu0 %v2149
      %3042 = vmatprep.mubr.bf16.mxu0 %v908
      %3043 = vmatmul.mubr.bf16.gmra.mxu0 %v907
      %v3044 = vpop.f32.mrf.mxu0
      %v3045 = vadd.f32 %v842, %v3044
      %v3046 = vpop.f32.mrf.mxu0
      %v3047 = vadd.f32 %v846, %v3046
      %v3048 = vpop.f32.mrf.mxu0
      %v3049 = vadd.f32 %v842, %v3048
      %v3050 = vpop.f32.mrf.mxu0
      %v3051 = vadd.f32 %v846, %v3050
      %3052 = vmatprep.mubr.bf16.mxu0 %v914
      %3053 = vmatmul.mubr.bf16.gmra.mxu0 %v913
      %v3054 = vpop.f32.mrf.mxu0
      %v3055 = vadd.f32 %v842, %v3054
      %v3056 = vpop.f32.mrf.mxu0
      %v3057 = vadd.f32 %v846, %v3056
      %v3058 = vpop.f32.mrf.mxu0
      %v3059 = vadd.f32 %v842, %v3058
      %v3060 = vpop.f32.mrf.mxu0
      %v3061 = vadd.f32 %v846, %v3060
      %3062 = vdwg.mxu0
      %3063 = vmatprep.subr.bf16.mxu0 %v2270
      %3064 = vmatpush1.bf16.msra.mxu0 %v2269
      %3065 = vmatprep.subr.bf16.mxu0 %v2262
      %3066 = vmatpush1.bf16.msra.mxu0 %v2261
      %3067 = vmatprep.subr.bf16.mxu0 %v2254
      %3068 = vmatpush1.bf16.msra.mxu0 %v2253
      %3069 = vmatprep.subr.bf16.mxu0 %v2246
      %3070 = vmatpush1.bf16.msra.mxu0 %v2245
      %3071 = vmatprep.subr.bf16.mxu0 %v2238
      %3072 = vmatpush1.bf16.msra.mxu0 %v2237
      %3073 = vmatprep.subr.bf16.mxu0 %v2230
      %3074 = vmatpush1.bf16.msra.mxu0 %v2229
      %3075 = vmatprep.subr.bf16.mxu0 %v2222
      %3076 = vmatpush1.bf16.msra.mxu0 %v2221
      %3077 = vmatprep.subr.bf16.mxu0 %v2214
      %3078 = vmatpush1.bf16.msra.mxu0 %v2213
      %3079 = vmatprep.subr.bf16.mxu0 %v2334
      %3080 = vmatpush2.bf16.msra.mxu0 %v2333
      %3081 = vmatprep.subr.bf16.mxu0 %v2326
      %3082 = vmatpush2.bf16.msra.mxu0 %v2325
      %3083 = vmatprep.subr.bf16.mxu0 %v2318
      %3084 = vmatpush2.bf16.msra.mxu0 %v2317
      %3085 = vmatprep.subr.bf16.mxu0 %v2310
      %3086 = vmatpush2.bf16.msra.mxu0 %v2309
      %3087 = vmatprep.subr.bf16.mxu0 %v2302
      %3088 = vmatpush2.bf16.msra.mxu0 %v2301
      %3089 = vmatprep.subr.bf16.mxu0 %v2294
      %3090 = vmatpush2.bf16.msra.mxu0 %v2293
      %3091 = vmatprep.subr.bf16.mxu0 %v2286
      %3092 = vmatpush2.bf16.msra.mxu0 %v2285
      %3093 = vmatprep.subr.bf16.mxu0 %v2278
      %3094 = vmatpush2.bf16.msra.mxu0 %v2277
      %3095 = vmatprep.mubr.bf16.mxu0 %v910
      %3096 = vmatmul.mubr.bf16.gmra.mxu0 %v909
      %v3097 = vpop.f32.mrf.mxu0
      %v3098 = vadd.f32 %v3045, %v3097
      %v3099 = vpop.f32.mrf.mxu0
      %v3100 = vadd.f32 %v3047, %v3099
      %v3101 = vpop.f32.mrf.mxu0
      %v3102 = vadd.f32 %v3049, %v3101
      %v3103 = vpop.f32.mrf.mxu0
      %v3104 = vadd.f32 %v3051, %v3103
      %3105 = vmatprep.mubr.bf16.mxu0 %v916
      %3106 = vmatmul.mubr.bf16.gmra.mxu0 %v915
      %v3107 = vpop.f32.mrf.mxu0
      %v3108 = vadd.f32 %v3055, %v3107
      %v3109 = vpop.f32.mrf.mxu0
      %v3110 = vadd.f32 %v3057, %v3109
      %v3111 = vpop.f32.mrf.mxu0
      %v3112 = vadd.f32 %v3059, %v3111
      %v3113 = vpop.f32.mrf.mxu0
      %v3114 = vadd.f32 %v3061, %v3113
      %3115 = vdwg.mxu0
      %3116 = vmatprep.subr.bf16.mxu0 %v2398
      %3117 = vmatpush1.bf16.msra.mxu0 %v2397
      %3118 = vmatprep.subr.bf16.mxu0 %v2390
      %3119 = vmatpush1.bf16.msra.mxu0 %v2389
      %3120 = vmatprep.subr.bf16.mxu0 %v2382
      %3121 = vmatpush1.bf16.msra.mxu0 %v2381
      %3122 = vmatprep.subr.bf16.mxu0 %v2374
      %3123 = vmatpush1.bf16.msra.mxu0 %v2373
      %3124 = vmatprep.subr.bf16.mxu0 %v2366
      %3125 = vmatpush1.bf16.msra.mxu0 %v2365
      %3126 = vmatprep.subr.bf16.mxu0 %v2358
      %3127 = vmatpush1.bf16.msra.mxu0 %v2357
      %3128 = vmatprep.subr.bf16.mxu0 %v2350
      %3129 = vmatpush1.bf16.msra.mxu0 %v2349
      %3130 = vmatprep.subr.bf16.mxu0 %v2342
      %3131 = vmatpush1.bf16.msra.mxu0 %v2341
      %3132 = vmatprep.subr.bf16.mxu0 %v2462
      %3133 = vmatpush2.bf16.msra.mxu0 %v2461
      %3134 = vmatprep.subr.bf16.mxu0 %v2454
      %3135 = vmatpush2.bf16.msra.mxu0 %v2453
      %3136 = vmatprep.subr.bf16.mxu0 %v2446
      %3137 = vmatpush2.bf16.msra.mxu0 %v2445
      %3138 = vmatprep.subr.bf16.mxu0 %v2438
      %3139 = vmatpush2.bf16.msra.mxu0 %v2437
      %3140 = vmatprep.subr.bf16.mxu0 %v2430
      %3141 = vmatpush2.bf16.msra.mxu0 %v2429
      %3142 = vmatprep.subr.bf16.mxu0 %v2422
      %3143 = vmatpush2.bf16.msra.mxu0 %v2421
      %3144 = vmatprep.subr.bf16.mxu0 %v2414
      %3145 = vmatpush2.bf16.msra.mxu0 %v2413
      %3146 = vmatprep.subr.bf16.mxu0 %v2406
      %3147 = vmatpush2.bf16.msra.mxu0 %v2405
      %3148 = vmatprep.mubr.bf16.mxu0 %v912
      %3149 = vmatmul.mubr.bf16.gmra.mxu0 %v911
      %v3150 = vpop.f32.mrf.mxu0
      %v3151 = vadd.f32 %v3098, %v3150
      %v3152 = vpop.f32.mrf.mxu0
      %v3153 = vadd.f32 %v3100, %v3152
      %v3154 = vpop.f32.mrf.mxu0
      %v3155 = vadd.f32 %v3102, %v3154
      %v3156 = vpop.f32.mrf.mxu0
      %v3157 = vadd.f32 %v3104, %v3156
      %3158 = vmatprep.mubr.bf16.mxu0 %v918
      %3159 = vmatmul.mubr.bf16.gmra.mxu0 %v917
      %v3160 = vpop.f32.mrf.mxu0
      %v3161 = vadd.f32 %v3108, %v3160
      %v3162 = vpop.f32.mrf.mxu0
      %v3163 = vadd.f32 %v3110, %v3162
      %v3164 = vpop.f32.mrf.mxu0
      %v3165 = vadd.f32 %v3112, %v3164
      %v3166 = vpop.f32.mrf.mxu0
      %v3167 = vadd.f32 %v3114, %v3166
      %3168 = vdwg.mxu0
      %3169 = vmatprep.subr.bf16.mxu0 %v2144
      %3170 = vmatpush1.bf16.msra.mxu0 %v2143
      %3171 = vmatprep.subr.bf16.mxu0 %v2136
      %3172 = vmatpush1.bf16.msra.mxu0 %v2135
      %3173 = vmatprep.subr.bf16.mxu0 %v2128
      %3174 = vmatpush1.bf16.msra.mxu0 %v2127
      %3175 = vmatprep.subr.bf16.mxu0 %v2120
      %3176 = vmatpush1.bf16.msra.mxu0 %v2119
      %3177 = vmatprep.subr.bf16.mxu0 %v2112
      %3178 = vmatpush1.bf16.msra.mxu0 %v2111
      %3179 = vmatprep.subr.bf16.mxu0 %v2104
      %3180 = vmatpush1.bf16.msra.mxu0 %v2103
      %3181 = vmatprep.subr.bf16.mxu0 %v2096
      %3182 = vmatpush1.bf16.msra.mxu0 %v2095
      %3183 = vmatprep.subr.bf16.mxu0 %v2088
      %3184 = vmatpush1.bf16.msra.mxu0 %v2087
      %3185 = vmatprep.subr.bf16.mxu0 %v2208
      %3186 = vmatpush2.bf16.msra.mxu0 %v2207
      %3187 = vmatprep.subr.bf16.mxu0 %v2200
      %3188 = vmatpush2.bf16.msra.mxu0 %v2199
      %3189 = vmatprep.subr.bf16.mxu0 %v2192
      %3190 = vmatpush2.bf16.msra.mxu0 %v2191
      %3191 = vmatprep.subr.bf16.mxu0 %v2184
      %3192 = vmatpush2.bf16.msra.mxu0 %v2183
      %3193 = vmatprep.subr.bf16.mxu0 %v2176
      %3194 = vmatpush2.bf16.msra.mxu0 %v2175
      %3195 = vmatprep.subr.bf16.mxu0 %v2168
      %3196 = vmatpush2.bf16.msra.mxu0 %v2167
      %3197 = vmatprep.subr.bf16.mxu0 %v2160
      %3198 = vmatpush2.bf16.msra.mxu0 %v2159
      %3199 = vmatprep.subr.bf16.mxu0 %v2152
      %3200 = vmatpush2.bf16.msra.mxu0 %v2151
      %3201 = vmatprep.mubr.bf16.mxu0 %v908
      %3202 = vmatmul.mubr.bf16.gmra.mxu0 %v907
      %v3203 = vpop.f32.mrf.mxu0
      %v3204 = vadd.f32 %v850, %v3203
      %v3205 = vpop.f32.mrf.mxu0
      %v3206 = vadd.f32 %v854, %v3205
      %v3207 = vpop.f32.mrf.mxu0
      %v3208 = vadd.f32 %v850, %v3207
      %v3209 = vpop.f32.mrf.mxu0
      %v3210 = vadd.f32 %v854, %v3209
      %3211 = vmatprep.mubr.bf16.mxu0 %v914
      %3212 = vmatmul.mubr.bf16.gmra.mxu0 %v913
      %v3213 = vpop.f32.mrf.mxu0
      %v3214 = vadd.f32 %v850, %v3213
      %v3215 = vpop.f32.mrf.mxu0
      %v3216 = vadd.f32 %v854, %v3215
      %v3217 = vpop.f32.mrf.mxu0
      %v3218 = vadd.f32 %v850, %v3217
      %v3219 = vpop.f32.mrf.mxu0
      %v3220 = vadd.f32 %v854, %v3219
      %3221 = vdwg.mxu0
      %3222 = vmatprep.subr.bf16.mxu0 %v2272
      %3223 = vmatpush1.bf16.msra.mxu0 %v2271
      %3224 = vmatprep.subr.bf16.mxu0 %v2264
      %3225 = vmatpush1.bf16.msra.mxu0 %v2263
      %3226 = vmatprep.subr.bf16.mxu0 %v2256
      %3227 = vmatpush1.bf16.msra.mxu0 %v2255
      %3228 = vmatprep.subr.bf16.mxu0 %v2248
      %3229 = vmatpush1.bf16.msra.mxu0 %v2247
      %3230 = vmatprep.subr.bf16.mxu0 %v2240
      %3231 = vmatpush1.bf16.msra.mxu0 %v2239
      %3232 = vmatprep.subr.bf16.mxu0 %v2232
      %3233 = vmatpush1.bf16.msra.mxu0 %v2231
      %3234 = vmatprep.subr.bf16.mxu0 %v2224
      %3235 = vmatpush1.bf16.msra.mxu0 %v2223
      %3236 = vmatprep.subr.bf16.mxu0 %v2216
      %3237 = vmatpush1.bf16.msra.mxu0 %v2215
      %3238 = vmatprep.subr.bf16.mxu0 %v2336
      %3239 = vmatpush2.bf16.msra.mxu0 %v2335
      %3240 = vmatprep.subr.bf16.mxu0 %v2328
      %3241 = vmatpush2.bf16.msra.mxu0 %v2327
      %3242 = vmatprep.subr.bf16.mxu0 %v2320
      %3243 = vmatpush2.bf16.msra.mxu0 %v2319
      %3244 = vmatprep.subr.bf16.mxu0 %v2312
      %3245 = vmatpush2.bf16.msra.mxu0 %v2311
      %3246 = vmatprep.subr.bf16.mxu0 %v2304
      %3247 = vmatpush2.bf16.msra.mxu0 %v2303
      %3248 = vmatprep.subr.bf16.mxu0 %v2296
      %3249 = vmatpush2.bf16.msra.mxu0 %v2295
      %3250 = vmatprep.subr.bf16.mxu0 %v2288
      %3251 = vmatpush2.bf16.msra.mxu0 %v2287
      %3252 = vmatprep.subr.bf16.mxu0 %v2280
      %3253 = vmatpush2.bf16.msra.mxu0 %v2279
      %3254 = vmatprep.mubr.bf16.mxu0 %v910
      %3255 = vmatmul.mubr.bf16.gmra.mxu0 %v909
      %v3256 = vpop.f32.mrf.mxu0
      %v3257 = vadd.f32 %v3204, %v3256
      %v3258 = vpop.f32.mrf.mxu0
      %v3259 = vadd.f32 %v3206, %v3258
      %v3260 = vpop.f32.mrf.mxu0
      %v3261 = vadd.f32 %v3208, %v3260
      %v3262 = vpop.f32.mrf.mxu0
      %v3263 = vadd.f32 %v3210, %v3262
      %3264 = vmatprep.mubr.bf16.mxu0 %v916
      %3265 = vmatmul.mubr.bf16.gmra.mxu0 %v915
      %v3266 = vpop.f32.mrf.mxu0
      %v3267 = vadd.f32 %v3214, %v3266
      %v3268 = vpop.f32.mrf.mxu0
      %v3269 = vadd.f32 %v3216, %v3268
      %v3270 = vpop.f32.mrf.mxu0
      %v3271 = vadd.f32 %v3218, %v3270
      %v3272 = vpop.f32.mrf.mxu0
      %v3273 = vadd.f32 %v3220, %v3272
      %3274 = vdwg.mxu0
      %3275 = vmatprep.subr.bf16.mxu0 %v2400
      %3276 = vmatpush1.bf16.msra.mxu0 %v2399
      %3277 = vmatprep.subr.bf16.mxu0 %v2392
      %3278 = vmatpush1.bf16.msra.mxu0 %v2391
      %3279 = vmatprep.subr.bf16.mxu0 %v2384
      %3280 = vmatpush1.bf16.msra.mxu0 %v2383
      %3281 = vmatprep.subr.bf16.mxu0 %v2376
      %3282 = vmatpush1.bf16.msra.mxu0 %v2375
      %3283 = vmatprep.subr.bf16.mxu0 %v2368
      %3284 = vmatpush1.bf16.msra.mxu0 %v2367
      %3285 = vmatprep.subr.bf16.mxu0 %v2360
      %3286 = vmatpush1.bf16.msra.mxu0 %v2359
      %3287 = vmatprep.subr.bf16.mxu0 %v2352
      %3288 = vmatpush1.bf16.msra.mxu0 %v2351
      %3289 = vmatprep.subr.bf16.mxu0 %v2344
      %3290 = vmatpush1.bf16.msra.mxu0 %v2343
      %3291 = vmatprep.subr.bf16.mxu0 %v2464
      %3292 = vmatpush2.bf16.msra.mxu0 %v2463
      %3293 = vmatprep.subr.bf16.mxu0 %v2456
      %3294 = vmatpush2.bf16.msra.mxu0 %v2455
      %3295 = vmatprep.subr.bf16.mxu0 %v2448
      %3296 = vmatpush2.bf16.msra.mxu0 %v2447
      %3297 = vmatprep.subr.bf16.mxu0 %v2440
      %3298 = vmatpush2.bf16.msra.mxu0 %v2439
      %3299 = vmatprep.subr.bf16.mxu0 %v2432
      %3300 = vmatpush2.bf16.msra.mxu0 %v2431
      %3301 = vmatprep.subr.bf16.mxu0 %v2424
      %3302 = vmatpush2.bf16.msra.mxu0 %v2423
      %3303 = vmatprep.subr.bf16.mxu0 %v2416
      %3304 = vmatpush2.bf16.msra.mxu0 %v2415
      %3305 = vmatprep.subr.bf16.mxu0 %v2408
      %3306 = vmatpush2.bf16.msra.mxu0 %v2407
      %3307 = vmatprep.mubr.bf16.mxu0 %v912
      %3308 = vmatmul.mubr.bf16.gmra.mxu0 %v911
      %v3309 = vpop.f32.mrf.mxu0
      %v3310 = vadd.f32 %v3257, %v3309
      %v3311 = vpop.f32.mrf.mxu0
      %v3312 = vadd.f32 %v3259, %v3311
      %v3313 = vpop.f32.mrf.mxu0
      %v3314 = vadd.f32 %v3261, %v3313
      %v3315 = vpop.f32.mrf.mxu0
      %v3316 = vadd.f32 %v3263, %v3315
      %3317 = vmatprep.mubr.bf16.mxu0 %v918
      %3318 = vmatmul.mubr.bf16.gmra.mxu0 %v917
      %v3319 = vpop.f32.mrf.mxu0
      %v3320 = vadd.f32 %v3267, %v3319
      %v3321 = vpop.f32.mrf.mxu0
      %v3322 = vadd.f32 %v3269, %v3321
      %v3323 = vpop.f32.mrf.mxu0
      %v3324 = vadd.f32 %v3271, %v3323
      %v3325 = vpop.f32.mrf.mxu0
      %v3326 = vadd.f32 %v3273, %v3325
      %3327 = vdwg.mxu0
      %3328 = vmatprep.subr.bf16.mxu0 %v2146
      %3329 = vmatpush1.bf16.msra.mxu0 %v2145
      %3330 = vmatprep.subr.bf16.mxu0 %v2138
      %3331 = vmatpush1.bf16.msra.mxu0 %v2137
      %3332 = vmatprep.subr.bf16.mxu0 %v2130
      %3333 = vmatpush1.bf16.msra.mxu0 %v2129
      %3334 = vmatprep.subr.bf16.mxu0 %v2122
      %3335 = vmatpush1.bf16.msra.mxu0 %v2121
      %3336 = vmatprep.subr.bf16.mxu0 %v2114
      %3337 = vmatpush1.bf16.msra.mxu0 %v2113
      %3338 = vmatprep.subr.bf16.mxu0 %v2106
      %3339 = vmatpush1.bf16.msra.mxu0 %v2105
      %3340 = vmatprep.subr.bf16.mxu0 %v2098
      %3341 = vmatpush1.bf16.msra.mxu0 %v2097
      %3342 = vmatprep.subr.bf16.mxu0 %v2090
      %3343 = vmatpush1.bf16.msra.mxu0 %v2089
      %3344 = vmatprep.subr.bf16.mxu0 %v2210
      %3345 = vmatpush2.bf16.msra.mxu0 %v2209
      %3346 = vmatprep.subr.bf16.mxu0 %v2202
      %3347 = vmatpush2.bf16.msra.mxu0 %v2201
      %3348 = vmatprep.subr.bf16.mxu0 %v2194
      %3349 = vmatpush2.bf16.msra.mxu0 %v2193
      %3350 = vmatprep.subr.bf16.mxu0 %v2186
      %3351 = vmatpush2.bf16.msra.mxu0 %v2185
      %3352 = vmatprep.subr.bf16.mxu0 %v2178
      %3353 = vmatpush2.bf16.msra.mxu0 %v2177
      %3354 = vmatprep.subr.bf16.mxu0 %v2170
      %3355 = vmatpush2.bf16.msra.mxu0 %v2169
      %3356 = vmatprep.subr.bf16.mxu0 %v2162
      %3357 = vmatpush2.bf16.msra.mxu0 %v2161
      %3358 = vmatprep.subr.bf16.mxu0 %v2154
      %3359 = vmatpush2.bf16.msra.mxu0 %v2153
      %3360 = vmatprep.mubr.bf16.mxu0 %v908
      %3361 = vmatmul.mubr.bf16.gmra.mxu0 %v907
      %v3362 = vpop.f32.mrf.mxu0
      %v3363 = vadd.f32 %v858, %v3362
      %v3364 = vpop.f32.mrf.mxu0
      %v3365 = vadd.f32 %v862, %v3364
      %v3366 = vpop.f32.mrf.mxu0
      %v3367 = vadd.f32 %v858, %v3366
      %v3368 = vpop.f32.mrf.mxu0
      %v3369 = vadd.f32 %v862, %v3368
      %3370 = vmatprep.mubr.bf16.mxu0 %v914
      %3371 = vmatmul.mubr.bf16.gmra.mxu0 %v913
      %v3372 = vpop.f32.mrf.mxu0
      %v3373 = vadd.f32 %v858, %v3372
      %v3374 = vpop.f32.mrf.mxu0
      %v3375 = vadd.f32 %v862, %v3374
      %v3376 = vpop.f32.mrf.mxu0
      %v3377 = vadd.f32 %v858, %v3376
      %v3378 = vpop.f32.mrf.mxu0
      %v3379 = vadd.f32 %v862, %v3378
      %3380 = vdwg.mxu0
      %3381 = vmatprep.subr.bf16.mxu0 %v2274
      %3382 = vmatpush1.bf16.msra.mxu0 %v2273
      %3383 = vmatprep.subr.bf16.mxu0 %v2266
      %3384 = vmatpush1.bf16.msra.mxu0 %v2265
      %3385 = vmatprep.subr.bf16.mxu0 %v2258
      %3386 = vmatpush1.bf16.msra.mxu0 %v2257
      %3387 = vmatprep.subr.bf16.mxu0 %v2250
      %3388 = vmatpush1.bf16.msra.mxu0 %v2249
      %3389 = vmatprep.subr.bf16.mxu0 %v2242
      %3390 = vmatpush1.bf16.msra.mxu0 %v2241
      %3391 = vmatprep.subr.bf16.mxu0 %v2234
      %3392 = vmatpush1.bf16.msra.mxu0 %v2233
      %3393 = vmatprep.subr.bf16.mxu0 %v2226
      %3394 = vmatpush1.bf16.msra.mxu0 %v2225
      %3395 = vmatprep.subr.bf16.mxu0 %v2218
      %3396 = vmatpush1.bf16.msra.mxu0 %v2217
      %3397 = vmatprep.subr.bf16.mxu0 %v2338
      %3398 = vmatpush2.bf16.msra.mxu0 %v2337
      %3399 = vmatprep.subr.bf16.mxu0 %v2330
      %3400 = vmatpush2.bf16.msra.mxu0 %v2329
      %3401 = vmatprep.subr.bf16.mxu0 %v2322
      %3402 = vmatpush2.bf16.msra.mxu0 %v2321
      %3403 = vmatprep.subr.bf16.mxu0 %v2314
      %3404 = vmatpush2.bf16.msra.mxu0 %v2313
      %3405 = vmatprep.subr.bf16.mxu0 %v2306
      %3406 = vmatpush2.bf16.msra.mxu0 %v2305
      %3407 = vmatprep.subr.bf16.mxu0 %v2298
      %3408 = vmatpush2.bf16.msra.mxu0 %v2297
      %3409 = vmatprep.subr.bf16.mxu0 %v2290
      %3410 = vmatpush2.bf16.msra.mxu0 %v2289
      %3411 = vmatprep.subr.bf16.mxu0 %v2282
      %3412 = vmatpush2.bf16.msra.mxu0 %v2281
      %3413 = vmatprep.mubr.bf16.mxu0 %v910
      %3414 = vmatmul.mubr.bf16.gmra.mxu0 %v909
      %v3415 = vpop.f32.mrf.mxu0
      %v3416 = vadd.f32 %v3363, %v3415
      %v3417 = vpop.f32.mrf.mxu0
      %v3418 = vadd.f32 %v3365, %v3417
      %v3419 = vpop.f32.mrf.mxu0
      %v3420 = vadd.f32 %v3367, %v3419
      %v3421 = vpop.f32.mrf.mxu0
      %v3422 = vadd.f32 %v3369, %v3421
      %3423 = vmatprep.mubr.bf16.mxu0 %v916
      %3424 = vmatmul.mubr.bf16.gmra.mxu0 %v915
      %v3425 = vpop.f32.mrf.mxu0
      %v3426 = vadd.f32 %v3373, %v3425
      %v3427 = vpop.f32.mrf.mxu0
      %v3428 = vadd.f32 %v3375, %v3427
      %v3429 = vpop.f32.mrf.mxu0
      %v3430 = vadd.f32 %v3377, %v3429
      %v3431 = vpop.f32.mrf.mxu0
      %v3432 = vadd.f32 %v3379, %v3431
      %3433 = vdwg.mxu0
      %3434 = vmatprep.subr.bf16.mxu0 %v2402
      %3435 = vmatpush1.bf16.msra.mxu0 %v2401
      %3436 = vmatprep.subr.bf16.mxu0 %v2394
      %3437 = vmatpush1.bf16.msra.mxu0 %v2393
      %3438 = vmatprep.subr.bf16.mxu0 %v2386
      %3439 = vmatpush1.bf16.msra.mxu0 %v2385
      %3440 = vmatprep.subr.bf16.mxu0 %v2378
      %3441 = vmatpush1.bf16.msra.mxu0 %v2377
      %3442 = vmatprep.subr.bf16.mxu0 %v2370
      %3443 = vmatpush1.bf16.msra.mxu0 %v2369
      %3444 = vmatprep.subr.bf16.mxu0 %v2362
      %3445 = vmatpush1.bf16.msra.mxu0 %v2361
      %3446 = vmatprep.subr.bf16.mxu0 %v2354
      %3447 = vmatpush1.bf16.msra.mxu0 %v2353
      %3448 = vmatprep.subr.bf16.mxu0 %v2346
      %3449 = vmatpush1.bf16.msra.mxu0 %v2345
      %3450 = vmatprep.subr.bf16.mxu0 %v2466
      %3451 = vmatpush2.bf16.msra.mxu0 %v2465
      %3452 = vmatprep.subr.bf16.mxu0 %v2458
      %3453 = vmatpush2.bf16.msra.mxu0 %v2457
      %3454 = vmatprep.subr.bf16.mxu0 %v2450
      %3455 = vmatpush2.bf16.msra.mxu0 %v2449
      %3456 = vmatprep.subr.bf16.mxu0 %v2442
      %3457 = vmatpush2.bf16.msra.mxu0 %v2441
      %3458 = vmatprep.subr.bf16.mxu0 %v2434
      %3459 = vmatpush2.bf16.msra.mxu0 %v2433
      %3460 = vmatprep.subr.bf16.mxu0 %v2426
      %3461 = vmatpush2.bf16.msra.mxu0 %v2425
      %3462 = vmatprep.subr.bf16.mxu0 %v2418
      %3463 = vmatpush2.bf16.msra.mxu0 %v2417
      %3464 = vmatprep.subr.bf16.mxu0 %v2410
      %3465 = vmatpush2.bf16.msra.mxu0 %v2409
      %3466 = vmatprep.mubr.bf16.mxu0 %v912
      %3467 = vmatmul.mubr.bf16.gmra.mxu0 %v911
      %v3468 = vpop.f32.mrf.mxu0
      %v3469 = vadd.f32 %v3416, %v3468
      %v3470 = vpop.f32.mrf.mxu0
      %v3471 = vadd.f32 %v3418, %v3470
      %v3472 = vpop.f32.mrf.mxu0
      %v3473 = vadd.f32 %v3420, %v3472
      %v3474 = vpop.f32.mrf.mxu0
      %v3475 = vadd.f32 %v3422, %v3474
      %3476 = vmatprep.mubr.bf16.mxu0 %v918
      %3477 = vmatmul.mubr.bf16.gmra.mxu0 %v917
      %v3478 = vpop.f32.mrf.mxu0
      %v3479 = vadd.f32 %v3426, %v3478
      %v3480 = vpop.f32.mrf.mxu0
      %v3481 = vadd.f32 %v3428, %v3480
      %v3482 = vpop.f32.mrf.mxu0
      %v3483 = vadd.f32 %v3430, %v3482
      %v3484 = vpop.f32.mrf.mxu0
      %v3485 = vadd.f32 %v3432, %v3484
      %3486 = vdwg.mxu0
      %3487 = vst [vmem:[#allocation2] sm:$0xff] %v2992
      %3488 = vst [vmem:[#allocation2 + $0x8] sm:$0xff] %v2994
      %3489 = vst [vmem:[#allocation2 + $0x10] sm:$0xff] %v3151
      %3490 = vst [vmem:[#allocation2 + $0x18] sm:$0xff] %v3153
      %3491 = vst [vmem:[#allocation2 + $0x20] sm:$0xff] %v3310
      %3492 = vst [vmem:[#allocation2 + $0x28] sm:$0xff] %v3312
      %3493 = vst [vmem:[#allocation2 + $0x30] sm:$0xff] %v3469
      %3494 = vst [vmem:[#allocation2 + $0x38] sm:$0xff] %v3471
      %3495 = vst [vmem:[#allocation2 + $0x40] sm:$0xff] %v2996
      %3496 = vst [vmem:[#allocation2 + $0x48] sm:$0xff] %v2998
      %3497 = vst [vmem:[#allocation2 + $0x50] sm:$0xff] %v3155
      %3498 = vst [vmem:[#allocation2 + $0x58] sm:$0xff] %v3157
      %3499 = vst [vmem:[#allocation2 + $0x60] sm:$0xff] %v3314
      %3500 = vst [vmem:[#allocation2 + $0x68] sm:$0xff] %v3316
      %3501 = vst [vmem:[#allocation2 + $0x70] sm:$0xff] %v3473
      %3502 = vst [vmem:[#allocation2 + $0x78] sm:$0xff] %v3475
      %3503 = vst [vmem:[#allocation2 + $0x80] sm:$0xff] %v3002
      %3504 = vst [vmem:[#allocation2 + $0x88] sm:$0xff] %v3004
      %3505 = vst [vmem:[#allocation2 + $0x90] sm:$0xff] %v3161
      %3506 = vst [vmem:[#allocation2 + $0x98] sm:$0xff] %v3163
      %3507 = vst [vmem:[#allocation2 + $0xa0] sm:$0xff] %v3320
      %3508 = vst [vmem:[#allocation2 + $0xa8] sm:$0xff] %v3322
      %3509 = vst [vmem:[#allocation2 + $0xb0] sm:$0xff] %v3479
      %3510 = vst [vmem:[#allocation2 + $0xb8] sm:$0xff] %v3481
      %3511 = vst [vmem:[#allocation2 + $0xc0] sm:$0xff] %v3006
      %3512 = vst [vmem:[#allocation2 + $0xc8] sm:$0xff] %v3008
      %3513 = vst [vmem:[#allocation2 + $0xd0] sm:$0xff] %v3165
      %3514 = vst [vmem:[#allocation2 + $0xd8] sm:$0xff] %v3167
      %3515 = vst [vmem:[#allocation2 + $0xe0] sm:$0xff] %v3324
      %3516 = vst [vmem:[#allocation2 + $0xe8] sm:$0xff] %v3326
      %3517 = vst [vmem:[#allocation2 + $0xf0] sm:$0xff] %v3483
      %3518 = vst [vmem:[#allocation2 + $0xf8] sm:$0xff] %v3485
      %v3519 = vld [vmem:[%s5] sm:$0xff]
      %v3520 = vld [vmem:[%s5 + $0x8] sm:$0xff]
      %v3521 = vld [vmem:[%s5 + $0x10] sm:$0xff]
      %v3522 = vld [vmem:[%s5 + $0x18] sm:$0xff]
      %v3523 = vld [vmem:[%s5 + $0x20] sm:$0xff]
      %v3524 = vld [vmem:[%s5 + $0x28] sm:$0xff]
      %v3525 = vld [vmem:[%s5 + $0x30] sm:$0xff]
      %v3526 = vld [vmem:[%s5 + $0x38] sm:$0xff]
      %v3527 = vld [vmem:[%s5 + $0x40] sm:$0xff]
      %v3528 = vld [vmem:[%s5 + $0x48] sm:$0xff]
      %v3529 = vld [vmem:[%s5 + $0x50] sm:$0xff]
      %v3530 = vld [vmem:[%s5 + $0x58] sm:$0xff]
      %v3531 = vld [vmem:[%s5 + $0x60] sm:$0xff]
      %v3532 = vld [vmem:[%s5 + $0x68] sm:$0xff]
      %v3533 = vld [vmem:[%s5 + $0x70] sm:$0xff]
      %v3534 = vld [vmem:[%s5 + $0x78] sm:$0xff]
      %v3535 = vld [vmem:[%s5 + $0x80] sm:$0xff]
      %v3536 = vld [vmem:[%s5 + $0x88] sm:$0xff]
      %v3537 = vld [vmem:[%s5 + $0x90] sm:$0xff]
      %v3538 = vld [vmem:[%s5 + $0x98] sm:$0xff]
      %v3539 = vld [vmem:[%s5 + $0xa0] sm:$0xff]
      %v3540 = vld [vmem:[%s5 + $0xa8] sm:$0xff]
      %v3541 = vld [vmem:[%s5 + $0xb0] sm:$0xff]
      %v3542 = vld [vmem:[%s5 + $0xb8] sm:$0xff]
      %v3543 = vld [vmem:[%s5 + $0xc0] sm:$0xff]
      %v3544 = vld [vmem:[%s5 + $0xc8] sm:$0xff]
      %v3545 = vld [vmem:[%s5 + $0xd0] sm:$0xff]
      %v3546 = vld [vmem:[%s5 + $0xd8] sm:$0xff]
      %v3547 = vld [vmem:[%s5 + $0xe0] sm:$0xff]
      %v3548 = vld [vmem:[%s5 + $0xe8] sm:$0xff]
      %v3549 = vld [vmem:[%s5 + $0xf0] sm:$0xff]
      %v3550 = vld [vmem:[%s5 + $0xf8] sm:$0xff]
      %v3551 = vld [vmem:[%s5 + $0x100] sm:$0xff]
      %v3552 = vld [vmem:[%s5 + $0x108] sm:$0xff]
      %v3553 = vld [vmem:[%s5 + $0x110] sm:$0xff]
      %v3554 = vld [vmem:[%s5 + $0x118] sm:$0xff]
      %v3555 = vld [vmem:[%s5 + $0x120] sm:$0xff]
      %v3556 = vld [vmem:[%s5 + $0x128] sm:$0xff]
      %v3557 = vld [vmem:[%s5 + $0x130] sm:$0xff]
      %v3558 = vld [vmem:[%s5 + $0x138] sm:$0xff]
      %v3559 = vld [vmem:[%s5 + $0x140] sm:$0xff]
      %v3560 = vld [vmem:[%s5 + $0x148] sm:$0xff]
      %v3561 = vld [vmem:[%s5 + $0x150] sm:$0xff]
      %v3562 = vld [vmem:[%s5 + $0x158] sm:$0xff]
      %v3563 = vld [vmem:[%s5 + $0x160] sm:$0xff]
      %v3564 = vld [vmem:[%s5 + $0x168] sm:$0xff]
      %v3565 = vld [vmem:[%s5 + $0x170] sm:$0xff]
      %v3566 = vld [vmem:[%s5 + $0x178] sm:$0xff]
      %v3567 = vld [vmem:[%s5 + $0x180] sm:$0xff]
      %v3568 = vld [vmem:[%s5 + $0x188] sm:$0xff]
      %v3569 = vld [vmem:[%s5 + $0x190] sm:$0xff]
      %v3570 = vld [vmem:[%s5 + $0x198] sm:$0xff]
      %v3571 = vld [vmem:[%s5 + $0x1a0] sm:$0xff]
      %v3572 = vld [vmem:[%s5 + $0x1a8] sm:$0xff]
      %v3573 = vld [vmem:[%s5 + $0x1b0] sm:$0xff]
      %v3574 = vld [vmem:[%s5 + $0x1b8] sm:$0xff]
      %v3575 = vld [vmem:[%s5 + $0x1c0] sm:$0xff]
      %v3576 = vld [vmem:[%s5 + $0x1c8] sm:$0xff]
      %v3577 = vld [vmem:[%s5 + $0x1d0] sm:$0xff]
      %v3578 = vld [vmem:[%s5 + $0x1d8] sm:$0xff]
      %v3579 = vld [vmem:[%s5 + $0x1e0] sm:$0xff]
      %v3580 = vld [vmem:[%s5 + $0x1e8] sm:$0xff]
      %v3581 = vld [vmem:[%s5 + $0x1f0] sm:$0xff]
      %v3582 = vld [vmem:[%s5 + $0x1f8] sm:$0xff]
      %v3583 = vld [vmem:[%s5 + $0x200] sm:$0xff]
      %v3584 = vld [vmem:[%s5 + $0x208] sm:$0xff]
      %v3585 = vld [vmem:[%s5 + $0x210] sm:$0xff]
      %v3586 = vld [vmem:[%s5 + $0x218] sm:$0xff]
      %v3587 = vld [vmem:[%s5 + $0x220] sm:$0xff]
      %v3588 = vld [vmem:[%s5 + $0x228] sm:$0xff]
      %v3589 = vld [vmem:[%s5 + $0x230] sm:$0xff]
      %v3590 = vld [vmem:[%s5 + $0x238] sm:$0xff]
      %v3591 = vld [vmem:[%s5 + $0x240] sm:$0xff]
      %v3592 = vld [vmem:[%s5 + $0x248] sm:$0xff]
      %v3593 = vld [vmem:[%s5 + $0x250] sm:$0xff]
      %v3594 = vld [vmem:[%s5 + $0x258] sm:$0xff]
      %v3595 = vld [vmem:[%s5 + $0x260] sm:$0xff]
      %v3596 = vld [vmem:[%s5 + $0x268] sm:$0xff]
      %v3597 = vld [vmem:[%s5 + $0x270] sm:$0xff]
      %v3598 = vld [vmem:[%s5 + $0x278] sm:$0xff]
      %v3599 = vld [vmem:[%s5 + $0x280] sm:$0xff]
      %v3600 = vld [vmem:[%s5 + $0x288] sm:$0xff]
      %v3601 = vld [vmem:[%s5 + $0x290] sm:$0xff]
      %v3602 = vld [vmem:[%s5 + $0x298] sm:$0xff]
      %v3603 = vld [vmem:[%s5 + $0x2a0] sm:$0xff]
      %v3604 = vld [vmem:[%s5 + $0x2a8] sm:$0xff]
      %v3605 = vld [vmem:[%s5 + $0x2b0] sm:$0xff]
      %v3606 = vld [vmem:[%s5 + $0x2b8] sm:$0xff]
      %v3607 = vld [vmem:[%s5 + $0x2c0] sm:$0xff]
      %v3608 = vld [vmem:[%s5 + $0x2c8] sm:$0xff]
      %v3609 = vld [vmem:[%s5 + $0x2d0] sm:$0xff]
      %v3610 = vld [vmem:[%s5 + $0x2d8] sm:$0xff]
      %v3611 = vld [vmem:[%s5 + $0x2e0] sm:$0xff]
      %v3612 = vld [vmem:[%s5 + $0x2e8] sm:$0xff]
      %v3613 = vld [vmem:[%s5 + $0x2f0] sm:$0xff]
      %v3614 = vld [vmem:[%s5 + $0x2f8] sm:$0xff]
      %v3615 = vld [vmem:[%s5 + $0x300] sm:$0xff]
      %v3616 = vld [vmem:[%s5 + $0x308] sm:$0xff]
      %v3617 = vld [vmem:[%s5 + $0x310] sm:$0xff]
      %v3618 = vld [vmem:[%s5 + $0x318] sm:$0xff]
      %v3619 = vld [vmem:[%s5 + $0x320] sm:$0xff]
      %v3620 = vld [vmem:[%s5 + $0x328] sm:$0xff]
      %v3621 = vld [vmem:[%s5 + $0x330] sm:$0xff]
      %v3622 = vld [vmem:[%s5 + $0x338] sm:$0xff]
      %v3623 = vld [vmem:[%s5 + $0x340] sm:$0xff]
      %v3624 = vld [vmem:[%s5 + $0x348] sm:$0xff]
      %v3625 = vld [vmem:[%s5 + $0x350] sm:$0xff]
      %v3626 = vld [vmem:[%s5 + $0x358] sm:$0xff]
      %v3627 = vld [vmem:[%s5 + $0x360] sm:$0xff]
      %v3628 = vld [vmem:[%s5 + $0x368] sm:$0xff]
      %v3629 = vld [vmem:[%s5 + $0x370] sm:$0xff]
      %v3630 = vld [vmem:[%s5 + $0x378] sm:$0xff]
      %v3631 = vld [vmem:[%s5 + $0x380] sm:$0xff]
      %v3632 = vld [vmem:[%s5 + $0x388] sm:$0xff]
      %v3633 = vld [vmem:[%s5 + $0x390] sm:$0xff]
      %v3634 = vld [vmem:[%s5 + $0x398] sm:$0xff]
      %v3635 = vld [vmem:[%s5 + $0x3a0] sm:$0xff]
      %v3636 = vld [vmem:[%s5 + $0x3a8] sm:$0xff]
      %v3637 = vld [vmem:[%s5 + $0x3b0] sm:$0xff]
      %v3638 = vld [vmem:[%s5 + $0x3b8] sm:$0xff]
      %v3639 = vld [vmem:[%s5 + $0x3c0] sm:$0xff]
      %v3640 = vld [vmem:[%s5 + $0x3c8] sm:$0xff]
      %v3641 = vld [vmem:[%s5 + $0x3d0] sm:$0xff]
      %v3642 = vld [vmem:[%s5 + $0x3d8] sm:$0xff]
      %v3643 = vld [vmem:[%s5 + $0x3e0] sm:$0xff]
      %v3644 = vld [vmem:[%s5 + $0x3e8] sm:$0xff]
      %v3645 = vld [vmem:[%s5 + $0x3f0] sm:$0xff]
      %v3646 = vld [vmem:[%s5 + $0x3f8] sm:$0xff]
      %v3647 = vld [vmem:[%s5 + $0x400] sm:$0xff]
      %v3648 = vld [vmem:[%s5 + $0x408] sm:$0xff]
      %v3649 = vld [vmem:[%s5 + $0x410] sm:$0xff]
      %v3650 = vld [vmem:[%s5 + $0x418] sm:$0xff]
      %v3651 = vld [vmem:[%s5 + $0x420] sm:$0xff]
      %v3652 = vld [vmem:[%s5 + $0x428] sm:$0xff]
      %v3653 = vld [vmem:[%s5 + $0x430] sm:$0xff]
      %v3654 = vld [vmem:[%s5 + $0x438] sm:$0xff]
      %v3655 = vld [vmem:[%s5 + $0x440] sm:$0xff]
      %v3656 = vld [vmem:[%s5 + $0x448] sm:$0xff]
      %v3657 = vld [vmem:[%s5 + $0x450] sm:$0xff]
      %v3658 = vld [vmem:[%s5 + $0x458] sm:$0xff]
      %v3659 = vld [vmem:[%s5 + $0x460] sm:$0xff]
      %v3660 = vld [vmem:[%s5 + $0x468] sm:$0xff]
      %v3661 = vld [vmem:[%s5 + $0x470] sm:$0xff]
      %v3662 = vld [vmem:[%s5 + $0x478] sm:$0xff]
      %v3663 = vld [vmem:[%s5 + $0x480] sm:$0xff]
      %v3664 = vld [vmem:[%s5 + $0x488] sm:$0xff]
      %v3665 = vld [vmem:[%s5 + $0x490] sm:$0xff]
      %v3666 = vld [vmem:[%s5 + $0x498] sm:$0xff]
      %v3667 = vld [vmem:[%s5 + $0x4a0] sm:$0xff]
      %v3668 = vld [vmem:[%s5 + $0x4a8] sm:$0xff]
      %v3669 = vld [vmem:[%s5 + $0x4b0] sm:$0xff]
      %v3670 = vld [vmem:[%s5 + $0x4b8] sm:$0xff]
      %v3671 = vld [vmem:[%s5 + $0x4c0] sm:$0xff]
      %v3672 = vld [vmem:[%s5 + $0x4c8] sm:$0xff]
      %v3673 = vld [vmem:[%s5 + $0x4d0] sm:$0xff]
      %v3674 = vld [vmem:[%s5 + $0x4d8] sm:$0xff]
      %v3675 = vld [vmem:[%s5 + $0x4e0] sm:$0xff]
      %v3676 = vld [vmem:[%s5 + $0x4e8] sm:$0xff]
      %v3677 = vld [vmem:[%s5 + $0x4f0] sm:$0xff]
      %v3678 = vld [vmem:[%s5 + $0x4f8] sm:$0xff]
      %v3679 = vld [vmem:[%s5 + $0x500] sm:$0xff]
      %v3680 = vld [vmem:[%s5 + $0x508] sm:$0xff]
      %v3681 = vld [vmem:[%s5 + $0x510] sm:$0xff]
      %v3682 = vld [vmem:[%s5 + $0x518] sm:$0xff]
      %v3683 = vld [vmem:[%s5 + $0x520] sm:$0xff]
      %v3684 = vld [vmem:[%s5 + $0x528] sm:$0xff]
      %v3685 = vld [vmem:[%s5 + $0x530] sm:$0xff]
      %v3686 = vld [vmem:[%s5 + $0x538] sm:$0xff]
      %v3687 = vld [vmem:[%s5 + $0x540] sm:$0xff]
      %v3688 = vld [vmem:[%s5 + $0x548] sm:$0xff]
      %v3689 = vld [vmem:[%s5 + $0x550] sm:$0xff]
      %v3690 = vld [vmem:[%s5 + $0x558] sm:$0xff]
      %v3691 = vld [vmem:[%s5 + $0x560] sm:$0xff]
      %v3692 = vld [vmem:[%s5 + $0x568] sm:$0xff]
      %v3693 = vld [vmem:[%s5 + $0x570] sm:$0xff]
      %v3694 = vld [vmem:[%s5 + $0x578] sm:$0xff]
      %v3695 = vld [vmem:[%s5 + $0x580] sm:$0xff]
      %v3696 = vld [vmem:[%s5 + $0x588] sm:$0xff]
      %v3697 = vld [vmem:[%s5 + $0x590] sm:$0xff]
      %v3698 = vld [vmem:[%s5 + $0x598] sm:$0xff]
      %v3699 = vld [vmem:[%s5 + $0x5a0] sm:$0xff]
      %v3700 = vld [vmem:[%s5 + $0x5a8] sm:$0xff]
      %v3701 = vld [vmem:[%s5 + $0x5b0] sm:$0xff]
      %v3702 = vld [vmem:[%s5 + $0x5b8] sm:$0xff]
      %v3703 = vld [vmem:[%s5 + $0x5c0] sm:$0xff]
      %v3704 = vld [vmem:[%s5 + $0x5c8] sm:$0xff]
      %v3705 = vld [vmem:[%s5 + $0x5d0] sm:$0xff]
      %v3706 = vld [vmem:[%s5 + $0x5d8] sm:$0xff]
      %v3707 = vld [vmem:[%s5 + $0x5e0] sm:$0xff]
      %v3708 = vld [vmem:[%s5 + $0x5e8] sm:$0xff]
      %v3709 = vld [vmem:[%s5 + $0x5f0] sm:$0xff]
      %v3710 = vld [vmem:[%s5 + $0x5f8] sm:$0xff]
      %v3711 = vld [vmem:[%s5 + $0x600] sm:$0xff]
      %v3712 = vld [vmem:[%s5 + $0x608] sm:$0xff]
      %v3713 = vld [vmem:[%s5 + $0x610] sm:$0xff]
      %v3714 = vld [vmem:[%s5 + $0x618] sm:$0xff]
      %v3715 = vld [vmem:[%s5 + $0x620] sm:$0xff]
      %v3716 = vld [vmem:[%s5 + $0x628] sm:$0xff]
      %v3717 = vld [vmem:[%s5 + $0x630] sm:$0xff]
      %v3718 = vld [vmem:[%s5 + $0x638] sm:$0xff]
      %v3719 = vld [vmem:[%s5 + $0x640] sm:$0xff]
      %v3720 = vld [vmem:[%s5 + $0x648] sm:$0xff]
      %v3721 = vld [vmem:[%s5 + $0x650] sm:$0xff]
      %v3722 = vld [vmem:[%s5 + $0x658] sm:$0xff]
      %v3723 = vld [vmem:[%s5 + $0x660] sm:$0xff]
      %v3724 = vld [vmem:[%s5 + $0x668] sm:$0xff]
      %v3725 = vld [vmem:[%s5 + $0x670] sm:$0xff]
      %v3726 = vld [vmem:[%s5 + $0x678] sm:$0xff]
      %v3727 = vld [vmem:[%s5 + $0x680] sm:$0xff]
      %v3728 = vld [vmem:[%s5 + $0x688] sm:$0xff]
      %v3729 = vld [vmem:[%s5 + $0x690] sm:$0xff]
      %v3730 = vld [vmem:[%s5 + $0x698] sm:$0xff]
      %v3731 = vld [vmem:[%s5 + $0x6a0] sm:$0xff]
      %v3732 = vld [vmem:[%s5 + $0x6a8] sm:$0xff]
      %v3733 = vld [vmem:[%s5 + $0x6b0] sm:$0xff]
      %v3734 = vld [vmem:[%s5 + $0x6b8] sm:$0xff]
      %v3735 = vld [vmem:[%s5 + $0x6c0] sm:$0xff]
      %v3736 = vld [vmem:[%s5 + $0x6c8] sm:$0xff]
      %v3737 = vld [vmem:[%s5 + $0x6d0] sm:$0xff]
      %v3738 = vld [vmem:[%s5 + $0x6d8] sm:$0xff]
      %v3739 = vld [vmem:[%s5 + $0x6e0] sm:$0xff]
      %v3740 = vld [vmem:[%s5 + $0x6e8] sm:$0xff]
      %v3741 = vld [vmem:[%s5 + $0x6f0] sm:$0xff]
      %v3742 = vld [vmem:[%s5 + $0x6f8] sm:$0xff]
      %v3743 = vld [vmem:[%s5 + $0x700] sm:$0xff]
      %v3744 = vld [vmem:[%s5 + $0x708] sm:$0xff]
      %v3745 = vld [vmem:[%s5 + $0x710] sm:$0xff]
      %v3746 = vld [vmem:[%s5 + $0x718] sm:$0xff]
      %v3747 = vld [vmem:[%s5 + $0x720] sm:$0xff]
      %v3748 = vld [vmem:[%s5 + $0x728] sm:$0xff]
      %v3749 = vld [vmem:[%s5 + $0x730] sm:$0xff]
      %v3750 = vld [vmem:[%s5 + $0x738] sm:$0xff]
      %v3751 = vld [vmem:[%s5 + $0x740] sm:$0xff]
      %v3752 = vld [vmem:[%s5 + $0x748] sm:$0xff]
      %v3753 = vld [vmem:[%s5 + $0x750] sm:$0xff]
      %v3754 = vld [vmem:[%s5 + $0x758] sm:$0xff]
      %v3755 = vld [vmem:[%s5 + $0x760] sm:$0xff]
      %v3756 = vld [vmem:[%s5 + $0x768] sm:$0xff]
      %v3757 = vld [vmem:[%s5 + $0x770] sm:$0xff]
      %v3758 = vld [vmem:[%s5 + $0x778] sm:$0xff]
      %v3759 = vld [vmem:[%s5 + $0x780] sm:$0xff]
      %v3760 = vld [vmem:[%s5 + $0x788] sm:$0xff]
      %v3761 = vld [vmem:[%s5 + $0x790] sm:$0xff]
      %v3762 = vld [vmem:[%s5 + $0x798] sm:$0xff]
      %v3763 = vld [vmem:[%s5 + $0x7a0] sm:$0xff]
      %v3764 = vld [vmem:[%s5 + $0x7a8] sm:$0xff]
      %v3765 = vld [vmem:[%s5 + $0x7b0] sm:$0xff]
      %v3766 = vld [vmem:[%s5 + $0x7b8] sm:$0xff]
      %v3767 = vld [vmem:[%s5 + $0x7c0] sm:$0xff]
      %v3768 = vld [vmem:[%s5 + $0x7c8] sm:$0xff]
      %v3769 = vld [vmem:[%s5 + $0x7d0] sm:$0xff]
      %v3770 = vld [vmem:[%s5 + $0x7d8] sm:$0xff]
      %v3771 = vld [vmem:[%s5 + $0x7e0] sm:$0xff]
      %v3772 = vld [vmem:[%s5 + $0x7e8] sm:$0xff]
      %v3773 = vld [vmem:[%s5 + $0x7f0] sm:$0xff]
      %v3774 = vld [vmem:[%s5 + $0x7f8] sm:$0xff]
      %v3775 = vld [vmem:[%s5 + $0x800] sm:$0xff]
      %v3776 = vld [vmem:[%s5 + $0x808] sm:$0xff]
      %v3777 = vld [vmem:[%s5 + $0x810] sm:$0xff]
      %v3778 = vld [vmem:[%s5 + $0x818] sm:$0xff]
      %v3779 = vld [vmem:[%s5 + $0x820] sm:$0xff]
      %v3780 = vld [vmem:[%s5 + $0x828] sm:$0xff]
      %v3781 = vld [vmem:[%s5 + $0x830] sm:$0xff]
      %v3782 = vld [vmem:[%s5 + $0x838] sm:$0xff]
      %v3783 = vld [vmem:[%s5 + $0x840] sm:$0xff]
      %v3784 = vld [vmem:[%s5 + $0x848] sm:$0xff]
      %v3785 = vld [vmem:[%s5 + $0x850] sm:$0xff]
      %v3786 = vld [vmem:[%s5 + $0x858] sm:$0xff]
      %v3787 = vld [vmem:[%s5 + $0x860] sm:$0xff]
      %v3788 = vld [vmem:[%s5 + $0x868] sm:$0xff]
      %v3789 = vld [vmem:[%s5 + $0x870] sm:$0xff]
      %v3790 = vld [vmem:[%s5 + $0x878] sm:$0xff]
      %v3791 = vld [vmem:[%s5 + $0x880] sm:$0xff]
      %v3792 = vld [vmem:[%s5 + $0x888] sm:$0xff]
      %v3793 = vld [vmem:[%s5 + $0x890] sm:$0xff]
      %v3794 = vld [vmem:[%s5 + $0x898] sm:$0xff]
      %v3795 = vld [vmem:[%s5 + $0x8a0] sm:$0xff]
      %v3796 = vld [vmem:[%s5 + $0x8a8] sm:$0xff]
      %v3797 = vld [vmem:[%s5 + $0x8b0] sm:$0xff]
      %v3798 = vld [vmem:[%s5 + $0x8b8] sm:$0xff]
      %v3799 = vld [vmem:[%s5 + $0x8c0] sm:$0xff]
      %v3800 = vld [vmem:[%s5 + $0x8c8] sm:$0xff]
      %v3801 = vld [vmem:[%s5 + $0x8d0] sm:$0xff]
      %v3802 = vld [vmem:[%s5 + $0x8d8] sm:$0xff]
      %v3803 = vld [vmem:[%s5 + $0x8e0] sm:$0xff]
      %v3804 = vld [vmem:[%s5 + $0x8e8] sm:$0xff]
      %v3805 = vld [vmem:[%s5 + $0x8f0] sm:$0xff]
      %v3806 = vld [vmem:[%s5 + $0x8f8] sm:$0xff]
      %v3807 = vld [vmem:[%s5 + $0x900] sm:$0xff]
      %v3808 = vld [vmem:[%s5 + $0x908] sm:$0xff]
      %v3809 = vld [vmem:[%s5 + $0x910] sm:$0xff]
      %v3810 = vld [vmem:[%s5 + $0x918] sm:$0xff]
      %v3811 = vld [vmem:[%s5 + $0x920] sm:$0xff]
      %v3812 = vld [vmem:[%s5 + $0x928] sm:$0xff]
      %v3813 = vld [vmem:[%s5 + $0x930] sm:$0xff]
      %v3814 = vld [vmem:[%s5 + $0x938] sm:$0xff]
      %v3815 = vld [vmem:[%s5 + $0x940] sm:$0xff]
      %v3816 = vld [vmem:[%s5 + $0x948] sm:$0xff]
      %v3817 = vld [vmem:[%s5 + $0x950] sm:$0xff]
      %v3818 = vld [vmem:[%s5 + $0x958] sm:$0xff]
      %v3819 = vld [vmem:[%s5 + $0x960] sm:$0xff]
      %v3820 = vld [vmem:[%s5 + $0x968] sm:$0xff]
      %v3821 = vld [vmem:[%s5 + $0x970] sm:$0xff]
      %v3822 = vld [vmem:[%s5 + $0x978] sm:$0xff]
      %v3823 = vld [vmem:[%s5 + $0x980] sm:$0xff]
      %v3824 = vld [vmem:[%s5 + $0x988] sm:$0xff]
      %v3825 = vld [vmem:[%s5 + $0x990] sm:$0xff]
      %v3826 = vld [vmem:[%s5 + $0x998] sm:$0xff]
      %v3827 = vld [vmem:[%s5 + $0x9a0] sm:$0xff]
      %v3828 = vld [vmem:[%s5 + $0x9a8] sm:$0xff]
      %v3829 = vld [vmem:[%s5 + $0x9b0] sm:$0xff]
      %v3830 = vld [vmem:[%s5 + $0x9b8] sm:$0xff]
      %v3831 = vld [vmem:[%s5 + $0x9c0] sm:$0xff]
      %v3832 = vld [vmem:[%s5 + $0x9c8] sm:$0xff]
      %v3833 = vld [vmem:[%s5 + $0x9d0] sm:$0xff]
      %v3834 = vld [vmem:[%s5 + $0x9d8] sm:$0xff]
      %v3835 = vld [vmem:[%s5 + $0x9e0] sm:$0xff]
      %v3836 = vld [vmem:[%s5 + $0x9e8] sm:$0xff]
      %v3837 = vld [vmem:[%s5 + $0x9f0] sm:$0xff]
      %v3838 = vld [vmem:[%s5 + $0x9f8] sm:$0xff]
      %v3839 = vld [vmem:[%s5 + $0xa00] sm:$0xff]
      %v3840 = vld [vmem:[%s5 + $0xa08] sm:$0xff]
      %v3841 = vld [vmem:[%s5 + $0xa10] sm:$0xff]
      %v3842 = vld [vmem:[%s5 + $0xa18] sm:$0xff]
      %v3843 = vld [vmem:[%s5 + $0xa20] sm:$0xff]
      %v3844 = vld [vmem:[%s5 + $0xa28] sm:$0xff]
      %v3845 = vld [vmem:[%s5 + $0xa30] sm:$0xff]
      %v3846 = vld [vmem:[%s5 + $0xa38] sm:$0xff]
      %v3847 = vld [vmem:[%s5 + $0xa40] sm:$0xff]
      %v3848 = vld [vmem:[%s5 + $0xa48] sm:$0xff]
      %v3849 = vld [vmem:[%s5 + $0xa50] sm:$0xff]
      %v3850 = vld [vmem:[%s5 + $0xa58] sm:$0xff]
      %v3851 = vld [vmem:[%s5 + $0xa60] sm:$0xff]
      %v3852 = vld [vmem:[%s5 + $0xa68] sm:$0xff]
      %v3853 = vld [vmem:[%s5 + $0xa70] sm:$0xff]
      %v3854 = vld [vmem:[%s5 + $0xa78] sm:$0xff]
      %v3855 = vld [vmem:[%s5 + $0xa80] sm:$0xff]
      %v3856 = vld [vmem:[%s5 + $0xa88] sm:$0xff]
      %v3857 = vld [vmem:[%s5 + $0xa90] sm:$0xff]
      %v3858 = vld [vmem:[%s5 + $0xa98] sm:$0xff]
      %v3859 = vld [vmem:[%s5 + $0xaa0] sm:$0xff]
      %v3860 = vld [vmem:[%s5 + $0xaa8] sm:$0xff]
      %v3861 = vld [vmem:[%s5 + $0xab0] sm:$0xff]
      %v3862 = vld [vmem:[%s5 + $0xab8] sm:$0xff]
      %v3863 = vld [vmem:[%s5 + $0xac0] sm:$0xff]
      %v3864 = vld [vmem:[%s5 + $0xac8] sm:$0xff]
      %v3865 = vld [vmem:[%s5 + $0xad0] sm:$0xff]
      %v3866 = vld [vmem:[%s5 + $0xad8] sm:$0xff]
      %v3867 = vld [vmem:[%s5 + $0xae0] sm:$0xff]
      %v3868 = vld [vmem:[%s5 + $0xae8] sm:$0xff]
      %v3869 = vld [vmem:[%s5 + $0xaf0] sm:$0xff]
      %v3870 = vld [vmem:[%s5 + $0xaf8] sm:$0xff]
      %v3871 = vld [vmem:[%s5 + $0xb00] sm:$0xff]
      %v3872 = vld [vmem:[%s5 + $0xb08] sm:$0xff]
      %v3873 = vld [vmem:[%s5 + $0xb10] sm:$0xff]
      %v3874 = vld [vmem:[%s5 + $0xb18] sm:$0xff]
      %v3875 = vld [vmem:[%s5 + $0xb20] sm:$0xff]
      %v3876 = vld [vmem:[%s5 + $0xb28] sm:$0xff]
      %v3877 = vld [vmem:[%s5 + $0xb30] sm:$0xff]
      %v3878 = vld [vmem:[%s5 + $0xb38] sm:$0xff]
      %v3879 = vld [vmem:[%s5 + $0xb40] sm:$0xff]
      %v3880 = vld [vmem:[%s5 + $0xb48] sm:$0xff]
      %v3881 = vld [vmem:[%s5 + $0xb50] sm:$0xff]
      %v3882 = vld [vmem:[%s5 + $0xb58] sm:$0xff]
      %v3883 = vld [vmem:[%s5 + $0xb60] sm:$0xff]
      %v3884 = vld [vmem:[%s5 + $0xb68] sm:$0xff]
      %v3885 = vld [vmem:[%s5 + $0xb70] sm:$0xff]
      %v3886 = vld [vmem:[%s5 + $0xb78] sm:$0xff]
      %v3887 = vld [vmem:[%s5 + $0xb80] sm:$0xff]
      %v3888 = vld [vmem:[%s5 + $0xb88] sm:$0xff]
      %v3889 = vld [vmem:[%s5 + $0xb90] sm:$0xff]
      %v3890 = vld [vmem:[%s5 + $0xb98] sm:$0xff]
      %v3891 = vld [vmem:[%s5 + $0xba0] sm:$0xff]
      %v3892 = vld [vmem:[%s5 + $0xba8] sm:$0xff]
      %v3893 = vld [vmem:[%s5 + $0xbb0] sm:$0xff]
      %v3894 = vld [vmem:[%s5 + $0xbb8] sm:$0xff]
      %v3895 = vld [vmem:[%s5 + $0xbc0] sm:$0xff]
      %v3896 = vld [vmem:[%s5 + $0xbc8] sm:$0xff]
      %v3897 = vld [vmem:[%s5 + $0xbd0] sm:$0xff]
      %v3898 = vld [vmem:[%s5 + $0xbd8] sm:$0xff]
      %v3899 = vld [vmem:[%s5 + $0xbe0] sm:$0xff]
      %v3900 = vld [vmem:[%s5 + $0xbe8] sm:$0xff]
      %v3901 = vld [vmem:[%s5 + $0xbf0] sm:$0xff]
      %v3902 = vld [vmem:[%s5 + $0xbf8] sm:$0xff]
      %v3903 = vld [vmem:[%s7] sm:$0xff]
      %v3905 = vlaneseq
      %v3906 = vshrl.u32 %v3905, 7
      %v3907 = vsub.s32 0, %v3906
      %v3908 = vrot.slane %v3903, %v3907
      %v3909 = vlaneseq
      %v3910 = vshrl.u32 %v3909, 7
      %v3911 = vsub.s32 1, %v3910
      %v3912 = vrot.slane %v3903, %v3911
      %v3913 = vlaneseq
      %v3914 = vshrl.u32 %v3913, 7
      %v3915 = vsub.s32 2, %v3914
      %v3916 = vrot.slane %v3903, %v3915
      %v3917 = vlaneseq
      %v3918 = vshrl.u32 %v3917, 7
      %v3919 = vsub.s32 3, %v3918
      %v3920 = vrot.slane %v3903, %v3919
      %v3921 = vlaneseq
      %v3922 = vshrl.u32 %v3921, 7
      %v3923 = vsub.s32 4, %v3922
      %v3924 = vrot.slane %v3903, %v3923
      %v3925 = vlaneseq
      %v3926 = vshrl.u32 %v3925, 7
      %v3927 = vsub.s32 5, %v3926
      %v3928 = vrot.slane %v3903, %v3927
      %v3929 = vlaneseq
      %v3930 = vshrl.u32 %v3929, 7
      %v3931 = vsub.s32 6, %v3930
      %v3932 = vrot.slane %v3903, %v3931
      %v3933 = vlaneseq
      %v3934 = vshrl.u32 %v3933, 7
      %v3935 = vsub.s32 7, %v3934
      %v3936 = vrot.slane %v3903, %v3935
      %v3957 = vunpack.c.l.b16 %v433
      %v3958 = vunpack.c.h.b16 %v433
      %v3959 = vunpack.c.l.b16 %v434
      %v3960 = vunpack.c.h.b16 %v434
      %v3961 = vunpack.c.l.b16 %v435
      %v3962 = vunpack.c.h.b16 %v435
      %v3963 = vunpack.c.l.b16 %v436
      %v3964 = vunpack.c.h.b16 %v436
      %v3965 = vunpack.c.l.b16 %v437
      %v3966 = vunpack.c.h.b16 %v437
      %v3967 = vunpack.c.l.b16 %v438
      %v3968 = vunpack.c.h.b16 %v438
      %v3969 = vunpack.c.l.b16 %v439
      %v3970 = vunpack.c.h.b16 %v439
      %v3971 = vunpack.c.l.b16 %v440
      %v3972 = vunpack.c.h.b16 %v440
      %v3973 = vunpack.c.l.b16 %v441
      %v3974 = vunpack.c.h.b16 %v441
      %v3975 = vunpack.c.l.b16 %v442
      %v3976 = vunpack.c.h.b16 %v442
      %v3977 = vunpack.c.l.b16 %v443
      %v3978 = vunpack.c.h.b16 %v443
      %v3979 = vunpack.c.l.b16 %v444
      %v3980 = vunpack.c.h.b16 %v444
      %v3981 = vpack.c.b16 %v3963, %v3957
      %v3982 = vpack.c.b16 %v3964, %v3958
      %v3983 = vpack.c.b16 %v3965, %v3959
      %v3984 = vpack.c.b16 %v3966, %v3960
      %v3985 = vpack.c.b16 %v3967, %v3961
      %v3986 = vpack.c.b16 %v3968, %v3962
      %v3987 = vpack.c.b16 %v3975, %v3969
      %v3988 = vpack.c.b16 %v3976, %v3970
      %v3989 = vpack.c.b16 %v3977, %v3971
      %v3990 = vpack.c.b16 %v3978, %v3972
      %v3991 = vpack.c.b16 %v3979, %v3973
      %v3992 = vpack.c.b16 %v3980, %v3974
      %v4389 = vunpack.c.l.b16 %v3519
      %v4390 = vunpack.c.h.b16 %v3519
      %v4391 = vunpack.c.l.b16 %v3520
      %v4392 = vunpack.c.h.b16 %v3520
      %v4393 = vunpack.c.l.b16 %v3521
      %v4394 = vunpack.c.h.b16 %v3521
      %v4395 = vunpack.c.l.b16 %v3522
      %v4396 = vunpack.c.h.b16 %v3522
      %v4397 = vunpack.c.l.b16 %v3523
      %v4398 = vunpack.c.h.b16 %v3523
      %v4399 = vunpack.c.l.b16 %v3524
      %v4400 = vunpack.c.h.b16 %v3524
      %v4401 = vunpack.c.l.b16 %v3525
      %v4402 = vunpack.c.h.b16 %v3525
      %v4403 = vunpack.c.l.b16 %v3526
      %v4404 = vunpack.c.h.b16 %v3526
      %v4405 = vunpack.c.l.b16 %v3527
      %v4406 = vunpack.c.h.b16 %v3527
      %v4407 = vunpack.c.l.b16 %v3528
      %v4408 = vunpack.c.h.b16 %v3528
      %v4409 = vunpack.c.l.b16 %v3529
      %v4410 = vunpack.c.h.b16 %v3529
      %v4411 = vunpack.c.l.b16 %v3530
      %v4412 = vunpack.c.h.b16 %v3530
      %v4413 = vunpack.c.l.b16 %v3531
      %v4414 = vunpack.c.h.b16 %v3531
      %v4415 = vunpack.c.l.b16 %v3532
      %v4416 = vunpack.c.h.b16 %v3532
      %v4417 = vunpack.c.l.b16 %v3533
      %v4418 = vunpack.c.h.b16 %v3533
      %v4419 = vunpack.c.l.b16 %v3534
      %v4420 = vunpack.c.h.b16 %v3534
      %v4421 = vunpack.c.l.b16 %v3535
      %v4422 = vunpack.c.h.b16 %v3535
      %v4423 = vunpack.c.l.b16 %v3536
      %v4424 = vunpack.c.h.b16 %v3536
      %v4425 = vunpack.c.l.b16 %v3537
      %v4426 = vunpack.c.h.b16 %v3537
      %v4427 = vunpack.c.l.b16 %v3538
      %v4428 = vunpack.c.h.b16 %v3538
      %v4429 = vunpack.c.l.b16 %v3539
      %v4430 = vunpack.c.h.b16 %v3539
      %v4431 = vunpack.c.l.b16 %v3540
      %v4432 = vunpack.c.h.b16 %v3540
      %v4433 = vunpack.c.l.b16 %v3541
      %v4434 = vunpack.c.h.b16 %v3541
      %v4435 = vunpack.c.l.b16 %v3542
      %v4436 = vunpack.c.h.b16 %v3542
      %v4437 = vunpack.c.l.b16 %v3543
      %v4438 = vunpack.c.h.b16 %v3543
      %v4439 = vunpack.c.l.b16 %v3544
      %v4440 = vunpack.c.h.b16 %v3544
      %v4441 = vunpack.c.l.b16 %v3545
      %v4442 = vunpack.c.h.b16 %v3545
      %v4443 = vunpack.c.l.b16 %v3546
      %v4444 = vunpack.c.h.b16 %v3546
      %v4445 = vunpack.c.l.b16 %v3547
      %v4446 = vunpack.c.h.b16 %v3547
      %v4447 = vunpack.c.l.b16 %v3548
      %v4448 = vunpack.c.h.b16 %v3548
      %v4449 = vunpack.c.l.b16 %v3549
      %v4450 = vunpack.c.h.b16 %v3549
      %v4451 = vunpack.c.l.b16 %v3550
      %v4452 = vunpack.c.h.b16 %v3550
      %v4453 = vunpack.c.l.b16 %v3551
      %v4454 = vunpack.c.h.b16 %v3551
      %v4455 = vunpack.c.l.b16 %v3552
      %v4456 = vunpack.c.h.b16 %v3552
      %v4457 = vunpack.c.l.b16 %v3553
      %v4458 = vunpack.c.h.b16 %v3553
      %v4459 = vunpack.c.l.b16 %v3554
      %v4460 = vunpack.c.h.b16 %v3554
      %v4461 = vunpack.c.l.b16 %v3555
      %v4462 = vunpack.c.h.b16 %v3555
      %v4463 = vunpack.c.l.b16 %v3556
      %v4464 = vunpack.c.h.b16 %v3556
      %v4465 = vunpack.c.l.b16 %v3557
      %v4466 = vunpack.c.h.b16 %v3557
      %v4467 = vunpack.c.l.b16 %v3558
      %v4468 = vunpack.c.h.b16 %v3558
      %v4469 = vunpack.c.l.b16 %v3559
      %v4470 = vunpack.c.h.b16 %v3559
      %v4471 = vunpack.c.l.b16 %v3560
      %v4472 = vunpack.c.h.b16 %v3560
      %v4473 = vunpack.c.l.b16 %v3561
      %v4474 = vunpack.c.h.b16 %v3561
      %v4475 = vunpack.c.l.b16 %v3562
      %v4476 = vunpack.c.h.b16 %v3562
      %v4477 = vunpack.c.l.b16 %v3563
      %v4478 = vunpack.c.h.b16 %v3563
      %v4479 = vunpack.c.l.b16 %v3564
      %v4480 = vunpack.c.h.b16 %v3564
      %v4481 = vunpack.c.l.b16 %v3565
      %v4482 = vunpack.c.h.b16 %v3565
      %v4483 = vunpack.c.l.b16 %v3566
      %v4484 = vunpack.c.h.b16 %v3566
      %v4485 = vunpack.c.l.b16 %v3567
      %v4486 = vunpack.c.h.b16 %v3567
      %v4487 = vunpack.c.l.b16 %v3568
      %v4488 = vunpack.c.h.b16 %v3568
      %v4489 = vunpack.c.l.b16 %v3569
      %v4490 = vunpack.c.h.b16 %v3569
      %v4491 = vunpack.c.l.b16 %v3570
      %v4492 = vunpack.c.h.b16 %v3570
      %v4493 = vunpack.c.l.b16 %v3571
      %v4494 = vunpack.c.h.b16 %v3571
      %v4495 = vunpack.c.l.b16 %v3572
      %v4496 = vunpack.c.h.b16 %v3572
      %v4497 = vunpack.c.l.b16 %v3573
      %v4498 = vunpack.c.h.b16 %v3573
      %v4499 = vunpack.c.l.b16 %v3574
      %v4500 = vunpack.c.h.b16 %v3574
      %v4501 = vunpack.c.l.b16 %v3575
      %v4502 = vunpack.c.h.b16 %v3575
      %v4503 = vunpack.c.l.b16 %v3576
      %v4504 = vunpack.c.h.b16 %v3576
      %v4505 = vunpack.c.l.b16 %v3577
      %v4506 = vunpack.c.h.b16 %v3577
      %v4507 = vunpack.c.l.b16 %v3578
      %v4508 = vunpack.c.h.b16 %v3578
      %v4509 = vunpack.c.l.b16 %v3579
      %v4510 = vunpack.c.h.b16 %v3579
      %v4511 = vunpack.c.l.b16 %v3580
      %v4512 = vunpack.c.h.b16 %v3580
      %v4513 = vunpack.c.l.b16 %v3581
      %v4514 = vunpack.c.h.b16 %v3581
      %v4515 = vunpack.c.l.b16 %v3582
      %v4516 = vunpack.c.h.b16 %v3582
      %v4517 = vunpack.c.l.b16 %v3583
      %v4518 = vunpack.c.h.b16 %v3583
      %v4519 = vunpack.c.l.b16 %v3584
      %v4520 = vunpack.c.h.b16 %v3584
      %v4521 = vunpack.c.l.b16 %v3585
      %v4522 = vunpack.c.h.b16 %v3585
      %v4523 = vunpack.c.l.b16 %v3586
      %v4524 = vunpack.c.h.b16 %v3586
      %v4525 = vunpack.c.l.b16 %v3587
      %v4526 = vunpack.c.h.b16 %v3587
      %v4527 = vunpack.c.l.b16 %v3588
      %v4528 = vunpack.c.h.b16 %v3588
      %v4529 = vunpack.c.l.b16 %v3589
      %v4530 = vunpack.c.h.b16 %v3589
      %v4531 = vunpack.c.l.b16 %v3590
      %v4532 = vunpack.c.h.b16 %v3590
      %v4533 = vunpack.c.l.b16 %v3591
      %v4534 = vunpack.c.h.b16 %v3591
      %v4535 = vunpack.c.l.b16 %v3592
      %v4536 = vunpack.c.h.b16 %v3592
      %v4537 = vunpack.c.l.b16 %v3593
      %v4538 = vunpack.c.h.b16 %v3593
      %v4539 = vunpack.c.l.b16 %v3594
      %v4540 = vunpack.c.h.b16 %v3594
      %v4541 = vunpack.c.l.b16 %v3595
      %v4542 = vunpack.c.h.b16 %v3595
      %v4543 = vunpack.c.l.b16 %v3596
      %v4544 = vunpack.c.h.b16 %v3596
      %v4545 = vunpack.c.l.b16 %v3597
      %v4546 = vunpack.c.h.b16 %v3597
      %v4547 = vunpack.c.l.b16 %v3598
      %v4548 = vunpack.c.h.b16 %v3598
      %v4549 = vunpack.c.l.b16 %v3599
      %v4550 = vunpack.c.h.b16 %v3599
      %v4551 = vunpack.c.l.b16 %v3600
      %v4552 = vunpack.c.h.b16 %v3600
      %v4553 = vunpack.c.l.b16 %v3601
      %v4554 = vunpack.c.h.b16 %v3601
      %v4555 = vunpack.c.l.b16 %v3602
      %v4556 = vunpack.c.h.b16 %v3602
      %v4557 = vunpack.c.l.b16 %v3603
      %v4558 = vunpack.c.h.b16 %v3603
      %v4559 = vunpack.c.l.b16 %v3604
      %v4560 = vunpack.c.h.b16 %v3604
      %v4561 = vunpack.c.l.b16 %v3605
      %v4562 = vunpack.c.h.b16 %v3605
      %v4563 = vunpack.c.l.b16 %v3606
      %v4564 = vunpack.c.h.b16 %v3606
      %v4565 = vunpack.c.l.b16 %v3607
      %v4566 = vunpack.c.h.b16 %v3607
      %v4567 = vunpack.c.l.b16 %v3608
      %v4568 = vunpack.c.h.b16 %v3608
      %v4569 = vunpack.c.l.b16 %v3609
      %v4570 = vunpack.c.h.b16 %v3609
      %v4571 = vunpack.c.l.b16 %v3610
      %v4572 = vunpack.c.h.b16 %v3610
      %v4573 = vunpack.c.l.b16 %v3611
      %v4574 = vunpack.c.h.b16 %v3611
      %v4575 = vunpack.c.l.b16 %v3612
      %v4576 = vunpack.c.h.b16 %v3612
      %v4577 = vunpack.c.l.b16 %v3613
      %v4578 = vunpack.c.h.b16 %v3613
      %v4579 = vunpack.c.l.b16 %v3614
      %v4580 = vunpack.c.h.b16 %v3614
      %v4581 = vunpack.c.l.b16 %v3615
      %v4582 = vunpack.c.h.b16 %v3615
      %v4583 = vunpack.c.l.b16 %v3616
      %v4584 = vunpack.c.h.b16 %v3616
      %v4585 = vunpack.c.l.b16 %v3617
      %v4586 = vunpack.c.h.b16 %v3617
      %v4587 = vunpack.c.l.b16 %v3618
      %v4588 = vunpack.c.h.b16 %v3618
      %v4589 = vunpack.c.l.b16 %v3619
      %v4590 = vunpack.c.h.b16 %v3619
      %v4591 = vunpack.c.l.b16 %v3620
      %v4592 = vunpack.c.h.b16 %v3620
      %v4593 = vunpack.c.l.b16 %v3621
      %v4594 = vunpack.c.h.b16 %v3621
      %v4595 = vunpack.c.l.b16 %v3622
      %v4596 = vunpack.c.h.b16 %v3622
      %v4597 = vunpack.c.l.b16 %v3623
      %v4598 = vunpack.c.h.b16 %v3623
      %v4599 = vunpack.c.l.b16 %v3624
      %v4600 = vunpack.c.h.b16 %v3624
      %v4601 = vunpack.c.l.b16 %v3625
      %v4602 = vunpack.c.h.b16 %v3625
      %v4603 = vunpack.c.l.b16 %v3626
      %v4604 = vunpack.c.h.b16 %v3626
      %v4605 = vunpack.c.l.b16 %v3627
      %v4606 = vunpack.c.h.b16 %v3627
      %v4607 = vunpack.c.l.b16 %v3628
      %v4608 = vunpack.c.h.b16 %v3628
      %v4609 = vunpack.c.l.b16 %v3629
      %v4610 = vunpack.c.h.b16 %v3629
      %v4611 = vunpack.c.l.b16 %v3630
      %v4612 = vunpack.c.h.b16 %v3630
      %v4613 = vunpack.c.l.b16 %v3631
      %v4614 = vunpack.c.h.b16 %v3631
      %v4615 = vunpack.c.l.b16 %v3632
      %v4616 = vunpack.c.h.b16 %v3632
      %v4617 = vunpack.c.l.b16 %v3633
      %v4618 = vunpack.c.h.b16 %v3633
      %v4619 = vunpack.c.l.b16 %v3634
      %v4620 = vunpack.c.h.b16 %v3634
      %v4621 = vunpack.c.l.b16 %v3635
      %v4622 = vunpack.c.h.b16 %v3635
      %v4623 = vunpack.c.l.b16 %v3636
      %v4624 = vunpack.c.h.b16 %v3636
      %v4625 = vunpack.c.l.b16 %v3637
      %v4626 = vunpack.c.h.b16 %v3637
      %v4627 = vunpack.c.l.b16 %v3638
      %v4628 = vunpack.c.h.b16 %v3638
      %v4629 = vunpack.c.l.b16 %v3639
      %v4630 = vunpack.c.h.b16 %v3639
      %v4631 = vunpack.c.l.b16 %v3640
      %v4632 = vunpack.c.h.b16 %v3640
      %v4633 = vunpack.c.l.b16 %v3641
      %v4634 = vunpack.c.h.b16 %v3641
      %v4635 = vunpack.c.l.b16 %v3642
      %v4636 = vunpack.c.h.b16 %v3642
      %v4637 = vunpack.c.l.b16 %v3643
      %v4638 = vunpack.c.h.b16 %v3643
      %v4639 = vunpack.c.l.b16 %v3644
      %v4640 = vunpack.c.h.b16 %v3644
      %v4641 = vunpack.c.l.b16 %v3645
      %v4642 = vunpack.c.h.b16 %v3645
      %v4643 = vunpack.c.l.b16 %v3646
      %v4644 = vunpack.c.h.b16 %v3646
      %v4645 = vunpack.c.l.b16 %v3647
      %v4646 = vunpack.c.h.b16 %v3647
      %v4647 = vunpack.c.l.b16 %v3648
      %v4648 = vunpack.c.h.b16 %v3648
      %v4649 = vunpack.c.l.b16 %v3649
      %v4650 = vunpack.c.h.b16 %v3649
      %v4651 = vunpack.c.l.b16 %v3650
      %v4652 = vunpack.c.h.b16 %v3650
      %v4653 = vunpack.c.l.b16 %v3651
      %v4654 = vunpack.c.h.b16 %v3651
      %v4655 = vunpack.c.l.b16 %v3652
      %v4656 = vunpack.c.h.b16 %v3652
      %v4657 = vunpack.c.l.b16 %v3653
      %v4658 = vunpack.c.h.b16 %v3653
      %v4659 = vunpack.c.l.b16 %v3654
      %v4660 = vunpack.c.h.b16 %v3654
      %v4661 = vunpack.c.l.b16 %v3655
      %v4662 = vunpack.c.h.b16 %v3655
      %v4663 = vunpack.c.l.b16 %v3656
      %v4664 = vunpack.c.h.b16 %v3656
      %v4665 = vunpack.c.l.b16 %v3657
      %v4666 = vunpack.c.h.b16 %v3657
      %v4667 = vunpack.c.l.b16 %v3658
      %v4668 = vunpack.c.h.b16 %v3658
      %v4669 = vunpack.c.l.b16 %v3659
      %v4670 = vunpack.c.h.b16 %v3659
      %v4671 = vunpack.c.l.b16 %v3660
      %v4672 = vunpack.c.h.b16 %v3660
      %v4673 = vunpack.c.l.b16 %v3661
      %v4674 = vunpack.c.h.b16 %v3661
      %v4675 = vunpack.c.l.b16 %v3662
      %v4676 = vunpack.c.h.b16 %v3662
      %v4677 = vunpack.c.l.b16 %v3663
      %v4678 = vunpack.c.h.b16 %v3663
      %v4679 = vunpack.c.l.b16 %v3664
      %v4680 = vunpack.c.h.b16 %v3664
      %v4681 = vunpack.c.l.b16 %v3665
      %v4682 = vunpack.c.h.b16 %v3665
      %v4683 = vunpack.c.l.b16 %v3666
      %v4684 = vunpack.c.h.b16 %v3666
      %v4685 = vunpack.c.l.b16 %v3667
      %v4686 = vunpack.c.h.b16 %v3667
      %v4687 = vunpack.c.l.b16 %v3668
      %v4688 = vunpack.c.h.b16 %v3668
      %v4689 = vunpack.c.l.b16 %v3669
      %v4690 = vunpack.c.h.b16 %v3669
      %v4691 = vunpack.c.l.b16 %v3670
      %v4692 = vunpack.c.h.b16 %v3670
      %v4693 = vunpack.c.l.b16 %v3671
      %v4694 = vunpack.c.h.b16 %v3671
      %v4695 = vunpack.c.l.b16 %v3672
      %v4696 = vunpack.c.h.b16 %v3672
      %v4697 = vunpack.c.l.b16 %v3673
      %v4698 = vunpack.c.h.b16 %v3673
      %v4699 = vunpack.c.l.b16 %v3674
      %v4700 = vunpack.c.h.b16 %v3674
      %v4701 = vunpack.c.l.b16 %v3675
      %v4702 = vunpack.c.h.b16 %v3675
      %v4703 = vunpack.c.l.b16 %v3676
      %v4704 = vunpack.c.h.b16 %v3676
      %v4705 = vunpack.c.l.b16 %v3677
      %v4706 = vunpack.c.h.b16 %v3677
      %v4707 = vunpack.c.l.b16 %v3678
      %v4708 = vunpack.c.h.b16 %v3678
      %v4709 = vunpack.c.l.b16 %v3679
      %v4710 = vunpack.c.h.b16 %v3679
      %v4711 = vunpack.c.l.b16 %v3680
      %v4712 = vunpack.c.h.b16 %v3680
      %v4713 = vunpack.c.l.b16 %v3681
      %v4714 = vunpack.c.h.b16 %v3681
      %v4715 = vunpack.c.l.b16 %v3682
      %v4716 = vunpack.c.h.b16 %v3682
      %v4717 = vunpack.c.l.b16 %v3683
      %v4718 = vunpack.c.h.b16 %v3683
      %v4719 = vunpack.c.l.b16 %v3684
      %v4720 = vunpack.c.h.b16 %v3684
      %v4721 = vunpack.c.l.b16 %v3685
      %v4722 = vunpack.c.h.b16 %v3685
      %v4723 = vunpack.c.l.b16 %v3686
      %v4724 = vunpack.c.h.b16 %v3686
      %v4725 = vunpack.c.l.b16 %v3687
      %v4726 = vunpack.c.h.b16 %v3687
      %v4727 = vunpack.c.l.b16 %v3688
      %v4728 = vunpack.c.h.b16 %v3688
      %v4729 = vunpack.c.l.b16 %v3689
      %v4730 = vunpack.c.h.b16 %v3689
      %v4731 = vunpack.c.l.b16 %v3690
      %v4732 = vunpack.c.h.b16 %v3690
      %v4733 = vunpack.c.l.b16 %v3691
      %v4734 = vunpack.c.h.b16 %v3691
      %v4735 = vunpack.c.l.b16 %v3692
      %v4736 = vunpack.c.h.b16 %v3692
      %v4737 = vunpack.c.l.b16 %v3693
      %v4738 = vunpack.c.h.b16 %v3693
      %v4739 = vunpack.c.l.b16 %v3694
      %v4740 = vunpack.c.h.b16 %v3694
      %v4741 = vunpack.c.l.b16 %v3695
      %v4742 = vunpack.c.h.b16 %v3695
      %v4743 = vunpack.c.l.b16 %v3696
      %v4744 = vunpack.c.h.b16 %v3696
      %v4745 = vunpack.c.l.b16 %v3697
      %v4746 = vunpack.c.h.b16 %v3697
      %v4747 = vunpack.c.l.b16 %v3698
      %v4748 = vunpack.c.h.b16 %v3698
      %v4749 = vunpack.c.l.b16 %v3699
      %v4750 = vunpack.c.h.b16 %v3699
      %v4751 = vunpack.c.l.b16 %v3700
      %v4752 = vunpack.c.h.b16 %v3700
      %v4753 = vunpack.c.l.b16 %v3701
      %v4754 = vunpack.c.h.b16 %v3701
      %v4755 = vunpack.c.l.b16 %v3702
      %v4756 = vunpack.c.h.b16 %v3702
      %v4757 = vunpack.c.l.b16 %v3703
      %v4758 = vunpack.c.h.b16 %v3703
      %v4759 = vunpack.c.l.b16 %v3704
      %v4760 = vunpack.c.h.b16 %v3704
      %v4761 = vunpack.c.l.b16 %v3705
      %v4762 = vunpack.c.h.b16 %v3705
      %v4763 = vunpack.c.l.b16 %v3706
      %v4764 = vunpack.c.h.b16 %v3706
      %v4765 = vunpack.c.l.b16 %v3707
      %v4766 = vunpack.c.h.b16 %v3707
      %v4767 = vunpack.c.l.b16 %v3708
      %v4768 = vunpack.c.h.b16 %v3708
      %v4769 = vunpack.c.l.b16 %v3709
      %v4770 = vunpack.c.h.b16 %v3709
      %v4771 = vunpack.c.l.b16 %v3710
      %v4772 = vunpack.c.h.b16 %v3710
      %v4773 = vunpack.c.l.b16 %v3711
      %v4774 = vunpack.c.h.b16 %v3711
      %v4775 = vunpack.c.l.b16 %v3712
      %v4776 = vunpack.c.h.b16 %v3712
      %v4777 = vunpack.c.l.b16 %v3713
      %v4778 = vunpack.c.h.b16 %v3713
      %v4779 = vunpack.c.l.b16 %v3714
      %v4780 = vunpack.c.h.b16 %v3714
      %v4781 = vunpack.c.l.b16 %v3715
      %v4782 = vunpack.c.h.b16 %v3715
      %v4783 = vunpack.c.l.b16 %v3716
      %v4784 = vunpack.c.h.b16 %v3716
      %v4785 = vunpack.c.l.b16 %v3717
      %v4786 = vunpack.c.h.b16 %v3717
      %v4787 = vunpack.c.l.b16 %v3718
      %v4788 = vunpack.c.h.b16 %v3718
      %v4789 = vunpack.c.l.b16 %v3719
      %v4790 = vunpack.c.h.b16 %v3719
      %v4791 = vunpack.c.l.b16 %v3720
      %v4792 = vunpack.c.h.b16 %v3720
      %v4793 = vunpack.c.l.b16 %v3721
      %v4794 = vunpack.c.h.b16 %v3721
      %v4795 = vunpack.c.l.b16 %v3722
      %v4796 = vunpack.c.h.b16 %v3722
      %v4797 = vunpack.c.l.b16 %v3723
      %v4798 = vunpack.c.h.b16 %v3723
      %v4799 = vunpack.c.l.b16 %v3724
      %v4800 = vunpack.c.h.b16 %v3724
      %v4801 = vunpack.c.l.b16 %v3725
      %v4802 = vunpack.c.h.b16 %v3725
      %v4803 = vunpack.c.l.b16 %v3726
      %v4804 = vunpack.c.h.b16 %v3726
      %v4805 = vunpack.c.l.b16 %v3727
      %v4806 = vunpack.c.h.b16 %v3727
      %v4807 = vunpack.c.l.b16 %v3728
      %v4808 = vunpack.c.h.b16 %v3728
      %v4809 = vunpack.c.l.b16 %v3729
      %v4810 = vunpack.c.h.b16 %v3729
      %v4811 = vunpack.c.l.b16 %v3730
      %v4812 = vunpack.c.h.b16 %v3730
      %v4813 = vunpack.c.l.b16 %v3731
      %v4814 = vunpack.c.h.b16 %v3731
      %v4815 = vunpack.c.l.b16 %v3732
      %v4816 = vunpack.c.h.b16 %v3732
      %v4817 = vunpack.c.l.b16 %v3733
      %v4818 = vunpack.c.h.b16 %v3733
      %v4819 = vunpack.c.l.b16 %v3734
      %v4820 = vunpack.c.h.b16 %v3734
      %v4821 = vunpack.c.l.b16 %v3735
      %v4822 = vunpack.c.h.b16 %v3735
      %v4823 = vunpack.c.l.b16 %v3736
      %v4824 = vunpack.c.h.b16 %v3736
      %v4825 = vunpack.c.l.b16 %v3737
      %v4826 = vunpack.c.h.b16 %v3737
      %v4827 = vunpack.c.l.b16 %v3738
      %v4828 = vunpack.c.h.b16 %v3738
      %v4829 = vunpack.c.l.b16 %v3739
      %v4830 = vunpack.c.h.b16 %v3739
      %v4831 = vunpack.c.l.b16 %v3740
      %v4832 = vunpack.c.h.b16 %v3740
      %v4833 = vunpack.c.l.b16 %v3741
      %v4834 = vunpack.c.h.b16 %v3741
      %v4835 = vunpack.c.l.b16 %v3742
      %v4836 = vunpack.c.h.b16 %v3742
      %v4837 = vunpack.c.l.b16 %v3743
      %v4838 = vunpack.c.h.b16 %v3743
      %v4839 = vunpack.c.l.b16 %v3744
      %v4840 = vunpack.c.h.b16 %v3744
      %v4841 = vunpack.c.l.b16 %v3745
      %v4842 = vunpack.c.h.b16 %v3745
      %v4843 = vunpack.c.l.b16 %v3746
      %v4844 = vunpack.c.h.b16 %v3746
      %v4845 = vunpack.c.l.b16 %v3747
      %v4846 = vunpack.c.h.b16 %v3747
      %v4847 = vunpack.c.l.b16 %v3748
      %v4848 = vunpack.c.h.b16 %v3748
      %v4849 = vunpack.c.l.b16 %v3749
      %v4850 = vunpack.c.h.b16 %v3749
      %v4851 = vunpack.c.l.b16 %v3750
      %v4852 = vunpack.c.h.b16 %v3750
      %v4853 = vunpack.c.l.b16 %v3751
      %v4854 = vunpack.c.h.b16 %v3751
      %v4855 = vunpack.c.l.b16 %v3752
      %v4856 = vunpack.c.h.b16 %v3752
      %v4857 = vunpack.c.l.b16 %v3753
      %v4858 = vunpack.c.h.b16 %v3753
      %v4859 = vunpack.c.l.b16 %v3754
      %v4860 = vunpack.c.h.b16 %v3754
      %v4861 = vunpack.c.l.b16 %v3755
      %v4862 = vunpack.c.h.b16 %v3755
      %v4863 = vunpack.c.l.b16 %v3756
      %v4864 = vunpack.c.h.b16 %v3756
      %v4865 = vunpack.c.l.b16 %v3757
      %v4866 = vunpack.c.h.b16 %v3757
      %v4867 = vunpack.c.l.b16 %v3758
      %v4868 = vunpack.c.h.b16 %v3758
      %v4869 = vunpack.c.l.b16 %v3759
      %v4870 = vunpack.c.h.b16 %v3759
      %v4871 = vunpack.c.l.b16 %v3760
      %v4872 = vunpack.c.h.b16 %v3760
      %v4873 = vunpack.c.l.b16 %v3761
      %v4874 = vunpack.c.h.b16 %v3761
      %v4875 = vunpack.c.l.b16 %v3762
      %v4876 = vunpack.c.h.b16 %v3762
      %v4877 = vunpack.c.l.b16 %v3763
      %v4878 = vunpack.c.h.b16 %v3763
      %v4879 = vunpack.c.l.b16 %v3764
      %v4880 = vunpack.c.h.b16 %v3764
      %v4881 = vunpack.c.l.b16 %v3765
      %v4882 = vunpack.c.h.b16 %v3765
      %v4883 = vunpack.c.l.b16 %v3766
      %v4884 = vunpack.c.h.b16 %v3766
      %v4885 = vunpack.c.l.b16 %v3767
      %v4886 = vunpack.c.h.b16 %v3767
      %v4887 = vunpack.c.l.b16 %v3768
      %v4888 = vunpack.c.h.b16 %v3768
      %v4889 = vunpack.c.l.b16 %v3769
      %v4890 = vunpack.c.h.b16 %v3769
      %v4891 = vunpack.c.l.b16 %v3770
      %v4892 = vunpack.c.h.b16 %v3770
      %v4893 = vunpack.c.l.b16 %v3771
      %v4894 = vunpack.c.h.b16 %v3771
      %v4895 = vunpack.c.l.b16 %v3772
      %v4896 = vunpack.c.h.b16 %v3772
      %v4897 = vunpack.c.l.b16 %v3773
      %v4898 = vunpack.c.h.b16 %v3773
      %v4899 = vunpack.c.l.b16 %v3774
      %v4900 = vunpack.c.h.b16 %v3774
      %v4901 = vunpack.c.l.b16 %v3775
      %v4902 = vunpack.c.h.b16 %v3775
      %v4903 = vunpack.c.l.b16 %v3776
      %v4904 = vunpack.c.h.b16 %v3776
      %v4905 = vunpack.c.l.b16 %v3777
      %v4906 = vunpack.c.h.b16 %v3777
      %v4907 = vunpack.c.l.b16 %v3778
      %v4908 = vunpack.c.h.b16 %v3778
      %v4909 = vunpack.c.l.b16 %v3779
      %v4910 = vunpack.c.h.b16 %v3779
      %v4911 = vunpack.c.l.b16 %v3780
      %v4912 = vunpack.c.h.b16 %v3780
      %v4913 = vunpack.c.l.b16 %v3781
      %v4914 = vunpack.c.h.b16 %v3781
      %v4915 = vunpack.c.l.b16 %v3782
      %v4916 = vunpack.c.h.b16 %v3782
      %v4917 = vunpack.c.l.b16 %v3783
      %v4918 = vunpack.c.h.b16 %v3783
      %v4919 = vunpack.c.l.b16 %v3784
      %v4920 = vunpack.c.h.b16 %v3784
      %v4921 = vunpack.c.l.b16 %v3785
      %v4922 = vunpack.c.h.b16 %v3785
      %v4923 = vunpack.c.l.b16 %v3786
      %v4924 = vunpack.c.h.b16 %v3786
      %v4925 = vunpack.c.l.b16 %v3787
      %v4926 = vunpack.c.h.b16 %v3787
      %v4927 = vunpack.c.l.b16 %v3788
      %v4928 = vunpack.c.h.b16 %v3788
      %v4929 = vunpack.c.l.b16 %v3789
      %v4930 = vunpack.c.h.b16 %v3789
      %v4931 = vunpack.c.l.b16 %v3790
      %v4932 = vunpack.c.h.b16 %v3790
      %v4933 = vunpack.c.l.b16 %v3791
      %v4934 = vunpack.c.h.b16 %v3791
      %v4935 = vunpack.c.l.b16 %v3792
      %v4936 = vunpack.c.h.b16 %v3792
      %v4937 = vunpack.c.l.b16 %v3793
      %v4938 = vunpack.c.h.b16 %v3793
      %v4939 = vunpack.c.l.b16 %v3794
      %v4940 = vunpack.c.h.b16 %v3794
      %v4941 = vunpack.c.l.b16 %v3795
      %v4942 = vunpack.c.h.b16 %v3795
      %v4943 = vunpack.c.l.b16 %v3796
      %v4944 = vunpack.c.h.b16 %v3796
      %v4945 = vunpack.c.l.b16 %v3797
      %v4946 = vunpack.c.h.b16 %v3797
      %v4947 = vunpack.c.l.b16 %v3798
      %v4948 = vunpack.c.h.b16 %v3798
      %v4949 = vunpack.c.l.b16 %v3799
      %v4950 = vunpack.c.h.b16 %v3799
      %v4951 = vunpack.c.l.b16 %v3800
      %v4952 = vunpack.c.h.b16 %v3800
      %v4953 = vunpack.c.l.b16 %v3801
      %v4954 = vunpack.c.h.b16 %v3801
      %v4955 = vunpack.c.l.b16 %v3802
      %v4956 = vunpack.c.h.b16 %v3802
      %v4957 = vunpack.c.l.b16 %v3803
      %v4958 = vunpack.c.h.b16 %v3803
      %v4959 = vunpack.c.l.b16 %v3804
      %v4960 = vunpack.c.h.b16 %v3804
      %v4961 = vunpack.c.l.b16 %v3805
      %v4962 = vunpack.c.h.b16 %v3805
      %v4963 = vunpack.c.l.b16 %v3806
      %v4964 = vunpack.c.h.b16 %v3806
      %v4965 = vunpack.c.l.b16 %v3807
      %v4966 = vunpack.c.h.b16 %v3807
      %v4967 = vunpack.c.l.b16 %v3808
      %v4968 = vunpack.c.h.b16 %v3808
      %v4969 = vunpack.c.l.b16 %v3809
      %v4970 = vunpack.c.h.b16 %v3809
      %v4971 = vunpack.c.l.b16 %v3810
      %v4972 = vunpack.c.h.b16 %v3810
      %v4973 = vunpack.c.l.b16 %v3811
      %v4974 = vunpack.c.h.b16 %v3811
      %v4975 = vunpack.c.l.b16 %v3812
      %v4976 = vunpack.c.h.b16 %v3812
      %v4977 = vunpack.c.l.b16 %v3813
      %v4978 = vunpack.c.h.b16 %v3813
      %v4979 = vunpack.c.l.b16 %v3814
      %v4980 = vunpack.c.h.b16 %v3814
      %v4981 = vunpack.c.l.b16 %v3815
      %v4982 = vunpack.c.h.b16 %v3815
      %v4983 = vunpack.c.l.b16 %v3816
      %v4984 = vunpack.c.h.b16 %v3816
      %v4985 = vunpack.c.l.b16 %v3817
      %v4986 = vunpack.c.h.b16 %v3817
      %v4987 = vunpack.c.l.b16 %v3818
      %v4988 = vunpack.c.h.b16 %v3818
      %v4989 = vunpack.c.l.b16 %v3819
      %v4990 = vunpack.c.h.b16 %v3819
      %v4991 = vunpack.c.l.b16 %v3820
      %v4992 = vunpack.c.h.b16 %v3820
      %v4993 = vunpack.c.l.b16 %v3821
      %v4994 = vunpack.c.h.b16 %v3821
      %v4995 = vunpack.c.l.b16 %v3822
      %v4996 = vunpack.c.h.b16 %v3822
      %v4997 = vunpack.c.l.b16 %v3823
      %v4998 = vunpack.c.h.b16 %v3823
      %v4999 = vunpack.c.l.b16 %v3824
      %v5000 = vunpack.c.h.b16 %v3824
      %v5001 = vunpack.c.l.b16 %v3825
      %v5002 = vunpack.c.h.b16 %v3825
      %v5003 = vunpack.c.l.b16 %v3826
      %v5004 = vunpack.c.h.b16 %v3826
      %v5005 = vunpack.c.l.b16 %v3827
      %v5006 = vunpack.c.h.b16 %v3827
      %v5007 = vunpack.c.l.b16 %v3828
      %v5008 = vunpack.c.h.b16 %v3828
      %v5009 = vunpack.c.l.b16 %v3829
      %v5010 = vunpack.c.h.b16 %v3829
      %v5011 = vunpack.c.l.b16 %v3830
      %v5012 = vunpack.c.h.b16 %v3830
      %v5013 = vunpack.c.l.b16 %v3831
      %v5014 = vunpack.c.h.b16 %v3831
      %v5015 = vunpack.c.l.b16 %v3832
      %v5016 = vunpack.c.h.b16 %v3832
      %v5017 = vunpack.c.l.b16 %v3833
      %v5018 = vunpack.c.h.b16 %v3833
      %v5019 = vunpack.c.l.b16 %v3834
      %v5020 = vunpack.c.h.b16 %v3834
      %v5021 = vunpack.c.l.b16 %v3835
      %v5022 = vunpack.c.h.b16 %v3835
      %v5023 = vunpack.c.l.b16 %v3836
      %v5024 = vunpack.c.h.b16 %v3836
      %v5025 = vunpack.c.l.b16 %v3837
      %v5026 = vunpack.c.h.b16 %v3837
      %v5027 = vunpack.c.l.b16 %v3838
      %v5028 = vunpack.c.h.b16 %v3838
      %v5029 = vunpack.c.l.b16 %v3839
      %v5030 = vunpack.c.h.b16 %v3839
      %v5031 = vunpack.c.l.b16 %v3840
      %v5032 = vunpack.c.h.b16 %v3840
      %v5033 = vunpack.c.l.b16 %v3841
      %v5034 = vunpack.c.h.b16 %v3841
      %v5035 = vunpack.c.l.b16 %v3842
      %v5036 = vunpack.c.h.b16 %v3842
      %v5037 = vunpack.c.l.b16 %v3843
      %v5038 = vunpack.c.h.b16 %v3843
      %v5039 = vunpack.c.l.b16 %v3844
      %v5040 = vunpack.c.h.b16 %v3844
      %v5041 = vunpack.c.l.b16 %v3845
      %v5042 = vunpack.c.h.b16 %v3845
      %v5043 = vunpack.c.l.b16 %v3846
      %v5044 = vunpack.c.h.b16 %v3846
      %v5045 = vunpack.c.l.b16 %v3847
      %v5046 = vunpack.c.h.b16 %v3847
      %v5047 = vunpack.c.l.b16 %v3848
      %v5048 = vunpack.c.h.b16 %v3848
      %v5049 = vunpack.c.l.b16 %v3849
      %v5050 = vunpack.c.h.b16 %v3849
      %v5051 = vunpack.c.l.b16 %v3850
      %v5052 = vunpack.c.h.b16 %v3850
      %v5053 = vunpack.c.l.b16 %v3851
      %v5054 = vunpack.c.h.b16 %v3851
      %v5055 = vunpack.c.l.b16 %v3852
      %v5056 = vunpack.c.h.b16 %v3852
      %v5057 = vunpack.c.l.b16 %v3853
      %v5058 = vunpack.c.h.b16 %v3853
      %v5059 = vunpack.c.l.b16 %v3854
      %v5060 = vunpack.c.h.b16 %v3854
      %v5061 = vunpack.c.l.b16 %v3855
      %v5062 = vunpack.c.h.b16 %v3855
      %v5063 = vunpack.c.l.b16 %v3856
      %v5064 = vunpack.c.h.b16 %v3856
      %v5065 = vunpack.c.l.b16 %v3857
      %v5066 = vunpack.c.h.b16 %v3857
      %v5067 = vunpack.c.l.b16 %v3858
      %v5068 = vunpack.c.h.b16 %v3858
      %v5069 = vunpack.c.l.b16 %v3859
      %v5070 = vunpack.c.h.b16 %v3859
      %v5071 = vunpack.c.l.b16 %v3860
      %v5072 = vunpack.c.h.b16 %v3860
      %v5073 = vunpack.c.l.b16 %v3861
      %v5074 = vunpack.c.h.b16 %v3861
      %v5075 = vunpack.c.l.b16 %v3862
      %v5076 = vunpack.c.h.b16 %v3862
      %v5077 = vunpack.c.l.b16 %v3863
      %v5078 = vunpack.c.h.b16 %v3863
      %v5079 = vunpack.c.l.b16 %v3864
      %v5080 = vunpack.c.h.b16 %v3864
      %v5081 = vunpack.c.l.b16 %v3865
      %v5082 = vunpack.c.h.b16 %v3865
      %v5083 = vunpack.c.l.b16 %v3866
      %v5084 = vunpack.c.h.b16 %v3866
      %v5085 = vunpack.c.l.b16 %v3867
      %v5086 = vunpack.c.h.b16 %v3867
      %v5087 = vunpack.c.l.b16 %v3868
      %v5088 = vunpack.c.h.b16 %v3868
      %v5089 = vunpack.c.l.b16 %v3869
      %v5090 = vunpack.c.h.b16 %v3869
      %v5091 = vunpack.c.l.b16 %v3870
      %v5092 = vunpack.c.h.b16 %v3870
      %v5093 = vunpack.c.l.b16 %v3871
      %v5094 = vunpack.c.h.b16 %v3871
      %v5095 = vunpack.c.l.b16 %v3872
      %v5096 = vunpack.c.h.b16 %v3872
      %v5097 = vunpack.c.l.b16 %v3873
      %v5098 = vunpack.c.h.b16 %v3873
      %v5099 = vunpack.c.l.b16 %v3874
      %v5100 = vunpack.c.h.b16 %v3874
      %v5101 = vunpack.c.l.b16 %v3875
      %v5102 = vunpack.c.h.b16 %v3875
      %v5103 = vunpack.c.l.b16 %v3876
      %v5104 = vunpack.c.h.b16 %v3876
      %v5105 = vunpack.c.l.b16 %v3877
      %v5106 = vunpack.c.h.b16 %v3877
      %v5107 = vunpack.c.l.b16 %v3878
      %v5108 = vunpack.c.h.b16 %v3878
      %v5109 = vunpack.c.l.b16 %v3879
      %v5110 = vunpack.c.h.b16 %v3879
      %v5111 = vunpack.c.l.b16 %v3880
      %v5112 = vunpack.c.h.b16 %v3880
      %v5113 = vunpack.c.l.b16 %v3881
      %v5114 = vunpack.c.h.b16 %v3881
      %v5115 = vunpack.c.l.b16 %v3882
      %v5116 = vunpack.c.h.b16 %v3882
      %v5117 = vunpack.c.l.b16 %v3883
      %v5118 = vunpack.c.h.b16 %v3883
      %v5119 = vunpack.c.l.b16 %v3884
      %v5120 = vunpack.c.h.b16 %v3884
      %v5121 = vunpack.c.l.b16 %v3885
      %v5122 = vunpack.c.h.b16 %v3885
      %v5123 = vunpack.c.l.b16 %v3886
      %v5124 = vunpack.c.h.b16 %v3886
      %v5125 = vunpack.c.l.b16 %v3887
      %v5126 = vunpack.c.h.b16 %v3887
      %v5127 = vunpack.c.l.b16 %v3888
      %v5128 = vunpack.c.h.b16 %v3888
      %v5129 = vunpack.c.l.b16 %v3889
      %v5130 = vunpack.c.h.b16 %v3889
      %v5131 = vunpack.c.l.b16 %v3890
      %v5132 = vunpack.c.h.b16 %v3890
      %v5133 = vunpack.c.l.b16 %v3891
      %v5134 = vunpack.c.h.b16 %v3891
      %v5135 = vunpack.c.l.b16 %v3892
      %v5136 = vunpack.c.h.b16 %v3892
      %v5137 = vunpack.c.l.b16 %v3893
      %v5138 = vunpack.c.h.b16 %v3893
      %v5139 = vunpack.c.l.b16 %v3894
      %v5140 = vunpack.c.h.b16 %v3894
      %v5141 = vunpack.c.l.b16 %v3895
      %v5142 = vunpack.c.h.b16 %v3895
      %v5143 = vunpack.c.l.b16 %v3896
      %v5144 = vunpack.c.h.b16 %v3896
      %v5145 = vunpack.c.l.b16 %v3897
      %v5146 = vunpack.c.h.b16 %v3897
      %v5147 = vunpack.c.l.b16 %v3898
      %v5148 = vunpack.c.h.b16 %v3898
      %v5149 = vunpack.c.l.b16 %v3899
      %v5150 = vunpack.c.h.b16 %v3899
      %v5151 = vunpack.c.l.b16 %v3900
      %v5152 = vunpack.c.h.b16 %v3900
      %v5153 = vunpack.c.l.b16 %v3901
      %v5154 = vunpack.c.h.b16 %v3901
      %v5155 = vunpack.c.l.b16 %v3902
      %v5156 = vunpack.c.h.b16 %v3902
      %v5157 = vpack.c.b16 %v4397, %v4389
      %v5158 = vpack.c.b16 %v4398, %v4390
      %v5159 = vpack.c.b16 %v4399, %v4391
      %v5160 = vpack.c.b16 %v4400, %v4392
      %v5161 = vpack.c.b16 %v4401, %v4393
      %v5162 = vpack.c.b16 %v4402, %v4394
      %v5163 = vpack.c.b16 %v4403, %v4395
      %v5164 = vpack.c.b16 %v4404, %v4396
      %v5165 = vpack.c.b16 %v4413, %v4405
      %v5166 = vpack.c.b16 %v4414, %v4406
      %v5167 = vpack.c.b16 %v4415, %v4407
      %v5168 = vpack.c.b16 %v4416, %v4408
      %v5169 = vpack.c.b16 %v4417, %v4409
      %v5170 = vpack.c.b16 %v4418, %v4410
      %v5171 = vpack.c.b16 %v4419, %v4411
      %v5172 = vpack.c.b16 %v4420, %v4412
      %v5173 = vpack.c.b16 %v4429, %v4421
      %v5174 = vpack.c.b16 %v4430, %v4422
      %v5175 = vpack.c.b16 %v4431, %v4423
      %v5176 = vpack.c.b16 %v4432, %v4424
      %v5177 = vpack.c.b16 %v4433, %v4425
      %v5178 = vpack.c.b16 %v4434, %v4426
      %v5179 = vpack.c.b16 %v4435, %v4427
      %v5180 = vpack.c.b16 %v4436, %v4428
      %v5181 = vpack.c.b16 %v4445, %v4437
      %v5182 = vpack.c.b16 %v4446, %v4438
      %v5183 = vpack.c.b16 %v4447, %v4439
      %v5184 = vpack.c.b16 %v4448, %v4440
      %v5185 = vpack.c.b16 %v4449, %v4441
      %v5186 = vpack.c.b16 %v4450, %v4442
      %v5187 = vpack.c.b16 %v4451, %v4443
      %v5188 = vpack.c.b16 %v4452, %v4444
      %v5189 = vpack.c.b16 %v4461, %v4453
      %v5190 = vpack.c.b16 %v4462, %v4454
      %v5191 = vpack.c.b16 %v4463, %v4455
      %v5192 = vpack.c.b16 %v4464, %v4456
      %v5193 = vpack.c.b16 %v4465, %v4457
      %v5194 = vpack.c.b16 %v4466, %v4458
      %v5195 = vpack.c.b16 %v4467, %v4459
      %v5196 = vpack.c.b16 %v4468, %v4460
      %v5197 = vpack.c.b16 %v4477, %v4469
      %v5198 = vpack.c.b16 %v4478, %v4470
      %v5199 = vpack.c.b16 %v4479, %v4471
      %v5200 = vpack.c.b16 %v4480, %v4472
      %v5201 = vpack.c.b16 %v4481, %v4473
      %v5202 = vpack.c.b16 %v4482, %v4474
      %v5203 = vpack.c.b16 %v4483, %v4475
      %v5204 = vpack.c.b16 %v4484, %v4476
      %v5205 = vpack.c.b16 %v4493, %v4485
      %v5206 = vpack.c.b16 %v4494, %v4486
      %v5207 = vpack.c.b16 %v4495, %v4487
      %v5208 = vpack.c.b16 %v4496, %v4488
      %v5209 = vpack.c.b16 %v4497, %v4489
      %v5210 = vpack.c.b16 %v4498, %v4490
      %v5211 = vpack.c.b16 %v4499, %v4491
      %v5212 = vpack.c.b16 %v4500, %v4492
      %v5213 = vpack.c.b16 %v4509, %v4501
      %v5214 = vpack.c.b16 %v4510, %v4502
      %v5215 = vpack.c.b16 %v4511, %v4503
      %v5216 = vpack.c.b16 %v4512, %v4504
      %v5217 = vpack.c.b16 %v4513, %v4505
      %v5218 = vpack.c.b16 %v4514, %v4506
      %v5219 = vpack.c.b16 %v4515, %v4507
      %v5220 = vpack.c.b16 %v4516, %v4508
      %v5221 = vpack.c.b16 %v4525, %v4517
      %v5222 = vpack.c.b16 %v4526, %v4518
      %v5223 = vpack.c.b16 %v4527, %v4519
      %v5224 = vpack.c.b16 %v4528, %v4520
      %v5225 = vpack.c.b16 %v4529, %v4521
      %v5226 = vpack.c.b16 %v4530, %v4522
      %v5227 = vpack.c.b16 %v4531, %v4523
      %v5228 = vpack.c.b16 %v4532, %v4524
      %v5229 = vpack.c.b16 %v4541, %v4533
      %v5230 = vpack.c.b16 %v4542, %v4534
      %v5231 = vpack.c.b16 %v4543, %v4535
      %v5232 = vpack.c.b16 %v4544, %v4536
      %v5233 = vpack.c.b16 %v4545, %v4537
      %v5234 = vpack.c.b16 %v4546, %v4538
      %v5235 = vpack.c.b16 %v4547, %v4539
      %v5236 = vpack.c.b16 %v4548, %v4540
      %v5237 = vpack.c.b16 %v4557, %v4549
      %v5238 = vpack.c.b16 %v4558, %v4550
      %v5239 = vpack.c.b16 %v4559, %v4551
      %v5240 = vpack.c.b16 %v4560, %v4552
      %v5241 = vpack.c.b16 %v4561, %v4553
      %v5242 = vpack.c.b16 %v4562, %v4554
      %v5243 = vpack.c.b16 %v4563, %v4555
      %v5244 = vpack.c.b16 %v4564, %v4556
      %v5245 = vpack.c.b16 %v4573, %v4565
      %v5246 = vpack.c.b16 %v4574, %v4566
      %v5247 = vpack.c.b16 %v4575, %v4567
      %v5248 = vpack.c.b16 %v4576, %v4568
      %v5249 = vpack.c.b16 %v4577, %v4569
      %v5250 = vpack.c.b16 %v4578, %v4570
      %v5251 = vpack.c.b16 %v4579, %v4571
      %v5252 = vpack.c.b16 %v4580, %v4572
      %v5253 = vpack.c.b16 %v4589, %v4581
      %v5254 = vpack.c.b16 %v4590, %v4582
      %v5255 = vpack.c.b16 %v4591, %v4583
      %v5256 = vpack.c.b16 %v4592, %v4584
      %v5257 = vpack.c.b16 %v4593, %v4585
      %v5258 = vpack.c.b16 %v4594, %v4586
      %v5259 = vpack.c.b16 %v4595, %v4587
      %v5260 = vpack.c.b16 %v4596, %v4588
      %v5261 = vpack.c.b16 %v4605, %v4597
      %v5262 = vpack.c.b16 %v4606, %v4598
      %v5263 = vpack.c.b16 %v4607, %v4599
      %v5264 = vpack.c.b16 %v4608, %v4600
      %v5265 = vpack.c.b16 %v4609, %v4601
      %v5266 = vpack.c.b16 %v4610, %v4602
      %v5267 = vpack.c.b16 %v4611, %v4603
      %v5268 = vpack.c.b16 %v4612, %v4604
      %v5269 = vpack.c.b16 %v4621, %v4613
      %v5270 = vpack.c.b16 %v4622, %v4614
      %v5271 = vpack.c.b16 %v4623, %v4615
      %v5272 = vpack.c.b16 %v4624, %v4616
      %v5273 = vpack.c.b16 %v4625, %v4617
      %v5274 = vpack.c.b16 %v4626, %v4618
      %v5275 = vpack.c.b16 %v4627, %v4619
      %v5276 = vpack.c.b16 %v4628, %v4620
      %v5277 = vpack.c.b16 %v4637, %v4629
      %v5278 = vpack.c.b16 %v4638, %v4630
      %v5279 = vpack.c.b16 %v4639, %v4631
      %v5280 = vpack.c.b16 %v4640, %v4632
      %v5281 = vpack.c.b16 %v4641, %v4633
      %v5282 = vpack.c.b16 %v4642, %v4634
      %v5283 = vpack.c.b16 %v4643, %v4635
      %v5284 = vpack.c.b16 %v4644, %v4636
      %v5285 = vpack.c.b16 %v4653, %v4645
      %v5286 = vpack.c.b16 %v4654, %v4646
      %v5287 = vpack.c.b16 %v4655, %v4647
      %v5288 = vpack.c.b16 %v4656, %v4648
      %v5289 = vpack.c.b16 %v4657, %v4649
      %v5290 = vpack.c.b16 %v4658, %v4650
      %v5291 = vpack.c.b16 %v4659, %v4651
      %v5292 = vpack.c.b16 %v4660, %v4652
      %v5293 = vpack.c.b16 %v4669, %v4661
      %v5294 = vpack.c.b16 %v4670, %v4662
      %v5295 = vpack.c.b16 %v4671, %v4663
      %v5296 = vpack.c.b16 %v4672, %v4664
      %v5297 = vpack.c.b16 %v4673, %v4665
      %v5298 = vpack.c.b16 %v4674, %v4666
      %v5299 = vpack.c.b16 %v4675, %v4667
      %v5300 = vpack.c.b16 %v4676, %v4668
      %v5301 = vpack.c.b16 %v4685, %v4677
      %v5302 = vpack.c.b16 %v4686, %v4678
      %v5303 = vpack.c.b16 %v4687, %v4679
      %v5304 = vpack.c.b16 %v4688, %v4680
      %v5305 = vpack.c.b16 %v4689, %v4681
      %v5306 = vpack.c.b16 %v4690, %v4682
      %v5307 = vpack.c.b16 %v4691, %v4683
      %v5308 = vpack.c.b16 %v4692, %v4684
      %v5309 = vpack.c.b16 %v4701, %v4693
      %v5310 = vpack.c.b16 %v4702, %v4694
      %v5311 = vpack.c.b16 %v4703, %v4695
      %v5312 = vpack.c.b16 %v4704, %v4696
      %v5313 = vpack.c.b16 %v4705, %v4697
      %v5314 = vpack.c.b16 %v4706, %v4698
      %v5315 = vpack.c.b16 %v4707, %v4699
      %v5316 = vpack.c.b16 %v4708, %v4700
      %v5317 = vpack.c.b16 %v4717, %v4709
      %v5318 = vpack.c.b16 %v4718, %v4710
      %v5319 = vpack.c.b16 %v4719, %v4711
      %v5320 = vpack.c.b16 %v4720, %v4712
      %v5321 = vpack.c.b16 %v4721, %v4713
      %v5322 = vpack.c.b16 %v4722, %v4714
      %v5323 = vpack.c.b16 %v4723, %v4715
      %v5324 = vpack.c.b16 %v4724, %v4716
      %v5325 = vpack.c.b16 %v4733, %v4725
      %v5326 = vpack.c.b16 %v4734, %v4726
      %v5327 = vpack.c.b16 %v4735, %v4727
      %v5328 = vpack.c.b16 %v4736, %v4728
      %v5329 = vpack.c.b16 %v4737, %v4729
      %v5330 = vpack.c.b16 %v4738, %v4730
      %v5331 = vpack.c.b16 %v4739, %v4731
      %v5332 = vpack.c.b16 %v4740, %v4732
      %v5333 = vpack.c.b16 %v4749, %v4741
      %v5334 = vpack.c.b16 %v4750, %v4742
      %v5335 = vpack.c.b16 %v4751, %v4743
      %v5336 = vpack.c.b16 %v4752, %v4744
      %v5337 = vpack.c.b16 %v4753, %v4745
      %v5338 = vpack.c.b16 %v4754, %v4746
      %v5339 = vpack.c.b16 %v4755, %v4747
      %v5340 = vpack.c.b16 %v4756, %v4748
      %v5341 = vpack.c.b16 %v4765, %v4757
      %v5342 = vpack.c.b16 %v4766, %v4758
      %v5343 = vpack.c.b16 %v4767, %v4759
      %v5344 = vpack.c.b16 %v4768, %v4760
      %v5345 = vpack.c.b16 %v4769, %v4761
      %v5346 = vpack.c.b16 %v4770, %v4762
      %v5347 = vpack.c.b16 %v4771, %v4763
      %v5348 = vpack.c.b16 %v4772, %v4764
      %v5349 = vpack.c.b16 %v4781, %v4773
      %v5350 = vpack.c.b16 %v4782, %v4774
      %v5351 = vpack.c.b16 %v4783, %v4775
      %v5352 = vpack.c.b16 %v4784, %v4776
      %v5353 = vpack.c.b16 %v4785, %v4777
      %v5354 = vpack.c.b16 %v4786, %v4778
      %v5355 = vpack.c.b16 %v4787, %v4779
      %v5356 = vpack.c.b16 %v4788, %v4780
      %v5357 = vpack.c.b16 %v4797, %v4789
      %v5358 = vpack.c.b16 %v4798, %v4790
      %v5359 = vpack.c.b16 %v4799, %v4791
      %v5360 = vpack.c.b16 %v4800, %v4792
      %v5361 = vpack.c.b16 %v4801, %v4793
      %v5362 = vpack.c.b16 %v4802, %v4794
      %v5363 = vpack.c.b16 %v4803, %v4795
      %v5364 = vpack.c.b16 %v4804, %v4796
      %v5365 = vpack.c.b16 %v4813, %v4805
      %v5366 = vpack.c.b16 %v4814, %v4806
      %v5367 = vpack.c.b16 %v4815, %v4807
      %v5368 = vpack.c.b16 %v4816, %v4808
      %v5369 = vpack.c.b16 %v4817, %v4809
      %v5370 = vpack.c.b16 %v4818, %v4810
      %v5371 = vpack.c.b16 %v4819, %v4811
      %v5372 = vpack.c.b16 %v4820, %v4812
      %v5373 = vpack.c.b16 %v4829, %v4821
      %v5374 = vpack.c.b16 %v4830, %v4822
      %v5375 = vpack.c.b16 %v4831, %v4823
      %v5376 = vpack.c.b16 %v4832, %v4824
      %v5377 = vpack.c.b16 %v4833, %v4825
      %v5378 = vpack.c.b16 %v4834, %v4826
      %v5379 = vpack.c.b16 %v4835, %v4827
      %v5380 = vpack.c.b16 %v4836, %v4828
      %v5381 = vpack.c.b16 %v4845, %v4837
      %v5382 = vpack.c.b16 %v4846, %v4838
      %v5383 = vpack.c.b16 %v4847, %v4839
      %v5384 = vpack.c.b16 %v4848, %v4840
      %v5385 = vpack.c.b16 %v4849, %v4841
      %v5386 = vpack.c.b16 %v4850, %v4842
      %v5387 = vpack.c.b16 %v4851, %v4843
      %v5388 = vpack.c.b16 %v4852, %v4844
      %v5389 = vpack.c.b16 %v4861, %v4853
      %v5390 = vpack.c.b16 %v4862, %v4854
      %v5391 = vpack.c.b16 %v4863, %v4855
      %v5392 = vpack.c.b16 %v4864, %v4856
      %v5393 = vpack.c.b16 %v4865, %v4857
      %v5394 = vpack.c.b16 %v4866, %v4858
      %v5395 = vpack.c.b16 %v4867, %v4859
      %v5396 = vpack.c.b16 %v4868, %v4860
      %v5397 = vpack.c.b16 %v4877, %v4869
      %v5398 = vpack.c.b16 %v4878, %v4870
      %v5399 = vpack.c.b16 %v4879, %v4871
      %v5400 = vpack.c.b16 %v4880, %v4872
      %v5401 = vpack.c.b16 %v4881, %v4873
      %v5402 = vpack.c.b16 %v4882, %v4874
      %v5403 = vpack.c.b16 %v4883, %v4875
      %v5404 = vpack.c.b16 %v4884, %v4876
      %v5405 = vpack.c.b16 %v4893, %v4885
      %v5406 = vpack.c.b16 %v4894, %v4886
      %v5407 = vpack.c.b16 %v4895, %v4887
      %v5408 = vpack.c.b16 %v4896, %v4888
      %v5409 = vpack.c.b16 %v4897, %v4889
      %v5410 = vpack.c.b16 %v4898, %v4890
      %v5411 = vpack.c.b16 %v4899, %v4891
      %v5412 = vpack.c.b16 %v4900, %v4892
      %v5413 = vpack.c.b16 %v4909, %v4901
      %v5414 = vpack.c.b16 %v4910, %v4902
      %v5415 = vpack.c.b16 %v4911, %v4903
      %v5416 = vpack.c.b16 %v4912, %v4904
      %v5417 = vpack.c.b16 %v4913, %v4905
      %v5418 = vpack.c.b16 %v4914, %v4906
      %v5419 = vpack.c.b16 %v4915, %v4907
      %v5420 = vpack.c.b16 %v4916, %v4908
      %v5421 = vpack.c.b16 %v4925, %v4917
      %v5422 = vpack.c.b16 %v4926, %v4918
      %v5423 = vpack.c.b16 %v4927, %v4919
      %v5424 = vpack.c.b16 %v4928, %v4920
      %v5425 = vpack.c.b16 %v4929, %v4921
      %v5426 = vpack.c.b16 %v4930, %v4922
      %v5427 = vpack.c.b16 %v4931, %v4923
      %v5428 = vpack.c.b16 %v4932, %v4924
      %v5429 = vpack.c.b16 %v4941, %v4933
      %v5430 = vpack.c.b16 %v4942, %v4934
      %v5431 = vpack.c.b16 %v4943, %v4935
      %v5432 = vpack.c.b16 %v4944, %v4936
      %v5433 = vpack.c.b16 %v4945, %v4937
      %v5434 = vpack.c.b16 %v4946, %v4938
      %v5435 = vpack.c.b16 %v4947, %v4939
      %v5436 = vpack.c.b16 %v4948, %v4940
      %v5437 = vpack.c.b16 %v4957, %v4949
      %v5438 = vpack.c.b16 %v4958, %v4950
      %v5439 = vpack.c.b16 %v4959, %v4951
      %v5440 = vpack.c.b16 %v4960, %v4952
      %v5441 = vpack.c.b16 %v4961, %v4953
      %v5442 = vpack.c.b16 %v4962, %v4954
      %v5443 = vpack.c.b16 %v4963, %v4955
      %v5444 = vpack.c.b16 %v4964, %v4956
      %v5445 = vpack.c.b16 %v4973, %v4965
      %v5446 = vpack.c.b16 %v4974, %v4966
      %v5447 = vpack.c.b16 %v4975, %v4967
      %v5448 = vpack.c.b16 %v4976, %v4968
      %v5449 = vpack.c.b16 %v4977, %v4969
      %v5450 = vpack.c.b16 %v4978, %v4970
      %v5451 = vpack.c.b16 %v4979, %v4971
      %v5452 = vpack.c.b16 %v4980, %v4972
      %v5453 = vpack.c.b16 %v4989, %v4981
      %v5454 = vpack.c.b16 %v4990, %v4982
      %v5455 = vpack.c.b16 %v4991, %v4983
      %v5456 = vpack.c.b16 %v4992, %v4984
      %v5457 = vpack.c.b16 %v4993, %v4985
      %v5458 = vpack.c.b16 %v4994, %v4986
      %v5459 = vpack.c.b16 %v4995, %v4987
      %v5460 = vpack.c.b16 %v4996, %v4988
      %v5461 = vpack.c.b16 %v5005, %v4997
      %v5462 = vpack.c.b16 %v5006, %v4998
      %v5463 = vpack.c.b16 %v5007, %v4999
      %v5464 = vpack.c.b16 %v5008, %v5000
      %v5465 = vpack.c.b16 %v5009, %v5001
      %v5466 = vpack.c.b16 %v5010, %v5002
      %v5467 = vpack.c.b16 %v5011, %v5003
      %v5468 = vpack.c.b16 %v5012, %v5004
      %v5469 = vpack.c.b16 %v5021, %v5013
      %v5470 = vpack.c.b16 %v5022, %v5014
      %v5471 = vpack.c.b16 %v5023, %v5015
      %v5472 = vpack.c.b16 %v5024, %v5016
      %v5473 = vpack.c.b16 %v5025, %v5017
      %v5474 = vpack.c.b16 %v5026, %v5018
      %v5475 = vpack.c.b16 %v5027, %v5019
      %v5476 = vpack.c.b16 %v5028, %v5020
      %v5477 = vpack.c.b16 %v5037, %v5029
      %v5478 = vpack.c.b16 %v5038, %v5030
      %v5479 = vpack.c.b16 %v5039, %v5031
      %v5480 = vpack.c.b16 %v5040, %v5032
      %v5481 = vpack.c.b16 %v5041, %v5033
      %v5482 = vpack.c.b16 %v5042, %v5034
      %v5483 = vpack.c.b16 %v5043, %v5035
      %v5484 = vpack.c.b16 %v5044, %v5036
      %v5485 = vpack.c.b16 %v5053, %v5045
      %v5486 = vpack.c.b16 %v5054, %v5046
      %v5487 = vpack.c.b16 %v5055, %v5047
      %v5488 = vpack.c.b16 %v5056, %v5048
      %v5489 = vpack.c.b16 %v5057, %v5049
      %v5490 = vpack.c.b16 %v5058, %v5050
      %v5491 = vpack.c.b16 %v5059, %v5051
      %v5492 = vpack.c.b16 %v5060, %v5052
      %v5493 = vpack.c.b16 %v5069, %v5061
      %v5494 = vpack.c.b16 %v5070, %v5062
      %v5495 = vpack.c.b16 %v5071, %v5063
      %v5496 = vpack.c.b16 %v5072, %v5064
      %v5497 = vpack.c.b16 %v5073, %v5065
      %v5498 = vpack.c.b16 %v5074, %v5066
      %v5499 = vpack.c.b16 %v5075, %v5067
      %v5500 = vpack.c.b16 %v5076, %v5068
      %v5501 = vpack.c.b16 %v5085, %v5077
      %v5502 = vpack.c.b16 %v5086, %v5078
      %v5503 = vpack.c.b16 %v5087, %v5079
      %v5504 = vpack.c.b16 %v5088, %v5080
      %v5505 = vpack.c.b16 %v5089, %v5081
      %v5506 = vpack.c.b16 %v5090, %v5082
      %v5507 = vpack.c.b16 %v5091, %v5083
      %v5508 = vpack.c.b16 %v5092, %v5084
      %v5509 = vpack.c.b16 %v5101, %v5093
      %v5510 = vpack.c.b16 %v5102, %v5094
      %v5511 = vpack.c.b16 %v5103, %v5095
      %v5512 = vpack.c.b16 %v5104, %v5096
      %v5513 = vpack.c.b16 %v5105, %v5097
      %v5514 = vpack.c.b16 %v5106, %v5098
      %v5515 = vpack.c.b16 %v5107, %v5099
      %v5516 = vpack.c.b16 %v5108, %v5100
      %v5517 = vpack.c.b16 %v5117, %v5109
      %v5518 = vpack.c.b16 %v5118, %v5110
      %v5519 = vpack.c.b16 %v5119, %v5111
      %v5520 = vpack.c.b16 %v5120, %v5112
      %v5521 = vpack.c.b16 %v5121, %v5113
      %v5522 = vpack.c.b16 %v5122, %v5114
      %v5523 = vpack.c.b16 %v5123, %v5115
      %v5524 = vpack.c.b16 %v5124, %v5116
      %v5525 = vpack.c.b16 %v5133, %v5125
      %v5526 = vpack.c.b16 %v5134, %v5126
      %v5527 = vpack.c.b16 %v5135, %v5127
      %v5528 = vpack.c.b16 %v5136, %v5128
      %v5529 = vpack.c.b16 %v5137, %v5129
      %v5530 = vpack.c.b16 %v5138, %v5130
      %v5531 = vpack.c.b16 %v5139, %v5131
      %v5532 = vpack.c.b16 %v5140, %v5132
      %v5533 = vpack.c.b16 %v5149, %v5141
      %v5534 = vpack.c.b16 %v5150, %v5142
      %v5535 = vpack.c.b16 %v5151, %v5143
      %v5536 = vpack.c.b16 %v5152, %v5144
      %v5537 = vpack.c.b16 %v5153, %v5145
      %v5538 = vpack.c.b16 %v5154, %v5146
      %v5539 = vpack.c.b16 %v5155, %v5147
      %v5540 = vpack.c.b16 %v5156, %v5148
      %5925 = vmatprep.subr.bf16.mxu0 %v5214
      %5926 = vmatpush1.bf16.msra.mxu0 %v5213
      %5927 = vmatprep.subr.bf16.mxu0 %v5206
      %5928 = vmatpush1.bf16.msra.mxu0 %v5205
      %5929 = vmatprep.subr.bf16.mxu0 %v5198
      %5930 = vmatpush1.bf16.msra.mxu0 %v5197
      %5931 = vmatprep.subr.bf16.mxu0 %v5190
      %5932 = vmatpush1.bf16.msra.mxu0 %v5189
      %5933 = vmatprep.subr.bf16.mxu0 %v5182
      %5934 = vmatpush1.bf16.msra.mxu0 %v5181
      %5935 = vmatprep.subr.bf16.mxu0 %v5174
      %5936 = vmatpush1.bf16.msra.mxu0 %v5173
      %5937 = vmatprep.subr.bf16.mxu0 %v5166
      %5938 = vmatpush1.bf16.msra.mxu0 %v5165
      %5939 = vmatprep.subr.bf16.mxu0 %v5158
      %5940 = vmatpush1.bf16.msra.mxu0 %v5157
      %5941 = vmatprep.subr.bf16.mxu0 %v5278
      %5942 = vmatpush2.bf16.msra.mxu0 %v5277
      %5943 = vmatprep.subr.bf16.mxu0 %v5270
      %5944 = vmatpush2.bf16.msra.mxu0 %v5269
      %5945 = vmatprep.subr.bf16.mxu0 %v5262
      %5946 = vmatpush2.bf16.msra.mxu0 %v5261
      %5947 = vmatprep.subr.bf16.mxu0 %v5254
      %5948 = vmatpush2.bf16.msra.mxu0 %v5253
      %5949 = vmatprep.subr.bf16.mxu0 %v5246
      %5950 = vmatpush2.bf16.msra.mxu0 %v5245
      %5951 = vmatprep.subr.bf16.mxu0 %v5238
      %5952 = vmatpush2.bf16.msra.mxu0 %v5237
      %5953 = vmatprep.subr.bf16.mxu0 %v5230
      %5954 = vmatpush2.bf16.msra.mxu0 %v5229
      %5955 = vmatprep.subr.bf16.mxu0 %v5222
      %5956 = vmatpush2.bf16.msra.mxu0 %v5221
      %5957 = vmatprep.mubr.bf16.mxu0 %v3982
      %5958 = vmatmul.mubr.bf16.gmra.mxu0 %v3981
      %v5959 = vpop.f32.mrf.mxu0
      %v5960 = vadd.f32 %v3908, %v5959
      %v5961 = vpop.f32.mrf.mxu0
      %v5962 = vadd.f32 %v3912, %v5961
      %v5963 = vpop.f32.mrf.mxu0
      %v5964 = vadd.f32 %v3908, %v5963
      %v5965 = vpop.f32.mrf.mxu0
      %v5966 = vadd.f32 %v3912, %v5965
      %5967 = vmatprep.mubr.bf16.mxu0 %v3988
      %5968 = vmatmul.mubr.bf16.gmra.mxu0 %v3987
      %v5969 = vpop.f32.mrf.mxu0
      %v5970 = vadd.f32 %v3908, %v5969
      %v5971 = vpop.f32.mrf.mxu0
      %v5972 = vadd.f32 %v3912, %v5971
      %v5973 = vpop.f32.mrf.mxu0
      %v5974 = vadd.f32 %v3908, %v5973
      %v5975 = vpop.f32.mrf.mxu0
      %v5976 = vadd.f32 %v3912, %v5975
      %5977 = vdwg.mxu0
      %5978 = vmatprep.subr.bf16.mxu0 %v5342
      %5979 = vmatpush1.bf16.msra.mxu0 %v5341
      %5980 = vmatprep.subr.bf16.mxu0 %v5334
      %5981 = vmatpush1.bf16.msra.mxu0 %v5333
      %5982 = vmatprep.subr.bf16.mxu0 %v5326
      %5983 = vmatpush1.bf16.msra.mxu0 %v5325
      %5984 = vmatprep.subr.bf16.mxu0 %v5318
      %5985 = vmatpush1.bf16.msra.mxu0 %v5317
      %5986 = vmatprep.subr.bf16.mxu0 %v5310
      %5987 = vmatpush1.bf16.msra.mxu0 %v5309
      %5988 = vmatprep.subr.bf16.mxu0 %v5302
      %5989 = vmatpush1.bf16.msra.mxu0 %v5301
      %5990 = vmatprep.subr.bf16.mxu0 %v5294
      %5991 = vmatpush1.bf16.msra.mxu0 %v5293
      %5992 = vmatprep.subr.bf16.mxu0 %v5286
      %5993 = vmatpush1.bf16.msra.mxu0 %v5285
      %5994 = vmatprep.subr.bf16.mxu0 %v5406
      %5995 = vmatpush2.bf16.msra.mxu0 %v5405
      %5996 = vmatprep.subr.bf16.mxu0 %v5398
      %5997 = vmatpush2.bf16.msra.mxu0 %v5397
      %5998 = vmatprep.subr.bf16.mxu0 %v5390
      %5999 = vmatpush2.bf16.msra.mxu0 %v5389
      %6000 = vmatprep.subr.bf16.mxu0 %v5382
      %6001 = vmatpush2.bf16.msra.mxu0 %v5381
      %6002 = vmatprep.subr.bf16.mxu0 %v5374
      %6003 = vmatpush2.bf16.msra.mxu0 %v5373
      %6004 = vmatprep.subr.bf16.mxu0 %v5366
      %6005 = vmatpush2.bf16.msra.mxu0 %v5365
      %6006 = vmatprep.subr.bf16.mxu0 %v5358
      %6007 = vmatpush2.bf16.msra.mxu0 %v5357
      %6008 = vmatprep.subr.bf16.mxu0 %v5350
      %6009 = vmatpush2.bf16.msra.mxu0 %v5349
      %6010 = vmatprep.mubr.bf16.mxu0 %v3984
      %6011 = vmatmul.mubr.bf16.gmra.mxu0 %v3983
      %v6012 = vpop.f32.mrf.mxu0
      %v6013 = vadd.f32 %v5960, %v6012
      %v6014 = vpop.f32.mrf.mxu0
      %v6015 = vadd.f32 %v5962, %v6014
      %v6016 = vpop.f32.mrf.mxu0
      %v6017 = vadd.f32 %v5964, %v6016
      %v6018 = vpop.f32.mrf.mxu0
      %v6019 = vadd.f32 %v5966, %v6018
      %6020 = vmatprep.mubr.bf16.mxu0 %v3990
      %6021 = vmatmul.mubr.bf16.gmra.mxu0 %v3989
      %v6022 = vpop.f32.mrf.mxu0
      %v6023 = vadd.f32 %v5970, %v6022
      %v6024 = vpop.f32.mrf.mxu0
      %v6025 = vadd.f32 %v5972, %v6024
      %v6026 = vpop.f32.mrf.mxu0
      %v6027 = vadd.f32 %v5974, %v6026
      %v6028 = vpop.f32.mrf.mxu0
      %v6029 = vadd.f32 %v5976, %v6028
      %6030 = vdwg.mxu0
      %6031 = vmatprep.subr.bf16.mxu0 %v5470
      %6032 = vmatpush1.bf16.msra.mxu0 %v5469
      %6033 = vmatprep.subr.bf16.mxu0 %v5462
      %6034 = vmatpush1.bf16.msra.mxu0 %v5461
      %6035 = vmatprep.subr.bf16.mxu0 %v5454
      %6036 = vmatpush1.bf16.msra.mxu0 %v5453
      %6037 = vmatprep.subr.bf16.mxu0 %v5446
      %6038 = vmatpush1.bf16.msra.mxu0 %v5445
      %6039 = vmatprep.subr.bf16.mxu0 %v5438
      %6040 = vmatpush1.bf16.msra.mxu0 %v5437
      %6041 = vmatprep.subr.bf16.mxu0 %v5430
      %6042 = vmatpush1.bf16.msra.mxu0 %v5429
      %6043 = vmatprep.subr.bf16.mxu0 %v5422
      %6044 = vmatpush1.bf16.msra.mxu0 %v5421
      %6045 = vmatprep.subr.bf16.mxu0 %v5414
      %6046 = vmatpush1.bf16.msra.mxu0 %v5413
      %6047 = vmatprep.subr.bf16.mxu0 %v5534
      %6048 = vmatpush2.bf16.msra.mxu0 %v5533
      %6049 = vmatprep.subr.bf16.mxu0 %v5526
      %6050 = vmatpush2.bf16.msra.mxu0 %v5525
      %6051 = vmatprep.subr.bf16.mxu0 %v5518
      %6052 = vmatpush2.bf16.msra.mxu0 %v5517
      %6053 = vmatprep.subr.bf16.mxu0 %v5510
      %6054 = vmatpush2.bf16.msra.mxu0 %v5509
      %6055 = vmatprep.subr.bf16.mxu0 %v5502
      %6056 = vmatpush2.bf16.msra.mxu0 %v5501
      %6057 = vmatprep.subr.bf16.mxu0 %v5494
      %6058 = vmatpush2.bf16.msra.mxu0 %v5493
      %6059 = vmatprep.subr.bf16.mxu0 %v5486
      %6060 = vmatpush2.bf16.msra.mxu0 %v5485
      %6061 = vmatprep.subr.bf16.mxu0 %v5478
      %6062 = vmatpush2.bf16.msra.mxu0 %v5477
      %6063 = vmatprep.mubr.bf16.mxu0 %v3986
      %6064 = vmatmul.mubr.bf16.gmra.mxu0 %v3985
      %v6065 = vpop.f32.mrf.mxu0
      %v6066 = vadd.f32 %v6013, %v6065
      %v6067 = vpop.f32.mrf.mxu0
      %v6068 = vadd.f32 %v6015, %v6067
      %v6069 = vpop.f32.mrf.mxu0
      %v6070 = vadd.f32 %v6017, %v6069
      %v6071 = vpop.f32.mrf.mxu0
      %v6072 = vadd.f32 %v6019, %v6071
      %6073 = vmatprep.mubr.bf16.mxu0 %v3992
      %6074 = vmatmul.mubr.bf16.gmra.mxu0 %v3991
      %v6075 = vpop.f32.mrf.mxu0
      %v6076 = vadd.f32 %v6023, %v6075
      %v6077 = vpop.f32.mrf.mxu0
      %v6078 = vadd.f32 %v6025, %v6077
      %v6079 = vpop.f32.mrf.mxu0
      %v6080 = vadd.f32 %v6027, %v6079
      %v6081 = vpop.f32.mrf.mxu0
      %v6082 = vadd.f32 %v6029, %v6081
      %6083 = vdwg.mxu0
      %6084 = vmatprep.subr.bf16.mxu0 %v5216
      %6085 = vmatpush1.bf16.msra.mxu0 %v5215
      %6086 = vmatprep.subr.bf16.mxu0 %v5208
      %6087 = vmatpush1.bf16.msra.mxu0 %v5207
      %6088 = vmatprep.subr.bf16.mxu0 %v5200
      %6089 = vmatpush1.bf16.msra.mxu0 %v5199
      %6090 = vmatprep.subr.bf16.mxu0 %v5192
      %6091 = vmatpush1.bf16.msra.mxu0 %v5191
      %6092 = vmatprep.subr.bf16.mxu0 %v5184
      %6093 = vmatpush1.bf16.msra.mxu0 %v5183
      %6094 = vmatprep.subr.bf16.mxu0 %v5176
      %6095 = vmatpush1.bf16.msra.mxu0 %v5175
      %6096 = vmatprep.subr.bf16.mxu0 %v5168
      %6097 = vmatpush1.bf16.msra.mxu0 %v5167
      %6098 = vmatprep.subr.bf16.mxu0 %v5160
      %6099 = vmatpush1.bf16.msra.mxu0 %v5159
      %6100 = vmatprep.subr.bf16.mxu0 %v5280
      %6101 = vmatpush2.bf16.msra.mxu0 %v5279
      %6102 = vmatprep.subr.bf16.mxu0 %v5272
      %6103 = vmatpush2.bf16.msra.mxu0 %v5271
      %6104 = vmatprep.subr.bf16.mxu0 %v5264
      %6105 = vmatpush2.bf16.msra.mxu0 %v5263
      %6106 = vmatprep.subr.bf16.mxu0 %v5256
      %6107 = vmatpush2.bf16.msra.mxu0 %v5255
      %6108 = vmatprep.subr.bf16.mxu0 %v5248
      %6109 = vmatpush2.bf16.msra.mxu0 %v5247
      %6110 = vmatprep.subr.bf16.mxu0 %v5240
      %6111 = vmatpush2.bf16.msra.mxu0 %v5239
      %6112 = vmatprep.subr.bf16.mxu0 %v5232
      %6113 = vmatpush2.bf16.msra.mxu0 %v5231
      %6114 = vmatprep.subr.bf16.mxu0 %v5224
      %6115 = vmatpush2.bf16.msra.mxu0 %v5223
      %6116 = vmatprep.mubr.bf16.mxu0 %v3982
      %6117 = vmatmul.mubr.bf16.gmra.mxu0 %v3981
      %v6118 = vpop.f32.mrf.mxu0
      %v6119 = vadd.f32 %v3916, %v6118
      %v6120 = vpop.f32.mrf.mxu0
      %v6121 = vadd.f32 %v3920, %v6120
      %v6122 = vpop.f32.mrf.mxu0
      %v6123 = vadd.f32 %v3916, %v6122
      %v6124 = vpop.f32.mrf.mxu0
      %v6125 = vadd.f32 %v3920, %v6124
      %6126 = vmatprep.mubr.bf16.mxu0 %v3988
      %6127 = vmatmul.mubr.bf16.gmra.mxu0 %v3987
      %v6128 = vpop.f32.mrf.mxu0
      %v6129 = vadd.f32 %v3916, %v6128
      %v6130 = vpop.f32.mrf.mxu0
      %v6131 = vadd.f32 %v3920, %v6130
      %v6132 = vpop.f32.mrf.mxu0
      %v6133 = vadd.f32 %v3916, %v6132
      %v6134 = vpop.f32.mrf.mxu0
      %v6135 = vadd.f32 %v3920, %v6134
      %6136 = vdwg.mxu0
      %6137 = vmatprep.subr.bf16.mxu0 %v5344
      %6138 = vmatpush1.bf16.msra.mxu0 %v5343
      %6139 = vmatprep.subr.bf16.mxu0 %v5336
      %6140 = vmatpush1.bf16.msra.mxu0 %v5335
      %6141 = vmatprep.subr.bf16.mxu0 %v5328
      %6142 = vmatpush1.bf16.msra.mxu0 %v5327
      %6143 = vmatprep.subr.bf16.mxu0 %v5320
      %6144 = vmatpush1.bf16.msra.mxu0 %v5319
      %6145 = vmatprep.subr.bf16.mxu0 %v5312
      %6146 = vmatpush1.bf16.msra.mxu0 %v5311
      %6147 = vmatprep.subr.bf16.mxu0 %v5304
      %6148 = vmatpush1.bf16.msra.mxu0 %v5303
      %6149 = vmatprep.subr.bf16.mxu0 %v5296
      %6150 = vmatpush1.bf16.msra.mxu0 %v5295
      %6151 = vmatprep.subr.bf16.mxu0 %v5288
      %6152 = vmatpush1.bf16.msra.mxu0 %v5287
      %6153 = vmatprep.subr.bf16.mxu0 %v5408
      %6154 = vmatpush2.bf16.msra.mxu0 %v5407
      %6155 = vmatprep.subr.bf16.mxu0 %v5400
      %6156 = vmatpush2.bf16.msra.mxu0 %v5399
      %6157 = vmatprep.subr.bf16.mxu0 %v5392
      %6158 = vmatpush2.bf16.msra.mxu0 %v5391
      %6159 = vmatprep.subr.bf16.mxu0 %v5384
      %6160 = vmatpush2.bf16.msra.mxu0 %v5383
      %6161 = vmatprep.subr.bf16.mxu0 %v5376
      %6162 = vmatpush2.bf16.msra.mxu0 %v5375
      %6163 = vmatprep.subr.bf16.mxu0 %v5368
      %6164 = vmatpush2.bf16.msra.mxu0 %v5367
      %6165 = vmatprep.subr.bf16.mxu0 %v5360
      %6166 = vmatpush2.bf16.msra.mxu0 %v5359
      %6167 = vmatprep.subr.bf16.mxu0 %v5352
      %6168 = vmatpush2.bf16.msra.mxu0 %v5351
      %6169 = vmatprep.mubr.bf16.mxu0 %v3984
      %6170 = vmatmul.mubr.bf16.gmra.mxu0 %v3983
      %v6171 = vpop.f32.mrf.mxu0
      %v6172 = vadd.f32 %v6119, %v6171
      %v6173 = vpop.f32.mrf.mxu0
      %v6174 = vadd.f32 %v6121, %v6173
      %v6175 = vpop.f32.mrf.mxu0
      %v6176 = vadd.f32 %v6123, %v6175
      %v6177 = vpop.f32.mrf.mxu0
      %v6178 = vadd.f32 %v6125, %v6177
      %6179 = vmatprep.mubr.bf16.mxu0 %v3990
      %6180 = vmatmul.mubr.bf16.gmra.mxu0 %v3989
      %v6181 = vpop.f32.mrf.mxu0
      %v6182 = vadd.f32 %v6129, %v6181
      %v6183 = vpop.f32.mrf.mxu0
      %v6184 = vadd.f32 %v6131, %v6183
      %v6185 = vpop.f32.mrf.mxu0
      %v6186 = vadd.f32 %v6133, %v6185
      %v6187 = vpop.f32.mrf.mxu0
      %v6188 = vadd.f32 %v6135, %v6187
      %6189 = vdwg.mxu0
      %6190 = vmatprep.subr.bf16.mxu0 %v5472
      %6191 = vmatpush1.bf16.msra.mxu0 %v5471
      %6192 = vmatprep.subr.bf16.mxu0 %v5464
      %6193 = vmatpush1.bf16.msra.mxu0 %v5463
      %6194 = vmatprep.subr.bf16.mxu0 %v5456
      %6195 = vmatpush1.bf16.msra.mxu0 %v5455
      %6196 = vmatprep.subr.bf16.mxu0 %v5448
      %6197 = vmatpush1.bf16.msra.mxu0 %v5447
      %6198 = vmatprep.subr.bf16.mxu0 %v5440
      %6199 = vmatpush1.bf16.msra.mxu0 %v5439
      %6200 = vmatprep.subr.bf16.mxu0 %v5432
      %6201 = vmatpush1.bf16.msra.mxu0 %v5431
      %6202 = vmatprep.subr.bf16.mxu0 %v5424
      %6203 = vmatpush1.bf16.msra.mxu0 %v5423
      %6204 = vmatprep.subr.bf16.mxu0 %v5416
      %6205 = vmatpush1.bf16.msra.mxu0 %v5415
      %6206 = vmatprep.subr.bf16.mxu0 %v5536
      %6207 = vmatpush2.bf16.msra.mxu0 %v5535
      %6208 = vmatprep.subr.bf16.mxu0 %v5528
      %6209 = vmatpush2.bf16.msra.mxu0 %v5527
      %6210 = vmatprep.subr.bf16.mxu0 %v5520
      %6211 = vmatpush2.bf16.msra.mxu0 %v5519
      %6212 = vmatprep.subr.bf16.mxu0 %v5512
      %6213 = vmatpush2.bf16.msra.mxu0 %v5511
      %6214 = vmatprep.subr.bf16.mxu0 %v5504
      %6215 = vmatpush2.bf16.msra.mxu0 %v5503
      %6216 = vmatprep.subr.bf16.mxu0 %v5496
      %6217 = vmatpush2.bf16.msra.mxu0 %v5495
      %6218 = vmatprep.subr.bf16.mxu0 %v5488
      %6219 = vmatpush2.bf16.msra.mxu0 %v5487
      %6220 = vmatprep.subr.bf16.mxu0 %v5480
      %6221 = vmatpush2.bf16.msra.mxu0 %v5479
      %6222 = vmatprep.mubr.bf16.mxu0 %v3986
      %6223 = vmatmul.mubr.bf16.gmra.mxu0 %v3985
      %v6224 = vpop.f32.mrf.mxu0
      %v6225 = vadd.f32 %v6172, %v6224
      %v6226 = vpop.f32.mrf.mxu0
      %v6227 = vadd.f32 %v6174, %v6226
      %v6228 = vpop.f32.mrf.mxu0
      %v6229 = vadd.f32 %v6176, %v6228
      %v6230 = vpop.f32.mrf.mxu0
      %v6231 = vadd.f32 %v6178, %v6230
      %6232 = vmatprep.mubr.bf16.mxu0 %v3992
      %6233 = vmatmul.mubr.bf16.gmra.mxu0 %v3991
      %v6234 = vpop.f32.mrf.mxu0
      %v6235 = vadd.f32 %v6182, %v6234
      %v6236 = vpop.f32.mrf.mxu0
      %v6237 = vadd.f32 %v6184, %v6236
      %v6238 = vpop.f32.mrf.mxu0
      %v6239 = vadd.f32 %v6186, %v6238
      %v6240 = vpop.f32.mrf.mxu0
      %v6241 = vadd.f32 %v6188, %v6240
      %6242 = vdwg.mxu0
      %6243 = vmatprep.subr.bf16.mxu0 %v5218
      %6244 = vmatpush1.bf16.msra.mxu0 %v5217
      %6245 = vmatprep.subr.bf16.mxu0 %v5210
      %6246 = vmatpush1.bf16.msra.mxu0 %v5209
      %6247 = vmatprep.subr.bf16.mxu0 %v5202
      %6248 = vmatpush1.bf16.msra.mxu0 %v5201
      %6249 = vmatprep.subr.bf16.mxu0 %v5194
      %6250 = vmatpush1.bf16.msra.mxu0 %v5193
      %6251 = vmatprep.subr.bf16.mxu0 %v5186
      %6252 = vmatpush1.bf16.msra.mxu0 %v5185
      %6253 = vmatprep.subr.bf16.mxu0 %v5178
      %6254 = vmatpush1.bf16.msra.mxu0 %v5177
      %6255 = vmatprep.subr.bf16.mxu0 %v5170
      %6256 = vmatpush1.bf16.msra.mxu0 %v5169
      %6257 = vmatprep.subr.bf16.mxu0 %v5162
      %6258 = vmatpush1.bf16.msra.mxu0 %v5161
      %6259 = vmatprep.subr.bf16.mxu0 %v5282
      %6260 = vmatpush2.bf16.msra.mxu0 %v5281
      %6261 = vmatprep.subr.bf16.mxu0 %v5274
      %6262 = vmatpush2.bf16.msra.mxu0 %v5273
      %6263 = vmatprep.subr.bf16.mxu0 %v5266
      %6264 = vmatpush2.bf16.msra.mxu0 %v5265
      %6265 = vmatprep.subr.bf16.mxu0 %v5258
      %6266 = vmatpush2.bf16.msra.mxu0 %v5257
      %6267 = vmatprep.subr.bf16.mxu0 %v5250
      %6268 = vmatpush2.bf16.msra.mxu0 %v5249
      %6269 = vmatprep.subr.bf16.mxu0 %v5242
      %6270 = vmatpush2.bf16.msra.mxu0 %v5241
      %6271 = vmatprep.subr.bf16.mxu0 %v5234
      %6272 = vmatpush2.bf16.msra.mxu0 %v5233
      %6273 = vmatprep.subr.bf16.mxu0 %v5226
      %6274 = vmatpush2.bf16.msra.mxu0 %v5225
      %6275 = vmatprep.mubr.bf16.mxu0 %v3982
      %6276 = vmatmul.mubr.bf16.gmra.mxu0 %v3981
      %v6277 = vpop.f32.mrf.mxu0
      %v6278 = vadd.f32 %v3924, %v6277
      %v6279 = vpop.f32.mrf.mxu0
      %v6280 = vadd.f32 %v3928, %v6279
      %v6281 = vpop.f32.mrf.mxu0
      %v6282 = vadd.f32 %v3924, %v6281
      %v6283 = vpop.f32.mrf.mxu0
      %v6284 = vadd.f32 %v3928, %v6283
      %6285 = vmatprep.mubr.bf16.mxu0 %v3988
      %6286 = vmatmul.mubr.bf16.gmra.mxu0 %v3987
      %v6287 = vpop.f32.mrf.mxu0
      %v6288 = vadd.f32 %v3924, %v6287
      %v6289 = vpop.f32.mrf.mxu0
      %v6290 = vadd.f32 %v3928, %v6289
      %v6291 = vpop.f32.mrf.mxu0
      %v6292 = vadd.f32 %v3924, %v6291
      %v6293 = vpop.f32.mrf.mxu0
      %v6294 = vadd.f32 %v3928, %v6293
      %6295 = vdwg.mxu0
      %6296 = vmatprep.subr.bf16.mxu0 %v5346
      %6297 = vmatpush1.bf16.msra.mxu0 %v5345
      %6298 = vmatprep.subr.bf16.mxu0 %v5338
      %6299 = vmatpush1.bf16.msra.mxu0 %v5337
      %6300 = vmatprep.subr.bf16.mxu0 %v5330
      %6301 = vmatpush1.bf16.msra.mxu0 %v5329
      %6302 = vmatprep.subr.bf16.mxu0 %v5322
      %6303 = vmatpush1.bf16.msra.mxu0 %v5321
      %6304 = vmatprep.subr.bf16.mxu0 %v5314
      %6305 = vmatpush1.bf16.msra.mxu0 %v5313
      %6306 = vmatprep.subr.bf16.mxu0 %v5306
      %6307 = vmatpush1.bf16.msra.mxu0 %v5305
      %6308 = vmatprep.subr.bf16.mxu0 %v5298
      %6309 = vmatpush1.bf16.msra.mxu0 %v5297
      %6310 = vmatprep.subr.bf16.mxu0 %v5290
      %6311 = vmatpush1.bf16.msra.mxu0 %v5289
      %6312 = vmatprep.subr.bf16.mxu0 %v5410
      %6313 = vmatpush2.bf16.msra.mxu0 %v5409
      %6314 = vmatprep.subr.bf16.mxu0 %v5402
      %6315 = vmatpush2.bf16.msra.mxu0 %v5401
      %6316 = vmatprep.subr.bf16.mxu0 %v5394
      %6317 = vmatpush2.bf16.msra.mxu0 %v5393
      %6318 = vmatprep.subr.bf16.mxu0 %v5386
      %6319 = vmatpush2.bf16.msra.mxu0 %v5385
      %6320 = vmatprep.subr.bf16.mxu0 %v5378
      %6321 = vmatpush2.bf16.msra.mxu0 %v5377
      %6322 = vmatprep.subr.bf16.mxu0 %v5370
      %6323 = vmatpush2.bf16.msra.mxu0 %v5369
      %6324 = vmatprep.subr.bf16.mxu0 %v5362
      %6325 = vmatpush2.bf16.msra.mxu0 %v5361
      %6326 = vmatprep.subr.bf16.mxu0 %v5354
      %6327 = vmatpush2.bf16.msra.mxu0 %v5353
      %6328 = vmatprep.mubr.bf16.mxu0 %v3984
      %6329 = vmatmul.mubr.bf16.gmra.mxu0 %v3983
      %v6330 = vpop.f32.mrf.mxu0
      %v6331 = vadd.f32 %v6278, %v6330
      %v6332 = vpop.f32.mrf.mxu0
      %v6333 = vadd.f32 %v6280, %v6332
      %v6334 = vpop.f32.mrf.mxu0
      %v6335 = vadd.f32 %v6282, %v6334
      %v6336 = vpop.f32.mrf.mxu0
      %v6337 = vadd.f32 %v6284, %v6336
      %6338 = vmatprep.mubr.bf16.mxu0 %v3990
      %6339 = vmatmul.mubr.bf16.gmra.mxu0 %v3989
      %v6340 = vpop.f32.mrf.mxu0
      %v6341 = vadd.f32 %v6288, %v6340
      %v6342 = vpop.f32.mrf.mxu0
      %v6343 = vadd.f32 %v6290, %v6342
      %v6344 = vpop.f32.mrf.mxu0
      %v6345 = vadd.f32 %v6292, %v6344
      %v6346 = vpop.f32.mrf.mxu0
      %v6347 = vadd.f32 %v6294, %v6346
      %6348 = vdwg.mxu0
      %6349 = vmatprep.subr.bf16.mxu0 %v5474
      %6350 = vmatpush1.bf16.msra.mxu0 %v5473
      %6351 = vmatprep.subr.bf16.mxu0 %v5466
      %6352 = vmatpush1.bf16.msra.mxu0 %v5465
      %6353 = vmatprep.subr.bf16.mxu0 %v5458
      %6354 = vmatpush1.bf16.msra.mxu0 %v5457
      %6355 = vmatprep.subr.bf16.mxu0 %v5450
      %6356 = vmatpush1.bf16.msra.mxu0 %v5449
      %6357 = vmatprep.subr.bf16.mxu0 %v5442
      %6358 = vmatpush1.bf16.msra.mxu0 %v5441
      %6359 = vmatprep.subr.bf16.mxu0 %v5434
      %6360 = vmatpush1.bf16.msra.mxu0 %v5433
      %6361 = vmatprep.subr.bf16.mxu0 %v5426
      %6362 = vmatpush1.bf16.msra.mxu0 %v5425
      %6363 = vmatprep.subr.bf16.mxu0 %v5418
      %6364 = vmatpush1.bf16.msra.mxu0 %v5417
      %6365 = vmatprep.subr.bf16.mxu0 %v5538
      %6366 = vmatpush2.bf16.msra.mxu0 %v5537
      %6367 = vmatprep.subr.bf16.mxu0 %v5530
      %6368 = vmatpush2.bf16.msra.mxu0 %v5529
      %6369 = vmatprep.subr.bf16.mxu0 %v5522
      %6370 = vmatpush2.bf16.msra.mxu0 %v5521
      %6371 = vmatprep.subr.bf16.mxu0 %v5514
      %6372 = vmatpush2.bf16.msra.mxu0 %v5513
      %6373 = vmatprep.subr.bf16.mxu0 %v5506
      %6374 = vmatpush2.bf16.msra.mxu0 %v5505
      %6375 = vmatprep.subr.bf16.mxu0 %v5498
      %6376 = vmatpush2.bf16.msra.mxu0 %v5497
      %6377 = vmatprep.subr.bf16.mxu0 %v5490
      %6378 = vmatpush2.bf16.msra.mxu0 %v5489
      %6379 = vmatprep.subr.bf16.mxu0 %v5482
      %6380 = vmatpush2.bf16.msra.mxu0 %v5481
      %6381 = vmatprep.mubr.bf16.mxu0 %v3986
      %6382 = vmatmul.mubr.bf16.gmra.mxu0 %v3985
      %v6383 = vpop.f32.mrf.mxu0
      %v6384 = vadd.f32 %v6331, %v6383
      %v6385 = vpop.f32.mrf.mxu0
      %v6386 = vadd.f32 %v6333, %v6385
      %v6387 = vpop.f32.mrf.mxu0
      %v6388 = vadd.f32 %v6335, %v6387
      %v6389 = vpop.f32.mrf.mxu0
      %v6390 = vadd.f32 %v6337, %v6389
      %6391 = vmatprep.mubr.bf16.mxu0 %v3992
      %6392 = vmatmul.mubr.bf16.gmra.mxu0 %v3991
      %v6393 = vpop.f32.mrf.mxu0
      %v6394 = vadd.f32 %v6341, %v6393
      %v6395 = vpop.f32.mrf.mxu0
      %v6396 = vadd.f32 %v6343, %v6395
      %v6397 = vpop.f32.mrf.mxu0
      %v6398 = vadd.f32 %v6345, %v6397
      %v6399 = vpop.f32.mrf.mxu0
      %v6400 = vadd.f32 %v6347, %v6399
      %6401 = vdwg.mxu0
      %6402 = vmatprep.subr.bf16.mxu0 %v5220
      %6403 = vmatpush1.bf16.msra.mxu0 %v5219
      %6404 = vmatprep.subr.bf16.mxu0 %v5212
      %6405 = vmatpush1.bf16.msra.mxu0 %v5211
      %6406 = vmatprep.subr.bf16.mxu0 %v5204
      %6407 = vmatpush1.bf16.msra.mxu0 %v5203
      %6408 = vmatprep.subr.bf16.mxu0 %v5196
      %6409 = vmatpush1.bf16.msra.mxu0 %v5195
      %6410 = vmatprep.subr.bf16.mxu0 %v5188
      %6411 = vmatpush1.bf16.msra.mxu0 %v5187
      %6412 = vmatprep.subr.bf16.mxu0 %v5180
      %6413 = vmatpush1.bf16.msra.mxu0 %v5179
      %6414 = vmatprep.subr.bf16.mxu0 %v5172
      %6415 = vmatpush1.bf16.msra.mxu0 %v5171
      %6416 = vmatprep.subr.bf16.mxu0 %v5164
      %6417 = vmatpush1.bf16.msra.mxu0 %v5163
      %6418 = vmatprep.subr.bf16.mxu0 %v5284
      %6419 = vmatpush2.bf16.msra.mxu0 %v5283
      %6420 = vmatprep.subr.bf16.mxu0 %v5276
      %6421 = vmatpush2.bf16.msra.mxu0 %v5275
      %6422 = vmatprep.subr.bf16.mxu0 %v5268
      %6423 = vmatpush2.bf16.msra.mxu0 %v5267
      %6424 = vmatprep.subr.bf16.mxu0 %v5260
      %6425 = vmatpush2.bf16.msra.mxu0 %v5259
      %6426 = vmatprep.subr.bf16.mxu0 %v5252
      %6427 = vmatpush2.bf16.msra.mxu0 %v5251
      %6428 = vmatprep.subr.bf16.mxu0 %v5244
      %6429 = vmatpush2.bf16.msra.mxu0 %v5243
      %6430 = vmatprep.subr.bf16.mxu0 %v5236
      %6431 = vmatpush2.bf16.msra.mxu0 %v5235
      %6432 = vmatprep.subr.bf16.mxu0 %v5228
      %6433 = vmatpush2.bf16.msra.mxu0 %v5227
      %6434 = vmatprep.mubr.bf16.mxu0 %v3982
      %6435 = vmatmul.mubr.bf16.gmra.mxu0 %v3981
      %v6436 = vpop.f32.mrf.mxu0
      %v6437 = vadd.f32 %v3932, %v6436
      %v6438 = vpop.f32.mrf.mxu0
      %v6439 = vadd.f32 %v3936, %v6438
      %v6440 = vpop.f32.mrf.mxu0
      %v6441 = vadd.f32 %v3932, %v6440
      %v6442 = vpop.f32.mrf.mxu0
      %v6443 = vadd.f32 %v3936, %v6442
      %6444 = vmatprep.mubr.bf16.mxu0 %v3988
      %6445 = vmatmul.mubr.bf16.gmra.mxu0 %v3987
      %v6446 = vpop.f32.mrf.mxu0
      %v6447 = vadd.f32 %v3932, %v6446
      %v6448 = vpop.f32.mrf.mxu0
      %v6449 = vadd.f32 %v3936, %v6448
      %v6450 = vpop.f32.mrf.mxu0
      %v6451 = vadd.f32 %v3932, %v6450
      %v6452 = vpop.f32.mrf.mxu0
      %v6453 = vadd.f32 %v3936, %v6452
      %6454 = vdwg.mxu0
      %6455 = vmatprep.subr.bf16.mxu0 %v5348
      %6456 = vmatpush1.bf16.msra.mxu0 %v5347
      %6457 = vmatprep.subr.bf16.mxu0 %v5340
      %6458 = vmatpush1.bf16.msra.mxu0 %v5339
      %6459 = vmatprep.subr.bf16.mxu0 %v5332
      %6460 = vmatpush1.bf16.msra.mxu0 %v5331
      %6461 = vmatprep.subr.bf16.mxu0 %v5324
      %6462 = vmatpush1.bf16.msra.mxu0 %v5323
      %6463 = vmatprep.subr.bf16.mxu0 %v5316
      %6464 = vmatpush1.bf16.msra.mxu0 %v5315
      %6465 = vmatprep.subr.bf16.mxu0 %v5308
      %6466 = vmatpush1.bf16.msra.mxu0 %v5307
      %6467 = vmatprep.subr.bf16.mxu0 %v5300
      %6468 = vmatpush1.bf16.msra.mxu0 %v5299
      %6469 = vmatprep.subr.bf16.mxu0 %v5292
      %6470 = vmatpush1.bf16.msra.mxu0 %v5291
      %6471 = vmatprep.subr.bf16.mxu0 %v5412
      %6472 = vmatpush2.bf16.msra.mxu0 %v5411
      %6473 = vmatprep.subr.bf16.mxu0 %v5404
      %6474 = vmatpush2.bf16.msra.mxu0 %v5403
      %6475 = vmatprep.subr.bf16.mxu0 %v5396
      %6476 = vmatpush2.bf16.msra.mxu0 %v5395
      %6477 = vmatprep.subr.bf16.mxu0 %v5388
      %6478 = vmatpush2.bf16.msra.mxu0 %v5387
      %6479 = vmatprep.subr.bf16.mxu0 %v5380
      %6480 = vmatpush2.bf16.msra.mxu0 %v5379
      %6481 = vmatprep.subr.bf16.mxu0 %v5372
      %6482 = vmatpush2.bf16.msra.mxu0 %v5371
      %6483 = vmatprep.subr.bf16.mxu0 %v5364
      %6484 = vmatpush2.bf16.msra.mxu0 %v5363
      %6485 = vmatprep.subr.bf16.mxu0 %v5356
      %6486 = vmatpush2.bf16.msra.mxu0 %v5355
      %6487 = vmatprep.mubr.bf16.mxu0 %v3984
      %6488 = vmatmul.mubr.bf16.gmra.mxu0 %v3983
      %v6489 = vpop.f32.mrf.mxu0
      %v6490 = vadd.f32 %v6437, %v6489
      %v6491 = vpop.f32.mrf.mxu0
      %v6492 = vadd.f32 %v6439, %v6491
      %v6493 = vpop.f32.mrf.mxu0
      %v6494 = vadd.f32 %v6441, %v6493
      %v6495 = vpop.f32.mrf.mxu0
      %v6496 = vadd.f32 %v6443, %v6495
      %6497 = vmatprep.mubr.bf16.mxu0 %v3990
      %6498 = vmatmul.mubr.bf16.gmra.mxu0 %v3989
      %v6499 = vpop.f32.mrf.mxu0
      %v6500 = vadd.f32 %v6447, %v6499
      %v6501 = vpop.f32.mrf.mxu0
      %v6502 = vadd.f32 %v6449, %v6501
      %v6503 = vpop.f32.mrf.mxu0
      %v6504 = vadd.f32 %v6451, %v6503
      %v6505 = vpop.f32.mrf.mxu0
      %v6506 = vadd.f32 %v6453, %v6505
      %6507 = vdwg.mxu0
      %6508 = vmatprep.subr.bf16.mxu0 %v5476
      %6509 = vmatpush1.bf16.msra.mxu0 %v5475
      %6510 = vmatprep.subr.bf16.mxu0 %v5468
      %6511 = vmatpush1.bf16.msra.mxu0 %v5467
      %6512 = vmatprep.subr.bf16.mxu0 %v5460
      %6513 = vmatpush1.bf16.msra.mxu0 %v5459
      %6514 = vmatprep.subr.bf16.mxu0 %v5452
      %6515 = vmatpush1.bf16.msra.mxu0 %v5451
      %6516 = vmatprep.subr.bf16.mxu0 %v5444
      %6517 = vmatpush1.bf16.msra.mxu0 %v5443
      %6518 = vmatprep.subr.bf16.mxu0 %v5436
      %6519 = vmatpush1.bf16.msra.mxu0 %v5435
      %6520 = vmatprep.subr.bf16.mxu0 %v5428
      %6521 = vmatpush1.bf16.msra.mxu0 %v5427
      %6522 = vmatprep.subr.bf16.mxu0 %v5420
      %6523 = vmatpush1.bf16.msra.mxu0 %v5419
      %6524 = vmatprep.subr.bf16.mxu0 %v5540
      %6525 = vmatpush2.bf16.msra.mxu0 %v5539
      %6526 = vmatprep.subr.bf16.mxu0 %v5532
      %6527 = vmatpush2.bf16.msra.mxu0 %v5531
      %6528 = vmatprep.subr.bf16.mxu0 %v5524
      %6529 = vmatpush2.bf16.msra.mxu0 %v5523
      %6530 = vmatprep.subr.bf16.mxu0 %v5516
      %6531 = vmatpush2.bf16.msra.mxu0 %v5515
      %6532 = vmatprep.subr.bf16.mxu0 %v5508
      %6533 = vmatpush2.bf16.msra.mxu0 %v5507
      %6534 = vmatprep.subr.bf16.mxu0 %v5500
      %6535 = vmatpush2.bf16.msra.mxu0 %v5499
      %6536 = vmatprep.subr.bf16.mxu0 %v5492
      %6537 = vmatpush2.bf16.msra.mxu0 %v5491
      %6538 = vmatprep.subr.bf16.mxu0 %v5484
      %6539 = vmatpush2.bf16.msra.mxu0 %v5483
      %6540 = vmatprep.mubr.bf16.mxu0 %v3986
      %6541 = vmatmul.mubr.bf16.gmra.mxu0 %v3985
      %v6542 = vpop.f32.mrf.mxu0
      %v6543 = vadd.f32 %v6490, %v6542
      %v6544 = vpop.f32.mrf.mxu0
      %v6545 = vadd.f32 %v6492, %v6544
      %v6546 = vpop.f32.mrf.mxu0
      %v6547 = vadd.f32 %v6494, %v6546
      %v6548 = vpop.f32.mrf.mxu0
      %v6549 = vadd.f32 %v6496, %v6548
      %6550 = vmatprep.mubr.bf16.mxu0 %v3992
      %6551 = vmatmul.mubr.bf16.gmra.mxu0 %v3991
      %v6552 = vpop.f32.mrf.mxu0
      %v6553 = vadd.f32 %v6500, %v6552
      %v6554 = vpop.f32.mrf.mxu0
      %v6555 = vadd.f32 %v6502, %v6554
      %v6556 = vpop.f32.mrf.mxu0
      %v6557 = vadd.f32 %v6504, %v6556
      %v6558 = vpop.f32.mrf.mxu0
      %v6559 = vadd.f32 %v6506, %v6558
      %6560 = vdwg.mxu0
      %6561 = vst [vmem:[#allocation3] sm:$0xff] %v6066
      %6562 = vst [vmem:[#allocation3 + $0x8] sm:$0xff] %v6068
      %6563 = vst [vmem:[#allocation3 + $0x10] sm:$0xff] %v6225
      %6564 = vst [vmem:[#allocation3 + $0x18] sm:$0xff] %v6227
      %6565 = vst [vmem:[#allocation3 + $0x20] sm:$0xff] %v6384
      %6566 = vst [vmem:[#allocation3 + $0x28] sm:$0xff] %v6386
      %6567 = vst [vmem:[#allocation3 + $0x30] sm:$0xff] %v6543
      %6568 = vst [vmem:[#allocation3 + $0x38] sm:$0xff] %v6545
      %6569 = vst [vmem:[#allocation3 + $0x40] sm:$0xff] %v6070
      %6570 = vst [vmem:[#allocation3 + $0x48] sm:$0xff] %v6072
      %6571 = vst [vmem:[#allocation3 + $0x50] sm:$0xff] %v6229
      %6572 = vst [vmem:[#allocation3 + $0x58] sm:$0xff] %v6231
      %6573 = vst [vmem:[#allocation3 + $0x60] sm:$0xff] %v6388
      %6574 = vst [vmem:[#allocation3 + $0x68] sm:$0xff] %v6390
      %6575 = vst [vmem:[#allocation3 + $0x70] sm:$0xff] %v6547
      %6576 = vst [vmem:[#allocation3 + $0x78] sm:$0xff] %v6549
      %6577 = vst [vmem:[#allocation3 + $0x80] sm:$0xff] %v6076
      %6578 = vst [vmem:[#allocation3 + $0x88] sm:$0xff] %v6078
      %6579 = vst [vmem:[#allocation3 + $0x90] sm:$0xff] %v6235
      %6580 = vst [vmem:[#allocation3 + $0x98] sm:$0xff] %v6237
      %6581 = vst [vmem:[#allocation3 + $0xa0] sm:$0xff] %v6394
      %6582 = vst [vmem:[#allocation3 + $0xa8] sm:$0xff] %v6396
      %6583 = vst [vmem:[#allocation3 + $0xb0] sm:$0xff] %v6553
      %6584 = vst [vmem:[#allocation3 + $0xb8] sm:$0xff] %v6555
      %6585 = vst [vmem:[#allocation3 + $0xc0] sm:$0xff] %v6080
      %6586 = vst [vmem:[#allocation3 + $0xc8] sm:$0xff] %v6082
      %6587 = vst [vmem:[#allocation3 + $0xd0] sm:$0xff] %v6239
      %6588 = vst [vmem:[#allocation3 + $0xd8] sm:$0xff] %v6241
      %6589 = vst [vmem:[#allocation3 + $0xe0] sm:$0xff] %v6398
      %6590 = vst [vmem:[#allocation3 + $0xe8] sm:$0xff] %v6400
      %6591 = vst [vmem:[#allocation3 + $0xf0] sm:$0xff] %v6557
      %6592 = vst [vmem:[#allocation3 + $0xf8] sm:$0xff] %v6559
      %v6593 = vld [vmem:[%s3] sm:$0xff]
      %v6594 = vld [vmem:[%s3 + $0x8] sm:$0xff]
      %v6595 = vld [vmem:[%s3 + $0x10] sm:$0xff]
      %v6596 = vld [vmem:[%s3 + $0x18] sm:$0xff]
      %v6597 = vld [vmem:[%s3 + $0x20] sm:$0xff]
      %v6598 = vld [vmem:[%s3 + $0x28] sm:$0xff]
      %v6599 = vld [vmem:[%s3 + $0x30] sm:$0xff]
      %v6600 = vld [vmem:[%s3 + $0x38] sm:$0xff]
      %v6601 = vld [vmem:[%s3 + $0x40] sm:$0xff]
      %v6602 = vld [vmem:[%s3 + $0x48] sm:$0xff]
      %v6603 = vld [vmem:[%s3 + $0x50] sm:$0xff]
      %v6604 = vld [vmem:[%s3 + $0x58] sm:$0xff]
      %v6605 = vld [vmem:[%s3 + $0x60] sm:$0xff]
      %v6606 = vld [vmem:[%s3 + $0x68] sm:$0xff]
      %v6607 = vld [vmem:[%s3 + $0x70] sm:$0xff]
      %v6608 = vld [vmem:[%s3 + $0x78] sm:$0xff]
      %v6609 = vld [vmem:[%s3 + $0x80] sm:$0xff]
      %v6610 = vld [vmem:[%s3 + $0x88] sm:$0xff]
      %v6611 = vld [vmem:[%s3 + $0x90] sm:$0xff]
      %v6612 = vld [vmem:[%s3 + $0x98] sm:$0xff]
      %v6613 = vld [vmem:[%s3 + $0xa0] sm:$0xff]
      %v6614 = vld [vmem:[%s3 + $0xa8] sm:$0xff]
      %v6615 = vld [vmem:[%s3 + $0xb0] sm:$0xff]
      %v6616 = vld [vmem:[%s3 + $0xb8] sm:$0xff]
      %v6617 = vld [vmem:[%s3 + $0xc0] sm:$0xff]
      %v6618 = vld [vmem:[%s3 + $0xc8] sm:$0xff]
      %v6619 = vld [vmem:[%s3 + $0xd0] sm:$0xff]
      %v6620 = vld [vmem:[%s3 + $0xd8] sm:$0xff]
      %v6621 = vld [vmem:[%s3 + $0xe0] sm:$0xff]
      %v6622 = vld [vmem:[%s3 + $0xe8] sm:$0xff]
      %v6623 = vld [vmem:[%s3 + $0xf0] sm:$0xff]
      %v6624 = vld [vmem:[%s3 + $0xf8] sm:$0xff]
      %v6625 = vld [vmem:[%s3 + $0x100] sm:$0xff]
      %v6626 = vld [vmem:[%s3 + $0x108] sm:$0xff]
      %v6627 = vld [vmem:[%s3 + $0x110] sm:$0xff]
      %v6628 = vld [vmem:[%s3 + $0x118] sm:$0xff]
      %v6629 = vld [vmem:[%s3 + $0x120] sm:$0xff]
      %v6630 = vld [vmem:[%s3 + $0x128] sm:$0xff]
      %v6631 = vld [vmem:[%s3 + $0x130] sm:$0xff]
      %v6632 = vld [vmem:[%s3 + $0x138] sm:$0xff]
      %v6633 = vld [vmem:[%s3 + $0x140] sm:$0xff]
      %v6634 = vld [vmem:[%s3 + $0x148] sm:$0xff]
      %v6635 = vld [vmem:[%s3 + $0x150] sm:$0xff]
      %v6636 = vld [vmem:[%s3 + $0x158] sm:$0xff]
      %v6637 = vld [vmem:[%s3 + $0x160] sm:$0xff]
      %v6638 = vld [vmem:[%s3 + $0x168] sm:$0xff]
      %v6639 = vld [vmem:[%s3 + $0x170] sm:$0xff]
      %v6640 = vld [vmem:[%s3 + $0x178] sm:$0xff]
      %v6641 = vld [vmem:[%s3 + $0x180] sm:$0xff]
      %v6642 = vld [vmem:[%s3 + $0x188] sm:$0xff]
      %v6643 = vld [vmem:[%s3 + $0x190] sm:$0xff]
      %v6644 = vld [vmem:[%s3 + $0x198] sm:$0xff]
      %v6645 = vld [vmem:[%s3 + $0x1a0] sm:$0xff]
      %v6646 = vld [vmem:[%s3 + $0x1a8] sm:$0xff]
      %v6647 = vld [vmem:[%s3 + $0x1b0] sm:$0xff]
      %v6648 = vld [vmem:[%s3 + $0x1b8] sm:$0xff]
      %v6649 = vld [vmem:[%s3 + $0x1c0] sm:$0xff]
      %v6650 = vld [vmem:[%s3 + $0x1c8] sm:$0xff]
      %v6651 = vld [vmem:[%s3 + $0x1d0] sm:$0xff]
      %v6652 = vld [vmem:[%s3 + $0x1d8] sm:$0xff]
      %v6653 = vld [vmem:[%s3 + $0x1e0] sm:$0xff]
      %v6654 = vld [vmem:[%s3 + $0x1e8] sm:$0xff]
      %v6655 = vld [vmem:[%s3 + $0x1f0] sm:$0xff]
      %v6656 = vld [vmem:[%s3 + $0x1f8] sm:$0xff]
      %v6657 = vld [vmem:[%s3 + $0x200] sm:$0xff]
      %v6658 = vld [vmem:[%s3 + $0x208] sm:$0xff]
      %v6659 = vld [vmem:[%s3 + $0x210] sm:$0xff]
      %v6660 = vld [vmem:[%s3 + $0x218] sm:$0xff]
      %v6661 = vld [vmem:[%s3 + $0x220] sm:$0xff]
      %v6662 = vld [vmem:[%s3 + $0x228] sm:$0xff]
      %v6663 = vld [vmem:[%s3 + $0x230] sm:$0xff]
      %v6664 = vld [vmem:[%s3 + $0x238] sm:$0xff]
      %v6665 = vld [vmem:[%s3 + $0x240] sm:$0xff]
      %v6666 = vld [vmem:[%s3 + $0x248] sm:$0xff]
      %v6667 = vld [vmem:[%s3 + $0x250] sm:$0xff]
      %v6668 = vld [vmem:[%s3 + $0x258] sm:$0xff]
      %v6669 = vld [vmem:[%s3 + $0x260] sm:$0xff]
      %v6670 = vld [vmem:[%s3 + $0x268] sm:$0xff]
      %v6671 = vld [vmem:[%s3 + $0x270] sm:$0xff]
      %v6672 = vld [vmem:[%s3 + $0x278] sm:$0xff]
      %v6673 = vld [vmem:[%s3 + $0x280] sm:$0xff]
      %v6674 = vld [vmem:[%s3 + $0x288] sm:$0xff]
      %v6675 = vld [vmem:[%s3 + $0x290] sm:$0xff]
      %v6676 = vld [vmem:[%s3 + $0x298] sm:$0xff]
      %v6677 = vld [vmem:[%s3 + $0x2a0] sm:$0xff]
      %v6678 = vld [vmem:[%s3 + $0x2a8] sm:$0xff]
      %v6679 = vld [vmem:[%s3 + $0x2b0] sm:$0xff]
      %v6680 = vld [vmem:[%s3 + $0x2b8] sm:$0xff]
      %v6681 = vld [vmem:[%s3 + $0x2c0] sm:$0xff]
      %v6682 = vld [vmem:[%s3 + $0x2c8] sm:$0xff]
      %v6683 = vld [vmem:[%s3 + $0x2d0] sm:$0xff]
      %v6684 = vld [vmem:[%s3 + $0x2d8] sm:$0xff]
      %v6685 = vld [vmem:[%s3 + $0x2e0] sm:$0xff]
      %v6686 = vld [vmem:[%s3 + $0x2e8] sm:$0xff]
      %v6687 = vld [vmem:[%s3 + $0x2f0] sm:$0xff]
      %v6688 = vld [vmem:[%s3 + $0x2f8] sm:$0xff]
      %v6689 = vld [vmem:[%s3 + $0x300] sm:$0xff]
      %v6690 = vld [vmem:[%s3 + $0x308] sm:$0xff]
      %v6691 = vld [vmem:[%s3 + $0x310] sm:$0xff]
      %v6692 = vld [vmem:[%s3 + $0x318] sm:$0xff]
      %v6693 = vld [vmem:[%s3 + $0x320] sm:$0xff]
      %v6694 = vld [vmem:[%s3 + $0x328] sm:$0xff]
      %v6695 = vld [vmem:[%s3 + $0x330] sm:$0xff]
      %v6696 = vld [vmem:[%s3 + $0x338] sm:$0xff]
      %v6697 = vld [vmem:[%s3 + $0x340] sm:$0xff]
      %v6698 = vld [vmem:[%s3 + $0x348] sm:$0xff]
      %v6699 = vld [vmem:[%s3 + $0x350] sm:$0xff]
      %v6700 = vld [vmem:[%s3 + $0x358] sm:$0xff]
      %v6701 = vld [vmem:[%s3 + $0x360] sm:$0xff]
      %v6702 = vld [vmem:[%s3 + $0x368] sm:$0xff]
      %v6703 = vld [vmem:[%s3 + $0x370] sm:$0xff]
      %v6704 = vld [vmem:[%s3 + $0x378] sm:$0xff]
      %v6705 = vld [vmem:[%s3 + $0x380] sm:$0xff]
      %v6706 = vld [vmem:[%s3 + $0x388] sm:$0xff]
      %v6707 = vld [vmem:[%s3 + $0x390] sm:$0xff]
      %v6708 = vld [vmem:[%s3 + $0x398] sm:$0xff]
      %v6709 = vld [vmem:[%s3 + $0x3a0] sm:$0xff]
      %v6710 = vld [vmem:[%s3 + $0x3a8] sm:$0xff]
      %v6711 = vld [vmem:[%s3 + $0x3b0] sm:$0xff]
      %v6712 = vld [vmem:[%s3 + $0x3b8] sm:$0xff]
      %v6713 = vld [vmem:[%s3 + $0x3c0] sm:$0xff]
      %v6714 = vld [vmem:[%s3 + $0x3c8] sm:$0xff]
      %v6715 = vld [vmem:[%s3 + $0x3d0] sm:$0xff]
      %v6716 = vld [vmem:[%s3 + $0x3d8] sm:$0xff]
      %v6717 = vld [vmem:[%s3 + $0x3e0] sm:$0xff]
      %v6718 = vld [vmem:[%s3 + $0x3e8] sm:$0xff]
      %v6719 = vld [vmem:[%s3 + $0x3f0] sm:$0xff]
      %v6720 = vld [vmem:[%s3 + $0x3f8] sm:$0xff]
      %v6721 = vld [vmem:[%s6] sm:$0xff]
      %v6722 = vld [vmem:[%s6 + $0x8] sm:$0xff]
      %v6723 = vld [vmem:[%s6 + $0x10] sm:$0xff]
      %v6724 = vld [vmem:[%s6 + $0x18] sm:$0xff]
      %v6725 = vld [vmem:[%s6 + $0x20] sm:$0xff]
      %v6726 = vld [vmem:[%s6 + $0x28] sm:$0xff]
      %v6727 = vld [vmem:[%s6 + $0x30] sm:$0xff]
      %v6728 = vld [vmem:[%s6 + $0x38] sm:$0xff]
      %v6729 = vld [vmem:[%s6 + $0x40] sm:$0xff]
      %v6730 = vld [vmem:[%s6 + $0x48] sm:$0xff]
      %v6731 = vld [vmem:[%s6 + $0x50] sm:$0xff]
      %v6732 = vld [vmem:[%s6 + $0x58] sm:$0xff]
      %v6733 = vld [vmem:[%s6 + $0x60] sm:$0xff]
      %v6734 = vld [vmem:[%s6 + $0x68] sm:$0xff]
      %v6735 = vld [vmem:[%s6 + $0x70] sm:$0xff]
      %v6736 = vld [vmem:[%s6 + $0x78] sm:$0xff]
      %v6737 = vld [vmem:[%s6 + $0x80] sm:$0xff]
      %v6738 = vld [vmem:[%s6 + $0x88] sm:$0xff]
      %v6739 = vld [vmem:[%s6 + $0x90] sm:$0xff]
      %v6740 = vld [vmem:[%s6 + $0x98] sm:$0xff]
      %v6741 = vld [vmem:[%s6 + $0xa0] sm:$0xff]
      %v6742 = vld [vmem:[%s6 + $0xa8] sm:$0xff]
      %v6743 = vld [vmem:[%s6 + $0xb0] sm:$0xff]
      %v6744 = vld [vmem:[%s6 + $0xb8] sm:$0xff]
      %v6745 = vld [vmem:[%s6 + $0xc0] sm:$0xff]
      %v6746 = vld [vmem:[%s6 + $0xc8] sm:$0xff]
      %v6747 = vld [vmem:[%s6 + $0xd0] sm:$0xff]
      %v6748 = vld [vmem:[%s6 + $0xd8] sm:$0xff]
      %v6749 = vld [vmem:[%s6 + $0xe0] sm:$0xff]
      %v6750 = vld [vmem:[%s6 + $0xe8] sm:$0xff]
      %v6751 = vld [vmem:[%s6 + $0xf0] sm:$0xff]
      %v6752 = vld [vmem:[%s6 + $0xf8] sm:$0xff]
      %v6753 = vld [vmem:[%s6 + $0x100] sm:$0xff]
      %v6754 = vld [vmem:[%s6 + $0x108] sm:$0xff]
      %v6755 = vld [vmem:[%s6 + $0x110] sm:$0xff]
      %v6756 = vld [vmem:[%s6 + $0x118] sm:$0xff]
      %v6757 = vld [vmem:[%s6 + $0x120] sm:$0xff]
      %v6758 = vld [vmem:[%s6 + $0x128] sm:$0xff]
      %v6759 = vld [vmem:[%s6 + $0x130] sm:$0xff]
      %v6760 = vld [vmem:[%s6 + $0x138] sm:$0xff]
      %v6761 = vld [vmem:[%s6 + $0x140] sm:$0xff]
      %v6762 = vld [vmem:[%s6 + $0x148] sm:$0xff]
      %v6763 = vld [vmem:[%s6 + $0x150] sm:$0xff]
      %v6764 = vld [vmem:[%s6 + $0x158] sm:$0xff]
      %v6765 = vld [vmem:[%s6 + $0x160] sm:$0xff]
      %v6766 = vld [vmem:[%s6 + $0x168] sm:$0xff]
      %v6767 = vld [vmem:[%s6 + $0x170] sm:$0xff]
      %v6768 = vld [vmem:[%s6 + $0x178] sm:$0xff]
      %v6769 = vld [vmem:[%s6 + $0x180] sm:$0xff]
      %v6770 = vld [vmem:[%s6 + $0x188] sm:$0xff]
      %v6771 = vld [vmem:[%s6 + $0x190] sm:$0xff]
      %v6772 = vld [vmem:[%s6 + $0x198] sm:$0xff]
      %v6773 = vld [vmem:[%s6 + $0x1a0] sm:$0xff]
      %v6774 = vld [vmem:[%s6 + $0x1a8] sm:$0xff]
      %v6775 = vld [vmem:[%s6 + $0x1b0] sm:$0xff]
      %v6776 = vld [vmem:[%s6 + $0x1b8] sm:$0xff]
      %v6777 = vld [vmem:[%s6 + $0x1c0] sm:$0xff]
      %v6778 = vld [vmem:[%s6 + $0x1c8] sm:$0xff]
      %v6779 = vld [vmem:[%s6 + $0x1d0] sm:$0xff]
      %v6780 = vld [vmem:[%s6 + $0x1d8] sm:$0xff]
      %v6781 = vld [vmem:[%s6 + $0x1e0] sm:$0xff]
      %v6782 = vld [vmem:[%s6 + $0x1e8] sm:$0xff]
      %v6783 = vld [vmem:[%s6 + $0x1f0] sm:$0xff]
      %v6784 = vld [vmem:[%s6 + $0x1f8] sm:$0xff]
      %v6785 = vld [vmem:[%s6 + $0x200] sm:$0xff]
      %v6786 = vld [vmem:[%s6 + $0x208] sm:$0xff]
      %v6787 = vld [vmem:[%s6 + $0x210] sm:$0xff]
      %v6788 = vld [vmem:[%s6 + $0x218] sm:$0xff]
      %v6789 = vld [vmem:[%s6 + $0x220] sm:$0xff]
      %v6790 = vld [vmem:[%s6 + $0x228] sm:$0xff]
      %v6791 = vld [vmem:[%s6 + $0x230] sm:$0xff]
      %v6792 = vld [vmem:[%s6 + $0x238] sm:$0xff]
      %v6793 = vld [vmem:[%s6 + $0x240] sm:$0xff]
      %v6794 = vld [vmem:[%s6 + $0x248] sm:$0xff]
      %v6795 = vld [vmem:[%s6 + $0x250] sm:$0xff]
      %v6796 = vld [vmem:[%s6 + $0x258] sm:$0xff]
      %v6797 = vld [vmem:[%s6 + $0x260] sm:$0xff]
      %v6798 = vld [vmem:[%s6 + $0x268] sm:$0xff]
      %v6799 = vld [vmem:[%s6 + $0x270] sm:$0xff]
      %v6800 = vld [vmem:[%s6 + $0x278] sm:$0xff]
      %v6801 = vld [vmem:[%s6 + $0x280] sm:$0xff]
      %v6802 = vld [vmem:[%s6 + $0x288] sm:$0xff]
      %v6803 = vld [vmem:[%s6 + $0x290] sm:$0xff]
      %v6804 = vld [vmem:[%s6 + $0x298] sm:$0xff]
      %v6805 = vld [vmem:[%s6 + $0x2a0] sm:$0xff]
      %v6806 = vld [vmem:[%s6 + $0x2a8] sm:$0xff]
      %v6807 = vld [vmem:[%s6 + $0x2b0] sm:$0xff]
      %v6808 = vld [vmem:[%s6 + $0x2b8] sm:$0xff]
      %v6809 = vld [vmem:[%s6 + $0x2c0] sm:$0xff]
      %v6810 = vld [vmem:[%s6 + $0x2c8] sm:$0xff]
      %v6811 = vld [vmem:[%s6 + $0x2d0] sm:$0xff]
      %v6812 = vld [vmem:[%s6 + $0x2d8] sm:$0xff]
      %v6813 = vld [vmem:[%s6 + $0x2e0] sm:$0xff]
      %v6814 = vld [vmem:[%s6 + $0x2e8] sm:$0xff]
      %v6815 = vld [vmem:[%s6 + $0x2f0] sm:$0xff]
      %v6816 = vld [vmem:[%s6 + $0x2f8] sm:$0xff]
      %v6817 = vld [vmem:[%s6 + $0x300] sm:$0xff]
      %v6818 = vld [vmem:[%s6 + $0x308] sm:$0xff]
      %v6819 = vld [vmem:[%s6 + $0x310] sm:$0xff]
      %v6820 = vld [vmem:[%s6 + $0x318] sm:$0xff]
      %v6821 = vld [vmem:[%s6 + $0x320] sm:$0xff]
      %v6822 = vld [vmem:[%s6 + $0x328] sm:$0xff]
      %v6823 = vld [vmem:[%s6 + $0x330] sm:$0xff]
      %v6824 = vld [vmem:[%s6 + $0x338] sm:$0xff]
      %v6825 = vld [vmem:[%s6 + $0x340] sm:$0xff]
      %v6826 = vld [vmem:[%s6 + $0x348] sm:$0xff]
      %v6827 = vld [vmem:[%s6 + $0x350] sm:$0xff]
      %v6828 = vld [vmem:[%s6 + $0x358] sm:$0xff]
      %v6829 = vld [vmem:[%s6 + $0x360] sm:$0xff]
      %v6830 = vld [vmem:[%s6 + $0x368] sm:$0xff]
      %v6831 = vld [vmem:[%s6 + $0x370] sm:$0xff]
      %v6832 = vld [vmem:[%s6 + $0x378] sm:$0xff]
      %v6833 = vld [vmem:[%s6 + $0x380] sm:$0xff]
      %v6834 = vld [vmem:[%s6 + $0x388] sm:$0xff]
      %v6835 = vld [vmem:[%s6 + $0x390] sm:$0xff]
      %v6836 = vld [vmem:[%s6 + $0x398] sm:$0xff]
      %v6837 = vld [vmem:[%s6 + $0x3a0] sm:$0xff]
      %v6838 = vld [vmem:[%s6 + $0x3a8] sm:$0xff]
      %v6839 = vld [vmem:[%s6 + $0x3b0] sm:$0xff]
      %v6840 = vld [vmem:[%s6 + $0x3b8] sm:$0xff]
      %v6841 = vld [vmem:[%s6 + $0x3c0] sm:$0xff]
      %v6842 = vld [vmem:[%s6 + $0x3c8] sm:$0xff]
      %v6843 = vld [vmem:[%s6 + $0x3d0] sm:$0xff]
      %v6844 = vld [vmem:[%s6 + $0x3d8] sm:$0xff]
      %v6845 = vld [vmem:[%s6 + $0x3e0] sm:$0xff]
      %v6846 = vld [vmem:[%s6 + $0x3e8] sm:$0xff]
      %v6847 = vld [vmem:[%s6 + $0x3f0] sm:$0xff]
      %v6848 = vld [vmem:[%s6 + $0x3f8] sm:$0xff]
      %v6849 = vld [vmem:[#allocation4] sm:$0xff]
      %v6850 = vld [vmem:[#allocation4 + $0x8] sm:$0xff]
      %v6851 = vld [vmem:[#allocation5] sm:$0xff]
      %v6852 = vld [vmem:[#allocation5 + $0x8] sm:$0xff]
      %v6853 = vld [vmem:[#allocation6] sm:$0xff]
      %v6854 = vld [vmem:[#allocation6 + $0x8] sm:$0xff]
      %v6855 = vld [vmem:[#allocation7] sm:$0xff]
      %v6856 = vld [vmem:[#allocation7 + $0x8] sm:$0xff]
      %s6857 = smul.u32 0, 8
      %s6858 = smul.addr %s6857, 8
      %s6859 = scalar_lea.vmem [#allocation2], %s6858
      %v6860 = vld [vmem:[%s6859] sm:$0xff]
      %v6861 = vld [vmem:[%s6859 + $0x8] sm:$0xff]
      %v6862 = vld [vmem:[%s6859 + $0x10] sm:$0xff]
      %v6863 = vld [vmem:[%s6859 + $0x18] sm:$0xff]
      %v6864 = vld [vmem:[%s6859 + $0x20] sm:$0xff]
      %v6865 = vld [vmem:[%s6859 + $0x28] sm:$0xff]
      %v6866 = vld [vmem:[%s6859 + $0x30] sm:$0xff]
      %v6867 = vld [vmem:[%s6859 + $0x38] sm:$0xff]
      %s6868 = smul.u32 3, 8
      %s6869 = smul.addr %s6868, 8
      %s6870 = scalar_lea.vmem [#allocation3], %s6869
      %v6871 = vld [vmem:[%s6870] sm:$0xff]
      %v6872 = vld [vmem:[%s6870 + $0x8] sm:$0xff]
      %v6873 = vld [vmem:[%s6870 + $0x10] sm:$0xff]
      %v6874 = vld [vmem:[%s6870 + $0x18] sm:$0xff]
      %v6875 = vld [vmem:[%s6870 + $0x20] sm:$0xff]
      %v6876 = vld [vmem:[%s6870 + $0x28] sm:$0xff]
      %v6877 = vld [vmem:[%s6870 + $0x30] sm:$0xff]
      %v6878 = vld [vmem:[%s6870 + $0x38] sm:$0xff]
      %v6879 = vpack.c.bf16 %v6849, %v6849
      %v6880 = vpack.c.bf16 %v6850, %v6850
      %v7009 = vunpack.c.l.b16 %v6593
      %v7010 = vunpack.c.h.b16 %v6593
      %v7011 = vunpack.c.l.b16 %v6594
      %v7012 = vunpack.c.h.b16 %v6594
      %v7013 = vunpack.c.l.b16 %v6595
      %v7014 = vunpack.c.h.b16 %v6595
      %v7015 = vunpack.c.l.b16 %v6596
      %v7016 = vunpack.c.h.b16 %v6596
      %v7017 = vunpack.c.l.b16 %v6597
      %v7018 = vunpack.c.h.b16 %v6597
      %v7019 = vunpack.c.l.b16 %v6598
      %v7020 = vunpack.c.h.b16 %v6598
      %v7021 = vunpack.c.l.b16 %v6599
      %v7022 = vunpack.c.h.b16 %v6599
      %v7023 = vunpack.c.l.b16 %v6600
      %v7024 = vunpack.c.h.b16 %v6600
      %v7025 = vunpack.c.l.b16 %v6601
      %v7026 = vunpack.c.h.b16 %v6601
      %v7027 = vunpack.c.l.b16 %v6602
      %v7028 = vunpack.c.h.b16 %v6602
      %v7029 = vunpack.c.l.b16 %v6603
      %v7030 = vunpack.c.h.b16 %v6603
      %v7031 = vunpack.c.l.b16 %v6604
      %v7032 = vunpack.c.h.b16 %v6604
      %v7033 = vunpack.c.l.b16 %v6605
      %v7034 = vunpack.c.h.b16 %v6605
      %v7035 = vunpack.c.l.b16 %v6606
      %v7036 = vunpack.c.h.b16 %v6606
      %v7037 = vunpack.c.l.b16 %v6607
      %v7038 = vunpack.c.h.b16 %v6607
      %v7039 = vunpack.c.l.b16 %v6608
      %v7040 = vunpack.c.h.b16 %v6608
      %v7041 = vunpack.c.l.b16 %v6609
      %v7042 = vunpack.c.h.b16 %v6609
      %v7043 = vunpack.c.l.b16 %v6610
      %v7044 = vunpack.c.h.b16 %v6610
      %v7045 = vunpack.c.l.b16 %v6611
      %v7046 = vunpack.c.h.b16 %v6611
      %v7047 = vunpack.c.l.b16 %v6612
      %v7048 = vunpack.c.h.b16 %v6612
      %v7049 = vunpack.c.l.b16 %v6613
      %v7050 = vunpack.c.h.b16 %v6613
      %v7051 = vunpack.c.l.b16 %v6614
      %v7052 = vunpack.c.h.b16 %v6614
      %v7053 = vunpack.c.l.b16 %v6615
      %v7054 = vunpack.c.h.b16 %v6615
      %v7055 = vunpack.c.l.b16 %v6616
      %v7056 = vunpack.c.h.b16 %v6616
      %v7057 = vunpack.c.l.b16 %v6617
      %v7058 = vunpack.c.h.b16 %v6617
      %v7059 = vunpack.c.l.b16 %v6618
      %v7060 = vunpack.c.h.b16 %v6618
      %v7061 = vunpack.c.l.b16 %v6619
      %v7062 = vunpack.c.h.b16 %v6619
      %v7063 = vunpack.c.l.b16 %v6620
      %v7064 = vunpack.c.h.b16 %v6620
      %v7065 = vunpack.c.l.b16 %v6621
      %v7066 = vunpack.c.h.b16 %v6621
      %v7067 = vunpack.c.l.b16 %v6622
      %v7068 = vunpack.c.h.b16 %v6622
      %v7069 = vunpack.c.l.b16 %v6623
      %v7070 = vunpack.c.h.b16 %v6623
      %v7071 = vunpack.c.l.b16 %v6624
      %v7072 = vunpack.c.h.b16 %v6624
      %v7073 = vunpack.c.l.b16 %v6625
      %v7074 = vunpack.c.h.b16 %v6625
      %v7075 = vunpack.c.l.b16 %v6626
      %v7076 = vunpack.c.h.b16 %v6626
      %v7077 = vunpack.c.l.b16 %v6627
      %v7078 = vunpack.c.h.b16 %v6627
      %v7079 = vunpack.c.l.b16 %v6628
      %v7080 = vunpack.c.h.b16 %v6628
      %v7081 = vunpack.c.l.b16 %v6629
      %v7082 = vunpack.c.h.b16 %v6629
      %v7083 = vunpack.c.l.b16 %v6630
      %v7084 = vunpack.c.h.b16 %v6630
      %v7085 = vunpack.c.l.b16 %v6631
      %v7086 = vunpack.c.h.b16 %v6631
      %v7087 = vunpack.c.l.b16 %v6632
      %v7088 = vunpack.c.h.b16 %v6632
      %v7089 = vunpack.c.l.b16 %v6633
      %v7090 = vunpack.c.h.b16 %v6633
      %v7091 = vunpack.c.l.b16 %v6634
      %v7092 = vunpack.c.h.b16 %v6634
      %v7093 = vunpack.c.l.b16 %v6635
      %v7094 = vunpack.c.h.b16 %v6635
      %v7095 = vunpack.c.l.b16 %v6636
      %v7096 = vunpack.c.h.b16 %v6636
      %v7097 = vunpack.c.l.b16 %v6637
      %v7098 = vunpack.c.h.b16 %v6637
      %v7099 = vunpack.c.l.b16 %v6638
      %v7100 = vunpack.c.h.b16 %v6638
      %v7101 = vunpack.c.l.b16 %v6639
      %v7102 = vunpack.c.h.b16 %v6639
      %v7103 = vunpack.c.l.b16 %v6640
      %v7104 = vunpack.c.h.b16 %v6640
      %v7105 = vunpack.c.l.b16 %v6641
      %v7106 = vunpack.c.h.b16 %v6641
      %v7107 = vunpack.c.l.b16 %v6642
      %v7108 = vunpack.c.h.b16 %v6642
      %v7109 = vunpack.c.l.b16 %v6643
      %v7110 = vunpack.c.h.b16 %v6643
      %v7111 = vunpack.c.l.b16 %v6644
      %v7112 = vunpack.c.h.b16 %v6644
      %v7113 = vunpack.c.l.b16 %v6645
      %v7114 = vunpack.c.h.b16 %v6645
      %v7115 = vunpack.c.l.b16 %v6646
      %v7116 = vunpack.c.h.b16 %v6646
      %v7117 = vunpack.c.l.b16 %v6647
      %v7118 = vunpack.c.h.b16 %v6647
      %v7119 = vunpack.c.l.b16 %v6648
      %v7120 = vunpack.c.h.b16 %v6648
      %v7121 = vunpack.c.l.b16 %v6649
      %v7122 = vunpack.c.h.b16 %v6649
      %v7123 = vunpack.c.l.b16 %v6650
      %v7124 = vunpack.c.h.b16 %v6650
      %v7125 = vunpack.c.l.b16 %v6651
      %v7126 = vunpack.c.h.b16 %v6651
      %v7127 = vunpack.c.l.b16 %v6652
      %v7128 = vunpack.c.h.b16 %v6652
      %v7129 = vunpack.c.l.b16 %v6653
      %v7130 = vunpack.c.h.b16 %v6653
      %v7131 = vunpack.c.l.b16 %v6654
      %v7132 = vunpack.c.h.b16 %v6654
      %v7133 = vunpack.c.l.b16 %v6655
      %v7134 = vunpack.c.h.b16 %v6655
      %v7135 = vunpack.c.l.b16 %v6656
      %v7136 = vunpack.c.h.b16 %v6656
      %v7137 = vunpack.c.l.b16 %v6657
      %v7138 = vunpack.c.h.b16 %v6657
      %v7139 = vunpack.c.l.b16 %v6658
      %v7140 = vunpack.c.h.b16 %v6658
      %v7141 = vunpack.c.l.b16 %v6659
      %v7142 = vunpack.c.h.b16 %v6659
      %v7143 = vunpack.c.l.b16 %v6660
      %v7144 = vunpack.c.h.b16 %v6660
      %v7145 = vunpack.c.l.b16 %v6661
      %v7146 = vunpack.c.h.b16 %v6661
      %v7147 = vunpack.c.l.b16 %v6662
      %v7148 = vunpack.c.h.b16 %v6662
      %v7149 = vunpack.c.l.b16 %v6663
      %v7150 = vunpack.c.h.b16 %v6663
      %v7151 = vunpack.c.l.b16 %v6664
      %v7152 = vunpack.c.h.b16 %v6664
      %v7153 = vunpack.c.l.b16 %v6665
      %v7154 = vunpack.c.h.b16 %v6665
      %v7155 = vunpack.c.l.b16 %v6666
      %v7156 = vunpack.c.h.b16 %v6666
      %v7157 = vunpack.c.l.b16 %v6667
      %v7158 = vunpack.c.h.b16 %v6667
      %v7159 = vunpack.c.l.b16 %v6668
      %v7160 = vunpack.c.h.b16 %v6668
      %v7161 = vunpack.c.l.b16 %v6669
      %v7162 = vunpack.c.h.b16 %v6669
      %v7163 = vunpack.c.l.b16 %v6670
      %v7164 = vunpack.c.h.b16 %v6670
      %v7165 = vunpack.c.l.b16 %v6671
      %v7166 = vunpack.c.h.b16 %v6671
      %v7167 = vunpack.c.l.b16 %v6672
      %v7168 = vunpack.c.h.b16 %v6672
      %v7169 = vunpack.c.l.b16 %v6673
      %v7170 = vunpack.c.h.b16 %v6673
      %v7171 = vunpack.c.l.b16 %v6674
      %v7172 = vunpack.c.h.b16 %v6674
      %v7173 = vunpack.c.l.b16 %v6675
      %v7174 = vunpack.c.h.b16 %v6675
      %v7175 = vunpack.c.l.b16 %v6676
      %v7176 = vunpack.c.h.b16 %v6676
      %v7177 = vunpack.c.l.b16 %v6677
      %v7178 = vunpack.c.h.b16 %v6677
      %v7179 = vunpack.c.l.b16 %v6678
      %v7180 = vunpack.c.h.b16 %v6678
      %v7181 = vunpack.c.l.b16 %v6679
      %v7182 = vunpack.c.h.b16 %v6679
      %v7183 = vunpack.c.l.b16 %v6680
      %v7184 = vunpack.c.h.b16 %v6680
      %v7185 = vunpack.c.l.b16 %v6681
      %v7186 = vunpack.c.h.b16 %v6681
      %v7187 = vunpack.c.l.b16 %v6682
      %v7188 = vunpack.c.h.b16 %v6682
      %v7189 = vunpack.c.l.b16 %v6683
      %v7190 = vunpack.c.h.b16 %v6683
      %v7191 = vunpack.c.l.b16 %v6684
      %v7192 = vunpack.c.h.b16 %v6684
      %v7193 = vunpack.c.l.b16 %v6685
      %v7194 = vunpack.c.h.b16 %v6685
      %v7195 = vunpack.c.l.b16 %v6686
      %v7196 = vunpack.c.h.b16 %v6686
      %v7197 = vunpack.c.l.b16 %v6687
      %v7198 = vunpack.c.h.b16 %v6687
      %v7199 = vunpack.c.l.b16 %v6688
      %v7200 = vunpack.c.h.b16 %v6688
      %v7201 = vunpack.c.l.b16 %v6689
      %v7202 = vunpack.c.h.b16 %v6689
      %v7203 = vunpack.c.l.b16 %v6690
      %v7204 = vunpack.c.h.b16 %v6690
      %v7205 = vunpack.c.l.b16 %v6691
      %v7206 = vunpack.c.h.b16 %v6691
      %v7207 = vunpack.c.l.b16 %v6692
      %v7208 = vunpack.c.h.b16 %v6692
      %v7209 = vunpack.c.l.b16 %v6693
      %v7210 = vunpack.c.h.b16 %v6693
      %v7211 = vunpack.c.l.b16 %v6694
      %v7212 = vunpack.c.h.b16 %v6694
      %v7213 = vunpack.c.l.b16 %v6695
      %v7214 = vunpack.c.h.b16 %v6695
      %v7215 = vunpack.c.l.b16 %v6696
      %v7216 = vunpack.c.h.b16 %v6696
      %v7217 = vunpack.c.l.b16 %v6697
      %v7218 = vunpack.c.h.b16 %v6697
      %v7219 = vunpack.c.l.b16 %v6698
      %v7220 = vunpack.c.h.b16 %v6698
      %v7221 = vunpack.c.l.b16 %v6699
      %v7222 = vunpack.c.h.b16 %v6699
      %v7223 = vunpack.c.l.b16 %v6700
      %v7224 = vunpack.c.h.b16 %v6700
      %v7225 = vunpack.c.l.b16 %v6701
      %v7226 = vunpack.c.h.b16 %v6701
      %v7227 = vunpack.c.l.b16 %v6702
      %v7228 = vunpack.c.h.b16 %v6702
      %v7229 = vunpack.c.l.b16 %v6703
      %v7230 = vunpack.c.h.b16 %v6703
      %v7231 = vunpack.c.l.b16 %v6704
      %v7232 = vunpack.c.h.b16 %v6704
      %v7233 = vunpack.c.l.b16 %v6705
      %v7234 = vunpack.c.h.b16 %v6705
      %v7235 = vunpack.c.l.b16 %v6706
      %v7236 = vunpack.c.h.b16 %v6706
      %v7237 = vunpack.c.l.b16 %v6707
      %v7238 = vunpack.c.h.b16 %v6707
      %v7239 = vunpack.c.l.b16 %v6708
      %v7240 = vunpack.c.h.b16 %v6708
      %v7241 = vunpack.c.l.b16 %v6709
      %v7242 = vunpack.c.h.b16 %v6709
      %v7243 = vunpack.c.l.b16 %v6710
      %v7244 = vunpack.c.h.b16 %v6710
      %v7245 = vunpack.c.l.b16 %v6711
      %v7246 = vunpack.c.h.b16 %v6711
      %v7247 = vunpack.c.l.b16 %v6712
      %v7248 = vunpack.c.h.b16 %v6712
      %v7249 = vunpack.c.l.b16 %v6713
      %v7250 = vunpack.c.h.b16 %v6713
      %v7251 = vunpack.c.l.b16 %v6714
      %v7252 = vunpack.c.h.b16 %v6714
      %v7253 = vunpack.c.l.b16 %v6715
      %v7254 = vunpack.c.h.b16 %v6715
      %v7255 = vunpack.c.l.b16 %v6716
      %v7256 = vunpack.c.h.b16 %v6716
      %v7257 = vunpack.c.l.b16 %v6717
      %v7258 = vunpack.c.h.b16 %v6717
      %v7259 = vunpack.c.l.b16 %v6718
      %v7260 = vunpack.c.h.b16 %v6718
      %v7261 = vunpack.c.l.b16 %v6719
      %v7262 = vunpack.c.h.b16 %v6719
      %v7263 = vunpack.c.l.b16 %v6720
      %v7264 = vunpack.c.h.b16 %v6720
      %v7265 = vpack.c.b16 %v7017, %v7009
      %v7266 = vpack.c.b16 %v7018, %v7010
      %v7267 = vpack.c.b16 %v7019, %v7011
      %v7268 = vpack.c.b16 %v7020, %v7012
      %v7269 = vpack.c.b16 %v7021, %v7013
      %v7270 = vpack.c.b16 %v7022, %v7014
      %v7271 = vpack.c.b16 %v7023, %v7015
      %v7272 = vpack.c.b16 %v7024, %v7016
      %v7273 = vpack.c.b16 %v7033, %v7025
      %v7274 = vpack.c.b16 %v7034, %v7026
      %v7275 = vpack.c.b16 %v7035, %v7027
      %v7276 = vpack.c.b16 %v7036, %v7028
      %v7277 = vpack.c.b16 %v7037, %v7029
      %v7278 = vpack.c.b16 %v7038, %v7030
      %v7279 = vpack.c.b16 %v7039, %v7031
      %v7280 = vpack.c.b16 %v7040, %v7032
      %v7281 = vpack.c.b16 %v7049, %v7041
      %v7282 = vpack.c.b16 %v7050, %v7042
      %v7283 = vpack.c.b16 %v7051, %v7043
      %v7284 = vpack.c.b16 %v7052, %v7044
      %v7285 = vpack.c.b16 %v7053, %v7045
      %v7286 = vpack.c.b16 %v7054, %v7046
      %v7287 = vpack.c.b16 %v7055, %v7047
      %v7288 = vpack.c.b16 %v7056, %v7048
      %v7289 = vpack.c.b16 %v7065, %v7057
      %v7290 = vpack.c.b16 %v7066, %v7058
      %v7291 = vpack.c.b16 %v7067, %v7059
      %v7292 = vpack.c.b16 %v7068, %v7060
      %v7293 = vpack.c.b16 %v7069, %v7061
      %v7294 = vpack.c.b16 %v7070, %v7062
      %v7295 = vpack.c.b16 %v7071, %v7063
      %v7296 = vpack.c.b16 %v7072, %v7064
      %v7297 = vpack.c.b16 %v7081, %v7073
      %v7298 = vpack.c.b16 %v7082, %v7074
      %v7299 = vpack.c.b16 %v7083, %v7075
      %v7300 = vpack.c.b16 %v7084, %v7076
      %v7301 = vpack.c.b16 %v7085, %v7077
      %v7302 = vpack.c.b16 %v7086, %v7078
      %v7303 = vpack.c.b16 %v7087, %v7079
      %v7304 = vpack.c.b16 %v7088, %v7080
      %v7305 = vpack.c.b16 %v7097, %v7089
      %v7306 = vpack.c.b16 %v7098, %v7090
      %v7307 = vpack.c.b16 %v7099, %v7091
      %v7308 = vpack.c.b16 %v7100, %v7092
      %v7309 = vpack.c.b16 %v7101, %v7093
      %v7310 = vpack.c.b16 %v7102, %v7094
      %v7311 = vpack.c.b16 %v7103, %v7095
      %v7312 = vpack.c.b16 %v7104, %v7096
      %v7313 = vpack.c.b16 %v7113, %v7105
      %v7314 = vpack.c.b16 %v7114, %v7106
      %v7315 = vpack.c.b16 %v7115, %v7107
      %v7316 = vpack.c.b16 %v7116, %v7108
      %v7317 = vpack.c.b16 %v7117, %v7109
      %v7318 = vpack.c.b16 %v7118, %v7110
      %v7319 = vpack.c.b16 %v7119, %v7111
      %v7320 = vpack.c.b16 %v7120, %v7112
      %v7321 = vpack.c.b16 %v7129, %v7121
      %v7322 = vpack.c.b16 %v7130, %v7122
      %v7323 = vpack.c.b16 %v7131, %v7123
      %v7324 = vpack.c.b16 %v7132, %v7124
      %v7325 = vpack.c.b16 %v7133, %v7125
      %v7326 = vpack.c.b16 %v7134, %v7126
      %v7327 = vpack.c.b16 %v7135, %v7127
      %v7328 = vpack.c.b16 %v7136, %v7128
      %v7329 = vpack.c.b16 %v7145, %v7137
      %v7330 = vpack.c.b16 %v7146, %v7138
      %v7331 = vpack.c.b16 %v7147, %v7139
      %v7332 = vpack.c.b16 %v7148, %v7140
      %v7333 = vpack.c.b16 %v7149, %v7141
      %v7334 = vpack.c.b16 %v7150, %v7142
      %v7335 = vpack.c.b16 %v7151, %v7143
      %v7336 = vpack.c.b16 %v7152, %v7144
      %v7337 = vpack.c.b16 %v7161, %v7153
      %v7338 = vpack.c.b16 %v7162, %v7154
      %v7339 = vpack.c.b16 %v7163, %v7155
      %v7340 = vpack.c.b16 %v7164, %v7156
      %v7341 = vpack.c.b16 %v7165, %v7157
      %v7342 = vpack.c.b16 %v7166, %v7158
      %v7343 = vpack.c.b16 %v7167, %v7159
      %v7344 = vpack.c.b16 %v7168, %v7160
      %v7345 = vpack.c.b16 %v7177, %v7169
      %v7346 = vpack.c.b16 %v7178, %v7170
      %v7347 = vpack.c.b16 %v7179, %v7171
      %v7348 = vpack.c.b16 %v7180, %v7172
      %v7349 = vpack.c.b16 %v7181, %v7173
      %v7350 = vpack.c.b16 %v7182, %v7174
      %v7351 = vpack.c.b16 %v7183, %v7175
      %v7352 = vpack.c.b16 %v7184, %v7176
      %v7353 = vpack.c.b16 %v7193, %v7185
      %v7354 = vpack.c.b16 %v7194, %v7186
      %v7355 = vpack.c.b16 %v7195, %v7187
      %v7356 = vpack.c.b16 %v7196, %v7188
      %v7357 = vpack.c.b16 %v7197, %v7189
      %v7358 = vpack.c.b16 %v7198, %v7190
      %v7359 = vpack.c.b16 %v7199, %v7191
      %v7360 = vpack.c.b16 %v7200, %v7192
      %v7361 = vpack.c.b16 %v7209, %v7201
      %v7362 = vpack.c.b16 %v7210, %v7202
      %v7363 = vpack.c.b16 %v7211, %v7203
      %v7364 = vpack.c.b16 %v7212, %v7204
      %v7365 = vpack.c.b16 %v7213, %v7205
      %v7366 = vpack.c.b16 %v7214, %v7206
      %v7367 = vpack.c.b16 %v7215, %v7207
      %v7368 = vpack.c.b16 %v7216, %v7208
      %v7369 = vpack.c.b16 %v7225, %v7217
      %v7370 = vpack.c.b16 %v7226, %v7218
      %v7371 = vpack.c.b16 %v7227, %v7219
      %v7372 = vpack.c.b16 %v7228, %v7220
      %v7373 = vpack.c.b16 %v7229, %v7221
      %v7374 = vpack.c.b16 %v7230, %v7222
      %v7375 = vpack.c.b16 %v7231, %v7223
      %v7376 = vpack.c.b16 %v7232, %v7224
      %v7377 = vpack.c.b16 %v7241, %v7233
      %v7378 = vpack.c.b16 %v7242, %v7234
      %v7379 = vpack.c.b16 %v7243, %v7235
      %v7380 = vpack.c.b16 %v7244, %v7236
      %v7381 = vpack.c.b16 %v7245, %v7237
      %v7382 = vpack.c.b16 %v7246, %v7238
      %v7383 = vpack.c.b16 %v7247, %v7239
      %v7384 = vpack.c.b16 %v7248, %v7240
      %v7385 = vpack.c.b16 %v7257, %v7249
      %v7386 = vpack.c.b16 %v7258, %v7250
      %v7387 = vpack.c.b16 %v7259, %v7251
      %v7388 = vpack.c.b16 %v7260, %v7252
      %v7389 = vpack.c.b16 %v7261, %v7253
      %v7390 = vpack.c.b16 %v7262, %v7254
      %v7391 = vpack.c.b16 %v7263, %v7255
      %v7392 = vpack.c.b16 %v7264, %v7256
      %7521 = vmatprep.subr.bf16.mxu0 %v7322
      %7522 = vmatpush1.bf16.msra.mxu0 %v7321
      %7523 = vmatprep.subr.bf16.mxu0 %v7314
      %7524 = vmatpush1.bf16.msra.mxu0 %v7313
      %7525 = vmatprep.subr.bf16.mxu0 %v7306
      %7526 = vmatpush1.bf16.msra.mxu0 %v7305
      %7527 = vmatprep.subr.bf16.mxu0 %v7298
      %7528 = vmatpush1.bf16.msra.mxu0 %v7297
      %7529 = vmatprep.subr.bf16.mxu0 %v7290
      %7530 = vmatpush1.bf16.msra.mxu0 %v7289
      %7531 = vmatprep.subr.bf16.mxu0 %v7282
      %7532 = vmatpush1.bf16.msra.mxu0 %v7281
      %7533 = vmatprep.subr.bf16.mxu0 %v7274
      %7534 = vmatpush1.bf16.msra.mxu0 %v7273
      %7535 = vmatprep.subr.bf16.mxu0 %v7266
      %7536 = vmatpush1.bf16.msra.mxu0 %v7265
      %7537 = vmatprep.subr.bf16.mxu0 %v7386
      %7538 = vmatpush2.bf16.msra.mxu0 %v7385
      %7539 = vmatprep.subr.bf16.mxu0 %v7378
      %7540 = vmatpush2.bf16.msra.mxu0 %v7377
      %7541 = vmatprep.subr.bf16.mxu0 %v7370
      %7542 = vmatpush2.bf16.msra.mxu0 %v7369
      %7543 = vmatprep.subr.bf16.mxu0 %v7362
      %7544 = vmatpush2.bf16.msra.mxu0 %v7361
      %7545 = vmatprep.subr.bf16.mxu0 %v7354
      %7546 = vmatpush2.bf16.msra.mxu0 %v7353
      %7547 = vmatprep.subr.bf16.mxu0 %v7346
      %7548 = vmatpush2.bf16.msra.mxu0 %v7345
      %7549 = vmatprep.subr.bf16.mxu0 %v7338
      %7550 = vmatpush2.bf16.msra.mxu0 %v7337
      %7551 = vmatprep.subr.bf16.mxu0 %v7330
      %7552 = vmatpush2.bf16.msra.mxu0 %v7329
      %7553 = vmatprep.mubr.bf16.mxu0 %v6880
      %7554 = vmatmul.mubr.bf16.gmra.mxu0 %v6879
      %v7555 = vpop.f32.mrf.mxu0
      %v7556 = vadd.f32 0.0, %v7555
      %v7557 = vpop.f32.mrf.mxu0
      %v7558 = vadd.f32 0.0, %v7557
      %v7559 = vpop.f32.mrf.mxu0
      %v7560 = vpop.f32.mrf.mxu0
      %7561 = vdwg.mxu0
      %7562 = vmatprep.subr.bf16.mxu0 %v7324
      %7563 = vmatpush1.bf16.msra.mxu0 %v7323
      %7564 = vmatprep.subr.bf16.mxu0 %v7316
      %7565 = vmatpush1.bf16.msra.mxu0 %v7315
      %7566 = vmatprep.subr.bf16.mxu0 %v7308
      %7567 = vmatpush1.bf16.msra.mxu0 %v7307
      %7568 = vmatprep.subr.bf16.mxu0 %v7300
      %7569 = vmatpush1.bf16.msra.mxu0 %v7299
      %7570 = vmatprep.subr.bf16.mxu0 %v7292
      %7571 = vmatpush1.bf16.msra.mxu0 %v7291
      %7572 = vmatprep.subr.bf16.mxu0 %v7284
      %7573 = vmatpush1.bf16.msra.mxu0 %v7283
      %7574 = vmatprep.subr.bf16.mxu0 %v7276
      %7575 = vmatpush1.bf16.msra.mxu0 %v7275
      %7576 = vmatprep.subr.bf16.mxu0 %v7268
      %7577 = vmatpush1.bf16.msra.mxu0 %v7267
      %7578 = vmatprep.subr.bf16.mxu0 %v7388
      %7579 = vmatpush2.bf16.msra.mxu0 %v7387
      %7580 = vmatprep.subr.bf16.mxu0 %v7380
      %7581 = vmatpush2.bf16.msra.mxu0 %v7379
      %7582 = vmatprep.subr.bf16.mxu0 %v7372
      %7583 = vmatpush2.bf16.msra.mxu0 %v7371
      %7584 = vmatprep.subr.bf16.mxu0 %v7364
      %7585 = vmatpush2.bf16.msra.mxu0 %v7363
      %7586 = vmatprep.subr.bf16.mxu0 %v7356
      %7587 = vmatpush2.bf16.msra.mxu0 %v7355
      %7588 = vmatprep.subr.bf16.mxu0 %v7348
      %7589 = vmatpush2.bf16.msra.mxu0 %v7347
      %7590 = vmatprep.subr.bf16.mxu0 %v7340
      %7591 = vmatpush2.bf16.msra.mxu0 %v7339
      %7592 = vmatprep.subr.bf16.mxu0 %v7332
      %7593 = vmatpush2.bf16.msra.mxu0 %v7331
      %7594 = vmatprep.mubr.bf16.mxu0 %v6880
      %7595 = vmatmul.mubr.bf16.gmra.mxu0 %v6879
      %v7596 = vpop.f32.mrf.mxu0
      %v7597 = vadd.f32 0.0, %v7596
      %v7598 = vpop.f32.mrf.mxu0
      %v7599 = vadd.f32 0.0, %v7598
      %v7600 = vpop.f32.mrf.mxu0
      %v7601 = vpop.f32.mrf.mxu0
      %7602 = vdwg.mxu0
      %7603 = vmatprep.subr.bf16.mxu0 %v7326
      %7604 = vmatpush1.bf16.msra.mxu0 %v7325
      %7605 = vmatprep.subr.bf16.mxu0 %v7318
      %7606 = vmatpush1.bf16.msra.mxu0 %v7317
      %7607 = vmatprep.subr.bf16.mxu0 %v7310
      %7608 = vmatpush1.bf16.msra.mxu0 %v7309
      %7609 = vmatprep.subr.bf16.mxu0 %v7302
      %7610 = vmatpush1.bf16.msra.mxu0 %v7301
      %7611 = vmatprep.subr.bf16.mxu0 %v7294
      %7612 = vmatpush1.bf16.msra.mxu0 %v7293
      %7613 = vmatprep.subr.bf16.mxu0 %v7286
      %7614 = vmatpush1.bf16.msra.mxu0 %v7285
      %7615 = vmatprep.subr.bf16.mxu0 %v7278
      %7616 = vmatpush1.bf16.msra.mxu0 %v7277
      %7617 = vmatprep.subr.bf16.mxu0 %v7270
      %7618 = vmatpush1.bf16.msra.mxu0 %v7269
      %7619 = vmatprep.subr.bf16.mxu0 %v7390
      %7620 = vmatpush2.bf16.msra.mxu0 %v7389
      %7621 = vmatprep.subr.bf16.mxu0 %v7382
      %7622 = vmatpush2.bf16.msra.mxu0 %v7381
      %7623 = vmatprep.subr.bf16.mxu0 %v7374
      %7624 = vmatpush2.bf16.msra.mxu0 %v7373
      %7625 = vmatprep.subr.bf16.mxu0 %v7366
      %7626 = vmatpush2.bf16.msra.mxu0 %v7365
      %7627 = vmatprep.subr.bf16.mxu0 %v7358
      %7628 = vmatpush2.bf16.msra.mxu0 %v7357
      %7629 = vmatprep.subr.bf16.mxu0 %v7350
      %7630 = vmatpush2.bf16.msra.mxu0 %v7349
      %7631 = vmatprep.subr.bf16.mxu0 %v7342
      %7632 = vmatpush2.bf16.msra.mxu0 %v7341
      %7633 = vmatprep.subr.bf16.mxu0 %v7334
      %7634 = vmatpush2.bf16.msra.mxu0 %v7333
      %7635 = vmatprep.mubr.bf16.mxu0 %v6880
      %7636 = vmatmul.mubr.bf16.gmra.mxu0 %v6879
      %v7637 = vpop.f32.mrf.mxu0
      %v7638 = vadd.f32 0.0, %v7637
      %v7639 = vpop.f32.mrf.mxu0
      %v7640 = vadd.f32 0.0, %v7639
      %v7641 = vpop.f32.mrf.mxu0
      %v7642 = vpop.f32.mrf.mxu0
      %7643 = vdwg.mxu0
      %7644 = vmatprep.subr.bf16.mxu0 %v7328
      %7645 = vmatpush1.bf16.msra.mxu0 %v7327
      %7646 = vmatprep.subr.bf16.mxu0 %v7320
      %7647 = vmatpush1.bf16.msra.mxu0 %v7319
      %7648 = vmatprep.subr.bf16.mxu0 %v7312
      %7649 = vmatpush1.bf16.msra.mxu0 %v7311
      %7650 = vmatprep.subr.bf16.mxu0 %v7304
      %7651 = vmatpush1.bf16.msra.mxu0 %v7303
      %7652 = vmatprep.subr.bf16.mxu0 %v7296
      %7653 = vmatpush1.bf16.msra.mxu0 %v7295
      %7654 = vmatprep.subr.bf16.mxu0 %v7288
      %7655 = vmatpush1.bf16.msra.mxu0 %v7287
      %7656 = vmatprep.subr.bf16.mxu0 %v7280
      %7657 = vmatpush1.bf16.msra.mxu0 %v7279
      %7658 = vmatprep.subr.bf16.mxu0 %v7272
      %7659 = vmatpush1.bf16.msra.mxu0 %v7271
      %7660 = vmatprep.subr.bf16.mxu0 %v7392
      %7661 = vmatpush2.bf16.msra.mxu0 %v7391
      %7662 = vmatprep.subr.bf16.mxu0 %v7384
      %7663 = vmatpush2.bf16.msra.mxu0 %v7383
      %7664 = vmatprep.subr.bf16.mxu0 %v7376
      %7665 = vmatpush2.bf16.msra.mxu0 %v7375
      %7666 = vmatprep.subr.bf16.mxu0 %v7368
      %7667 = vmatpush2.bf16.msra.mxu0 %v7367
      %7668 = vmatprep.subr.bf16.mxu0 %v7360
      %7669 = vmatpush2.bf16.msra.mxu0 %v7359
      %7670 = vmatprep.subr.bf16.mxu0 %v7352
      %7671 = vmatpush2.bf16.msra.mxu0 %v7351
      %7672 = vmatprep.subr.bf16.mxu0 %v7344
      %7673 = vmatpush2.bf16.msra.mxu0 %v7343
      %7674 = vmatprep.subr.bf16.mxu0 %v7336
      %7675 = vmatpush2.bf16.msra.mxu0 %v7335
      %7676 = vmatprep.mubr.bf16.mxu0 %v6880
      %7677 = vmatmul.mubr.bf16.gmra.mxu0 %v6879
      %v7678 = vpop.f32.mrf.mxu0
      %v7679 = vadd.f32 0.0, %v7678
      %v7680 = vpop.f32.mrf.mxu0
      %v7681 = vadd.f32 0.0, %v7680
      %v7682 = vpop.f32.mrf.mxu0
      %v7683 = vpop.f32.mrf.mxu0
      %7684 = vdwg.mxu0
      %v7685 = vadd.f32 %v6860, %v7556
      %v7686 = vadd.f32 %v6861, %v7558
      %v7687 = vadd.f32 %v6862, %v7597
      %v7688 = vadd.f32 %v6863, %v7599
      %v7689 = vadd.f32 %v6864, %v7638
      %v7690 = vadd.f32 %v6865, %v7640
      %v7691 = vadd.f32 %v6866, %v7679
      %v7692 = vadd.f32 %v6867, %v7681
      %v7693 = vxor.u32 %v7685, 2147483648
      %v7694 = vxor.u32 %v7686, 2147483648
      %v7695 = vmul.f32 %v7693, 1.442695
      %v7696 = vpow.pop %v7695
      %v7697 = vmul.f32 %v7694, 1.442695
      %v7698 = vpow.pop %v7697
      %v7699 = vadd.f32 %v7696, 1.0
      %v7700 = vadd.f32 %v7698, 1.0
      %v7701 = vrcp.pop %v7699
      %v7702 = vmul.f32 1.0, %v7701
      %v7703 = vrcp.pop %v7700
      %v7704 = vmul.f32 1.0, %v7703
      %v7705 = vxor.u32 %v7687, 2147483648
      %v7706 = vxor.u32 %v7688, 2147483648
      %v7707 = vmul.f32 %v7705, 1.442695
      %v7708 = vpow.pop %v7707
      %v7709 = vmul.f32 %v7706, 1.442695
      %v7710 = vpow.pop %v7709
      %v7711 = vadd.f32 %v7708, 1.0
      %v7712 = vadd.f32 %v7710, 1.0
      %v7713 = vrcp.pop %v7711
      %v7714 = vmul.f32 1.0, %v7713
      %v7715 = vrcp.pop %v7712
      %v7716 = vmul.f32 1.0, %v7715
      %v7717 = vtanh.pop %v7689
      %v7718 = vtanh.pop %v7690
      %v7719 = vxor.u32 %v7691, 2147483648
      %v7720 = vxor.u32 %v7692, 2147483648
      %v7721 = vmul.f32 %v7719, 1.442695
      %v7722 = vpow.pop %v7721
      %v7723 = vmul.f32 %v7720, 1.442695
      %v7724 = vpow.pop %v7723
      %v7725 = vadd.f32 %v7722, 1.0
      %v7726 = vadd.f32 %v7724, 1.0
      %v7727 = vrcp.pop %v7725
      %v7728 = vmul.f32 1.0, %v7727
      %v7729 = vrcp.pop %v7726
      %v7730 = vmul.f32 1.0, %v7729
      %v7731 = vmul.f32 %v7714, %v6851
      %v7732 = vmul.f32 %v7716, %v6852
      %v7733 = vmul.f32 %v7702, %v7717
      %v7734 = vmul.f32 %v7704, %v7718
      %v7735 = vadd.f32 %v7731, %v7733
      %v7736 = vadd.f32 %v7732, %v7734
      %v7737 = vtanh.pop %v7735
      %v7738 = vtanh.pop %v7736
      %v7739 = vmul.f32 %v7728, %v7737
      %v7740 = vmul.f32 %v7730, %v7738
      %v7741 = vpack.c.bf16 %v6853, %v6853
      %v7742 = vpack.c.bf16 %v6854, %v6854
      %v7871 = vunpack.c.l.b16 %v6721
      %v7872 = vunpack.c.h.b16 %v6721
      %v7873 = vunpack.c.l.b16 %v6722
      %v7874 = vunpack.c.h.b16 %v6722
      %v7875 = vunpack.c.l.b16 %v6723
      %v7876 = vunpack.c.h.b16 %v6723
      %v7877 = vunpack.c.l.b16 %v6724
      %v7878 = vunpack.c.h.b16 %v6724
      %v7879 = vunpack.c.l.b16 %v6725
      %v7880 = vunpack.c.h.b16 %v6725
      %v7881 = vunpack.c.l.b16 %v6726
      %v7882 = vunpack.c.h.b16 %v6726
      %v7883 = vunpack.c.l.b16 %v6727
      %v7884 = vunpack.c.h.b16 %v6727
      %v7885 = vunpack.c.l.b16 %v6728
      %v7886 = vunpack.c.h.b16 %v6728
      %v7887 = vunpack.c.l.b16 %v6729
      %v7888 = vunpack.c.h.b16 %v6729
      %v7889 = vunpack.c.l.b16 %v6730
      %v7890 = vunpack.c.h.b16 %v6730
      %v7891 = vunpack.c.l.b16 %v6731
      %v7892 = vunpack.c.h.b16 %v6731
      %v7893 = vunpack.c.l.b16 %v6732
      %v7894 = vunpack.c.h.b16 %v6732
      %v7895 = vunpack.c.l.b16 %v6733
      %v7896 = vunpack.c.h.b16 %v6733
      %v7897 = vunpack.c.l.b16 %v6734
      %v7898 = vunpack.c.h.b16 %v6734
      %v7899 = vunpack.c.l.b16 %v6735
      %v7900 = vunpack.c.h.b16 %v6735
      %v7901 = vunpack.c.l.b16 %v6736
      %v7902 = vunpack.c.h.b16 %v6736
      %v7903 = vunpack.c.l.b16 %v6737
      %v7904 = vunpack.c.h.b16 %v6737
      %v7905 = vunpack.c.l.b16 %v6738
      %v7906 = vunpack.c.h.b16 %v6738
      %v7907 = vunpack.c.l.b16 %v6739
      %v7908 = vunpack.c.h.b16 %v6739
      %v7909 = vunpack.c.l.b16 %v6740
      %v7910 = vunpack.c.h.b16 %v6740
      %v7911 = vunpack.c.l.b16 %v6741
      %v7912 = vunpack.c.h.b16 %v6741
      %v7913 = vunpack.c.l.b16 %v6742
      %v7914 = vunpack.c.h.b16 %v6742
      %v7915 = vunpack.c.l.b16 %v6743
      %v7916 = vunpack.c.h.b16 %v6743
      %v7917 = vunpack.c.l.b16 %v6744
      %v7918 = vunpack.c.h.b16 %v6744
      %v7919 = vunpack.c.l.b16 %v6745
      %v7920 = vunpack.c.h.b16 %v6745
      %v7921 = vunpack.c.l.b16 %v6746
      %v7922 = vunpack.c.h.b16 %v6746
      %v7923 = vunpack.c.l.b16 %v6747
      %v7924 = vunpack.c.h.b16 %v6747
      %v7925 = vunpack.c.l.b16 %v6748
      %v7926 = vunpack.c.h.b16 %v6748
      %v7927 = vunpack.c.l.b16 %v6749
      %v7928 = vunpack.c.h.b16 %v6749
      %v7929 = vunpack.c.l.b16 %v6750
      %v7930 = vunpack.c.h.b16 %v6750
      %v7931 = vunpack.c.l.b16 %v6751
      %v7932 = vunpack.c.h.b16 %v6751
      %v7933 = vunpack.c.l.b16 %v6752
      %v7934 = vunpack.c.h.b16 %v6752
      %v7935 = vunpack.c.l.b16 %v6753
      %v7936 = vunpack.c.h.b16 %v6753
      %v7937 = vunpack.c.l.b16 %v6754
      %v7938 = vunpack.c.h.b16 %v6754
      %v7939 = vunpack.c.l.b16 %v6755
      %v7940 = vunpack.c.h.b16 %v6755
      %v7941 = vunpack.c.l.b16 %v6756
      %v7942 = vunpack.c.h.b16 %v6756
      %v7943 = vunpack.c.l.b16 %v6757
      %v7944 = vunpack.c.h.b16 %v6757
      %v7945 = vunpack.c.l.b16 %v6758
      %v7946 = vunpack.c.h.b16 %v6758
      %v7947 = vunpack.c.l.b16 %v6759
      %v7948 = vunpack.c.h.b16 %v6759
      %v7949 = vunpack.c.l.b16 %v6760
      %v7950 = vunpack.c.h.b16 %v6760
      %v7951 = vunpack.c.l.b16 %v6761
      %v7952 = vunpack.c.h.b16 %v6761
      %v7953 = vunpack.c.l.b16 %v6762
      %v7954 = vunpack.c.h.b16 %v6762
      %v7955 = vunpack.c.l.b16 %v6763
      %v7956 = vunpack.c.h.b16 %v6763
      %v7957 = vunpack.c.l.b16 %v6764
      %v7958 = vunpack.c.h.b16 %v6764
      %v7959 = vunpack.c.l.b16 %v6765
      %v7960 = vunpack.c.h.b16 %v6765
      %v7961 = vunpack.c.l.b16 %v6766
      %v7962 = vunpack.c.h.b16 %v6766
      %v7963 = vunpack.c.l.b16 %v6767
      %v7964 = vunpack.c.h.b16 %v6767
      %v7965 = vunpack.c.l.b16 %v6768
      %v7966 = vunpack.c.h.b16 %v6768
      %v7967 = vunpack.c.l.b16 %v6769
      %v7968 = vunpack.c.h.b16 %v6769
      %v7969 = vunpack.c.l.b16 %v6770
      %v7970 = vunpack.c.h.b16 %v6770
      %v7971 = vunpack.c.l.b16 %v6771
      %v7972 = vunpack.c.h.b16 %v6771
      %v7973 = vunpack.c.l.b16 %v6772
      %v7974 = vunpack.c.h.b16 %v6772
      %v7975 = vunpack.c.l.b16 %v6773
      %v7976 = vunpack.c.h.b16 %v6773
      %v7977 = vunpack.c.l.b16 %v6774
      %v7978 = vunpack.c.h.b16 %v6774
      %v7979 = vunpack.c.l.b16 %v6775
      %v7980 = vunpack.c.h.b16 %v6775
      %v7981 = vunpack.c.l.b16 %v6776
      %v7982 = vunpack.c.h.b16 %v6776
      %v7983 = vunpack.c.l.b16 %v6777
      %v7984 = vunpack.c.h.b16 %v6777
      %v7985 = vunpack.c.l.b16 %v6778
      %v7986 = vunpack.c.h.b16 %v6778
      %v7987 = vunpack.c.l.b16 %v6779
      %v7988 = vunpack.c.h.b16 %v6779
      %v7989 = vunpack.c.l.b16 %v6780
      %v7990 = vunpack.c.h.b16 %v6780
      %v7991 = vunpack.c.l.b16 %v6781
      %v7992 = vunpack.c.h.b16 %v6781
      %v7993 = vunpack.c.l.b16 %v6782
      %v7994 = vunpack.c.h.b16 %v6782
      %v7995 = vunpack.c.l.b16 %v6783
      %v7996 = vunpack.c.h.b16 %v6783
      %v7997 = vunpack.c.l.b16 %v6784
      %v7998 = vunpack.c.h.b16 %v6784
      %v7999 = vunpack.c.l.b16 %v6785
      %v8000 = vunpack.c.h.b16 %v6785
      %v8001 = vunpack.c.l.b16 %v6786
      %v8002 = vunpack.c.h.b16 %v6786
      %v8003 = vunpack.c.l.b16 %v6787
      %v8004 = vunpack.c.h.b16 %v6787
      %v8005 = vunpack.c.l.b16 %v6788
      %v8006 = vunpack.c.h.b16 %v6788
      %v8007 = vunpack.c.l.b16 %v6789
      %v8008 = vunpack.c.h.b16 %v6789
      %v8009 = vunpack.c.l.b16 %v6790
      %v8010 = vunpack.c.h.b16 %v6790
      %v8011 = vunpack.c.l.b16 %v6791
      %v8012 = vunpack.c.h.b16 %v6791
      %v8013 = vunpack.c.l.b16 %v6792
      %v8014 = vunpack.c.h.b16 %v6792
      %v8015 = vunpack.c.l.b16 %v6793
      %v8016 = vunpack.c.h.b16 %v6793
      %v8017 = vunpack.c.l.b16 %v6794
      %v8018 = vunpack.c.h.b16 %v6794
      %v8019 = vunpack.c.l.b16 %v6795
      %v8020 = vunpack.c.h.b16 %v6795
      %v8021 = vunpack.c.l.b16 %v6796
      %v8022 = vunpack.c.h.b16 %v6796
      %v8023 = vunpack.c.l.b16 %v6797
      %v8024 = vunpack.c.h.b16 %v6797
      %v8025 = vunpack.c.l.b16 %v6798
      %v8026 = vunpack.c.h.b16 %v6798
      %v8027 = vunpack.c.l.b16 %v6799
      %v8028 = vunpack.c.h.b16 %v6799
      %v8029 = vunpack.c.l.b16 %v6800
      %v8030 = vunpack.c.h.b16 %v6800
      %v8031 = vunpack.c.l.b16 %v6801
      %v8032 = vunpack.c.h.b16 %v6801
      %v8033 = vunpack.c.l.b16 %v6802
      %v8034 = vunpack.c.h.b16 %v6802
      %v8035 = vunpack.c.l.b16 %v6803
      %v8036 = vunpack.c.h.b16 %v6803
      %v8037 = vunpack.c.l.b16 %v6804
      %v8038 = vunpack.c.h.b16 %v6804
      %v8039 = vunpack.c.l.b16 %v6805
      %v8040 = vunpack.c.h.b16 %v6805
      %v8041 = vunpack.c.l.b16 %v6806
      %v8042 = vunpack.c.h.b16 %v6806
      %v8043 = vunpack.c.l.b16 %v6807
      %v8044 = vunpack.c.h.b16 %v6807
      %v8045 = vunpack.c.l.b16 %v6808
      %v8046 = vunpack.c.h.b16 %v6808
      %v8047 = vunpack.c.l.b16 %v6809
      %v8048 = vunpack.c.h.b16 %v6809
      %v8049 = vunpack.c.l.b16 %v6810
      %v8050 = vunpack.c.h.b16 %v6810
      %v8051 = vunpack.c.l.b16 %v6811
      %v8052 = vunpack.c.h.b16 %v6811
      %v8053 = vunpack.c.l.b16 %v6812
      %v8054 = vunpack.c.h.b16 %v6812
      %v8055 = vunpack.c.l.b16 %v6813
      %v8056 = vunpack.c.h.b16 %v6813
      %v8057 = vunpack.c.l.b16 %v6814
      %v8058 = vunpack.c.h.b16 %v6814
      %v8059 = vunpack.c.l.b16 %v6815
      %v8060 = vunpack.c.h.b16 %v6815
      %v8061 = vunpack.c.l.b16 %v6816
      %v8062 = vunpack.c.h.b16 %v6816
      %v8063 = vunpack.c.l.b16 %v6817
      %v8064 = vunpack.c.h.b16 %v6817
      %v8065 = vunpack.c.l.b16 %v6818
      %v8066 = vunpack.c.h.b16 %v6818
      %v8067 = vunpack.c.l.b16 %v6819
      %v8068 = vunpack.c.h.b16 %v6819
      %v8069 = vunpack.c.l.b16 %v6820
      %v8070 = vunpack.c.h.b16 %v6820
      %v8071 = vunpack.c.l.b16 %v6821
      %v8072 = vunpack.c.h.b16 %v6821
      %v8073 = vunpack.c.l.b16 %v6822
      %v8074 = vunpack.c.h.b16 %v6822
      %v8075 = vunpack.c.l.b16 %v6823
      %v8076 = vunpack.c.h.b16 %v6823
      %v8077 = vunpack.c.l.b16 %v6824
      %v8078 = vunpack.c.h.b16 %v6824
      %v8079 = vunpack.c.l.b16 %v6825
      %v8080 = vunpack.c.h.b16 %v6825
      %v8081 = vunpack.c.l.b16 %v6826
      %v8082 = vunpack.c.h.b16 %v6826
      %v8083 = vunpack.c.l.b16 %v6827
      %v8084 = vunpack.c.h.b16 %v6827
      %v8085 = vunpack.c.l.b16 %v6828
      %v8086 = vunpack.c.h.b16 %v6828
      %v8087 = vunpack.c.l.b16 %v6829
      %v8088 = vunpack.c.h.b16 %v6829
      %v8089 = vunpack.c.l.b16 %v6830
      %v8090 = vunpack.c.h.b16 %v6830
      %v8091 = vunpack.c.l.b16 %v6831
      %v8092 = vunpack.c.h.b16 %v6831
      %v8093 = vunpack.c.l.b16 %v6832
      %v8094 = vunpack.c.h.b16 %v6832
      %v8095 = vunpack.c.l.b16 %v6833
      %v8096 = vunpack.c.h.b16 %v6833
      %v8097 = vunpack.c.l.b16 %v6834
      %v8098 = vunpack.c.h.b16 %v6834
      %v8099 = vunpack.c.l.b16 %v6835
      %v8100 = vunpack.c.h.b16 %v6835
      %v8101 = vunpack.c.l.b16 %v6836
      %v8102 = vunpack.c.h.b16 %v6836
      %v8103 = vunpack.c.l.b16 %v6837
      %v8104 = vunpack.c.h.b16 %v6837
      %v8105 = vunpack.c.l.b16 %v6838
      %v8106 = vunpack.c.h.b16 %v6838
      %v8107 = vunpack.c.l.b16 %v6839
      %v8108 = vunpack.c.h.b16 %v6839
      %v8109 = vunpack.c.l.b16 %v6840
      %v8110 = vunpack.c.h.b16 %v6840
      %v8111 = vunpack.c.l.b16 %v6841
      %v8112 = vunpack.c.h.b16 %v6841
      %v8113 = vunpack.c.l.b16 %v6842
      %v8114 = vunpack.c.h.b16 %v6842
      %v8115 = vunpack.c.l.b16 %v6843
      %v8116 = vunpack.c.h.b16 %v6843
      %v8117 = vunpack.c.l.b16 %v6844
      %v8118 = vunpack.c.h.b16 %v6844
      %v8119 = vunpack.c.l.b16 %v6845
      %v8120 = vunpack.c.h.b16 %v6845
      %v8121 = vunpack.c.l.b16 %v6846
      %v8122 = vunpack.c.h.b16 %v6846
      %v8123 = vunpack.c.l.b16 %v6847
      %v8124 = vunpack.c.h.b16 %v6847
      %v8125 = vunpack.c.l.b16 %v6848
      %v8126 = vunpack.c.h.b16 %v6848
      %v8127 = vpack.c.b16 %v7879, %v7871
      %v8128 = vpack.c.b16 %v7880, %v7872
      %v8129 = vpack.c.b16 %v7881, %v7873
      %v8130 = vpack.c.b16 %v7882, %v7874
      %v8131 = vpack.c.b16 %v7883, %v7875
      %v8132 = vpack.c.b16 %v7884, %v7876
      %v8133 = vpack.c.b16 %v7885, %v7877
      %v8134 = vpack.c.b16 %v7886, %v7878
      %v8135 = vpack.c.b16 %v7895, %v7887
      %v8136 = vpack.c.b16 %v7896, %v7888
      %v8137 = vpack.c.b16 %v7897, %v7889
      %v8138 = vpack.c.b16 %v7898, %v7890
      %v8139 = vpack.c.b16 %v7899, %v7891
      %v8140 = vpack.c.b16 %v7900, %v7892
      %v8141 = vpack.c.b16 %v7901, %v7893
      %v8142 = vpack.c.b16 %v7902, %v7894
      %v8143 = vpack.c.b16 %v7911, %v7903
      %v8144 = vpack.c.b16 %v7912, %v7904
      %v8145 = vpack.c.b16 %v7913, %v7905
      %v8146 = vpack.c.b16 %v7914, %v7906
      %v8147 = vpack.c.b16 %v7915, %v7907
      %v8148 = vpack.c.b16 %v7916, %v7908
      %v8149 = vpack.c.b16 %v7917, %v7909
      %v8150 = vpack.c.b16 %v7918, %v7910
      %v8151 = vpack.c.b16 %v7927, %v7919
      %v8152 = vpack.c.b16 %v7928, %v7920
      %v8153 = vpack.c.b16 %v7929, %v7921
      %v8154 = vpack.c.b16 %v7930, %v7922
      %v8155 = vpack.c.b16 %v7931, %v7923
      %v8156 = vpack.c.b16 %v7932, %v7924
      %v8157 = vpack.c.b16 %v7933, %v7925
      %v8158 = vpack.c.b16 %v7934, %v7926
      %v8159 = vpack.c.b16 %v7943, %v7935
      %v8160 = vpack.c.b16 %v7944, %v7936
      %v8161 = vpack.c.b16 %v7945, %v7937
      %v8162 = vpack.c.b16 %v7946, %v7938
      %v8163 = vpack.c.b16 %v7947, %v7939
      %v8164 = vpack.c.b16 %v7948, %v7940
      %v8165 = vpack.c.b16 %v7949, %v7941
      %v8166 = vpack.c.b16 %v7950, %v7942
      %v8167 = vpack.c.b16 %v7959, %v7951
      %v8168 = vpack.c.b16 %v7960, %v7952
      %v8169 = vpack.c.b16 %v7961, %v7953
      %v8170 = vpack.c.b16 %v7962, %v7954
      %v8171 = vpack.c.b16 %v7963, %v7955
      %v8172 = vpack.c.b16 %v7964, %v7956
      %v8173 = vpack.c.b16 %v7965, %v7957
      %v8174 = vpack.c.b16 %v7966, %v7958
      %v8175 = vpack.c.b16 %v7975, %v7967
      %v8176 = vpack.c.b16 %v7976, %v7968
      %v8177 = vpack.c.b16 %v7977, %v7969
      %v8178 = vpack.c.b16 %v7978, %v7970
      %v8179 = vpack.c.b16 %v7979, %v7971
      %v8180 = vpack.c.b16 %v7980, %v7972
      %v8181 = vpack.c.b16 %v7981, %v7973
      %v8182 = vpack.c.b16 %v7982, %v7974
      %v8183 = vpack.c.b16 %v7991, %v7983
      %v8184 = vpack.c.b16 %v7992, %v7984
      %v8185 = vpack.c.b16 %v7993, %v7985
      %v8186 = vpack.c.b16 %v7994, %v7986
      %v8187 = vpack.c.b16 %v7995, %v7987
      %v8188 = vpack.c.b16 %v7996, %v7988
      %v8189 = vpack.c.b16 %v7997, %v7989
      %v8190 = vpack.c.b16 %v7998, %v7990
      %v8191 = vpack.c.b16 %v8007, %v7999
      %v8192 = vpack.c.b16 %v8008, %v8000
      %v8193 = vpack.c.b16 %v8009, %v8001
      %v8194 = vpack.c.b16 %v8010, %v8002
      %v8195 = vpack.c.b16 %v8011, %v8003
      %v8196 = vpack.c.b16 %v8012, %v8004
      %v8197 = vpack.c.b16 %v8013, %v8005
      %v8198 = vpack.c.b16 %v8014, %v8006
      %v8199 = vpack.c.b16 %v8023, %v8015
      %v8200 = vpack.c.b16 %v8024, %v8016
      %v8201 = vpack.c.b16 %v8025, %v8017
      %v8202 = vpack.c.b16 %v8026, %v8018
      %v8203 = vpack.c.b16 %v8027, %v8019
      %v8204 = vpack.c.b16 %v8028, %v8020
      %v8205 = vpack.c.b16 %v8029, %v8021
      %v8206 = vpack.c.b16 %v8030, %v8022
      %v8207 = vpack.c.b16 %v8039, %v8031
      %v8208 = vpack.c.b16 %v8040, %v8032
      %v8209 = vpack.c.b16 %v8041, %v8033
      %v8210 = vpack.c.b16 %v8042, %v8034
      %v8211 = vpack.c.b16 %v8043, %v8035
      %v8212 = vpack.c.b16 %v8044, %v8036
      %v8213 = vpack.c.b16 %v8045, %v8037
      %v8214 = vpack.c.b16 %v8046, %v8038
      %v8215 = vpack.c.b16 %v8055, %v8047
      %v8216 = vpack.c.b16 %v8056, %v8048
      %v8217 = vpack.c.b16 %v8057, %v8049
      %v8218 = vpack.c.b16 %v8058, %v8050
      %v8219 = vpack.c.b16 %v8059, %v8051
      %v8220 = vpack.c.b16 %v8060, %v8052
      %v8221 = vpack.c.b16 %v8061, %v8053
      %v8222 = vpack.c.b16 %v8062, %v8054
      %v8223 = vpack.c.b16 %v8071, %v8063
      %v8224 = vpack.c.b16 %v8072, %v8064
      %v8225 = vpack.c.b16 %v8073, %v8065
      %v8226 = vpack.c.b16 %v8074, %v8066
      %v8227 = vpack.c.b16 %v8075, %v8067
      %v8228 = vpack.c.b16 %v8076, %v8068
      %v8229 = vpack.c.b16 %v8077, %v8069
      %v8230 = vpack.c.b16 %v8078, %v8070
      %v8231 = vpack.c.b16 %v8087, %v8079
      %v8232 = vpack.c.b16 %v8088, %v8080
      %v8233 = vpack.c.b16 %v8089, %v8081
      %v8234 = vpack.c.b16 %v8090, %v8082
      %v8235 = vpack.c.b16 %v8091, %v8083
      %v8236 = vpack.c.b16 %v8092, %v8084
      %v8237 = vpack.c.b16 %v8093, %v8085
      %v8238 = vpack.c.b16 %v8094, %v8086
      %v8239 = vpack.c.b16 %v8103, %v8095
      %v8240 = vpack.c.b16 %v8104, %v8096
      %v8241 = vpack.c.b16 %v8105, %v8097
      %v8242 = vpack.c.b16 %v8106, %v8098
      %v8243 = vpack.c.b16 %v8107, %v8099
      %v8244 = vpack.c.b16 %v8108, %v8100
      %v8245 = vpack.c.b16 %v8109, %v8101
      %v8246 = vpack.c.b16 %v8110, %v8102
      %v8247 = vpack.c.b16 %v8119, %v8111
      %v8248 = vpack.c.b16 %v8120, %v8112
      %v8249 = vpack.c.b16 %v8121, %v8113
      %v8250 = vpack.c.b16 %v8122, %v8114
      %v8251 = vpack.c.b16 %v8123, %v8115
      %v8252 = vpack.c.b16 %v8124, %v8116
      %v8253 = vpack.c.b16 %v8125, %v8117
      %v8254 = vpack.c.b16 %v8126, %v8118
      %8383 = vmatprep.subr.bf16.mxu0 %v8184
      %8384 = vmatpush1.bf16.msra.mxu0 %v8183
      %8385 = vmatprep.subr.bf16.mxu0 %v8176
      %8386 = vmatpush1.bf16.msra.mxu0 %v8175
      %8387 = vmatprep.subr.bf16.mxu0 %v8168
      %8388 = vmatpush1.bf16.msra.mxu0 %v8167
      %8389 = vmatprep.subr.bf16.mxu0 %v8160
      %8390 = vmatpush1.bf16.msra.mxu0 %v8159
      %8391 = vmatprep.subr.bf16.mxu0 %v8152
      %8392 = vmatpush1.bf16.msra.mxu0 %v8151
      %8393 = vmatprep.subr.bf16.mxu0 %v8144
      %8394 = vmatpush1.bf16.msra.mxu0 %v8143
      %8395 = vmatprep.subr.bf16.mxu0 %v8136
      %8396 = vmatpush1.bf16.msra.mxu0 %v8135
      %8397 = vmatprep.subr.bf16.mxu0 %v8128
      %8398 = vmatpush1.bf16.msra.mxu0 %v8127
      %8399 = vmatprep.subr.bf16.mxu0 %v8248
      %8400 = vmatpush2.bf16.msra.mxu0 %v8247
      %8401 = vmatprep.subr.bf16.mxu0 %v8240
      %8402 = vmatpush2.bf16.msra.mxu0 %v8239
      %8403 = vmatprep.subr.bf16.mxu0 %v8232
      %8404 = vmatpush2.bf16.msra.mxu0 %v8231
      %8405 = vmatprep.subr.bf16.mxu0 %v8224
      %8406 = vmatpush2.bf16.msra.mxu0 %v8223
      %8407 = vmatprep.subr.bf16.mxu0 %v8216
      %8408 = vmatpush2.bf16.msra.mxu0 %v8215
      %8409 = vmatprep.subr.bf16.mxu0 %v8208
      %8410 = vmatpush2.bf16.msra.mxu0 %v8207
      %8411 = vmatprep.subr.bf16.mxu0 %v8200
      %8412 = vmatpush2.bf16.msra.mxu0 %v8199
      %8413 = vmatprep.subr.bf16.mxu0 %v8192
      %8414 = vmatpush2.bf16.msra.mxu0 %v8191
      %8415 = vmatprep.mubr.bf16.mxu0 %v7742
      %8416 = vmatmul.mubr.bf16.gmra.mxu0 %v7741
      %v8417 = vpop.f32.mrf.mxu0
      %v8418 = vadd.f32 0.0, %v8417
      %v8419 = vpop.f32.mrf.mxu0
      %v8420 = vadd.f32 0.0, %v8419
      %v8421 = vpop.f32.mrf.mxu0
      %v8422 = vpop.f32.mrf.mxu0
      %8423 = vdwg.mxu0
      %8424 = vmatprep.subr.bf16.mxu0 %v8186
      %8425 = vmatpush1.bf16.msra.mxu0 %v8185
      %8426 = vmatprep.subr.bf16.mxu0 %v8178
      %8427 = vmatpush1.bf16.msra.mxu0 %v8177
      %8428 = vmatprep.subr.bf16.mxu0 %v8170
      %8429 = vmatpush1.bf16.msra.mxu0 %v8169
      %8430 = vmatprep.subr.bf16.mxu0 %v8162
      %8431 = vmatpush1.bf16.msra.mxu0 %v8161
      %8432 = vmatprep.subr.bf16.mxu0 %v8154
      %8433 = vmatpush1.bf16.msra.mxu0 %v8153
      %8434 = vmatprep.subr.bf16.mxu0 %v8146
      %8435 = vmatpush1.bf16.msra.mxu0 %v8145
      %8436 = vmatprep.subr.bf16.mxu0 %v8138
      %8437 = vmatpush1.bf16.msra.mxu0 %v8137
      %8438 = vmatprep.subr.bf16.mxu0 %v8130
      %8439 = vmatpush1.bf16.msra.mxu0 %v8129
      %8440 = vmatprep.subr.bf16.mxu0 %v8250
      %8441 = vmatpush2.bf16.msra.mxu0 %v8249
      %8442 = vmatprep.subr.bf16.mxu0 %v8242
      %8443 = vmatpush2.bf16.msra.mxu0 %v8241
      %8444 = vmatprep.subr.bf16.mxu0 %v8234
      %8445 = vmatpush2.bf16.msra.mxu0 %v8233
      %8446 = vmatprep.subr.bf16.mxu0 %v8226
      %8447 = vmatpush2.bf16.msra.mxu0 %v8225
      %8448 = vmatprep.subr.bf16.mxu0 %v8218
      %8449 = vmatpush2.bf16.msra.mxu0 %v8217
      %8450 = vmatprep.subr.bf16.mxu0 %v8210
      %8451 = vmatpush2.bf16.msra.mxu0 %v8209
      %8452 = vmatprep.subr.bf16.mxu0 %v8202
      %8453 = vmatpush2.bf16.msra.mxu0 %v8201
      %8454 = vmatprep.subr.bf16.mxu0 %v8194
      %8455 = vmatpush2.bf16.msra.mxu0 %v8193
      %8456 = vmatprep.mubr.bf16.mxu0 %v7742
      %8457 = vmatmul.mubr.bf16.gmra.mxu0 %v7741
      %v8458 = vpop.f32.mrf.mxu0
      %v8459 = vadd.f32 0.0, %v8458
      %v8460 = vpop.f32.mrf.mxu0
      %v8461 = vadd.f32 0.0, %v8460
      %v8462 = vpop.f32.mrf.mxu0
      %v8463 = vpop.f32.mrf.mxu0
      %8464 = vdwg.mxu0
      %8465 = vmatprep.subr.bf16.mxu0 %v8188
      %8466 = vmatpush1.bf16.msra.mxu0 %v8187
      %8467 = vmatprep.subr.bf16.mxu0 %v8180
      %8468 = vmatpush1.bf16.msra.mxu0 %v8179
      %8469 = vmatprep.subr.bf16.mxu0 %v8172
      %8470 = vmatpush1.bf16.msra.mxu0 %v8171
      %8471 = vmatprep.subr.bf16.mxu0 %v8164
      %8472 = vmatpush1.bf16.msra.mxu0 %v8163
      %8473 = vmatprep.subr.bf16.mxu0 %v8156
      %8474 = vmatpush1.bf16.msra.mxu0 %v8155
      %8475 = vmatprep.subr.bf16.mxu0 %v8148
      %8476 = vmatpush1.bf16.msra.mxu0 %v8147
      %8477 = vmatprep.subr.bf16.mxu0 %v8140
      %8478 = vmatpush1.bf16.msra.mxu0 %v8139
      %8479 = vmatprep.subr.bf16.mxu0 %v8132
      %8480 = vmatpush1.bf16.msra.mxu0 %v8131
      %8481 = vmatprep.subr.bf16.mxu0 %v8252
      %8482 = vmatpush2.bf16.msra.mxu0 %v8251
      %8483 = vmatprep.subr.bf16.mxu0 %v8244
      %8484 = vmatpush2.bf16.msra.mxu0 %v8243
      %8485 = vmatprep.subr.bf16.mxu0 %v8236
      %8486 = vmatpush2.bf16.msra.mxu0 %v8235
      %8487 = vmatprep.subr.bf16.mxu0 %v8228
      %8488 = vmatpush2.bf16.msra.mxu0 %v8227
      %8489 = vmatprep.subr.bf16.mxu0 %v8220
      %8490 = vmatpush2.bf16.msra.mxu0 %v8219
      %8491 = vmatprep.subr.bf16.mxu0 %v8212
      %8492 = vmatpush2.bf16.msra.mxu0 %v8211
      %8493 = vmatprep.subr.bf16.mxu0 %v8204
      %8494 = vmatpush2.bf16.msra.mxu0 %v8203
      %8495 = vmatprep.subr.bf16.mxu0 %v8196
      %8496 = vmatpush2.bf16.msra.mxu0 %v8195
      %8497 = vmatprep.mubr.bf16.mxu0 %v7742
      %8498 = vmatmul.mubr.bf16.gmra.mxu0 %v7741
      %v8499 = vpop.f32.mrf.mxu0
      %v8500 = vadd.f32 0.0, %v8499
      %v8501 = vpop.f32.mrf.mxu0
      %v8502 = vadd.f32 0.0, %v8501
      %v8503 = vpop.f32.mrf.mxu0
      %v8504 = vpop.f32.mrf.mxu0
      %8505 = vdwg.mxu0
      %8506 = vmatprep.subr.bf16.mxu0 %v8190
      %8507 = vmatpush1.bf16.msra.mxu0 %v8189
      %8508 = vmatprep.subr.bf16.mxu0 %v8182
      %8509 = vmatpush1.bf16.msra.mxu0 %v8181
      %8510 = vmatprep.subr.bf16.mxu0 %v8174
      %8511 = vmatpush1.bf16.msra.mxu0 %v8173
      %8512 = vmatprep.subr.bf16.mxu0 %v8166
      %8513 = vmatpush1.bf16.msra.mxu0 %v8165
      %8514 = vmatprep.subr.bf16.mxu0 %v8158
      %8515 = vmatpush1.bf16.msra.mxu0 %v8157
      %8516 = vmatprep.subr.bf16.mxu0 %v8150
      %8517 = vmatpush1.bf16.msra.mxu0 %v8149
      %8518 = vmatprep.subr.bf16.mxu0 %v8142
      %8519 = vmatpush1.bf16.msra.mxu0 %v8141
      %8520 = vmatprep.subr.bf16.mxu0 %v8134
      %8521 = vmatpush1.bf16.msra.mxu0 %v8133
      %8522 = vmatprep.subr.bf16.mxu0 %v8254
      %8523 = vmatpush2.bf16.msra.mxu0 %v8253
      %8524 = vmatprep.subr.bf16.mxu0 %v8246
      %8525 = vmatpush2.bf16.msra.mxu0 %v8245
      %8526 = vmatprep.subr.bf16.mxu0 %v8238
      %8527 = vmatpush2.bf16.msra.mxu0 %v8237
      %8528 = vmatprep.subr.bf16.mxu0 %v8230
      %8529 = vmatpush2.bf16.msra.mxu0 %v8229
      %8530 = vmatprep.subr.bf16.mxu0 %v8222
      %8531 = vmatpush2.bf16.msra.mxu0 %v8221
      %8532 = vmatprep.subr.bf16.mxu0 %v8214
      %8533 = vmatpush2.bf16.msra.mxu0 %v8213
      %8534 = vmatprep.subr.bf16.mxu0 %v8206
      %8535 = vmatpush2.bf16.msra.mxu0 %v8205
      %8536 = vmatprep.subr.bf16.mxu0 %v8198
      %8537 = vmatpush2.bf16.msra.mxu0 %v8197
      %8538 = vmatprep.mubr.bf16.mxu0 %v7742
      %8539 = vmatmul.mubr.bf16.gmra.mxu0 %v7741
      %v8540 = vpop.f32.mrf.mxu0
      %v8541 = vadd.f32 0.0, %v8540
      %v8542 = vpop.f32.mrf.mxu0
      %v8543 = vadd.f32 0.0, %v8542
      %v8544 = vpop.f32.mrf.mxu0
      %v8545 = vpop.f32.mrf.mxu0
      %8546 = vdwg.mxu0
      %v8547 = vadd.f32 %v6871, %v8418
      %v8548 = vadd.f32 %v6872, %v8420
      %v8549 = vadd.f32 %v6873, %v8459
      %v8550 = vadd.f32 %v6874, %v8461
      %v8551 = vadd.f32 %v6875, %v8500
      %v8552 = vadd.f32 %v6876, %v8502
      %v8553 = vadd.f32 %v6877, %v8541
      %v8554 = vadd.f32 %v6878, %v8543
      %v8555 = vxor.u32 %v8547, 2147483648
      %v8556 = vxor.u32 %v8548, 2147483648
      %v8557 = vmul.f32 %v8555, 1.442695
      %v8558 = vpow.pop %v8557
      %v8559 = vmul.f32 %v8556, 1.442695
      %v8560 = vpow.pop %v8559
      %v8561 = vadd.f32 %v8558, 1.0
      %v8562 = vadd.f32 %v8560, 1.0
      %v8563 = vrcp.pop %v8561
      %v8564 = vmul.f32 1.0, %v8563
      %v8565 = vrcp.pop %v8562
      %v8566 = vmul.f32 1.0, %v8565
      %v8567 = vxor.u32 %v8549, 2147483648
      %v8568 = vxor.u32 %v8550, 2147483648
      %v8569 = vmul.f32 %v8567, 1.442695
      %v8570 = vpow.pop %v8569
      %v8571 = vmul.f32 %v8568, 1.442695
      %v8572 = vpow.pop %v8571
      %v8573 = vadd.f32 %v8570, 1.0
      %v8574 = vadd.f32 %v8572, 1.0
      %v8575 = vrcp.pop %v8573
      %v8576 = vmul.f32 1.0, %v8575
      %v8577 = vrcp.pop %v8574
      %v8578 = vmul.f32 1.0, %v8577
      %v8579 = vtanh.pop %v8551
      %v8580 = vtanh.pop %v8552
      %v8581 = vxor.u32 %v8553, 2147483648
      %v8582 = vxor.u32 %v8554, 2147483648
      %v8583 = vmul.f32 %v8581, 1.442695
      %v8584 = vpow.pop %v8583
      %v8585 = vmul.f32 %v8582, 1.442695
      %v8586 = vpow.pop %v8585
      %v8587 = vadd.f32 %v8584, 1.0
      %v8588 = vadd.f32 %v8586, 1.0
      %v8589 = vrcp.pop %v8587
      %v8590 = vmul.f32 1.0, %v8589
      %v8591 = vrcp.pop %v8588
      %v8592 = vmul.f32 1.0, %v8591
      %v8593 = vmul.f32 %v8576, %v6855
      %v8594 = vmul.f32 %v8578, %v6856
      %v8595 = vmul.f32 %v8564, %v8579
      %v8596 = vmul.f32 %v8566, %v8580
      %v8597 = vadd.f32 %v8593, %v8595
      %v8598 = vadd.f32 %v8594, %v8596
      %v8599 = vtanh.pop %v8597
      %v8600 = vtanh.pop %v8598
      %v8601 = vmul.f32 %v8590, %v8599
      %v8602 = vmul.f32 %v8592, %v8600
      %s8603 = smul.u32 1, 8
      %s8604 = smul.addr %s8603, 8
      %s8605 = scalar_lea.vmem [#allocation2], %s8604
      %v8606 = vld [vmem:[%s8605] sm:$0xff]
      %v8607 = vld [vmem:[%s8605 + $0x8] sm:$0xff]
      %v8608 = vld [vmem:[%s8605 + $0x10] sm:$0xff]
      %v8609 = vld [vmem:[%s8605 + $0x18] sm:$0xff]
      %v8610 = vld [vmem:[%s8605 + $0x20] sm:$0xff]
      %v8611 = vld [vmem:[%s8605 + $0x28] sm:$0xff]
      %v8612 = vld [vmem:[%s8605 + $0x30] sm:$0xff]
      %v8613 = vld [vmem:[%s8605 + $0x38] sm:$0xff]
      %s8614 = smul.u32 2, 8
      %s8615 = smul.addr %s8614, 8
      %s8616 = scalar_lea.vmem [#allocation3], %s8615
      %v8617 = vld [vmem:[%s8616] sm:$0xff]
      %v8618 = vld [vmem:[%s8616 + $0x8] sm:$0xff]
      %v8619 = vld [vmem:[%s8616 + $0x10] sm:$0xff]
      %v8620 = vld [vmem:[%s8616 + $0x18] sm:$0xff]
      %v8621 = vld [vmem:[%s8616 + $0x20] sm:$0xff]
      %v8622 = vld [vmem:[%s8616 + $0x28] sm:$0xff]
      %v8623 = vld [vmem:[%s8616 + $0x30] sm:$0xff]
      %v8624 = vld [vmem:[%s8616 + $0x38] sm:$0xff]
      %v8625 = vpack.c.bf16 %v7739, %v7739
      %v8626 = vpack.c.bf16 %v7740, %v7740
      %8627 = vmatprep.subr.bf16.mxu0 %v7322
      %8628 = vmatpush1.bf16.msra.mxu0 %v7321
      %8629 = vmatprep.subr.bf16.mxu0 %v7314
      %8630 = vmatpush1.bf16.msra.mxu0 %v7313
      %8631 = vmatprep.subr.bf16.mxu0 %v7306
      %8632 = vmatpush1.bf16.msra.mxu0 %v7305
      %8633 = vmatprep.subr.bf16.mxu0 %v7298
      %8634 = vmatpush1.bf16.msra.mxu0 %v7297
      %8635 = vmatprep.subr.bf16.mxu0 %v7290
      %8636 = vmatpush1.bf16.msra.mxu0 %v7289
      %8637 = vmatprep.subr.bf16.mxu0 %v7282
      %8638 = vmatpush1.bf16.msra.mxu0 %v7281
      %8639 = vmatprep.subr.bf16.mxu0 %v7274
      %8640 = vmatpush1.bf16.msra.mxu0 %v7273
      %8641 = vmatprep.subr.bf16.mxu0 %v7266
      %8642 = vmatpush1.bf16.msra.mxu0 %v7265
      %8643 = vmatprep.subr.bf16.mxu0 %v7386
      %8644 = vmatpush2.bf16.msra.mxu0 %v7385
      %8645 = vmatprep.subr.bf16.mxu0 %v7378
      %8646 = vmatpush2.bf16.msra.mxu0 %v7377
      %8647 = vmatprep.subr.bf16.mxu0 %v7370
      %8648 = vmatpush2.bf16.msra.mxu0 %v7369
      %8649 = vmatprep.subr.bf16.mxu0 %v7362
      %8650 = vmatpush2.bf16.msra.mxu0 %v7361
      %8651 = vmatprep.subr.bf16.mxu0 %v7354
      %8652 = vmatpush2.bf16.msra.mxu0 %v7353
      %8653 = vmatprep.subr.bf16.mxu0 %v7346
      %8654 = vmatpush2.bf16.msra.mxu0 %v7345
      %8655 = vmatprep.subr.bf16.mxu0 %v7338
      %8656 = vmatpush2.bf16.msra.mxu0 %v7337
      %8657 = vmatprep.subr.bf16.mxu0 %v7330
      %8658 = vmatpush2.bf16.msra.mxu0 %v7329
      %8659 = vmatprep.mubr.bf16.mxu0 %v8626
      %8660 = vmatmul.mubr.bf16.gmra.mxu0 %v8625
      %v8661 = vpop.f32.mrf.mxu0
      %v8662 = vadd.f32 0.0, %v8661
      %v8663 = vpop.f32.mrf.mxu0
      %v8664 = vadd.f32 0.0, %v8663
      %v8665 = vpop.f32.mrf.mxu0
      %v8666 = vpop.f32.mrf.mxu0
      %8667 = vdwg.mxu0
      %8668 = vmatprep.subr.bf16.mxu0 %v7324
      %8669 = vmatpush1.bf16.msra.mxu0 %v7323
      %8670 = vmatprep.subr.bf16.mxu0 %v7316
      %8671 = vmatpush1.bf16.msra.mxu0 %v7315
      %8672 = vmatprep.subr.bf16.mxu0 %v7308
      %8673 = vmatpush1.bf16.msra.mxu0 %v7307
      %8674 = vmatprep.subr.bf16.mxu0 %v7300
      %8675 = vmatpush1.bf16.msra.mxu0 %v7299
      %8676 = vmatprep.subr.bf16.mxu0 %v7292
      %8677 = vmatpush1.bf16.msra.mxu0 %v7291
      %8678 = vmatprep.subr.bf16.mxu0 %v7284
      %8679 = vmatpush1.bf16.msra.mxu0 %v7283
      %8680 = vmatprep.subr.bf16.mxu0 %v7276
      %8681 = vmatpush1.bf16.msra.mxu0 %v7275
      %8682 = vmatprep.subr.bf16.mxu0 %v7268
      %8683 = vmatpush1.bf16.msra.mxu0 %v7267
      %8684 = vmatprep.subr.bf16.mxu0 %v7388
      %8685 = vmatpush2.bf16.msra.mxu0 %v7387
      %8686 = vmatprep.subr.bf16.mxu0 %v7380
      %8687 = vmatpush2.bf16.msra.mxu0 %v7379
      %8688 = vmatprep.subr.bf16.mxu0 %v7372
      %8689 = vmatpush2.bf16.msra.mxu0 %v7371
      %8690 = vmatprep.subr.bf16.mxu0 %v7364
      %8691 = vmatpush2.bf16.msra.mxu0 %v7363
      %8692 = vmatprep.subr.bf16.mxu0 %v7356
      %8693 = vmatpush2.bf16.msra.mxu0 %v7355
      %8694 = vmatprep.subr.bf16.mxu0 %v7348
      %8695 = vmatpush2.bf16.msra.mxu0 %v7347
      %8696 = vmatprep.subr.bf16.mxu0 %v7340
      %8697 = vmatpush2.bf16.msra.mxu0 %v7339
      %8698 = vmatprep.subr.bf16.mxu0 %v7332
      %8699 = vmatpush2.bf16.msra.mxu0 %v7331
      %8700 = vmatprep.mubr.bf16.mxu0 %v8626
      %8701 = vmatmul.mubr.bf16.gmra.mxu0 %v8625
      %v8702 = vpop.f32.mrf.mxu0
      %v8703 = vadd.f32 0.0, %v8702
      %v8704 = vpop.f32.mrf.mxu0
      %v8705 = vadd.f32 0.0, %v8704
      %v8706 = vpop.f32.mrf.mxu0
      %v8707 = vpop.f32.mrf.mxu0
      %8708 = vdwg.mxu0
      %8709 = vmatprep.subr.bf16.mxu0 %v7326
      %8710 = vmatpush1.bf16.msra.mxu0 %v7325
      %8711 = vmatprep.subr.bf16.mxu0 %v7318
      %8712 = vmatpush1.bf16.msra.mxu0 %v7317
      %8713 = vmatprep.subr.bf16.mxu0 %v7310
      %8714 = vmatpush1.bf16.msra.mxu0 %v7309
      %8715 = vmatprep.subr.bf16.mxu0 %v7302
      %8716 = vmatpush1.bf16.msra.mxu0 %v7301
      %8717 = vmatprep.subr.bf16.mxu0 %v7294
      %8718 = vmatpush1.bf16.msra.mxu0 %v7293
      %8719 = vmatprep.subr.bf16.mxu0 %v7286
      %8720 = vmatpush1.bf16.msra.mxu0 %v7285
      %8721 = vmatprep.subr.bf16.mxu0 %v7278
      %8722 = vmatpush1.bf16.msra.mxu0 %v7277
      %8723 = vmatprep.subr.bf16.mxu0 %v7270
      %8724 = vmatpush1.bf16.msra.mxu0 %v7269
      %8725 = vmatprep.subr.bf16.mxu0 %v7390
      %8726 = vmatpush2.bf16.msra.mxu0 %v7389
      %8727 = vmatprep.subr.bf16.mxu0 %v7382
      %8728 = vmatpush2.bf16.msra.mxu0 %v7381
      %8729 = vmatprep.subr.bf16.mxu0 %v7374
      %8730 = vmatpush2.bf16.msra.mxu0 %v7373
      %8731 = vmatprep.subr.bf16.mxu0 %v7366
      %8732 = vmatpush2.bf16.msra.mxu0 %v7365
      %8733 = vmatprep.subr.bf16.mxu0 %v7358
      %8734 = vmatpush2.bf16.msra.mxu0 %v7357
      %8735 = vmatprep.subr.bf16.mxu0 %v7350
      %8736 = vmatpush2.bf16.msra.mxu0 %v7349
      %8737 = vmatprep.subr.bf16.mxu0 %v7342
      %8738 = vmatpush2.bf16.msra.mxu0 %v7341
      %8739 = vmatprep.subr.bf16.mxu0 %v7334
      %8740 = vmatpush2.bf16.msra.mxu0 %v7333
      %8741 = vmatprep.mubr.bf16.mxu0 %v8626
      %8742 = vmatmul.mubr.bf16.gmra.mxu0 %v8625
      %v8743 = vpop.f32.mrf.mxu0
      %v8744 = vadd.f32 0.0, %v8743
      %v8745 = vpop.f32.mrf.mxu0
      %v8746 = vadd.f32 0.0, %v8745
      %v8747 = vpop.f32.mrf.mxu0
      %v8748 = vpop.f32.mrf.mxu0
      %8749 = vdwg.mxu0
      %8750 = vmatprep.subr.bf16.mxu0 %v7328
      %8751 = vmatpush1.bf16.msra.mxu0 %v7327
      %8752 = vmatprep.subr.bf16.mxu0 %v7320
      %8753 = vmatpush1.bf16.msra.mxu0 %v7319
      %8754 = vmatprep.subr.bf16.mxu0 %v7312
      %8755 = vmatpush1.bf16.msra.mxu0 %v7311
      %8756 = vmatprep.subr.bf16.mxu0 %v7304
      %8757 = vmatpush1.bf16.msra.mxu0 %v7303
      %8758 = vmatprep.subr.bf16.mxu0 %v7296
      %8759 = vmatpush1.bf16.msra.mxu0 %v7295
      %8760 = vmatprep.subr.bf16.mxu0 %v7288
      %8761 = vmatpush1.bf16.msra.mxu0 %v7287
      %8762 = vmatprep.subr.bf16.mxu0 %v7280
      %8763 = vmatpush1.bf16.msra.mxu0 %v7279
      %8764 = vmatprep.subr.bf16.mxu0 %v7272
      %8765 = vmatpush1.bf16.msra.mxu0 %v7271
      %8766 = vmatprep.subr.bf16.mxu0 %v7392
      %8767 = vmatpush2.bf16.msra.mxu0 %v7391
      %8768 = vmatprep.subr.bf16.mxu0 %v7384
      %8769 = vmatpush2.bf16.msra.mxu0 %v7383
      %8770 = vmatprep.subr.bf16.mxu0 %v7376
      %8771 = vmatpush2.bf16.msra.mxu0 %v7375
      %8772 = vmatprep.subr.bf16.mxu0 %v7368
      %8773 = vmatpush2.bf16.msra.mxu0 %v7367
      %8774 = vmatprep.subr.bf16.mxu0 %v7360
      %8775 = vmatpush2.bf16.msra.mxu0 %v7359
      %8776 = vmatprep.subr.bf16.mxu0 %v7352
      %8777 = vmatpush2.bf16.msra.mxu0 %v7351
      %8778 = vmatprep.subr.bf16.mxu0 %v7344
      %8779 = vmatpush2.bf16.msra.mxu0 %v7343
      %8780 = vmatprep.subr.bf16.mxu0 %v7336
      %8781 = vmatpush2.bf16.msra.mxu0 %v7335
      %8782 = vmatprep.mubr.bf16.mxu0 %v8626
      %8783 = vmatmul.mubr.bf16.gmra.mxu0 %v8625
      %v8784 = vpop.f32.mrf.mxu0
      %v8785 = vadd.f32 0.0, %v8784
      %v8786 = vpop.f32.mrf.mxu0
      %v8787 = vadd.f32 0.0, %v8786
      %v8788 = vpop.f32.mrf.mxu0
      %v8789 = vpop.f32.mrf.mxu0
      %8790 = vdwg.mxu0
      %v8791 = vadd.f32 %v8606, %v8662
      %v8792 = vadd.f32 %v8607, %v8664
      %v8793 = vadd.f32 %v8608, %v8703
      %v8794 = vadd.f32 %v8609, %v8705
      %v8795 = vadd.f32 %v8610, %v8744
      %v8796 = vadd.f32 %v8611, %v8746
      %v8797 = vadd.f32 %v8612, %v8785
      %v8798 = vadd.f32 %v8613, %v8787
      %v8799 = vxor.u32 %v8791, 2147483648
      %v8800 = vxor.u32 %v8792, 2147483648
      %v8801 = vmul.f32 %v8799, 1.442695
      %v8802 = vpow.pop %v8801
      %v8803 = vmul.f32 %v8800, 1.442695
      %v8804 = vpow.pop %v8803
      %v8805 = vadd.f32 %v8802, 1.0
      %v8806 = vadd.f32 %v8804, 1.0
      %v8807 = vrcp.pop %v8805
      %v8808 = vmul.f32 1.0, %v8807
      %v8809 = vrcp.pop %v8806
      %v8810 = vmul.f32 1.0, %v8809
      %v8811 = vxor.u32 %v8793, 2147483648
      %v8812 = vxor.u32 %v8794, 2147483648
      %v8813 = vmul.f32 %v8811, 1.442695
      %v8814 = vpow.pop %v8813
      %v8815 = vmul.f32 %v8812, 1.442695
      %v8816 = vpow.pop %v8815
      %v8817 = vadd.f32 %v8814, 1.0
      %v8818 = vadd.f32 %v8816, 1.0
      %v8819 = vrcp.pop %v8817
      %v8820 = vmul.f32 1.0, %v8819
      %v8821 = vrcp.pop %v8818
      %v8822 = vmul.f32 1.0, %v8821
      %v8823 = vtanh.pop %v8795
      %v8824 = vtanh.pop %v8796
      %v8825 = vxor.u32 %v8797, 2147483648
      %v8826 = vxor.u32 %v8798, 2147483648
      %v8827 = vmul.f32 %v8825, 1.442695
      %v8828 = vpow.pop %v8827
      %v8829 = vmul.f32 %v8826, 1.442695
      %v8830 = vpow.pop %v8829
      %v8831 = vadd.f32 %v8828, 1.0
      %v8832 = vadd.f32 %v8830, 1.0
      %v8833 = vrcp.pop %v8831
      %v8834 = vmul.f32 1.0, %v8833
      %v8835 = vrcp.pop %v8832
      %v8836 = vmul.f32 1.0, %v8835
      %v8837 = vmul.f32 %v8820, %v7735
      %v8838 = vmul.f32 %v8822, %v7736
      %v8839 = vmul.f32 %v8808, %v8823
      %v8840 = vmul.f32 %v8810, %v8824
      %v8841 = vadd.f32 %v8837, %v8839
      %v8842 = vadd.f32 %v8838, %v8840
      %v8843 = vtanh.pop %v8841
      %v8844 = vtanh.pop %v8842
      %v8845 = vmul.f32 %v8834, %v8843
      %v8846 = vmul.f32 %v8836, %v8844
      %v8847 = vpack.c.bf16 %v8601, %v8601
      %v8848 = vpack.c.bf16 %v8602, %v8602
      %8849 = vmatprep.subr.bf16.mxu0 %v8184
      %8850 = vmatpush1.bf16.msra.mxu0 %v8183
      %8851 = vmatprep.subr.bf16.mxu0 %v8176
      %8852 = vmatpush1.bf16.msra.mxu0 %v8175
      %8853 = vmatprep.subr.bf16.mxu0 %v8168
      %8854 = vmatpush1.bf16.msra.mxu0 %v8167
      %8855 = vmatprep.subr.bf16.mxu0 %v8160
      %8856 = vmatpush1.bf16.msra.mxu0 %v8159
      %8857 = vmatprep.subr.bf16.mxu0 %v8152
      %8858 = vmatpush1.bf16.msra.mxu0 %v8151
      %8859 = vmatprep.subr.bf16.mxu0 %v8144
      %8860 = vmatpush1.bf16.msra.mxu0 %v8143
      %8861 = vmatprep.subr.bf16.mxu0 %v8136
      %8862 = vmatpush1.bf16.msra.mxu0 %v8135
      %8863 = vmatprep.subr.bf16.mxu0 %v8128
      %8864 = vmatpush1.bf16.msra.mxu0 %v8127
      %8865 = vmatprep.subr.bf16.mxu0 %v8248
      %8866 = vmatpush2.bf16.msra.mxu0 %v8247
      %8867 = vmatprep.subr.bf16.mxu0 %v8240
      %8868 = vmatpush2.bf16.msra.mxu0 %v8239
      %8869 = vmatprep.subr.bf16.mxu0 %v8232
      %8870 = vmatpush2.bf16.msra.mxu0 %v8231
      %8871 = vmatprep.subr.bf16.mxu0 %v8224
      %8872 = vmatpush2.bf16.msra.mxu0 %v8223
      %8873 = vmatprep.subr.bf16.mxu0 %v8216
      %8874 = vmatpush2.bf16.msra.mxu0 %v8215
      %8875 = vmatprep.subr.bf16.mxu0 %v8208
      %8876 = vmatpush2.bf16.msra.mxu0 %v8207
      %8877 = vmatprep.subr.bf16.mxu0 %v8200
      %8878 = vmatpush2.bf16.msra.mxu0 %v8199
      %8879 = vmatprep.subr.bf16.mxu0 %v8192
      %8880 = vmatpush2.bf16.msra.mxu0 %v8191
      %8881 = vmatprep.mubr.bf16.mxu0 %v8848
      %8882 = vmatmul.mubr.bf16.gmra.mxu0 %v8847
      %v8883 = vpop.f32.mrf.mxu0
      %v8884 = vadd.f32 0.0, %v8883
      %v8885 = vpop.f32.mrf.mxu0
      %v8886 = vadd.f32 0.0, %v8885
      %v8887 = vpop.f32.mrf.mxu0
      %v8888 = vpop.f32.mrf.mxu0
      %8889 = vdwg.mxu0
      %8890 = vmatprep.subr.bf16.mxu0 %v8186
      %8891 = vmatpush1.bf16.msra.mxu0 %v8185
      %8892 = vmatprep.subr.bf16.mxu0 %v8178
      %8893 = vmatpush1.bf16.msra.mxu0 %v8177
      %8894 = vmatprep.subr.bf16.mxu0 %v8170
      %8895 = vmatpush1.bf16.msra.mxu0 %v8169
      %8896 = vmatprep.subr.bf16.mxu0 %v8162
      %8897 = vmatpush1.bf16.msra.mxu0 %v8161
      %8898 = vmatprep.subr.bf16.mxu0 %v8154
      %8899 = vmatpush1.bf16.msra.mxu0 %v8153
      %8900 = vmatprep.subr.bf16.mxu0 %v8146
      %8901 = vmatpush1.bf16.msra.mxu0 %v8145
      %8902 = vmatprep.subr.bf16.mxu0 %v8138
      %8903 = vmatpush1.bf16.msra.mxu0 %v8137
      %8904 = vmatprep.subr.bf16.mxu0 %v8130
      %8905 = vmatpush1.bf16.msra.mxu0 %v8129
      %8906 = vmatprep.subr.bf16.mxu0 %v8250
      %8907 = vmatpush2.bf16.msra.mxu0 %v8249
      %8908 = vmatprep.subr.bf16.mxu0 %v8242
      %8909 = vmatpush2.bf16.msra.mxu0 %v8241
      %8910 = vmatprep.subr.bf16.mxu0 %v8234
      %8911 = vmatpush2.bf16.msra.mxu0 %v8233
      %8912 = vmatprep.subr.bf16.mxu0 %v8226
      %8913 = vmatpush2.bf16.msra.mxu0 %v8225
      %8914 = vmatprep.subr.bf16.mxu0 %v8218
      %8915 = vmatpush2.bf16.msra.mxu0 %v8217
      %8916 = vmatprep.subr.bf16.mxu0 %v8210
      %8917 = vmatpush2.bf16.msra.mxu0 %v8209
      %8918 = vmatprep.subr.bf16.mxu0 %v8202
      %8919 = vmatpush2.bf16.msra.mxu0 %v8201
      %8920 = vmatprep.subr.bf16.mxu0 %v8194
      %8921 = vmatpush2.bf16.msra.mxu0 %v8193
      %8922 = vmatprep.mubr.bf16.mxu0 %v8848
      %8923 = vmatmul.mubr.bf16.gmra.mxu0 %v8847
      %v8924 = vpop.f32.mrf.mxu0
      %v8925 = vadd.f32 0.0, %v8924
      %v8926 = vpop.f32.mrf.mxu0
      %v8927 = vadd.f32 0.0, %v8926
      %v8928 = vpop.f32.mrf.mxu0
      %v8929 = vpop.f32.mrf.mxu0
      %8930 = vdwg.mxu0
      %8931 = vmatprep.subr.bf16.mxu0 %v8188
      %8932 = vmatpush1.bf16.msra.mxu0 %v8187
      %8933 = vmatprep.subr.bf16.mxu0 %v8180
      %8934 = vmatpush1.bf16.msra.mxu0 %v8179
      %8935 = vmatprep.subr.bf16.mxu0 %v8172
      %8936 = vmatpush1.bf16.msra.mxu0 %v8171
      %8937 = vmatprep.subr.bf16.mxu0 %v8164
      %8938 = vmatpush1.bf16.msra.mxu0 %v8163
      %8939 = vmatprep.subr.bf16.mxu0 %v8156
      %8940 = vmatpush1.bf16.msra.mxu0 %v8155
      %8941 = vmatprep.subr.bf16.mxu0 %v8148
      %8942 = vmatpush1.bf16.msra.mxu0 %v8147
      %8943 = vmatprep.subr.bf16.mxu0 %v8140
      %8944 = vmatpush1.bf16.msra.mxu0 %v8139
      %8945 = vmatprep.subr.bf16.mxu0 %v8132
      %8946 = vmatpush1.bf16.msra.mxu0 %v8131
      %8947 = vmatprep.subr.bf16.mxu0 %v8252
      %8948 = vmatpush2.bf16.msra.mxu0 %v8251
      %8949 = vmatprep.subr.bf16.mxu0 %v8244
      %8950 = vmatpush2.bf16.msra.mxu0 %v8243
      %8951 = vmatprep.subr.bf16.mxu0 %v8236
      %8952 = vmatpush2.bf16.msra.mxu0 %v8235
      %8953 = vmatprep.subr.bf16.mxu0 %v8228
      %8954 = vmatpush2.bf16.msra.mxu0 %v8227
      %8955 = vmatprep.subr.bf16.mxu0 %v8220
      %8956 = vmatpush2.bf16.msra.mxu0 %v8219
      %8957 = vmatprep.subr.bf16.mxu0 %v8212
      %8958 = vmatpush2.bf16.msra.mxu0 %v8211
      %8959 = vmatprep.subr.bf16.mxu0 %v8204
      %8960 = vmatpush2.bf16.msra.mxu0 %v8203
      %8961 = vmatprep.subr.bf16.mxu0 %v8196
      %8962 = vmatpush2.bf16.msra.mxu0 %v8195
      %8963 = vmatprep.mubr.bf16.mxu0 %v8848
      %8964 = vmatmul.mubr.bf16.gmra.mxu0 %v8847
      %v8965 = vpop.f32.mrf.mxu0
      %v8966 = vadd.f32 0.0, %v8965
      %v8967 = vpop.f32.mrf.mxu0
      %v8968 = vadd.f32 0.0, %v8967
      %v8969 = vpop.f32.mrf.mxu0
      %v8970 = vpop.f32.mrf.mxu0
      %8971 = vdwg.mxu0
      %8972 = vmatprep.subr.bf16.mxu0 %v8190
      %8973 = vmatpush1.bf16.msra.mxu0 %v8189
      %8974 = vmatprep.subr.bf16.mxu0 %v8182
      %8975 = vmatpush1.bf16.msra.mxu0 %v8181
      %8976 = vmatprep.subr.bf16.mxu0 %v8174
      %8977 = vmatpush1.bf16.msra.mxu0 %v8173
      %8978 = vmatprep.subr.bf16.mxu0 %v8166
      %8979 = vmatpush1.bf16.msra.mxu0 %v8165
      %8980 = vmatprep.subr.bf16.mxu0 %v8158
      %8981 = vmatpush1.bf16.msra.mxu0 %v8157
      %8982 = vmatprep.subr.bf16.mxu0 %v8150
      %8983 = vmatpush1.bf16.msra.mxu0 %v8149
      %8984 = vmatprep.subr.bf16.mxu0 %v8142
      %8985 = vmatpush1.bf16.msra.mxu0 %v8141
      %8986 = vmatprep.subr.bf16.mxu0 %v8134
      %8987 = vmatpush1.bf16.msra.mxu0 %v8133
      %8988 = vmatprep.subr.bf16.mxu0 %v8254
      %8989 = vmatpush2.bf16.msra.mxu0 %v8253
      %8990 = vmatprep.subr.bf16.mxu0 %v8246
      %8991 = vmatpush2.bf16.msra.mxu0 %v8245
      %8992 = vmatprep.subr.bf16.mxu0 %v8238
      %8993 = vmatpush2.bf16.msra.mxu0 %v8237
      %8994 = vmatprep.subr.bf16.mxu0 %v8230
      %8995 = vmatpush2.bf16.msra.mxu0 %v8229
      %8996 = vmatprep.subr.bf16.mxu0 %v8222
      %8997 = vmatpush2.bf16.msra.mxu0 %v8221
      %8998 = vmatprep.subr.bf16.mxu0 %v8214
      %8999 = vmatpush2.bf16.msra.mxu0 %v8213
      %9000 = vmatprep.subr.bf16.mxu0 %v8206
      %9001 = vmatpush2.bf16.msra.mxu0 %v8205
      %9002 = vmatprep.subr.bf16.mxu0 %v8198
      %9003 = vmatpush2.bf16.msra.mxu0 %v8197
      %9004 = vmatprep.mubr.bf16.mxu0 %v8848
      %9005 = vmatmul.mubr.bf16.gmra.mxu0 %v8847
      %v9006 = vpop.f32.mrf.mxu0
      %v9007 = vadd.f32 0.0, %v9006
      %v9008 = vpop.f32.mrf.mxu0
      %v9009 = vadd.f32 0.0, %v9008
      %v9010 = vpop.f32.mrf.mxu0
      %v9011 = vpop.f32.mrf.mxu0
      %9012 = vdwg.mxu0
      %v9013 = vadd.f32 %v8617, %v8884
      %v9014 = vadd.f32 %v8618, %v8886
      %v9015 = vadd.f32 %v8619, %v8925
      %v9016 = vadd.f32 %v8620, %v8927
      %v9017 = vadd.f32 %v8621, %v8966
      %v9018 = vadd.f32 %v8622, %v8968
      %v9019 = vadd.f32 %v8623, %v9007
      %v9020 = vadd.f32 %v8624, %v9009
      %v9021 = vxor.u32 %v9013, 2147483648
      %v9022 = vxor.u32 %v9014, 2147483648
      %v9023 = vmul.f32 %v9021, 1.442695
      %v9024 = vpow.pop %v9023
      %v9025 = vmul.f32 %v9022, 1.442695
      %v9026 = vpow.pop %v9025
      %v9027 = vadd.f32 %v9024, 1.0
      %v9028 = vadd.f32 %v9026, 1.0
      %v9029 = vrcp.pop %v9027
      %v9030 = vmul.f32 1.0, %v9029
      %v9031 = vrcp.pop %v9028
      %v9032 = vmul.f32 1.0, %v9031
      %v9033 = vxor.u32 %v9015, 2147483648
      %v9034 = vxor.u32 %v9016, 2147483648
      %v9035 = vmul.f32 %v9033, 1.442695
      %v9036 = vpow.pop %v9035
      %v9037 = vmul.f32 %v9034, 1.442695
      %v9038 = vpow.pop %v9037
      %v9039 = vadd.f32 %v9036, 1.0
      %v9040 = vadd.f32 %v9038, 1.0
      %v9041 = vrcp.pop %v9039
      %v9042 = vmul.f32 1.0, %v9041
      %v9043 = vrcp.pop %v9040
      %v9044 = vmul.f32 1.0, %v9043
      %v9045 = vtanh.pop %v9017
      %v9046 = vtanh.pop %v9018
      %v9047 = vxor.u32 %v9019, 2147483648
      %v9048 = vxor.u32 %v9020, 2147483648
      %v9049 = vmul.f32 %v9047, 1.442695
      %v9050 = vpow.pop %v9049
      %v9051 = vmul.f32 %v9048, 1.442695
      %v9052 = vpow.pop %v9051
      %v9053 = vadd.f32 %v9050, 1.0
      %v9054 = vadd.f32 %v9052, 1.0
      %v9055 = vrcp.pop %v9053
      %v9056 = vmul.f32 1.0, %v9055
      %v9057 = vrcp.pop %v9054
      %v9058 = vmul.f32 1.0, %v9057
      %v9059 = vmul.f32 %v9042, %v8597
      %v9060 = vmul.f32 %v9044, %v8598
      %v9061 = vmul.f32 %v9030, %v9045
      %v9062 = vmul.f32 %v9032, %v9046
      %v9063 = vadd.f32 %v9059, %v9061
      %v9064 = vadd.f32 %v9060, %v9062
      %v9065 = vtanh.pop %v9063
      %v9066 = vtanh.pop %v9064
      %v9067 = vmul.f32 %v9056, %v9065
      %v9068 = vmul.f32 %v9058, %v9066
      %s9069 = smul.addr %s8614, 8
      %s9070 = scalar_lea.vmem [#allocation2], %s9069
      %v9071 = vld [vmem:[%s9070] sm:$0xff]
      %v9072 = vld [vmem:[%s9070 + $0x8] sm:$0xff]
      %v9073 = vld [vmem:[%s9070 + $0x10] sm:$0xff]
      %v9074 = vld [vmem:[%s9070 + $0x18] sm:$0xff]
      %v9075 = vld [vmem:[%s9070 + $0x20] sm:$0xff]
      %v9076 = vld [vmem:[%s9070 + $0x28] sm:$0xff]
      %v9077 = vld [vmem:[%s9070 + $0x30] sm:$0xff]
      %v9078 = vld [vmem:[%s9070 + $0x38] sm:$0xff]
      %s9079 = smul.addr %s8603, 8
      %s9080 = scalar_lea.vmem [#allocation3], %s9079
      %v9081 = vld [vmem:[%s9080] sm:$0xff]
      %v9082 = vld [vmem:[%s9080 + $0x8] sm:$0xff]
      %v9083 = vld [vmem:[%s9080 + $0x10] sm:$0xff]
      %v9084 = vld [vmem:[%s9080 + $0x18] sm:$0xff]
      %v9085 = vld [vmem:[%s9080 + $0x20] sm:$0xff]
      %v9086 = vld [vmem:[%s9080 + $0x28] sm:$0xff]
      %v9087 = vld [vmem:[%s9080 + $0x30] sm:$0xff]
      %v9088 = vld [vmem:[%s9080 + $0x38] sm:$0xff]
      %v9089 = vpack.c.bf16 %v8845, %v8845
      %v9090 = vpack.c.bf16 %v8846, %v8846
      %9091 = vmatprep.subr.bf16.mxu0 %v7322
      %9092 = vmatpush1.bf16.msra.mxu0 %v7321
      %9093 = vmatprep.subr.bf16.mxu0 %v7314
      %9094 = vmatpush1.bf16.msra.mxu0 %v7313
      %9095 = vmatprep.subr.bf16.mxu0 %v7306
      %9096 = vmatpush1.bf16.msra.mxu0 %v7305
      %9097 = vmatprep.subr.bf16.mxu0 %v7298
      %9098 = vmatpush1.bf16.msra.mxu0 %v7297
      %9099 = vmatprep.subr.bf16.mxu0 %v7290
      %9100 = vmatpush1.bf16.msra.mxu0 %v7289
      %9101 = vmatprep.subr.bf16.mxu0 %v7282
      %9102 = vmatpush1.bf16.msra.mxu0 %v7281
      %9103 = vmatprep.subr.bf16.mxu0 %v7274
      %9104 = vmatpush1.bf16.msra.mxu0 %v7273
      %9105 = vmatprep.subr.bf16.mxu0 %v7266
      %9106 = vmatpush1.bf16.msra.mxu0 %v7265
      %9107 = vmatprep.subr.bf16.mxu0 %v7386
      %9108 = vmatpush2.bf16.msra.mxu0 %v7385
      %9109 = vmatprep.subr.bf16.mxu0 %v7378
      %9110 = vmatpush2.bf16.msra.mxu0 %v7377
      %9111 = vmatprep.subr.bf16.mxu0 %v7370
      %9112 = vmatpush2.bf16.msra.mxu0 %v7369
      %9113 = vmatprep.subr.bf16.mxu0 %v7362
      %9114 = vmatpush2.bf16.msra.mxu0 %v7361
      %9115 = vmatprep.subr.bf16.mxu0 %v7354
      %9116 = vmatpush2.bf16.msra.mxu0 %v7353
      %9117 = vmatprep.subr.bf16.mxu0 %v7346
      %9118 = vmatpush2.bf16.msra.mxu0 %v7345
      %9119 = vmatprep.subr.bf16.mxu0 %v7338
      %9120 = vmatpush2.bf16.msra.mxu0 %v7337
      %9121 = vmatprep.subr.bf16.mxu0 %v7330
      %9122 = vmatpush2.bf16.msra.mxu0 %v7329
      %9123 = vmatprep.mubr.bf16.mxu0 %v9090
      %9124 = vmatmul.mubr.bf16.gmra.mxu0 %v9089
      %v9125 = vpop.f32.mrf.mxu0
      %v9126 = vadd.f32 0.0, %v9125
      %v9127 = vpop.f32.mrf.mxu0
      %v9128 = vadd.f32 0.0, %v9127
      %v9129 = vpop.f32.mrf.mxu0
      %v9130 = vpop.f32.mrf.mxu0
      %9131 = vdwg.mxu0
      %9132 = vmatprep.subr.bf16.mxu0 %v7324
      %9133 = vmatpush1.bf16.msra.mxu0 %v7323
      %9134 = vmatprep.subr.bf16.mxu0 %v7316
      %9135 = vmatpush1.bf16.msra.mxu0 %v7315
      %9136 = vmatprep.subr.bf16.mxu0 %v7308
      %9137 = vmatpush1.bf16.msra.mxu0 %v7307
      %9138 = vmatprep.subr.bf16.mxu0 %v7300
      %9139 = vmatpush1.bf16.msra.mxu0 %v7299
      %9140 = vmatprep.subr.bf16.mxu0 %v7292
      %9141 = vmatpush1.bf16.msra.mxu0 %v7291
      %9142 = vmatprep.subr.bf16.mxu0 %v7284
      %9143 = vmatpush1.bf16.msra.mxu0 %v7283
      %9144 = vmatprep.subr.bf16.mxu0 %v7276
      %9145 = vmatpush1.bf16.msra.mxu0 %v7275
      %9146 = vmatprep.subr.bf16.mxu0 %v7268
      %9147 = vmatpush1.bf16.msra.mxu0 %v7267
      %9148 = vmatprep.subr.bf16.mxu0 %v7388
      %9149 = vmatpush2.bf16.msra.mxu0 %v7387
      %9150 = vmatprep.subr.bf16.mxu0 %v7380
      %9151 = vmatpush2.bf16.msra.mxu0 %v7379
      %9152 = vmatprep.subr.bf16.mxu0 %v7372
      %9153 = vmatpush2.bf16.msra.mxu0 %v7371
      %9154 = vmatprep.subr.bf16.mxu0 %v7364
      %9155 = vmatpush2.bf16.msra.mxu0 %v7363
      %9156 = vmatprep.subr.bf16.mxu0 %v7356
      %9157 = vmatpush2.bf16.msra.mxu0 %v7355
      %9158 = vmatprep.subr.bf16.mxu0 %v7348
      %9159 = vmatpush2.bf16.msra.mxu0 %v7347
      %9160 = vmatprep.subr.bf16.mxu0 %v7340
      %9161 = vmatpush2.bf16.msra.mxu0 %v7339
      %9162 = vmatprep.subr.bf16.mxu0 %v7332
      %9163 = vmatpush2.bf16.msra.mxu0 %v7331
      %9164 = vmatprep.mubr.bf16.mxu0 %v9090
      %9165 = vmatmul.mubr.bf16.gmra.mxu0 %v9089
      %v9166 = vpop.f32.mrf.mxu0
      %v9167 = vadd.f32 0.0, %v9166
      %v9168 = vpop.f32.mrf.mxu0
      %v9169 = vadd.f32 0.0, %v9168
      %v9170 = vpop.f32.mrf.mxu0
      %v9171 = vpop.f32.mrf.mxu0
      %9172 = vdwg.mxu0
      %9173 = vmatprep.subr.bf16.mxu0 %v7326
      %9174 = vmatpush1.bf16.msra.mxu0 %v7325
      %9175 = vmatprep.subr.bf16.mxu0 %v7318
      %9176 = vmatpush1.bf16.msra.mxu0 %v7317
      %9177 = vmatprep.subr.bf16.mxu0 %v7310
      %9178 = vmatpush1.bf16.msra.mxu0 %v7309
      %9179 = vmatprep.subr.bf16.mxu0 %v7302
      %9180 = vmatpush1.bf16.msra.mxu0 %v7301
      %9181 = vmatprep.subr.bf16.mxu0 %v7294
      %9182 = vmatpush1.bf16.msra.mxu0 %v7293
      %9183 = vmatprep.subr.bf16.mxu0 %v7286
      %9184 = vmatpush1.bf16.msra.mxu0 %v7285
      %9185 = vmatprep.subr.bf16.mxu0 %v7278
      %9186 = vmatpush1.bf16.msra.mxu0 %v7277
      %9187 = vmatprep.subr.bf16.mxu0 %v7270
      %9188 = vmatpush1.bf16.msra.mxu0 %v7269
      %9189 = vmatprep.subr.bf16.mxu0 %v7390
      %9190 = vmatpush2.bf16.msra.mxu0 %v7389
      %9191 = vmatprep.subr.bf16.mxu0 %v7382
      %9192 = vmatpush2.bf16.msra.mxu0 %v7381
      %9193 = vmatprep.subr.bf16.mxu0 %v7374
      %9194 = vmatpush2.bf16.msra.mxu0 %v7373
      %9195 = vmatprep.subr.bf16.mxu0 %v7366
      %9196 = vmatpush2.bf16.msra.mxu0 %v7365
      %9197 = vmatprep.subr.bf16.mxu0 %v7358
      %9198 = vmatpush2.bf16.msra.mxu0 %v7357
      %9199 = vmatprep.subr.bf16.mxu0 %v7350
      %9200 = vmatpush2.bf16.msra.mxu0 %v7349
      %9201 = vmatprep.subr.bf16.mxu0 %v7342
      %9202 = vmatpush2.bf16.msra.mxu0 %v7341
      %9203 = vmatprep.subr.bf16.mxu0 %v7334
      %9204 = vmatpush2.bf16.msra.mxu0 %v7333
      %9205 = vmatprep.mubr.bf16.mxu0 %v9090
      %9206 = vmatmul.mubr.bf16.gmra.mxu0 %v9089
      %v9207 = vpop.f32.mrf.mxu0
      %v9208 = vadd.f32 0.0, %v9207
      %v9209 = vpop.f32.mrf.mxu0
      %v9210 = vadd.f32 0.0, %v9209
      %v9211 = vpop.f32.mrf.mxu0
      %v9212 = vpop.f32.mrf.mxu0
      %9213 = vdwg.mxu0
      %9214 = vmatprep.subr.bf16.mxu0 %v7328
      %9215 = vmatpush1.bf16.msra.mxu0 %v7327
      %9216 = vmatprep.subr.bf16.mxu0 %v7320
      %9217 = vmatpush1.bf16.msra.mxu0 %v7319
      %9218 = vmatprep.subr.bf16.mxu0 %v7312
      %9219 = vmatpush1.bf16.msra.mxu0 %v7311
      %9220 = vmatprep.subr.bf16.mxu0 %v7304
      %9221 = vmatpush1.bf16.msra.mxu0 %v7303
      %9222 = vmatprep.subr.bf16.mxu0 %v7296
      %9223 = vmatpush1.bf16.msra.mxu0 %v7295
      %9224 = vmatprep.subr.bf16.mxu0 %v7288
      %9225 = vmatpush1.bf16.msra.mxu0 %v7287
      %9226 = vmatprep.subr.bf16.mxu0 %v7280
      %9227 = vmatpush1.bf16.msra.mxu0 %v7279
      %9228 = vmatprep.subr.bf16.mxu0 %v7272
      %9229 = vmatpush1.bf16.msra.mxu0 %v7271
      %9230 = vmatprep.subr.bf16.mxu0 %v7392
      %9231 = vmatpush2.bf16.msra.mxu0 %v7391
      %9232 = vmatprep.subr.bf16.mxu0 %v7384
      %9233 = vmatpush2.bf16.msra.mxu0 %v7383
      %9234 = vmatprep.subr.bf16.mxu0 %v7376
      %9235 = vmatpush2.bf16.msra.mxu0 %v7375
      %9236 = vmatprep.subr.bf16.mxu0 %v7368
      %9237 = vmatpush2.bf16.msra.mxu0 %v7367
      %9238 = vmatprep.subr.bf16.mxu0 %v7360
      %9239 = vmatpush2.bf16.msra.mxu0 %v7359
      %9240 = vmatprep.subr.bf16.mxu0 %v7352
      %9241 = vmatpush2.bf16.msra.mxu0 %v7351
      %9242 = vmatprep.subr.bf16.mxu0 %v7344
      %9243 = vmatpush2.bf16.msra.mxu0 %v7343
      %9244 = vmatprep.subr.bf16.mxu0 %v7336
      %9245 = vmatpush2.bf16.msra.mxu0 %v7335
      %9246 = vmatprep.mubr.bf16.mxu0 %v9090
      %9247 = vmatmul.mubr.bf16.gmra.mxu0 %v9089
      %v9248 = vpop.f32.mrf.mxu0
      %v9249 = vadd.f32 0.0, %v9248
      %v9250 = vpop.f32.mrf.mxu0
      %v9251 = vadd.f32 0.0, %v9250
      %v9252 = vpop.f32.mrf.mxu0
      %v9253 = vpop.f32.mrf.mxu0
      %9254 = vdwg.mxu0
      %v9255 = vadd.f32 %v9071, %v9126
      %v9256 = vadd.f32 %v9072, %v9128
      %v9257 = vadd.f32 %v9073, %v9167
      %v9258 = vadd.f32 %v9074, %v9169
      %v9259 = vadd.f32 %v9075, %v9208
      %v9260 = vadd.f32 %v9076, %v9210
      %v9261 = vadd.f32 %v9077, %v9249
      %v9262 = vadd.f32 %v9078, %v9251
      %v9263 = vxor.u32 %v9255, 2147483648
      %v9264 = vxor.u32 %v9256, 2147483648
      %v9265 = vmul.f32 %v9263, 1.442695
      %v9266 = vpow.pop %v9265
      %v9267 = vmul.f32 %v9264, 1.442695
      %v9268 = vpow.pop %v9267
      %v9269 = vadd.f32 %v9266, 1.0
      %v9270 = vadd.f32 %v9268, 1.0
      %v9271 = vrcp.pop %v9269
      %v9272 = vmul.f32 1.0, %v9271
      %v9273 = vrcp.pop %v9270
      %v9274 = vmul.f32 1.0, %v9273
      %v9275 = vxor.u32 %v9257, 2147483648
      %v9276 = vxor.u32 %v9258, 2147483648
      %v9277 = vmul.f32 %v9275, 1.442695
      %v9278 = vpow.pop %v9277
      %v9279 = vmul.f32 %v9276, 1.442695
      %v9280 = vpow.pop %v9279
      %v9281 = vadd.f32 %v9278, 1.0
      %v9282 = vadd.f32 %v9280, 1.0
      %v9283 = vrcp.pop %v9281
      %v9284 = vmul.f32 1.0, %v9283
      %v9285 = vrcp.pop %v9282
      %v9286 = vmul.f32 1.0, %v9285
      %v9287 = vtanh.pop %v9259
      %v9288 = vtanh.pop %v9260
      %v9289 = vxor.u32 %v9261, 2147483648
      %v9290 = vxor.u32 %v9262, 2147483648
      %v9291 = vmul.f32 %v9289, 1.442695
      %v9292 = vpow.pop %v9291
      %v9293 = vmul.f32 %v9290, 1.442695
      %v9294 = vpow.pop %v9293
      %v9295 = vadd.f32 %v9292, 1.0
      %v9296 = vadd.f32 %v9294, 1.0
      %v9297 = vrcp.pop %v9295
      %v9298 = vmul.f32 1.0, %v9297
      %v9299 = vrcp.pop %v9296
      %v9300 = vmul.f32 1.0, %v9299
      %v9301 = vmul.f32 %v9284, %v8841
      %v9302 = vmul.f32 %v9286, %v8842
      %v9303 = vmul.f32 %v9272, %v9287
      %v9304 = vmul.f32 %v9274, %v9288
      %v9305 = vadd.f32 %v9301, %v9303
      %v9306 = vadd.f32 %v9302, %v9304
      %v9307 = vtanh.pop %v9305
      %v9308 = vtanh.pop %v9306
      %v9309 = vmul.f32 %v9298, %v9307
      %v9310 = vmul.f32 %v9300, %v9308
      %v9311 = vpack.c.bf16 %v9067, %v9067
      %v9312 = vpack.c.bf16 %v9068, %v9068
      %9313 = vmatprep.subr.bf16.mxu0 %v8184
      %9314 = vmatpush1.bf16.msra.mxu0 %v8183
      %9315 = vmatprep.subr.bf16.mxu0 %v8176
      %9316 = vmatpush1.bf16.msra.mxu0 %v8175
      %9317 = vmatprep.subr.bf16.mxu0 %v8168
      %9318 = vmatpush1.bf16.msra.mxu0 %v8167
      %9319 = vmatprep.subr.bf16.mxu0 %v8160
      %9320 = vmatpush1.bf16.msra.mxu0 %v8159
      %9321 = vmatprep.subr.bf16.mxu0 %v8152
      %9322 = vmatpush1.bf16.msra.mxu0 %v8151
      %9323 = vmatprep.subr.bf16.mxu0 %v8144
      %9324 = vmatpush1.bf16.msra.mxu0 %v8143
      %9325 = vmatprep.subr.bf16.mxu0 %v8136
      %9326 = vmatpush1.bf16.msra.mxu0 %v8135
      %9327 = vmatprep.subr.bf16.mxu0 %v8128
      %9328 = vmatpush1.bf16.msra.mxu0 %v8127
      %9329 = vmatprep.subr.bf16.mxu0 %v8248
      %9330 = vmatpush2.bf16.msra.mxu0 %v8247
      %9331 = vmatprep.subr.bf16.mxu0 %v8240
      %9332 = vmatpush2.bf16.msra.mxu0 %v8239
      %9333 = vmatprep.subr.bf16.mxu0 %v8232
      %9334 = vmatpush2.bf16.msra.mxu0 %v8231
      %9335 = vmatprep.subr.bf16.mxu0 %v8224
      %9336 = vmatpush2.bf16.msra.mxu0 %v8223
      %9337 = vmatprep.subr.bf16.mxu0 %v8216
      %9338 = vmatpush2.bf16.msra.mxu0 %v8215
      %9339 = vmatprep.subr.bf16.mxu0 %v8208
      %9340 = vmatpush2.bf16.msra.mxu0 %v8207
      %9341 = vmatprep.subr.bf16.mxu0 %v8200
      %9342 = vmatpush2.bf16.msra.mxu0 %v8199
      %9343 = vmatprep.subr.bf16.mxu0 %v8192
      %9344 = vmatpush2.bf16.msra.mxu0 %v8191
      %9345 = vmatprep.mubr.bf16.mxu0 %v9312
      %9346 = vmatmul.mubr.bf16.gmra.mxu0 %v9311
      %v9347 = vpop.f32.mrf.mxu0
      %v9348 = vadd.f32 0.0, %v9347
      %v9349 = vpop.f32.mrf.mxu0
      %v9350 = vadd.f32 0.0, %v9349
      %v9351 = vpop.f32.mrf.mxu0
      %v9352 = vpop.f32.mrf.mxu0
      %9353 = vdwg.mxu0
      %9354 = vmatprep.subr.bf16.mxu0 %v8186
      %9355 = vmatpush1.bf16.msra.mxu0 %v8185
      %9356 = vmatprep.subr.bf16.mxu0 %v8178
      %9357 = vmatpush1.bf16.msra.mxu0 %v8177
      %9358 = vmatprep.subr.bf16.mxu0 %v8170
      %9359 = vmatpush1.bf16.msra.mxu0 %v8169
      %9360 = vmatprep.subr.bf16.mxu0 %v8162
      %9361 = vmatpush1.bf16.msra.mxu0 %v8161
      %9362 = vmatprep.subr.bf16.mxu0 %v8154
      %9363 = vmatpush1.bf16.msra.mxu0 %v8153
      %9364 = vmatprep.subr.bf16.mxu0 %v8146
      %9365 = vmatpush1.bf16.msra.mxu0 %v8145
      %9366 = vmatprep.subr.bf16.mxu0 %v8138
      %9367 = vmatpush1.bf16.msra.mxu0 %v8137
      %9368 = vmatprep.subr.bf16.mxu0 %v8130
      %9369 = vmatpush1.bf16.msra.mxu0 %v8129
      %9370 = vmatprep.subr.bf16.mxu0 %v8250
      %9371 = vmatpush2.bf16.msra.mxu0 %v8249
      %9372 = vmatprep.subr.bf16.mxu0 %v8242
      %9373 = vmatpush2.bf16.msra.mxu0 %v8241
      %9374 = vmatprep.subr.bf16.mxu0 %v8234
      %9375 = vmatpush2.bf16.msra.mxu0 %v8233
      %9376 = vmatprep.subr.bf16.mxu0 %v8226
      %9377 = vmatpush2.bf16.msra.mxu0 %v8225
      %9378 = vmatprep.subr.bf16.mxu0 %v8218
      %9379 = vmatpush2.bf16.msra.mxu0 %v8217
      %9380 = vmatprep.subr.bf16.mxu0 %v8210
      %9381 = vmatpush2.bf16.msra.mxu0 %v8209
      %9382 = vmatprep.subr.bf16.mxu0 %v8202
      %9383 = vmatpush2.bf16.msra.mxu0 %v8201
      %9384 = vmatprep.subr.bf16.mxu0 %v8194
      %9385 = vmatpush2.bf16.msra.mxu0 %v8193
      %9386 = vmatprep.mubr.bf16.mxu0 %v9312
      %9387 = vmatmul.mubr.bf16.gmra.mxu0 %v9311
      %v9388 = vpop.f32.mrf.mxu0
      %v9389 = vadd.f32 0.0, %v9388
      %v9390 = vpop.f32.mrf.mxu0
      %v9391 = vadd.f32 0.0, %v9390
      %v9392 = vpop.f32.mrf.mxu0
      %v9393 = vpop.f32.mrf.mxu0
      %9394 = vdwg.mxu0
      %9395 = vmatprep.subr.bf16.mxu0 %v8188
      %9396 = vmatpush1.bf16.msra.mxu0 %v8187
      %9397 = vmatprep.subr.bf16.mxu0 %v8180
      %9398 = vmatpush1.bf16.msra.mxu0 %v8179
      %9399 = vmatprep.subr.bf16.mxu0 %v8172
      %9400 = vmatpush1.bf16.msra.mxu0 %v8171
      %9401 = vmatprep.subr.bf16.mxu0 %v8164
      %9402 = vmatpush1.bf16.msra.mxu0 %v8163
      %9403 = vmatprep.subr.bf16.mxu0 %v8156
      %9404 = vmatpush1.bf16.msra.mxu0 %v8155
      %9405 = vmatprep.subr.bf16.mxu0 %v8148
      %9406 = vmatpush1.bf16.msra.mxu0 %v8147
      %9407 = vmatprep.subr.bf16.mxu0 %v8140
      %9408 = vmatpush1.bf16.msra.mxu0 %v8139
      %9409 = vmatprep.subr.bf16.mxu0 %v8132
      %9410 = vmatpush1.bf16.msra.mxu0 %v8131
      %9411 = vmatprep.subr.bf16.mxu0 %v8252
      %9412 = vmatpush2.bf16.msra.mxu0 %v8251
      %9413 = vmatprep.subr.bf16.mxu0 %v8244
      %9414 = vmatpush2.bf16.msra.mxu0 %v8243
      %9415 = vmatprep.subr.bf16.mxu0 %v8236
      %9416 = vmatpush2.bf16.msra.mxu0 %v8235
      %9417 = vmatprep.subr.bf16.mxu0 %v8228
      %9418 = vmatpush2.bf16.msra.mxu0 %v8227
      %9419 = vmatprep.subr.bf16.mxu0 %v8220
      %9420 = vmatpush2.bf16.msra.mxu0 %v8219
      %9421 = vmatprep.subr.bf16.mxu0 %v8212
      %9422 = vmatpush2.bf16.msra.mxu0 %v8211
      %9423 = vmatprep.subr.bf16.mxu0 %v8204
      %9424 = vmatpush2.bf16.msra.mxu0 %v8203
      %9425 = vmatprep.subr.bf16.mxu0 %v8196
      %9426 = vmatpush2.bf16.msra.mxu0 %v8195
      %9427 = vmatprep.mubr.bf16.mxu0 %v9312
      %9428 = vmatmul.mubr.bf16.gmra.mxu0 %v9311
      %v9429 = vpop.f32.mrf.mxu0
      %v9430 = vadd.f32 0.0, %v9429
      %v9431 = vpop.f32.mrf.mxu0
      %v9432 = vadd.f32 0.0, %v9431
      %v9433 = vpop.f32.mrf.mxu0
      %v9434 = vpop.f32.mrf.mxu0
      %9435 = vdwg.mxu0
      %9436 = vmatprep.subr.bf16.mxu0 %v8190
      %9437 = vmatpush1.bf16.msra.mxu0 %v8189
      %9438 = vmatprep.subr.bf16.mxu0 %v8182
      %9439 = vmatpush1.bf16.msra.mxu0 %v8181
      %9440 = vmatprep.subr.bf16.mxu0 %v8174
      %9441 = vmatpush1.bf16.msra.mxu0 %v8173
      %9442 = vmatprep.subr.bf16.mxu0 %v8166
      %9443 = vmatpush1.bf16.msra.mxu0 %v8165
      %9444 = vmatprep.subr.bf16.mxu0 %v8158
      %9445 = vmatpush1.bf16.msra.mxu0 %v8157
      %9446 = vmatprep.subr.bf16.mxu0 %v8150
      %9447 = vmatpush1.bf16.msra.mxu0 %v8149
      %9448 = vmatprep.subr.bf16.mxu0 %v8142
      %9449 = vmatpush1.bf16.msra.mxu0 %v8141
      %9450 = vmatprep.subr.bf16.mxu0 %v8134
      %9451 = vmatpush1.bf16.msra.mxu0 %v8133
      %9452 = vmatprep.subr.bf16.mxu0 %v8254
      %9453 = vmatpush2.bf16.msra.mxu0 %v8253
      %9454 = vmatprep.subr.bf16.mxu0 %v8246
      %9455 = vmatpush2.bf16.msra.mxu0 %v8245
      %9456 = vmatprep.subr.bf16.mxu0 %v8238
      %9457 = vmatpush2.bf16.msra.mxu0 %v8237
      %9458 = vmatprep.subr.bf16.mxu0 %v8230
      %9459 = vmatpush2.bf16.msra.mxu0 %v8229
      %9460 = vmatprep.subr.bf16.mxu0 %v8222
      %9461 = vmatpush2.bf16.msra.mxu0 %v8221
      %9462 = vmatprep.subr.bf16.mxu0 %v8214
      %9463 = vmatpush2.bf16.msra.mxu0 %v8213
      %9464 = vmatprep.subr.bf16.mxu0 %v8206
      %9465 = vmatpush2.bf16.msra.mxu0 %v8205
      %9466 = vmatprep.subr.bf16.mxu0 %v8198
      %9467 = vmatpush2.bf16.msra.mxu0 %v8197
      %9468 = vmatprep.mubr.bf16.mxu0 %v9312
      %9469 = vmatmul.mubr.bf16.gmra.mxu0 %v9311
      %v9470 = vpop.f32.mrf.mxu0
      %v9471 = vadd.f32 0.0, %v9470
      %v9472 = vpop.f32.mrf.mxu0
      %v9473 = vadd.f32 0.0, %v9472
      %v9474 = vpop.f32.mrf.mxu0
      %v9475 = vpop.f32.mrf.mxu0
      %9476 = vdwg.mxu0
      %v9477 = vadd.f32 %v9081, %v9348
      %v9478 = vadd.f32 %v9082, %v9350
      %v9479 = vadd.f32 %v9083, %v9389
      %v9480 = vadd.f32 %v9084, %v9391
      %v9481 = vadd.f32 %v9085, %v9430
      %v9482 = vadd.f32 %v9086, %v9432
      %v9483 = vadd.f32 %v9087, %v9471
      %v9484 = vadd.f32 %v9088, %v9473
      %v9485 = vxor.u32 %v9477, 2147483648
      %v9486 = vxor.u32 %v9478, 2147483648
      %v9487 = vmul.f32 %v9485, 1.442695
      %v9488 = vpow.pop %v9487
      %v9489 = vmul.f32 %v9486, 1.442695
      %v9490 = vpow.pop %v9489
      %v9491 = vadd.f32 %v9488, 1.0
      %v9492 = vadd.f32 %v9490, 1.0
      %v9493 = vrcp.pop %v9491
      %v9494 = vmul.f32 1.0, %v9493
      %v9495 = vrcp.pop %v9492
      %v9496 = vmul.f32 1.0, %v9495
      %v9497 = vxor.u32 %v9479, 2147483648
      %v9498 = vxor.u32 %v9480, 2147483648
      %v9499 = vmul.f32 %v9497, 1.442695
      %v9500 = vpow.pop %v9499
      %v9501 = vmul.f32 %v9498, 1.442695
      %v9502 = vpow.pop %v9501
      %v9503 = vadd.f32 %v9500, 1.0
      %v9504 = vadd.f32 %v9502, 1.0
      %v9505 = vrcp.pop %v9503
      %v9506 = vmul.f32 1.0, %v9505
      %v9507 = vrcp.pop %v9504
      %v9508 = vmul.f32 1.0, %v9507
      %v9509 = vtanh.pop %v9481
      %v9510 = vtanh.pop %v9482
      %v9511 = vxor.u32 %v9483, 2147483648
      %v9512 = vxor.u32 %v9484, 2147483648
      %v9513 = vmul.f32 %v9511, 1.442695
      %v9514 = vpow.pop %v9513
      %v9515 = vmul.f32 %v9512, 1.442695
      %v9516 = vpow.pop %v9515
      %v9517 = vadd.f32 %v9514, 1.0
      %v9518 = vadd.f32 %v9516, 1.0
      %v9519 = vrcp.pop %v9517
      %v9520 = vmul.f32 1.0, %v9519
      %v9521 = vrcp.pop %v9518
      %v9522 = vmul.f32 1.0, %v9521
      %v9523 = vmul.f32 %v9506, %v9063
      %v9524 = vmul.f32 %v9508, %v9064
      %v9525 = vmul.f32 %v9494, %v9509
      %v9526 = vmul.f32 %v9496, %v9510
      %v9527 = vadd.f32 %v9523, %v9525
      %v9528 = vadd.f32 %v9524, %v9526
      %v9529 = vtanh.pop %v9527
      %v9530 = vtanh.pop %v9528
      %v9531 = vmul.f32 %v9520, %v9529
      %v9532 = vmul.f32 %v9522, %v9530
      %s9533 = smul.addr %s6868, 8
      %s9534 = scalar_lea.vmem [#allocation2], %s9533
      %v9535 = vld [vmem:[%s9534] sm:$0xff]
      %v9536 = vld [vmem:[%s9534 + $0x8] sm:$0xff]
      %v9537 = vld [vmem:[%s9534 + $0x10] sm:$0xff]
      %v9538 = vld [vmem:[%s9534 + $0x18] sm:$0xff]
      %v9539 = vld [vmem:[%s9534 + $0x20] sm:$0xff]
      %v9540 = vld [vmem:[%s9534 + $0x28] sm:$0xff]
      %v9541 = vld [vmem:[%s9534 + $0x30] sm:$0xff]
      %v9542 = vld [vmem:[%s9534 + $0x38] sm:$0xff]
      %s9543 = smul.addr %s6857, 8
      %s9544 = scalar_lea.vmem [#allocation3], %s9543
      %v9545 = vld [vmem:[%s9544] sm:$0xff]
      %v9546 = vld [vmem:[%s9544 + $0x8] sm:$0xff]
      %v9547 = vld [vmem:[%s9544 + $0x10] sm:$0xff]
      %v9548 = vld [vmem:[%s9544 + $0x18] sm:$0xff]
      %v9549 = vld [vmem:[%s9544 + $0x20] sm:$0xff]
      %v9550 = vld [vmem:[%s9544 + $0x28] sm:$0xff]
      %v9551 = vld [vmem:[%s9544 + $0x30] sm:$0xff]
      %v9552 = vld [vmem:[%s9544 + $0x38] sm:$0xff]
      %v9553 = vpack.c.bf16 %v9309, %v9309
      %v9554 = vpack.c.bf16 %v9310, %v9310
      %9555 = vmatprep.subr.bf16.mxu0 %v7322
      %9556 = vmatpush1.bf16.msra.mxu0 %v7321
      %9557 = vmatprep.subr.bf16.mxu0 %v7314
      %9558 = vmatpush1.bf16.msra.mxu0 %v7313
      %9559 = vmatprep.subr.bf16.mxu0 %v7306
      %9560 = vmatpush1.bf16.msra.mxu0 %v7305
      %9561 = vmatprep.subr.bf16.mxu0 %v7298
      %9562 = vmatpush1.bf16.msra.mxu0 %v7297
      %9563 = vmatprep.subr.bf16.mxu0 %v7290
      %9564 = vmatpush1.bf16.msra.mxu0 %v7289
      %9565 = vmatprep.subr.bf16.mxu0 %v7282
      %9566 = vmatpush1.bf16.msra.mxu0 %v7281
      %9567 = vmatprep.subr.bf16.mxu0 %v7274
      %9568 = vmatpush1.bf16.msra.mxu0 %v7273
      %9569 = vmatprep.subr.bf16.mxu0 %v7266
      %9570 = vmatpush1.bf16.msra.mxu0 %v7265
      %9571 = vmatprep.subr.bf16.mxu0 %v7386
      %9572 = vmatpush2.bf16.msra.mxu0 %v7385
      %9573 = vmatprep.subr.bf16.mxu0 %v7378
      %9574 = vmatpush2.bf16.msra.mxu0 %v7377
      %9575 = vmatprep.subr.bf16.mxu0 %v7370
      %9576 = vmatpush2.bf16.msra.mxu0 %v7369
      %9577 = vmatprep.subr.bf16.mxu0 %v7362
      %9578 = vmatpush2.bf16.msra.mxu0 %v7361
      %9579 = vmatprep.subr.bf16.mxu0 %v7354
      %9580 = vmatpush2.bf16.msra.mxu0 %v7353
      %9581 = vmatprep.subr.bf16.mxu0 %v7346
      %9582 = vmatpush2.bf16.msra.mxu0 %v7345
      %9583 = vmatprep.subr.bf16.mxu0 %v7338
      %9584 = vmatpush2.bf16.msra.mxu0 %v7337
      %9585 = vmatprep.subr.bf16.mxu0 %v7330
      %9586 = vmatpush2.bf16.msra.mxu0 %v7329
      %9587 = vmatprep.mubr.bf16.mxu0 %v9554
      %9588 = vmatmul.mubr.bf16.gmra.mxu0 %v9553
      %v9589 = vpop.f32.mrf.mxu0
      %v9590 = vadd.f32 0.0, %v9589
      %v9591 = vpop.f32.mrf.mxu0
      %v9592 = vadd.f32 0.0, %v9591
      %v9593 = vpop.f32.mrf.mxu0
      %v9594 = vpop.f32.mrf.mxu0
      %9595 = vdwg.mxu0
      %9596 = vmatprep.subr.bf16.mxu0 %v7324
      %9597 = vmatpush1.bf16.msra.mxu0 %v7323
      %9598 = vmatprep.subr.bf16.mxu0 %v7316
      %9599 = vmatpush1.bf16.msra.mxu0 %v7315
      %9600 = vmatprep.subr.bf16.mxu0 %v7308
      %9601 = vmatpush1.bf16.msra.mxu0 %v7307
      %9602 = vmatprep.subr.bf16.mxu0 %v7300
      %9603 = vmatpush1.bf16.msra.mxu0 %v7299
      %9604 = vmatprep.subr.bf16.mxu0 %v7292
      %9605 = vmatpush1.bf16.msra.mxu0 %v7291
      %9606 = vmatprep.subr.bf16.mxu0 %v7284
      %9607 = vmatpush1.bf16.msra.mxu0 %v7283
      %9608 = vmatprep.subr.bf16.mxu0 %v7276
      %9609 = vmatpush1.bf16.msra.mxu0 %v7275
      %9610 = vmatprep.subr.bf16.mxu0 %v7268
      %9611 = vmatpush1.bf16.msra.mxu0 %v7267
      %9612 = vmatprep.subr.bf16.mxu0 %v7388
      %9613 = vmatpush2.bf16.msra.mxu0 %v7387
      %9614 = vmatprep.subr.bf16.mxu0 %v7380
      %9615 = vmatpush2.bf16.msra.mxu0 %v7379
      %9616 = vmatprep.subr.bf16.mxu0 %v7372
      %9617 = vmatpush2.bf16.msra.mxu0 %v7371
      %9618 = vmatprep.subr.bf16.mxu0 %v7364
      %9619 = vmatpush2.bf16.msra.mxu0 %v7363
      %9620 = vmatprep.subr.bf16.mxu0 %v7356
      %9621 = vmatpush2.bf16.msra.mxu0 %v7355
      %9622 = vmatprep.subr.bf16.mxu0 %v7348
      %9623 = vmatpush2.bf16.msra.mxu0 %v7347
      %9624 = vmatprep.subr.bf16.mxu0 %v7340
      %9625 = vmatpush2.bf16.msra.mxu0 %v7339
      %9626 = vmatprep.subr.bf16.mxu0 %v7332
      %9627 = vmatpush2.bf16.msra.mxu0 %v7331
      %9628 = vmatprep.mubr.bf16.mxu0 %v9554
      %9629 = vmatmul.mubr.bf16.gmra.mxu0 %v9553
      %v9630 = vpop.f32.mrf.mxu0
      %v9631 = vadd.f32 0.0, %v9630
      %v9632 = vpop.f32.mrf.mxu0
      %v9633 = vadd.f32 0.0, %v9632
      %v9634 = vpop.f32.mrf.mxu0
      %v9635 = vpop.f32.mrf.mxu0
      %9636 = vdwg.mxu0
      %9637 = vmatprep.subr.bf16.mxu0 %v7326
      %9638 = vmatpush1.bf16.msra.mxu0 %v7325
      %9639 = vmatprep.subr.bf16.mxu0 %v7318
      %9640 = vmatpush1.bf16.msra.mxu0 %v7317
      %9641 = vmatprep.subr.bf16.mxu0 %v7310
      %9642 = vmatpush1.bf16.msra.mxu0 %v7309
      %9643 = vmatprep.subr.bf16.mxu0 %v7302
      %9644 = vmatpush1.bf16.msra.mxu0 %v7301
      %9645 = vmatprep.subr.bf16.mxu0 %v7294
      %9646 = vmatpush1.bf16.msra.mxu0 %v7293
      %9647 = vmatprep.subr.bf16.mxu0 %v7286
      %9648 = vmatpush1.bf16.msra.mxu0 %v7285
      %9649 = vmatprep.subr.bf16.mxu0 %v7278
      %9650 = vmatpush1.bf16.msra.mxu0 %v7277
      %9651 = vmatprep.subr.bf16.mxu0 %v7270
      %9652 = vmatpush1.bf16.msra.mxu0 %v7269
      %9653 = vmatprep.subr.bf16.mxu0 %v7390
      %9654 = vmatpush2.bf16.msra.mxu0 %v7389
      %9655 = vmatprep.subr.bf16.mxu0 %v7382
      %9656 = vmatpush2.bf16.msra.mxu0 %v7381
      %9657 = vmatprep.subr.bf16.mxu0 %v7374
      %9658 = vmatpush2.bf16.msra.mxu0 %v7373
      %9659 = vmatprep.subr.bf16.mxu0 %v7366
      %9660 = vmatpush2.bf16.msra.mxu0 %v7365
      %9661 = vmatprep.subr.bf16.mxu0 %v7358
      %9662 = vmatpush2.bf16.msra.mxu0 %v7357
      %9663 = vmatprep.subr.bf16.mxu0 %v7350
      %9664 = vmatpush2.bf16.msra.mxu0 %v7349
      %9665 = vmatprep.subr.bf16.mxu0 %v7342
      %9666 = vmatpush2.bf16.msra.mxu0 %v7341
      %9667 = vmatprep.subr.bf16.mxu0 %v7334
      %9668 = vmatpush2.bf16.msra.mxu0 %v7333
      %9669 = vmatprep.mubr.bf16.mxu0 %v9554
      %9670 = vmatmul.mubr.bf16.gmra.mxu0 %v9553
      %v9671 = vpop.f32.mrf.mxu0
      %v9672 = vadd.f32 0.0, %v9671
      %v9673 = vpop.f32.mrf.mxu0
      %v9674 = vadd.f32 0.0, %v9673
      %v9675 = vpop.f32.mrf.mxu0
      %v9676 = vpop.f32.mrf.mxu0
      %9677 = vdwg.mxu0
      %9678 = vmatprep.subr.bf16.mxu0 %v7328
      %9679 = vmatpush1.bf16.msra.mxu0 %v7327
      %9680 = vmatprep.subr.bf16.mxu0 %v7320
      %9681 = vmatpush1.bf16.msra.mxu0 %v7319
      %9682 = vmatprep.subr.bf16.mxu0 %v7312
      %9683 = vmatpush1.bf16.msra.mxu0 %v7311
      %9684 = vmatprep.subr.bf16.mxu0 %v7304
      %9685 = vmatpush1.bf16.msra.mxu0 %v7303
      %9686 = vmatprep.subr.bf16.mxu0 %v7296
      %9687 = vmatpush1.bf16.msra.mxu0 %v7295
      %9688 = vmatprep.subr.bf16.mxu0 %v7288
      %9689 = vmatpush1.bf16.msra.mxu0 %v7287
      %9690 = vmatprep.subr.bf16.mxu0 %v7280
      %9691 = vmatpush1.bf16.msra.mxu0 %v7279
      %9692 = vmatprep.subr.bf16.mxu0 %v7272
      %9693 = vmatpush1.bf16.msra.mxu0 %v7271
      %9694 = vmatprep.subr.bf16.mxu0 %v7392
      %9695 = vmatpush2.bf16.msra.mxu0 %v7391
      %9696 = vmatprep.subr.bf16.mxu0 %v7384
      %9697 = vmatpush2.bf16.msra.mxu0 %v7383
      %9698 = vmatprep.subr.bf16.mxu0 %v7376
      %9699 = vmatpush2.bf16.msra.mxu0 %v7375
      %9700 = vmatprep.subr.bf16.mxu0 %v7368
      %9701 = vmatpush2.bf16.msra.mxu0 %v7367
      %9702 = vmatprep.subr.bf16.mxu0 %v7360
      %9703 = vmatpush2.bf16.msra.mxu0 %v7359
      %9704 = vmatprep.subr.bf16.mxu0 %v7352
      %9705 = vmatpush2.bf16.msra.mxu0 %v7351
      %9706 = vmatprep.subr.bf16.mxu0 %v7344
      %9707 = vmatpush2.bf16.msra.mxu0 %v7343
      %9708 = vmatprep.subr.bf16.mxu0 %v7336
      %9709 = vmatpush2.bf16.msra.mxu0 %v7335
      %9710 = vmatprep.mubr.bf16.mxu0 %v9554
      %9711 = vmatmul.mubr.bf16.gmra.mxu0 %v9553
      %v9712 = vpop.f32.mrf.mxu0
      %v9713 = vadd.f32 0.0, %v9712
      %v9714 = vpop.f32.mrf.mxu0
      %v9715 = vadd.f32 0.0, %v9714
      %v9716 = vpop.f32.mrf.mxu0
      %v9717 = vpop.f32.mrf.mxu0
      %9718 = vdwg.mxu0
      %v9719 = vadd.f32 %v9535, %v9590
      %v9720 = vadd.f32 %v9536, %v9592
      %v9721 = vadd.f32 %v9537, %v9631
      %v9722 = vadd.f32 %v9538, %v9633
      %v9723 = vadd.f32 %v9539, %v9672
      %v9724 = vadd.f32 %v9540, %v9674
      %v9725 = vadd.f32 %v9541, %v9713
      %v9726 = vadd.f32 %v9542, %v9715
      %v9727 = vxor.u32 %v9719, 2147483648
      %v9728 = vxor.u32 %v9720, 2147483648
      %v9729 = vmul.f32 %v9727, 1.442695
      %v9730 = vpow.pop %v9729
      %v9731 = vmul.f32 %v9728, 1.442695
      %v9732 = vpow.pop %v9731
      %v9733 = vadd.f32 %v9730, 1.0
      %v9734 = vadd.f32 %v9732, 1.0
      %v9735 = vrcp.pop %v9733
      %v9736 = vmul.f32 1.0, %v9735
      %v9737 = vrcp.pop %v9734
      %v9738 = vmul.f32 1.0, %v9737
      %v9739 = vxor.u32 %v9721, 2147483648
      %v9740 = vxor.u32 %v9722, 2147483648
      %v9741 = vmul.f32 %v9739, 1.442695
      %v9742 = vpow.pop %v9741
      %v9743 = vmul.f32 %v9740, 1.442695
      %v9744 = vpow.pop %v9743
      %v9745 = vadd.f32 %v9742, 1.0
      %v9746 = vadd.f32 %v9744, 1.0
      %v9747 = vrcp.pop %v9745
      %v9748 = vmul.f32 1.0, %v9747
      %v9749 = vrcp.pop %v9746
      %v9750 = vmul.f32 1.0, %v9749
      %v9751 = vtanh.pop %v9723
      %v9752 = vtanh.pop %v9724
      %v9753 = vxor.u32 %v9725, 2147483648
      %v9754 = vxor.u32 %v9726, 2147483648
      %v9755 = vmul.f32 %v9753, 1.442695
      %v9756 = vpow.pop %v9755
      %v9757 = vmul.f32 %v9754, 1.442695
      %v9758 = vpow.pop %v9757
      %v9759 = vadd.f32 %v9756, 1.0
      %v9760 = vadd.f32 %v9758, 1.0
      %v9761 = vrcp.pop %v9759
      %v9762 = vmul.f32 1.0, %v9761
      %v9763 = vrcp.pop %v9760
      %v9764 = vmul.f32 1.0, %v9763
      %v9765 = vmul.f32 %v9748, %v9305
      %v9766 = vmul.f32 %v9750, %v9306
      %v9767 = vmul.f32 %v9736, %v9751
      %v9768 = vmul.f32 %v9738, %v9752
      %v9769 = vadd.f32 %v9765, %v9767
      %v9770 = vadd.f32 %v9766, %v9768
      %v9771 = vtanh.pop %v9769
      %v9772 = vtanh.pop %v9770
      %v9773 = vmul.f32 %v9762, %v9771
      %v9774 = vmul.f32 %v9764, %v9772
      %v9775 = vpack.c.bf16 %v9531, %v9531
      %v9776 = vpack.c.bf16 %v9532, %v9532
      %9777 = vmatprep.subr.bf16.mxu0 %v8184
      %9778 = vmatpush1.bf16.msra.mxu0 %v8183
      %9779 = vmatprep.subr.bf16.mxu0 %v8176
      %9780 = vmatpush1.bf16.msra.mxu0 %v8175
      %9781 = vmatprep.subr.bf16.mxu0 %v8168
      %9782 = vmatpush1.bf16.msra.mxu0 %v8167
      %9783 = vmatprep.subr.bf16.mxu0 %v8160
      %9784 = vmatpush1.bf16.msra.mxu0 %v8159
      %9785 = vmatprep.subr.bf16.mxu0 %v8152
      %9786 = vmatpush1.bf16.msra.mxu0 %v8151
      %9787 = vmatprep.subr.bf16.mxu0 %v8144
      %9788 = vmatpush1.bf16.msra.mxu0 %v8143
      %9789 = vmatprep.subr.bf16.mxu0 %v8136
      %9790 = vmatpush1.bf16.msra.mxu0 %v8135
      %9791 = vmatprep.subr.bf16.mxu0 %v8128
      %9792 = vmatpush1.bf16.msra.mxu0 %v8127
      %9793 = vmatprep.subr.bf16.mxu0 %v8248
      %9794 = vmatpush2.bf16.msra.mxu0 %v8247
      %9795 = vmatprep.subr.bf16.mxu0 %v8240
      %9796 = vmatpush2.bf16.msra.mxu0 %v8239
      %9797 = vmatprep.subr.bf16.mxu0 %v8232
      %9798 = vmatpush2.bf16.msra.mxu0 %v8231
      %9799 = vmatprep.subr.bf16.mxu0 %v8224
      %9800 = vmatpush2.bf16.msra.mxu0 %v8223
      %9801 = vmatprep.subr.bf16.mxu0 %v8216
      %9802 = vmatpush2.bf16.msra.mxu0 %v8215
      %9803 = vmatprep.subr.bf16.mxu0 %v8208
      %9804 = vmatpush2.bf16.msra.mxu0 %v8207
      %9805 = vmatprep.subr.bf16.mxu0 %v8200
      %9806 = vmatpush2.bf16.msra.mxu0 %v8199
      %9807 = vmatprep.subr.bf16.mxu0 %v8192
      %9808 = vmatpush2.bf16.msra.mxu0 %v8191
      %9809 = vmatprep.mubr.bf16.mxu0 %v9776
      %9810 = vmatmul.mubr.bf16.gmra.mxu0 %v9775
      %v9811 = vpop.f32.mrf.mxu0
      %v9812 = vadd.f32 0.0, %v9811
      %v9813 = vpop.f32.mrf.mxu0
      %v9814 = vadd.f32 0.0, %v9813
      %v9815 = vpop.f32.mrf.mxu0
      %v9816 = vpop.f32.mrf.mxu0
      %9817 = vdwg.mxu0
      %9818 = vmatprep.subr.bf16.mxu0 %v8186
      %9819 = vmatpush1.bf16.msra.mxu0 %v8185
      %9820 = vmatprep.subr.bf16.mxu0 %v8178
      %9821 = vmatpush1.bf16.msra.mxu0 %v8177
      %9822 = vmatprep.subr.bf16.mxu0 %v8170
      %9823 = vmatpush1.bf16.msra.mxu0 %v8169
      %9824 = vmatprep.subr.bf16.mxu0 %v8162
      %9825 = vmatpush1.bf16.msra.mxu0 %v8161
      %9826 = vmatprep.subr.bf16.mxu0 %v8154
      %9827 = vmatpush1.bf16.msra.mxu0 %v8153
      %9828 = vmatprep.subr.bf16.mxu0 %v8146
      %9829 = vmatpush1.bf16.msra.mxu0 %v8145
      %9830 = vmatprep.subr.bf16.mxu0 %v8138
      %9831 = vmatpush1.bf16.msra.mxu0 %v8137
      %9832 = vmatprep.subr.bf16.mxu0 %v8130
      %9833 = vmatpush1.bf16.msra.mxu0 %v8129
      %9834 = vmatprep.subr.bf16.mxu0 %v8250
      %9835 = vmatpush2.bf16.msra.mxu0 %v8249
      %9836 = vmatprep.subr.bf16.mxu0 %v8242
      %9837 = vmatpush2.bf16.msra.mxu0 %v8241
      %9838 = vmatprep.subr.bf16.mxu0 %v8234
      %9839 = vmatpush2.bf16.msra.mxu0 %v8233
      %9840 = vmatprep.subr.bf16.mxu0 %v8226
      %9841 = vmatpush2.bf16.msra.mxu0 %v8225
      %9842 = vmatprep.subr.bf16.mxu0 %v8218
      %9843 = vmatpush2.bf16.msra.mxu0 %v8217
      %9844 = vmatprep.subr.bf16.mxu0 %v8210
      %9845 = vmatpush2.bf16.msra.mxu0 %v8209
      %9846 = vmatprep.subr.bf16.mxu0 %v8202
      %9847 = vmatpush2.bf16.msra.mxu0 %v8201
      %9848 = vmatprep.subr.bf16.mxu0 %v8194
      %9849 = vmatpush2.bf16.msra.mxu0 %v8193
      %9850 = vmatprep.mubr.bf16.mxu0 %v9776
      %9851 = vmatmul.mubr.bf16.gmra.mxu0 %v9775
      %v9852 = vpop.f32.mrf.mxu0
      %v9853 = vadd.f32 0.0, %v9852
      %v9854 = vpop.f32.mrf.mxu0
      %v9855 = vadd.f32 0.0, %v9854
      %v9856 = vpop.f32.mrf.mxu0
      %v9857 = vpop.f32.mrf.mxu0
      %9858 = vdwg.mxu0
      %9859 = vmatprep.subr.bf16.mxu0 %v8188
      %9860 = vmatpush1.bf16.msra.mxu0 %v8187
      %9861 = vmatprep.subr.bf16.mxu0 %v8180
      %9862 = vmatpush1.bf16.msra.mxu0 %v8179
      %9863 = vmatprep.subr.bf16.mxu0 %v8172
      %9864 = vmatpush1.bf16.msra.mxu0 %v8171
      %9865 = vmatprep.subr.bf16.mxu0 %v8164
      %9866 = vmatpush1.bf16.msra.mxu0 %v8163
      %9867 = vmatprep.subr.bf16.mxu0 %v8156
      %9868 = vmatpush1.bf16.msra.mxu0 %v8155
      %9869 = vmatprep.subr.bf16.mxu0 %v8148
      %9870 = vmatpush1.bf16.msra.mxu0 %v8147
      %9871 = vmatprep.subr.bf16.mxu0 %v8140
      %9872 = vmatpush1.bf16.msra.mxu0 %v8139
      %9873 = vmatprep.subr.bf16.mxu0 %v8132
      %9874 = vmatpush1.bf16.msra.mxu0 %v8131
      %9875 = vmatprep.subr.bf16.mxu0 %v8252
      %9876 = vmatpush2.bf16.msra.mxu0 %v8251
      %9877 = vmatprep.subr.bf16.mxu0 %v8244
      %9878 = vmatpush2.bf16.msra.mxu0 %v8243
      %9879 = vmatprep.subr.bf16.mxu0 %v8236
      %9880 = vmatpush2.bf16.msra.mxu0 %v8235
      %9881 = vmatprep.subr.bf16.mxu0 %v8228
      %9882 = vmatpush2.bf16.msra.mxu0 %v8227
      %9883 = vmatprep.subr.bf16.mxu0 %v8220
      %9884 = vmatpush2.bf16.msra.mxu0 %v8219
      %9885 = vmatprep.subr.bf16.mxu0 %v8212
      %9886 = vmatpush2.bf16.msra.mxu0 %v8211
      %9887 = vmatprep.subr.bf16.mxu0 %v8204
      %9888 = vmatpush2.bf16.msra.mxu0 %v8203
      %9889 = vmatprep.subr.bf16.mxu0 %v8196
      %9890 = vmatpush2.bf16.msra.mxu0 %v8195
      %9891 = vmatprep.mubr.bf16.mxu0 %v9776
      %9892 = vmatmul.mubr.bf16.gmra.mxu0 %v9775
      %v9893 = vpop.f32.mrf.mxu0
      %v9894 = vadd.f32 0.0, %v9893
      %v9895 = vpop.f32.mrf.mxu0
      %v9896 = vadd.f32 0.0, %v9895
      %v9897 = vpop.f32.mrf.mxu0
      %v9898 = vpop.f32.mrf.mxu0
      %9899 = vdwg.mxu0
      %9900 = vmatprep.subr.bf16.mxu0 %v8190
      %9901 = vmatpush1.bf16.msra.mxu0 %v8189
      %9902 = vmatprep.subr.bf16.mxu0 %v8182
      %9903 = vmatpush1.bf16.msra.mxu0 %v8181
      %9904 = vmatprep.subr.bf16.mxu0 %v8174
      %9905 = vmatpush1.bf16.msra.mxu0 %v8173
      %9906 = vmatprep.subr.bf16.mxu0 %v8166
      %9907 = vmatpush1.bf16.msra.mxu0 %v8165
      %9908 = vmatprep.subr.bf16.mxu0 %v8158
      %9909 = vmatpush1.bf16.msra.mxu0 %v8157
      %9910 = vmatprep.subr.bf16.mxu0 %v8150
      %9911 = vmatpush1.bf16.msra.mxu0 %v8149
      %9912 = vmatprep.subr.bf16.mxu0 %v8142
      %9913 = vmatpush1.bf16.msra.mxu0 %v8141
      %9914 = vmatprep.subr.bf16.mxu0 %v8134
      %9915 = vmatpush1.bf16.msra.mxu0 %v8133
      %9916 = vmatprep.subr.bf16.mxu0 %v8254
      %9917 = vmatpush2.bf16.msra.mxu0 %v8253
      %9918 = vmatprep.subr.bf16.mxu0 %v8246
      %9919 = vmatpush2.bf16.msra.mxu0 %v8245
      %9920 = vmatprep.subr.bf16.mxu0 %v8238
      %9921 = vmatpush2.bf16.msra.mxu0 %v8237
      %9922 = vmatprep.subr.bf16.mxu0 %v8230
      %9923 = vmatpush2.bf16.msra.mxu0 %v8229
      %9924 = vmatprep.subr.bf16.mxu0 %v8222
      %9925 = vmatpush2.bf16.msra.mxu0 %v8221
      %9926 = vmatprep.subr.bf16.mxu0 %v8214
      %9927 = vmatpush2.bf16.msra.mxu0 %v8213
      %9928 = vmatprep.subr.bf16.mxu0 %v8206
      %9929 = vmatpush2.bf16.msra.mxu0 %v8205
      %9930 = vmatprep.subr.bf16.mxu0 %v8198
      %9931 = vmatpush2.bf16.msra.mxu0 %v8197
      %9932 = vmatprep.mubr.bf16.mxu0 %v9776
      %9933 = vmatmul.mubr.bf16.gmra.mxu0 %v9775
      %v9934 = vpop.f32.mrf.mxu0
      %v9935 = vadd.f32 0.0, %v9934
      %v9936 = vpop.f32.mrf.mxu0
      %v9937 = vadd.f32 0.0, %v9936
      %v9938 = vpop.f32.mrf.mxu0
      %v9939 = vpop.f32.mrf.mxu0
      %9940 = vdwg.mxu0
      %v9941 = vadd.f32 %v9545, %v9812
      %v9942 = vadd.f32 %v9546, %v9814
      %v9943 = vadd.f32 %v9547, %v9853
      %v9944 = vadd.f32 %v9548, %v9855
      %v9945 = vadd.f32 %v9549, %v9894
      %v9946 = vadd.f32 %v9550, %v9896
      %v9947 = vadd.f32 %v9551, %v9935
      %v9948 = vadd.f32 %v9552, %v9937
      %v9949 = vxor.u32 %v9941, 2147483648
      %v9950 = vxor.u32 %v9942, 2147483648
      %v9951 = vmul.f32 %v9949, 1.442695
      %v9952 = vpow.pop %v9951
      %v9953 = vmul.f32 %v9950, 1.442695
      %v9954 = vpow.pop %v9953
      %v9955 = vadd.f32 %v9952, 1.0
      %v9956 = vadd.f32 %v9954, 1.0
      %v9957 = vrcp.pop %v9955
      %v9958 = vmul.f32 1.0, %v9957
      %v9959 = vrcp.pop %v9956
      %v9960 = vmul.f32 1.0, %v9959
      %v9961 = vxor.u32 %v9943, 2147483648
      %v9962 = vxor.u32 %v9944, 2147483648
      %v9963 = vmul.f32 %v9961, 1.442695
      %v9964 = vpow.pop %v9963
      %v9965 = vmul.f32 %v9962, 1.442695
      %v9966 = vpow.pop %v9965
      %v9967 = vadd.f32 %v9964, 1.0
      %v9968 = vadd.f32 %v9966, 1.0
      %v9969 = vrcp.pop %v9967
      %v9970 = vmul.f32 1.0, %v9969
      %v9971 = vrcp.pop %v9968
      %v9972 = vmul.f32 1.0, %v9971
      %v9973 = vtanh.pop %v9945
      %v9974 = vtanh.pop %v9946
      %v9975 = vxor.u32 %v9947, 2147483648
      %v9976 = vxor.u32 %v9948, 2147483648
      %v9977 = vmul.f32 %v9975, 1.442695
      %v9978 = vpow.pop %v9977
      %v9979 = vmul.f32 %v9976, 1.442695
      %v9980 = vpow.pop %v9979
      %v9981 = vadd.f32 %v9978, 1.0
      %v9982 = vadd.f32 %v9980, 1.0
      %v9983 = vrcp.pop %v9981
      %v9984 = vmul.f32 1.0, %v9983
      %v9985 = vrcp.pop %v9982
      %v9986 = vmul.f32 1.0, %v9985
      %v9987 = vmul.f32 %v9970, %v9527
      %v9988 = vmul.f32 %v9972, %v9528
      %v9989 = vmul.f32 %v9958, %v9973
      %v9990 = vmul.f32 %v9960, %v9974
      %v9991 = vadd.f32 %v9987, %v9989
      %v9992 = vadd.f32 %v9988, %v9990
      %v9993 = vtanh.pop %v9991
      %v9994 = vtanh.pop %v9992
      %v9995 = vmul.f32 %v9984, %v9993
      %v9996 = vmul.f32 %v9986, %v9994
      %9997 = vst [vmem:[#allocation4] sm:$0xff] %v9773
      %9998 = vst [vmem:[#allocation4 + $0x8] sm:$0xff] %v9774
      %9999 = vst [vmem:[#allocation5] sm:$0xff] %v9769
      %10000 = vst [vmem:[#allocation5 + $0x8] sm:$0xff] %v9770
      %10001 = vst [vmem:[#allocation6] sm:$0xff] %v9995
      %10002 = vst [vmem:[#allocation6 + $0x8] sm:$0xff] %v9996
      %10003 = vst [vmem:[#allocation7] sm:$0xff] %v9991
      %10004 = vst [vmem:[#allocation7 + $0x8] sm:$0xff] %v9992
      %p10005 = scmp.eq.s32.totalorder %s22, 1
      // Predicated region
      $region69: #{_lambda_.1} parent=63 // pred_check
        %p10006 = pneg %p10005
      $region70: #{_lambda_.1} parent=63 // pred_check_branch
        %10008 = sbr.rel (%p10006) target = $region72
      $region71: #{_lambda_.1} parent=63 // pred_region
        %v10009 = vld [vmem:[%s8] sm:$0xff]
        %v10010 = vld [vmem:[%s8 + $0x8] sm:$0xff]
        %v10011 = vld [vmem:[%s8 + $0x10] sm:$0xff]
        %v10012 = vld [vmem:[%s8 + $0x18] sm:$0xff]
        %v10013 = vld [vmem:[%s8 + $0x20] sm:$0xff]
        %v10014 = vld [vmem:[%s8 + $0x28] sm:$0xff]
        %v10015 = vld [vmem:[%s8 + $0x30] sm:$0xff]
        %v10016 = vld [vmem:[%s8 + $0x38] sm:$0xff]
        %v10017 = vld [vmem:[%s8 + $0x40] sm:$0xff]
        %v10018 = vld [vmem:[%s8 + $0x48] sm:$0xff]
        %v10019 = vld [vmem:[%s8 + $0x50] sm:$0xff]
        %v10020 = vld [vmem:[%s8 + $0x58] sm:$0xff]
        %v10021 = vld [vmem:[%s8 + $0x60] sm:$0xff]
        %v10022 = vld [vmem:[%s8 + $0x68] sm:$0xff]
        %v10023 = vld [vmem:[%s8 + $0x70] sm:$0xff]
        %v10024 = vld [vmem:[%s8 + $0x78] sm:$0xff]
        %v10025 = vld [vmem:[%s8 + $0x80] sm:$0xff]
        %v10026 = vld [vmem:[%s8 + $0x88] sm:$0xff]
        %v10027 = vld [vmem:[%s8 + $0x90] sm:$0xff]
        %v10028 = vld [vmem:[%s8 + $0x98] sm:$0xff]
        %v10029 = vld [vmem:[%s8 + $0xa0] sm:$0xff]
        %v10030 = vld [vmem:[%s8 + $0xa8] sm:$0xff]
        %v10031 = vld [vmem:[%s8 + $0xb0] sm:$0xff]
        %v10032 = vld [vmem:[%s8 + $0xb8] sm:$0xff]
        %v10033 = vld [vmem:[%s8 + $0xc0] sm:$0xff]
        %v10034 = vld [vmem:[%s8 + $0xc8] sm:$0xff]
        %v10035 = vld [vmem:[%s8 + $0xd0] sm:$0xff]
        %v10036 = vld [vmem:[%s8 + $0xd8] sm:$0xff]
        %v10037 = vld [vmem:[%s8 + $0xe0] sm:$0xff]
        %v10038 = vld [vmem:[%s8 + $0xe8] sm:$0xff]
        %v10039 = vld [vmem:[%s8 + $0xf0] sm:$0xff]
        %v10040 = vld [vmem:[%s8 + $0xf8] sm:$0xff]
        %v10041 = vld [vmem:[%s9] sm:$0xff]
        %v10042 = vld [vmem:[%s9 + $0x8] sm:$0xff]
        %v10043 = vld [vmem:[%s9 + $0x10] sm:$0xff]
        %v10044 = vld [vmem:[%s9 + $0x18] sm:$0xff]
        %v10045 = vld [vmem:[%s9 + $0x20] sm:$0xff]
        %v10046 = vld [vmem:[%s9 + $0x28] sm:$0xff]
        %v10047 = vld [vmem:[%s9 + $0x30] sm:$0xff]
        %v10048 = vld [vmem:[%s9 + $0x38] sm:$0xff]
        %v10049 = vld [vmem:[%s9 + $0x40] sm:$0xff]
        %v10050 = vld [vmem:[%s9 + $0x48] sm:$0xff]
        %v10051 = vld [vmem:[%s9 + $0x50] sm:$0xff]
        %v10052 = vld [vmem:[%s9 + $0x58] sm:$0xff]
        %v10053 = vld [vmem:[%s9 + $0x60] sm:$0xff]
        %v10054 = vld [vmem:[%s9 + $0x68] sm:$0xff]
        %v10055 = vld [vmem:[%s9 + $0x70] sm:$0xff]
        %v10056 = vld [vmem:[%s9 + $0x78] sm:$0xff]
        %v10057 = vld [vmem:[%s9 + $0x80] sm:$0xff]
        %v10058 = vld [vmem:[%s9 + $0x88] sm:$0xff]
        %v10059 = vld [vmem:[%s9 + $0x90] sm:$0xff]
        %v10060 = vld [vmem:[%s9 + $0x98] sm:$0xff]
        %v10061 = vld [vmem:[%s9 + $0xa0] sm:$0xff]
        %v10062 = vld [vmem:[%s9 + $0xa8] sm:$0xff]
        %v10063 = vld [vmem:[%s9 + $0xb0] sm:$0xff]
        %v10064 = vld [vmem:[%s9 + $0xb8] sm:$0xff]
        %v10065 = vld [vmem:[%s9 + $0xc0] sm:$0xff]
        %v10066 = vld [vmem:[%s9 + $0xc8] sm:$0xff]
        %v10067 = vld [vmem:[%s9 + $0xd0] sm:$0xff]
        %v10068 = vld [vmem:[%s9 + $0xd8] sm:$0xff]
        %v10069 = vld [vmem:[%s9 + $0xe0] sm:$0xff]
        %v10070 = vld [vmem:[%s9 + $0xe8] sm:$0xff]
        %v10071 = vld [vmem:[%s9 + $0xf0] sm:$0xff]
        %v10072 = vld [vmem:[%s9 + $0xf8] sm:$0xff]
        %10073 = vmatprep.subr.mxu0 0.0
        %10074 = vmatpush1.msra.mxu0 %v10056
        %10075 = vmatprep.subr.mxu0 0.0
        %10076 = vmatpush1.msra.mxu0 %v10055
        %10077 = vmatprep.subr.mxu0 0.0
        %10078 = vmatpush1.msra.mxu0 %v10054
        %10079 = vmatprep.subr.mxu0 0.0
        %10080 = vmatpush1.msra.mxu0 %v10053
        %10081 = vmatprep.subr.mxu0 0.0
        %10082 = vmatpush1.msra.mxu0 %v10052
        %10083 = vmatprep.subr.mxu0 0.0
        %10084 = vmatpush1.msra.mxu0 %v10051
        %10085 = vmatprep.subr.mxu0 0.0
        %10086 = vmatpush1.msra.mxu0 %v10050
        %10087 = vmatprep.subr.mxu0 0.0
        %10088 = vmatpush1.msra.mxu0 %v10049
        %10089 = vmatprep.subr.mxu0 0.0
        %10090 = vmatpush1.msra.mxu0 %v10048
        %10091 = vmatprep.subr.mxu0 0.0
        %10092 = vmatpush1.msra.mxu0 %v10047
        %10093 = vmatprep.subr.mxu0 0.0
        %10094 = vmatpush1.msra.mxu0 %v10046
        %10095 = vmatprep.subr.mxu0 0.0
        %10096 = vmatpush1.msra.mxu0 %v10045
        %10097 = vmatprep.subr.mxu0 0.0
        %10098 = vmatpush1.msra.mxu0 %v10044
        %10099 = vmatprep.subr.mxu0 0.0
        %10100 = vmatpush1.msra.mxu0 %v10043
        %10101 = vmatprep.subr.mxu0 0.0
        %10102 = vmatpush1.msra.mxu0 %v10042
        %10103 = vmatprep.subr.mxu0 0.0
        %10104 = vmatpush1.msra.mxu0 %v10041
        %10105 = vmatprep.subr.mxu0 0.0
        %10106 = vmatpush2.msra.mxu0 %v10072
        %10107 = vmatprep.subr.mxu0 0.0
        %10108 = vmatpush2.msra.mxu0 %v10071
        %10109 = vmatprep.subr.mxu0 0.0
        %10110 = vmatpush2.msra.mxu0 %v10070
        %10111 = vmatprep.subr.mxu0 0.0
        %10112 = vmatpush2.msra.mxu0 %v10069
        %10113 = vmatprep.subr.mxu0 0.0
        %10114 = vmatpush2.msra.mxu0 %v10068
        %10115 = vmatprep.subr.mxu0 0.0
        %10116 = vmatpush2.msra.mxu0 %v10067
        %10117 = vmatprep.subr.mxu0 0.0
        %10118 = vmatpush2.msra.mxu0 %v10066
        %10119 = vmatprep.subr.mxu0 0.0
        %10120 = vmatpush2.msra.mxu0 %v10065
        %10121 = vmatprep.subr.mxu0 0.0
        %10122 = vmatpush2.msra.mxu0 %v10064
        %10123 = vmatprep.subr.mxu0 0.0
        %10124 = vmatpush2.msra.mxu0 %v10063
        %10125 = vmatprep.subr.mxu0 0.0
        %10126 = vmatpush2.msra.mxu0 %v10062
        %10127 = vmatprep.subr.mxu0 0.0
        %10128 = vmatpush2.msra.mxu0 %v10061
        %10129 = vmatprep.subr.mxu0 0.0
        %10130 = vmatpush2.msra.mxu0 %v10060
        %10131 = vmatprep.subr.mxu0 0.0
        %10132 = vmatpush2.msra.mxu0 %v10059
        %10133 = vmatprep.subr.mxu0 0.0
        %10134 = vmatpush2.msra.mxu0 %v10058
        %10135 = vmatprep.subr.mxu0 0.0
        %10136 = vmatpush2.msra.mxu0 %v10057
        %10137 = vmatprep.mubr.f32.mxu0 %v9996
        %10138 = vmatmul.mubr.f32.gmra.mxu0 %v9995
        %v10139 = vpop.f32.mrf.mxu0
        %v10140 = vadd.f32 0.0, %v10139
        %v10141 = vpop.f32.mrf.mxu0
        %10142 = vdwg.mxu0
        %10143 = vmatprep.subr.mxu0 0.0
        %10144 = vmatpush1.msra.mxu0 %v10024
        %10145 = vmatprep.subr.mxu0 0.0
        %10146 = vmatpush1.msra.mxu0 %v10023
        %10147 = vmatprep.subr.mxu0 0.0
        %10148 = vmatpush1.msra.mxu0 %v10022
        %10149 = vmatprep.subr.mxu0 0.0
        %10150 = vmatpush1.msra.mxu0 %v10021
        %10151 = vmatprep.subr.mxu0 0.0
        %10152 = vmatpush1.msra.mxu0 %v10020
        %10153 = vmatprep.subr.mxu0 0.0
        %10154 = vmatpush1.msra.mxu0 %v10019
        %10155 = vmatprep.subr.mxu0 0.0
        %10156 = vmatpush1.msra.mxu0 %v10018
        %10157 = vmatprep.subr.mxu0 0.0
        %10158 = vmatpush1.msra.mxu0 %v10017
        %10159 = vmatprep.subr.mxu0 0.0
        %10160 = vmatpush1.msra.mxu0 %v10016
        %10161 = vmatprep.subr.mxu0 0.0
        %10162 = vmatpush1.msra.mxu0 %v10015
        %10163 = vmatprep.subr.mxu0 0.0
        %10164 = vmatpush1.msra.mxu0 %v10014
        %10165 = vmatprep.subr.mxu0 0.0
        %10166 = vmatpush1.msra.mxu0 %v10013
        %10167 = vmatprep.subr.mxu0 0.0
        %10168 = vmatpush1.msra.mxu0 %v10012
        %10169 = vmatprep.subr.mxu0 0.0
        %10170 = vmatpush1.msra.mxu0 %v10011
        %10171 = vmatprep.subr.mxu0 0.0
        %10172 = vmatpush1.msra.mxu0 %v10010
        %10173 = vmatprep.subr.mxu0 0.0
        %10174 = vmatpush1.msra.mxu0 %v10009
        %10175 = vmatprep.subr.mxu0 0.0
        %10176 = vmatpush2.msra.mxu0 %v10040
        %10177 = vmatprep.subr.mxu0 0.0
        %10178 = vmatpush2.msra.mxu0 %v10039
        %10179 = vmatprep.subr.mxu0 0.0
        %10180 = vmatpush2.msra.mxu0 %v10038
        %10181 = vmatprep.subr.mxu0 0.0
        %10182 = vmatpush2.msra.mxu0 %v10037
        %10183 = vmatprep.subr.mxu0 0.0
        %10184 = vmatpush2.msra.mxu0 %v10036
        %10185 = vmatprep.subr.mxu0 0.0
        %10186 = vmatpush2.msra.mxu0 %v10035
        %10187 = vmatprep.subr.mxu0 0.0
        %10188 = vmatpush2.msra.mxu0 %v10034
        %10189 = vmatprep.subr.mxu0 0.0
        %10190 = vmatpush2.msra.mxu0 %v10033
        %10191 = vmatprep.subr.mxu0 0.0
        %10192 = vmatpush2.msra.mxu0 %v10032
        %10193 = vmatprep.subr.mxu0 0.0
        %10194 = vmatpush2.msra.mxu0 %v10031
        %10195 = vmatprep.subr.mxu0 0.0
        %10196 = vmatpush2.msra.mxu0 %v10030
        %10197 = vmatprep.subr.mxu0 0.0
        %10198 = vmatpush2.msra.mxu0 %v10029
        %10199 = vmatprep.subr.mxu0 0.0
        %10200 = vmatpush2.msra.mxu0 %v10028
        %10201 = vmatprep.subr.mxu0 0.0
        %10202 = vmatpush2.msra.mxu0 %v10027
        %10203 = vmatprep.subr.mxu0 0.0
        %10204 = vmatpush2.msra.mxu0 %v10026
        %10205 = vmatprep.subr.mxu0 0.0
        %10206 = vmatpush2.msra.mxu0 %v10025
        %10207 = vmatprep.mubr.f32.mxu0 %v9774
        %10208 = vmatmul.mubr.f32.gmra.mxu0 %v9773
        %v10209 = vpop.f32.mrf.mxu0
        %v10210 = vadd.f32 %v10140, %v10209
        %v10211 = vpop.f32.mrf.mxu0
        %10212 = vdwg.mxu0
        %v10213 = vld [vmem:[%s10] sm:$0x1]
        %v10215 = vlaneseq
        %v10216 = vshrl.u32 %v10215, 7
        %v10217 = vsub.s32 0, %v10216
        %v10218 = vrot.slane %v10213, %v10217
        %v10220 = vadd.f32 %v10210, %v10218
        %vm10221 = vcmask 244736
        %10222 = vst.msk [vmem:[%s11] sm:$0xff] %vm10221, %v10220
      $region72: #{_lambda_.1} parent=63 // pred_fallthru
        _
      // Predicated region
      $region73: #{_lambda_.1} parent=63 // pred_check
        %p10223 = pneg %p278
      $region74: #{_lambda_.1} parent=63 // pred_check_branch
        %10225 = sbr.rel (%p10223) target = $region76
      $region75: #{_lambda_.1} parent=63 // pred_region
        _
      $region76: #{_lambda_.1} parent=63 // pred_fallthru
        _
      // Predicated region
      $region77: #{_lambda_.1} parent=63 // pred_check
        %p10226 = pneg %p278
      $region78: #{_lambda_.1} parent=63 // pred_check_branch
        %10228 = sbr.rel (%p10226) target = $region80
      $region79: #{_lambda_.1} parent=63 // pred_region
        _
      $region80: #{_lambda_.1} parent=63 // pred_fallthru
        _
    $region64: #{_lambda_.1} parent=5 // pred_fallthru
      _
    %p10229 = scmp.le.s32.totalorder 2, %s17
    // Predicated region
    $region81: #{_lambda_.1} parent=5 // pred_check
      %p10230 = pneg %p10229
    $region82: #{_lambda_.1} parent=5 // pred_check_branch
      %10232 = sbr.rel (%p10230) target = $region84
    $region83: #{_lambda_.1} parent=5 // pred_region
      %s10233 = ssub.s32 %s17, 2
    $region84: #{_lambda_.1} parent=5 // pred_fallthru
      _
  $region6: #{_lambda_.1} parent=0 // loop_footer
    %s21 = sadd.s32 1, %s17
  $region7: #{_lambda_.1} parent=0 // loop_footer_branch
    %16 = sbr.rel target = $region3
  $region8: #{_lambda_.1} parent=0 // loop_exit
    _

</llo_original>
